<compile_context>
chip_gen: v7x
topology: tpu7x:2x2x1
jax: 0.10.0
libtpu: 0.0.40
codegen_flags: <defaults>
</compile_context>

<pallas_src>
import functools

import jax
import jax.numpy as jnp
from jax.experimental import pallas as pl
from jax.experimental.pallas import tpu as pltpu


def _fused_matching_kernel(*args, n_conv, K, Wp, L):
    """Fused conv->BN->ReLU (x n_conv) -> 1x1 conv; Nb batch elements per step.

    args (inputs, outputs, scratch):
      x_ref                 : (C0, L) f32      L = Nb*S, padded+flattened input
      [w, shift] * n_conv   : (Cout, K*K*Cin) f32 (BN scale folded in), (Cout, 1) f32
      wl_ref, bl_ref        : (CL, Cn) f32, (CL, 1) f32   final 1x1 conv
      mask_ref              : (1, L) f32       1.0 at valid (non-halo/tail) lanes
      out_ref               : (CL, L) f32
      patches_ref           : (K*K*max_cin, L) f32 VMEM scratch (im2col)
    """
    x_ref = args[0]
    conv_refs = args[1:1 + 2 * n_conv]
    wl_ref, bl_ref, mask_ref = args[1 + 2 * n_conv:4 + 2 * n_conv]
    out_ref = args[4 + 2 * n_conv]
    patches_ref = args[5 + 2 * n_conv]

    pad = K // 2
    taps = [(dy, dx) for dy in range(-pad, pad + 1) for dx in range(-pad, pad + 1)]
    n_taps = len(taps)

    mask = mask_ref[...]                                    # (1, L) f32, hoisted

    h = x_ref[...]                                          # (C0, L) f32
    for l in range(n_conv):
        w_ref = conv_refs[2 * l]
        b_ref = conv_refs[2 * l + 1]
        cin = h.shape[0]

        # im2col: stack K*K rolled views of the flat spatial axis along the
        # channel (sublane) axis in VMEM scratch.  Shifts are static; rolls
        # ride the XLU slot (free filler next to the MXU/VPU work).
        for t, (dy, dx) in enumerate(taps):
            shift = (-(dy * Wp + dx)) % L
            rolled = h if shift == 0 else pltpu.roll(h, shift, 1)
            patches_ref[t * cin:(t + 1) * cin, :] = rolled
        patches = patches_ref[0:n_taps * cin, :]            # (K*K*cin, L) f32

        # Single wide MXU matmul for the whole layer (f32 accumulation).
        acc = jnp.dot(w_ref[...], patches, preferred_element_type=jnp.float32)

        # BN scale already folded into w; add shift, ReLU, then re-zero the
        # halo/tail so the next layer's shifted taps read exact zeros.
        h = jnp.maximum(acc + b_ref[...], 0.0) * mask

    # Final 1x1 conv with bias.
    out_ref[...] = (jnp.dot(wl_ref[...], h, preferred_element_type=jnp.float32)
                    + bl_ref[...])


def _pick_batch_block(n, per_batch_vmem_bytes, vmem_budget_bytes):
    """Largest divisor of n that fits the VMEM budget and keeps >= 2 grid steps."""
    nb = max(1, min(n, vmem_budget_bytes // max(per_batch_vmem_bytes, 1)))
    # v7x has 2 TensorCores: keep >= 2 grid steps when possible so both stay busy.
    while nb > 1 and (n + nb - 1) // nb < 2:
        nb -= 1
    # Avoid a ragged tail block.
    while n % nb:
        nb -= 1
    return nb


@functools.partial(jax.jit, static_argnames=("kernel_size", "batch_block"))
def custom_2d_conv_matching(x_nchw, params, *, kernel_size=3, batch_block=None):
    """Forward pass. Input/output in NCHW (PyTorch convention)."""
    N, C0, H, W = x_nchw.shape
    K = kernel_size
    pad = K // 2
    Hp, Wp = H + 2 * pad, W + 2 * pad
    s_raw = Hp * Wp
    S = ((s_raw + 127) // 128) * 128          # lane-pad each batch segment to 128*k

    conv_layers = params["conv"]
    w_last, b_last = params["w_last"], params["b_last"]
    n_conv = len(conv_layers)
    c_last = w_last.shape[0]
    max_cin = max([C0] + [lyr["w"].shape[1] // (K * K) for lyr in conv_layers])
    max_c = max([C0, c_last] + [lyr["w"].shape[0] for lyr in conv_layers])

    if batch_block is None:
        # Conservative per-batch-element VMEM estimate: im2col scratch +
        # double-buffered input/output blocks + live activation temps.
        per_batch = 4 * S * (K * K * max_cin + 2 * C0 + 2 * c_last + 3 * max_c)
        # 8 MiB budget stays well inside the default scoped VMEM limit on all of
        # v5e / v6e / v7x; raise vmem_limit_bytes only if this budget is raised.
        batch_block = _pick_batch_block(N, per_batch, vmem_budget_bytes=8 << 20)
    Nb = batch_block
    assert N % Nb == 0, (N, Nb)
    L = Nb * S

    # Channel-major, lane-dense layout: (C0, N*S) with each batch element in a
    # contiguous 128-aligned S-lane segment (zero halo + zero lane tail), so one
    # grid step sees a (C0, Nb*S) matmul operand with no in-kernel transposes.
    x_t = jnp.transpose(x_nchw, (1, 0, 2, 3))                        # (C0, N, H, W)
    x_pad = jnp.pad(x_t, ((0, 0), (0, 0), (pad, pad), (pad, pad)))   # zero halo
    x_flat = jnp.pad(x_pad.reshape(C0, N, s_raw),
                     ((0, 0), (0, 0), (0, S - s_raw)))               # zero lane tail
    x_flat = x_flat.reshape(C0, N * S)

    # 1.0 at valid (non-halo) flat positions, 0.0 in halo / lane tail; tiled per
    # batch segment so the same mask re-zeroes every segment after each layer.
    yy, xx = jnp.meshgrid(jnp.arange(Hp), jnp.arange(Wp), indexing="ij")
    valid = (yy >= pad) & (yy < pad + H) & (xx >= pad) & (xx < pad + W)
    mask_seg = jnp.pad(valid.reshape(1, s_raw).astype(jnp.float32),
                       ((0, 0), (0, S - s_raw)))
    mask = jnp.tile(mask_seg, (1, Nb))                               # (1, Nb*S)

    inputs = [x_flat]
    in_specs = [pl.BlockSpec((C0, L), lambda n: (0, n))]
    for lyr in conv_layers:
        for name in ("w", "shift"):
            arr = lyr[name]
            inputs.append(arr)
            in_specs.append(pl.BlockSpec(arr.shape, lambda n: (0, 0)))
    for arr in (w_last, b_last, mask):
        inputs.append(arr)
        in_specs.append(pl.BlockSpec(arr.shape, lambda n: (0, 0)))

    kernel = functools.partial(_fused_matching_kernel,
                               n_conv=n_conv, K=K, Wp=Wp, L=L)

    out_flat = pl.pallas_call(
        kernel,
        out_shape=jax.ShapeDtypeStruct((c_last, N * S), jnp.float32),
        grid_spec=pltpu.PrefetchScalarGridSpec(
            num_scalar_prefetch=0,
            grid=(N // Nb,),
            in_specs=in_specs,
            out_specs=pl.BlockSpec((c_last, L), lambda n: (0, n)),
            scratch_shapes=[pltpu.VMEM((K * K * max_cin, L), jnp.float32)],
        ),
        compiler_params=pltpu.CompilerParams(
            dimension_semantics=("parallel",)),
    )(*inputs)

    # Un-flatten, drop lane tail and halo, restore NCHW (tiny output slab).
    out = out_flat.reshape(c_last, N, S)[:, :, :s_raw].reshape(c_last, N, Hp, Wp)
    out = out[:, :, pad:pad + H, pad:pad + W]
    return jnp.transpose(out, (1, 0, 2, 3))


def init_params(key, config=(16, 32, 16, 1), kernel_size=3, eps=1e-5):
    """Deterministic synthetic parameters mirroring the PyTorch module's shapes.

    Returns (kernel_params, ref_params): kernel_params are packed for the Pallas
    kernel (im2col layout, eval-mode BN scale folded into the weight rows);
    ref_params keep plain f32 OIHW weights for the pure-JAX reference.
    """
    K = kernel_size
    conv_k, conv_r = [], []
    for i in range(len(config) - 2):
        cin, cout = config[i], config[i + 1]
        key, kw = jax.random.split(key)
        # PyTorch conv weight is (Cout, Cin, K, K).
        w_oihw = 0.1 * jax.random.normal(kw, (cout, cin, K, K), jnp.float32)
        # Eval-mode BatchNorm fold: gamma=1, beta=0, mean=0, var=1.
        gamma = jnp.ones((cout,), jnp.float32)
        beta = jnp.zeros((cout,), jnp.float32)
        run_mean = jnp.zeros((cout,), jnp.float32)
        run_var = jnp.ones((cout,), jnp.float32)
        scale = gamma / jnp.sqrt(run_var + eps)
        shift = beta - run_mean * scale
        # im2col weight layout: [co, (ky*K + kx)*cin + ci] = w[co, ci, ky, kx];
        # BN scale folded into the rows so the kernel epilogue is add+ReLU only.
        w_taps = jnp.transpose(w_oihw, (0, 2, 3, 1)).reshape(cout, K * K * cin)
        w_taps = w_taps * scale[:, None]
        conv_k.append(dict(w=w_taps, shift=shift.reshape(cout, 1)))
        conv_r.append(dict(w=w_oihw, scale=scale, shift=shift))

    # Final Conv2d(config[-2], config[-1], kernel_size=1) with bias.
    cin, cout = config[-2], config[-1]
    key, kw, kb = jax.random.split(key, 3)
    w_oihw = 0.1 * jax.random.normal(kw, (cout, cin, 1, 1), jnp.float32)
    bias = 0.1 * jax.random.normal(kb, (cout,), jnp.float32)
    kernel_params = dict(conv=conv_k,
                         w_last=w_oihw.reshape(cout, cin),
                         b_last=bias.reshape(cout, 1))
    ref_params = dict(conv=conv_r, w_last=w_oihw, b_last=bias)
    return kernel_params, ref_params


def reference_forward(x_nchw, ref_params, *, kernel_size=3):
    """Pure-JAX (XLA) f32 reference of the same forward pass."""
    pad = kernel_size // 2
    h = x_nchw
    for lyr in ref_params["conv"]:
        h = jax.lax.conv_general_dilated(
            h, lyr["w"], (1, 1), [(pad, pad), (pad, pad)],
            dimension_numbers=("NCHW", "OIHW", "NCHW"),
            precision=jax.lax.Precision.HIGHEST)
        h = h * lyr["scale"].reshape(1, -1, 1, 1) + lyr["shift"].reshape(1, -1, 1, 1)
        h = jnp.maximum(h, 0.0)
    h = jax.lax.conv_general_dilated(
        h, ref_params["w_last"], (1, 1), [(0, 0), (0, 0)],
        dimension_numbers=("NCHW", "OIHW", "NCHW"),
        precision=jax.lax.Precision.HIGHEST)
    return h + ref_params["b_last"].reshape(1, -1, 1, 1)


if __name__ == "__main__":
    key = jax.random.PRNGKey(0)
    key, kx = jax.random.split(key)

    config = (16, 32, 16, 1)
    N, H, W = 8, 16, 16
    x = jax.random.normal(kx, (N, config[0], H, W), jnp.float32)   # NCHW

    params, ref_params = init_params(key, config=config, kernel_size=3)

    out = custom_2d_conv_matching(x, params, kernel_size=3)
    out = jax.block_until_ready(out)

    assert out.shape == (N, config[-1], H, W), out.shape
    assert jnp.isfinite(out).all()

    ref = reference_forward(x, ref_params, kernel_size=3)
    max_err = float(jnp.max(jnp.abs(out - ref)))
    assert max_err < 5e-2, max_err

    print("KERNEL_OK")
</pallas_src>

<mosaic_0001>
module attributes {stable_mosaic.version = 11 : i64} {
  func.func @_fused_matching_kernel(%arg0: i32, %arg1: memref<16x1536xf32, #tpu.memory_space<vmem>>, %arg2: memref<32x144xf32, #tpu.memory_space<vmem>>, %arg3: memref<32x1xf32, #tpu.memory_space<vmem>>, %arg4: memref<16x288xf32, #tpu.memory_space<vmem>>, %arg5: memref<16x1xf32, #tpu.memory_space<vmem>>, %arg6: memref<1x16xf32, #tpu.memory_space<vmem>>, %arg7: memref<1x1xf32, #tpu.memory_space<vmem>>, %arg8: memref<1x1536xf32, #tpu.memory_space<vmem>>, %arg9: memref<1x1536xf32, #tpu.memory_space<vmem>>, %arg10: memref<288x1536xf32, #tpu.memory_space<vmem>>) attributes {dimension_semantics = [#tpu.dimension_semantics<parallel>], iteration_bounds = array<i64: 2>, scalar_prefetch = 0 : i64, scratch_operands = 1 : i64, tpu.core_type = #tpu.core_type<tc>, window_params = [{transform_indices = @transform_0, window_bounds = array<i64: 16, 1536>}, {pipeline_mode = #tpu.pipeline_mode<synchronous>, transform_indices = @transform_1, window_bounds = array<i64: 32, 144>}, {pipeline_mode = #tpu.pipeline_mode<synchronous>, transform_indices = @transform_2, window_bounds = array<i64: 32, 1>}, {pipeline_mode = #tpu.pipeline_mode<synchronous>, transform_indices = @transform_3, window_bounds = array<i64: 16, 288>}, {pipeline_mode = #tpu.pipeline_mode<synchronous>, transform_indices = @transform_4, window_bounds = array<i64: 16, 1>}, {pipeline_mode = #tpu.pipeline_mode<synchronous>, transform_indices = @transform_5, window_bounds = array<i64: 1, 16>}, {pipeline_mode = #tpu.pipeline_mode<synchronous>, transform_indices = @transform_6, window_bounds = array<i64: 1, 1>}, {pipeline_mode = #tpu.pipeline_mode<synchronous>, transform_indices = @transform_7, window_bounds = array<i64: 1, 1536>}, {transform_indices = @transform_8, window_bounds = array<i64: 1, 1536>}]} {
    %c0 = arith.constant 0 : index
    %c0_0 = arith.constant 0 : index
    %0 = vector.load %arg8[%c0, %c0_0] : memref<1x1536xf32, #tpu.memory_space<vmem>>, vector<1x1536xf32>
    %c0_1 = arith.constant 0 : index
    %c0_2 = arith.constant 0 : index
    %1 = vector.load %arg1[%c0_1, %c0_2] : memref<16x1536xf32, #tpu.memory_space<vmem>>, vector<16x1536xf32>
    %c19_i32 = arith.constant 19 : i32
    %2 = tpu.dynamic_rotate %1 by %c19_i32 dim 1 : vector<16x1536xf32>, i32 -> vector<16x1536xf32>
    %c0_3 = arith.constant 0 : index
    %c0_4 = arith.constant 0 : index
    %3 = vector.load %arg10[%c0_3, %c0_4] : memref<288x1536xf32, #tpu.memory_space<vmem>>, vector<16x1536xf32>
    tpu.vector_store %arg10[%c0_3, %c0_4], %2 {strides = array<i32>} : memref<288x1536xf32, #tpu.memory_space<vmem>>, vector<16x1536xf32>,
    %c18_i32 = arith.constant 18 : i32
    %4 = tpu.dynamic_rotate %1 by %c18_i32 dim 1 : vector<16x1536xf32>, i32 -> vector<16x1536xf32>
    %c16 = arith.constant 16 : index
    %c0_5 = arith.constant 0 : index
    %5 = vector.load %arg10[%c16, %c0_5] : memref<288x1536xf32, #tpu.memory_space<vmem>>, vector<16x1536xf32>
    tpu.vector_store %arg10[%c16, %c0_5], %4 {strides = array<i32>} : memref<288x1536xf32, #tpu.memory_space<vmem>>, vector<16x1536xf32>,
    %c17_i32 = arith.constant 17 : i32
    %6 = tpu.dynamic_rotate %1 by %c17_i32 dim 1 : vector<16x1536xf32>, i32 -> vector<16x1536xf32>
    %c32 = arith.constant 32 : index
    %c0_6 = arith.constant 0 : index
    %7 = vector.load %arg10[%c32, %c0_6] : memref<288x1536xf32, #tpu.memory_space<vmem>>, vector<16x1536xf32>
    tpu.vector_store %arg10[%c32, %c0_6], %6 {strides = array<i32>} : memref<288x1536xf32, #tpu.memory_space<vmem>>, vector<16x1536xf32>,
    %c1_i32 = arith.constant 1 : i32
    %8 = tpu.dynamic_rotate %1 by %c1_i32 dim 1 : vector<16x1536xf32>, i32 -> vector<16x1536xf32>
    %c48 = arith.constant 48 : index
    %c0_7 = arith.constant 0 : index
    %9 = vector.load %arg10[%c48, %c0_7] : memref<288x1536xf32, #tpu.memory_space<vmem>>, vector<16x1536xf32>
    tpu.vector_store %arg10[%c48, %c0_7], %8 {strides = array<i32>} : memref<288x1536xf32, #tpu.memory_space<vmem>>, vector<16x1536xf32>,
    %c64 = arith.constant 64 : index
    %c0_8 = arith.constant 0 : index
    %10 = vector.load %arg10[%c64, %c0_8] : memref<288x1536xf32, #tpu.memory_space<vmem>>, vector<16x1536xf32>
    tpu.vector_store %arg10[%c64, %c0_8], %1 {strides = array<i32>} : memref<288x1536xf32, #tpu.memory_space<vmem>>, vector<16x1536xf32>,
    %c1535_i32 = arith.constant 1535 : i32
    %11 = tpu.dynamic_rotate %1 by %c1535_i32 dim 1 : vector<16x1536xf32>, i32 -> vector<16x1536xf32>
    %c80 = arith.constant 80 : index
    %c0_9 = arith.constant 0 : index
    %12 = vector.load %arg10[%c80, %c0_9] : memref<288x1536xf32, #tpu.memory_space<vmem>>, vector<16x1536xf32>
    tpu.vector_store %arg10[%c80, %c0_9], %11 {strides = array<i32>} : memref<288x1536xf32, #tpu.memory_space<vmem>>, vector<16x1536xf32>,
    %c1519_i32 = arith.constant 1519 : i32
    %13 = tpu.dynamic_rotate %1 by %c1519_i32 dim 1 : vector<16x1536xf32>, i32 -> vector<16x1536xf32>
    %c96 = arith.constant 96 : index
    %c0_10 = arith.constant 0 : index
    %14 = vector.load %arg10[%c96, %c0_10] : memref<288x1536xf32, #tpu.memory_space<vmem>>, vector<16x1536xf32>
    tpu.vector_store %arg10[%c96, %c0_10], %13 {strides = array<i32>} : memref<288x1536xf32, #tpu.memory_space<vmem>>, vector<16x1536xf32>,
    %c1518_i32 = arith.constant 1518 : i32
    %15 = tpu.dynamic_rotate %1 by %c1518_i32 dim 1 : vector<16x1536xf32>, i32 -> vector<16x1536xf32>
    %c112 = arith.constant 112 : index
    %c0_11 = arith.constant 0 : index
    %16 = vector.load %arg10[%c112, %c0_11] : memref<288x1536xf32, #tpu.memory_space<vmem>>, vector<16x1536xf32>
    tpu.vector_store %arg10[%c112, %c0_11], %15 {strides = array<i32>} : memref<288x1536xf32, #tpu.memory_space<vmem>>, vector<16x1536xf32>,
    %c1517_i32 = arith.constant 1517 : i32
    %17 = tpu.dynamic_rotate %1 by %c1517_i32 dim 1 : vector<16x1536xf32>, i32 -> vector<16x1536xf32>
    %c128 = arith.constant 128 : index
    %c0_12 = arith.constant 0 : index
    %18 = vector.load %arg10[%c128, %c0_12] : memref<288x1536xf32, #tpu.memory_space<vmem>>, vector<16x1536xf32>
    tpu.vector_store %arg10[%c128, %c0_12], %17 {strides = array<i32>} : memref<288x1536xf32, #tpu.memory_space<vmem>>, vector<16x1536xf32>,
    %c0_13 = arith.constant 0 : index
    %c0_14 = arith.constant 0 : index
    %19 = vector.load %arg10[%c0_13, %c0_14] : memref<288x1536xf32, #tpu.memory_space<vmem>>, vector<144x1536xf32>
    %c0_15 = arith.constant 0 : index
    %c0_16 = arith.constant 0 : index
    %20 = vector.load %arg2[%c0_15, %c0_16] : memref<32x144xf32, #tpu.memory_space<vmem>>, vector<32x144xf32>
    %cst = arith.constant dense<0.000000e+00> : vector<32x1536xf32>
    %21 = tpu.matmul %20, %19, %cst {dimension_numbers = #tpu.dot_dimension_numbers<[1], [0], [0], [1], [0, 0, 1, 1], [], []>} : vector<32x144xf32>, vector<144x1536xf32>, vector<32x1536xf32> -> vector<32x1536xf32>
    %c0_17 = arith.constant 0 : index
    %c0_18 = arith.constant 0 : index
    %22 = vector.load %arg3[%c0_17, %c0_18] : memref<32x1xf32, #tpu.memory_space<vmem>>, vector<32x1xf32>
    %23 = vector.broadcast %22 : vector<32x1xf32> to vector<32x1536xf32>
    %24 = arith.addf %21, %23 : vector<32x1536xf32>
    %cst_19 = arith.constant 0.000000e+00 : f32
    %25 = vector.broadcast %cst_19 : f32 to vector<32x1536xf32>
    %26 = arith.maximumf %24, %25 : vector<32x1536xf32>
    %27 = vector.broadcast %0 : vector<1x1536xf32> to vector<32x1536xf32>
    %28 = arith.mulf %26, %27 : vector<32x1536xf32>
    %c19_i32_20 = arith.constant 19 : i32
    %29 = tpu.dynamic_rotate %28 by %c19_i32_20 dim 1 : vector<32x1536xf32>, i32 -> vector<32x1536xf32>
    %c0_21 = arith.constant 0 : index
    %c0_22 = arith.constant 0 : index
    %30 = vector.load %arg10[%c0_21, %c0_22] : memref<288x1536xf32, #tpu.memory_space<vmem>>, vector<32x1536xf32>
    tpu.vector_store %arg10[%c0_21, %c0_22], %29 {strides = array<i32>} : memref<288x1536xf32, #tpu.memory_space<vmem>>, vector<32x1536xf32>,
    %c18_i32_23 = arith.constant 18 : i32
    %31 = tpu.dynamic_rotate %28 by %c18_i32_23 dim 1 : vector<32x1536xf32>, i32 -> vector<32x1536xf32>
    %c32_24 = arith.constant 32 : index
    %c0_25 = arith.constant 0 : index
    %32 = vector.load %arg10[%c32_24, %c0_25] : memref<288x1536xf32, #tpu.memory_space<vmem>>, vector<32x1536xf32>
    tpu.vector_store %arg10[%c32_24, %c0_25], %31 {strides = array<i32>} : memref<288x1536xf32, #tpu.memory_space<vmem>>, vector<32x1536xf32>,
    %c17_i32_26 = arith.constant 17 : i32
    %33 = tpu.dynamic_rotate %28 by %c17_i32_26 dim 1 : vector<32x1536xf32>, i32 -> vector<32x1536xf32>
    %c64_27 = arith.constant 64 : index
    %c0_28 = arith.constant 0 : index
    %34 = vector.load %arg10[%c64_27, %c0_28] : memref<288x1536xf32, #tpu.memory_space<vmem>>, vector<32x1536xf32>
    tpu.vector_store %arg10[%c64_27, %c0_28], %33 {strides = array<i32>} : memref<288x1536xf32, #tpu.memory_space<vmem>>, vector<32x1536xf32>,
    %c1_i32_29 = arith.constant 1 : i32
    %35 = tpu.dynamic_rotate %28 by %c1_i32_29 dim 1 : vector<32x1536xf32>, i32 -> vector<32x1536xf32>
    %c96_30 = arith.constant 96 : index
    %c0_31 = arith.constant 0 : index
    %36 = vector.load %arg10[%c96_30, %c0_31] : memref<288x1536xf32, #tpu.memory_space<vmem>>, vector<32x1536xf32>
    tpu.vector_store %arg10[%c96_30, %c0_31], %35 {strides = array<i32>} : memref<288x1536xf32, #tpu.memory_space<vmem>>, vector<32x1536xf32>,
    %c128_32 = arith.constant 128 : index
    %c0_33 = arith.constant 0 : index
    %37 = vector.load %arg10[%c128_32, %c0_33] : memref<288x1536xf32, #tpu.memory_space<vmem>>, vector<32x1536xf32>
    tpu.vector_store %arg10[%c128_32, %c0_33], %28 {strides = array<i32>} : memref<288x1536xf32, #tpu.memory_space<vmem>>, vector<32x1536xf32>,
    %c1535_i32_34 = arith.constant 1535 : i32
    %38 = tpu.dynamic_rotate %28 by %c1535_i32_34 dim 1 : vector<32x1536xf32>, i32 -> vector<32x1536xf32>
    %c160 = arith.constant 160 : index
    %c0_35 = arith.constant 0 : index
    %39 = vector.load %arg10[%c160, %c0_35] : memref<288x1536xf32, #tpu.memory_space<vmem>>, vector<32x1536xf32>
    tpu.vector_store %arg10[%c160, %c0_35], %38 {strides = array<i32>} : memref<288x1536xf32, #tpu.memory_space<vmem>>, vector<32x1536xf32>,
    %c1519_i32_36 = arith.constant 1519 : i32
    %40 = tpu.dynamic_rotate %28 by %c1519_i32_36 dim 1 : vector<32x1536xf32>, i32 -> vector<32x1536xf32>
    %c192 = arith.constant 192 : index
    %c0_37 = arith.constant 0 : index
    %41 = vector.load %arg10[%c192, %c0_37] : memref<288x1536xf32, #tpu.memory_space<vmem>>, vector<32x1536xf32>
    tpu.vector_store %arg10[%c192, %c0_37], %40 {strides = array<i32>} : memref<288x1536xf32, #tpu.memory_space<vmem>>, vector<32x1536xf32>,
    %c1518_i32_38 = arith.constant 1518 : i32
    %42 = tpu.dynamic_rotate %28 by %c1518_i32_38 dim 1 : vector<32x1536xf32>, i32 -> vector<32x1536xf32>
    %c224 = arith.constant 224 : index
    %c0_39 = arith.constant 0 : index
    %43 = vector.load %arg10[%c224, %c0_39] : memref<288x1536xf32, #tpu.memory_space<vmem>>, vector<32x1536xf32>
    tpu.vector_store %arg10[%c224, %c0_39], %42 {strides = array<i32>} : memref<288x1536xf32, #tpu.memory_space<vmem>>, vector<32x1536xf32>,
    %c1517_i32_40 = arith.constant 1517 : i32
    %44 = tpu.dynamic_rotate %28 by %c1517_i32_40 dim 1 : vector<32x1536xf32>, i32 -> vector<32x1536xf32>
    %c256 = arith.constant 256 : index
    %c0_41 = arith.constant 0 : index
    %45 = vector.load %arg10[%c256, %c0_41] : memref<288x1536xf32, #tpu.memory_space<vmem>>, vector<32x1536xf32>
    tpu.vector_store %arg10[%c256, %c0_41], %44 {strides = array<i32>} : memref<288x1536xf32, #tpu.memory_space<vmem>>, vector<32x1536xf32>,
    %c0_42 = arith.constant 0 : index
    %c0_43 = arith.constant 0 : index
    %46 = vector.load %arg10[%c0_42, %c0_43] : memref<288x1536xf32, #tpu.memory_space<vmem>>, vector<288x1536xf32>
    %c0_44 = arith.constant 0 : index
    %c0_45 = arith.constant 0 : index
    %47 = vector.load %arg4[%c0_44, %c0_45] : memref<16x288xf32, #tpu.memory_space<vmem>>, vector<16x288xf32>
    %cst_46 = arith.constant dense<0.000000e+00> : vector<16x1536xf32>
    %48 = tpu.matmul %47, %46, %cst_46 {dimension_numbers = #tpu.dot_dimension_numbers<[1], [0], [0], [1], [0, 0, 1, 1], [], []>} : vector<16x288xf32>, vector<288x1536xf32>, vector<16x1536xf32> -> vector<16x1536xf32>
    %c0_47 = arith.constant 0 : index
    %c0_48 = arith.constant 0 : index
    %49 = vector.load %arg5[%c0_47, %c0_48] : memref<16x1xf32, #tpu.memory_space<vmem>>, vector<16x1xf32>
    %50 = vector.broadcast %49 : vector<16x1xf32> to vector<16x1536xf32>
    %51 = arith.addf %48, %50 : vector<16x1536xf32>
    %cst_49 = arith.constant 0.000000e+00 : f32
    %52 = vector.broadcast %cst_49 : f32 to vector<16x1536xf32>
    %53 = arith.maximumf %51, %52 : vector<16x1536xf32>
    %54 = vector.broadcast %0 : vector<1x1536xf32> to vector<16x1536xf32>
    %55 = arith.mulf %53, %54 : vector<16x1536xf32>
    %c0_50 = arith.constant 0 : index
    %c0_51 = arith.constant 0 : index
    %56 = vector.load %arg6[%c0_50, %c0_51] : memref<1x16xf32, #tpu.memory_space<vmem>>, vector<1x16xf32>
    %cst_52 = arith.constant dense<0.000000e+00> : vector<1x1536xf32>
    %57 = tpu.matmul %56, %55, %cst_52 {dimension_numbers = #tpu.dot_dimension_numbers<[1], [0], [0], [1], [0, 0, 1, 1], [], []>} : vector<1x16xf32>, vector<16x1536xf32>, vector<1x1536xf32> -> vector<1x1536xf32>
    %c0_53 = arith.constant 0 : index
    %c0_54 = arith.constant 0 : index
    %58 = vector.load %arg7[%c0_53, %c0_54] : memref<1x1xf32, #tpu.memory_space<vmem>>, vector<1x1xf32>
    %59 = vector.broadcast %58 : vector<1x1xf32> to vector<1x1536xf32>
    %60 = arith.addf %57, %59 : vector<1x1536xf32>
    %c0_55 = arith.constant 0 : index
    %c0_56 = arith.constant 0 : index
    %61 = vector.load %arg9[%c0_55, %c0_56] : memref<1x1536xf32, #tpu.memory_space<vmem>>, vector<1x1536xf32>
    tpu.vector_store %arg9[%c0_55, %c0_56], %60 {strides = array<i32>} : memref<1x1536xf32, #tpu.memory_space<vmem>>, vector<1x1536xf32>,
    return
  }
  func.func @transform_0(%arg0: i32) -> (i32, i32) {
    %c0_i32 = arith.constant 0 : i32
    %c0_i32_0 = arith.constant 0 : i32
    return %c0_i32, %arg0 : i32, i32
  }
  func.func @transform_1(%arg0: i32) -> (i32, i32) {
    %c0_i32 = arith.constant 0 : i32
    %c0_i32_0 = arith.constant 0 : i32
    %c0_i32_1 = arith.constant 0 : i32
    return %c0_i32, %c0_i32_0 : i32, i32
  }
  func.func @transform_2(%arg0: i32) -> (i32, i32) {
    %c0_i32 = arith.constant 0 : i32
    %c0_i32_0 = arith.constant 0 : i32
    %c0_i32_1 = arith.constant 0 : i32
    return %c0_i32, %c0_i32_0 : i32, i32
  }
  func.func @transform_3(%arg0: i32) -> (i32, i32) {
    %c0_i32 = arith.constant 0 : i32
    %c0_i32_0 = arith.constant 0 : i32
    %c0_i32_1 = arith.constant 0 : i32
    return %c0_i32, %c0_i32_0 : i32, i32
  }
  func.func @transform_4(%arg0: i32) -> (i32, i32) {
    %c0_i32 = arith.constant 0 : i32
    %c0_i32_0 = arith.constant 0 : i32
    %c0_i32_1 = arith.constant 0 : i32
    return %c0_i32, %c0_i32_0 : i32, i32
  }
  func.func @transform_5(%arg0: i32) -> (i32, i32) {
    %c0_i32 = arith.constant 0 : i32
    %c0_i32_0 = arith.constant 0 : i32
    %c0_i32_1 = arith.constant 0 : i32
    return %c0_i32, %c0_i32_0 : i32, i32
  }
  func.func @transform_6(%arg0: i32) -> (i32, i32) {
    %c0_i32 = arith.constant 0 : i32
    %c0_i32_0 = arith.constant 0 : i32
    %c0_i32_1 = arith.constant 0 : i32
    return %c0_i32, %c0_i32_0 : i32, i32
  }
  func.func @transform_7(%arg0: i32) -> (i32, i32) {
    %c0_i32 = arith.constant 0 : i32
    %c0_i32_0 = arith.constant 0 : i32
    %c0_i32_1 = arith.constant 0 : i32
    return %c0_i32, %c0_i32_0 : i32, i32
  }
  func.func @transform_8(%arg0: i32) -> (i32, i32) {
    %c0_i32 = arith.constant 0 : i32
    %c0_i32_0 = arith.constant 0 : i32
    return %c0_i32, %arg0 : i32, i32
  }
}

</mosaic_0001>

<llo_original>
// kernel: custom_2d_conv_matching.1
$region0: #{custom_2d_conv_matching.1}
  #allocation0 [shape = 'u32[]', space=smem, size = 0x4, offset = 0x4, fixed_abs, tag = 'smem constant byte address 0x4 - core index']
  #allocation1 [shape = 'u32[144,128]{1,0:T(1,128)}', space=vmem, size = 0x12000, scoped, tag = 'internal scratch']
  #allocation2 [shape = 'f32[288,1536]{1,0:T(8,128)}', space=vmem, size = 0x1b0000, scoped, tag = 'scratch operand']
  #allocation3 [shape = 'f32[1,1]{1,0:T(1,128)S(1)}', space=vmem, size = 0x200, scoped, tag = 'scoped memory for custom_2d_conv_matching.1']
  %s0 = inlined_call_operand.vmem [shape: f32[16,3072], index: 0, kind: input, shape index: {}]
  %s1 = inlined_call_operand.vmem [shape: f32[32,144], index: 1, kind: input, shape index: {}]
  %s2 = inlined_call_operand.vmem [shape: f32[32,1], index: 2, kind: input, shape index: {}]
  %s3 = inlined_call_operand.vmem [shape: f32[16,288], index: 3, kind: input, shape index: {}]
  %s4 = inlined_call_operand.vmem [shape: f32[16,1], index: 4, kind: input, shape index: {}]
  %s5 = inlined_call_operand.vmem [shape: f32[1,16], index: 5, kind: input, shape index: {}]
  %s6 = inlined_call_operand.<no memory space> [shape: f32[1,1], index: 6, kind: input, shape index: {}]
  %s7 = inlined_call_operand.vmem [shape: f32[1,1536], index: 7, kind: input, shape index: {}]
  %s8 = inlined_call_operand.vmem [shape: f32[1,3072], index: 8, kind: output, shape index: {}]
  %s9 = sld [smem:[#allocation0]]
  $region88: #{custom_2d_conv_matching.1} parent=0
    _
  %s11 = ssub.s32 1, %s9
  %s12 = scalar_select 0, %s11, %s9
  %v13 = vstv %s6
  %14 = vst [vmem:[#allocation3] sm:$0x1] %v13
  $region1: #{custom_2d_conv_matching.1} parent=0
    #allocation4 [shape = 'u8[196608]{0}', space=vmem, size = 0x30000, scoped, tag = 'input window, operand 0']
    loop: start=0, step=1, limit=4
    $region2: #{custom_2d_conv_matching.1} parent=1 // loop_pre_header
      _
    $region3: #{custom_2d_conv_matching.1} parent=1 // loop_header
      %s16 = sphi 0, %s20
      %p17 = scmp.ge.s32.totalorder %s16, 4
      %s26 = sphi 0, %s28
      %s29 = sphi 0, %s26
      %s30 = sphi 0, %s29
      %s46 = sphi 0, %s30
      %s50 = sphi 0, %s50
      %s52 = sphi 0, %s50
      %s53 = sphi 0, %s52
      %s67 = sphi 0, %s53
      %s71 = sphi 0, %s71
      %s73 = sphi 0, %s71
      %s74 = sphi 0, %s73
      %s88 = sphi 0, %s74
      %s92 = sphi 0, %s92
      %s94 = sphi 0, %s92
      %s95 = sphi 0, %s94
      %s109 = sphi 0, %s95
      %s113 = sphi 0, %s113
      %s115 = sphi 0, %s113
      %s116 = sphi 0, %s115
      %s130 = sphi 0, %s116
      %s134 = sphi 0, %s134
      %s136 = sphi 0, %s134
      %s137 = sphi 0, %s136
      %s151 = sphi 0, %s137
      %s155 = sphi 0, %s155
      %s157 = sphi 0, %s155
      %s158 = sphi 0, %s157
      %s172 = sphi 0, %s158
      %s176 = sphi 0, %s176
      %s178 = sphi 0, %s176
      %s179 = sphi 0, %s178
      %s193 = sphi 0, %s179
      %s199 = sphi 0, %s201
      %s202 = sphi 0, %s199
      %s203 = sphi 0, %s202
      %s219 = sphi 0, %s203
    $region4: #{custom_2d_conv_matching.1} parent=1 // loop_header_branch
      %19 = sbr.rel (%p17) target = $region8
    $region5: #{custom_2d_conv_matching.1} parent=1 // loop_body
      %s21 = ssub.s32 %s16, 1
      %s22 = ssub.s32 %s16, 2
      %s23 = sadd.s32 %s16, 1
      %s24 = ssub.s32 %s16, %s23
      %p25 = scmp.eq.s32.totalorder %s24, 0
      %s27 = sadd.s32 %s26, 1
      %s28 = scalar_select %p25, %s26, %s27
      %p31 = pneg %p25
      %p32 = scmp.eq.s32.totalorder %s16, 1
      %p33 = por %p31, %p32
      %p34 = scmp.ne.s32.totalorder %s26, %s29
      %p35 = scmp.eq.s32.totalorder %s16, 0
      %p36 = por %p34, %p35
      %p37 = scmp.ne.s32.totalorder %s26, %s29
      %p38 = scmp.eq.s32.totalorder %s21, 1
      %p39 = por %p37, %p38
      %p40 = scmp.ne.s32.totalorder %s29, %s30
      %p41 = scmp.eq.s32.totalorder %s21, 0
      %p42 = por %p40, %p41
      %p43 = scmp.ne.s32.totalorder %s29, %s30
      %p44 = scmp.eq.s32.totalorder %s22, 1
      %p45 = por %p43, %p44
      %p47 = scmp.ne.s32.totalorder %s30, %s46
      %p48 = scmp.eq.s32.totalorder %s22, 0
      %p49 = por %p47, %p48
      %s51 = sadd.s32 %s50, 1
      %p54 = scmp.eq.s32.totalorder %s16, 1
      %p55 = scmp.ne.s32.totalorder %s50, %s52
      %p56 = scmp.eq.s32.totalorder %s16, 0
      %p57 = por %p55, %p56
      %p58 = scmp.ne.s32.totalorder %s50, %s52
      %p59 = scmp.eq.s32.totalorder %s21, 1
      %p60 = por %p58, %p59
      %p61 = scmp.ne.s32.totalorder %s52, %s53
      %p62 = scmp.eq.s32.totalorder %s21, 0
      %p63 = por %p61, %p62
      %p64 = scmp.ne.s32.totalorder %s52, %s53
      %p65 = scmp.eq.s32.totalorder %s22, 1
      %p66 = por %p64, %p65
      %p68 = scmp.ne.s32.totalorder %s53, %s67
      %p69 = scmp.eq.s32.totalorder %s22, 0
      %p70 = por %p68, %p69
      %s72 = sadd.s32 %s71, 1
      %p75 = scmp.eq.s32.totalorder %s16, 1
      %p76 = scmp.ne.s32.totalorder %s71, %s73
      %p77 = scmp.eq.s32.totalorder %s16, 0
      %p78 = por %p76, %p77
      %p79 = scmp.ne.s32.totalorder %s71, %s73
      %p80 = scmp.eq.s32.totalorder %s21, 1
      %p81 = por %p79, %p80
      %p82 = scmp.ne.s32.totalorder %s73, %s74
      %p83 = scmp.eq.s32.totalorder %s21, 0
      %p84 = por %p82, %p83
      %p85 = scmp.ne.s32.totalorder %s73, %s74
      %p86 = scmp.eq.s32.totalorder %s22, 1
      %p87 = por %p85, %p86
      %p89 = scmp.ne.s32.totalorder %s74, %s88
      %p90 = scmp.eq.s32.totalorder %s22, 0
      %p91 = por %p89, %p90
      %s93 = sadd.s32 %s92, 1
      %p96 = scmp.eq.s32.totalorder %s16, 1
      %p97 = scmp.ne.s32.totalorder %s92, %s94
      %p98 = scmp.eq.s32.totalorder %s16, 0
      %p99 = por %p97, %p98
      %p100 = scmp.ne.s32.totalorder %s92, %s94
      %p101 = scmp.eq.s32.totalorder %s21, 1
      %p102 = por %p100, %p101
      %p103 = scmp.ne.s32.totalorder %s94, %s95
      %p104 = scmp.eq.s32.totalorder %s21, 0
      %p105 = por %p103, %p104
      %p106 = scmp.ne.s32.totalorder %s94, %s95
      %p107 = scmp.eq.s32.totalorder %s22, 1
      %p108 = por %p106, %p107
      %p110 = scmp.ne.s32.totalorder %s95, %s109
      %p111 = scmp.eq.s32.totalorder %s22, 0
      %p112 = por %p110, %p111
      %s114 = sadd.s32 %s113, 1
      %p117 = scmp.eq.s32.totalorder %s16, 1
      %p118 = scmp.ne.s32.totalorder %s113, %s115
      %p119 = scmp.eq.s32.totalorder %s16, 0
      %p120 = por %p118, %p119
      %p121 = scmp.ne.s32.totalorder %s113, %s115
      %p122 = scmp.eq.s32.totalorder %s21, 1
      %p123 = por %p121, %p122
      %p124 = scmp.ne.s32.totalorder %s115, %s116
      %p125 = scmp.eq.s32.totalorder %s21, 0
      %p126 = por %p124, %p125
      %p127 = scmp.ne.s32.totalorder %s115, %s116
      %p128 = scmp.eq.s32.totalorder %s22, 1
      %p129 = por %p127, %p128
      %p131 = scmp.ne.s32.totalorder %s116, %s130
      %p132 = scmp.eq.s32.totalorder %s22, 0
      %p133 = por %p131, %p132
      %s135 = sadd.s32 %s134, 1
      %p138 = scmp.eq.s32.totalorder %s16, 1
      %p139 = scmp.ne.s32.totalorder %s134, %s136
      %p140 = scmp.eq.s32.totalorder %s16, 0
      %p141 = por %p139, %p140
      %p142 = scmp.ne.s32.totalorder %s134, %s136
      %p143 = scmp.eq.s32.totalorder %s21, 1
      %p144 = por %p142, %p143
      %p145 = scmp.ne.s32.totalorder %s136, %s137
      %p146 = scmp.eq.s32.totalorder %s21, 0
      %p147 = por %p145, %p146
      %p148 = scmp.ne.s32.totalorder %s136, %s137
      %p149 = scmp.eq.s32.totalorder %s22, 1
      %p150 = por %p148, %p149
      %p152 = scmp.ne.s32.totalorder %s137, %s151
      %p153 = scmp.eq.s32.totalorder %s22, 0
      %p154 = por %p152, %p153
      %s156 = sadd.s32 %s155, 1
      %p159 = scmp.eq.s32.totalorder %s16, 1
      %p160 = scmp.ne.s32.totalorder %s155, %s157
      %p161 = scmp.eq.s32.totalorder %s16, 0
      %p162 = por %p160, %p161
      %p163 = scmp.ne.s32.totalorder %s155, %s157
      %p164 = scmp.eq.s32.totalorder %s21, 1
      %p165 = por %p163, %p164
      %p166 = scmp.ne.s32.totalorder %s157, %s158
      %p167 = scmp.eq.s32.totalorder %s21, 0
      %p168 = por %p166, %p167
      %p169 = scmp.ne.s32.totalorder %s157, %s158
      %p170 = scmp.eq.s32.totalorder %s22, 1
      %p171 = por %p169, %p170
      %p173 = scmp.ne.s32.totalorder %s158, %s172
      %p174 = scmp.eq.s32.totalorder %s22, 0
      %p175 = por %p173, %p174
      %s177 = sadd.s32 %s176, 1
      %p180 = scmp.eq.s32.totalorder %s16, 1
      %p181 = scmp.ne.s32.totalorder %s176, %s178
      %p182 = scmp.eq.s32.totalorder %s16, 0
      %p183 = por %p181, %p182
      %p184 = scmp.ne.s32.totalorder %s176, %s178
      %p185 = scmp.eq.s32.totalorder %s21, 1
      %p186 = por %p184, %p185
      %p187 = scmp.ne.s32.totalorder %s178, %s179
      %p188 = scmp.eq.s32.totalorder %s21, 0
      %p189 = por %p187, %p188
      %p190 = scmp.ne.s32.totalorder %s178, %s179
      %p191 = scmp.eq.s32.totalorder %s22, 1
      %p192 = por %p190, %p191
      %p194 = scmp.ne.s32.totalorder %s179, %s193
      %p195 = scmp.eq.s32.totalorder %s22, 0
      %p196 = por %p194, %p195
      %s197 = ssub.s32 %s16, %s23
      %p198 = scmp.eq.s32.totalorder %s197, 0
      %s200 = sadd.s32 %s199, 1
      %s201 = scalar_select %p198, %s199, %s200
      %p204 = pneg %p198
      %p205 = scmp.eq.s32.totalorder %s16, 1
      %p206 = por %p204, %p205
      %p207 = scmp.ne.s32.totalorder %s199, %s202
      %p208 = scmp.eq.s32.totalorder %s16, 0
      %p209 = por %p207, %p208
      %p210 = scmp.ne.s32.totalorder %s199, %s202
      %p211 = scmp.eq.s32.totalorder %s21, 1
      %p212 = por %p210, %p211
      %p213 = scmp.ne.s32.totalorder %s202, %s203
      %p214 = scmp.eq.s32.totalorder %s21, 0
      %p215 = por %p213, %p214
      %p216 = scmp.ne.s32.totalorder %s202, %s203
      %p217 = scmp.eq.s32.totalorder %s22, 1
      %p218 = por %p216, %p217
      %p220 = scmp.ne.s32.totalorder %s203, %s219
      %p221 = scmp.eq.s32.totalorder %s22, 0
      %p222 = por %p220, %p221
      %p223 = scmp.le.s32.totalorder 1, %s16
      %p224 = scmp.lt.s32.totalorder %s16, 3
      %p225 = pnand %p223, %p224
      %p226 = pneg %p225
      // Predicated region
      $region9: #{custom_2d_conv_matching.1} parent=5 // pred_check
        _
      $region10: #{custom_2d_conv_matching.1} parent=5 // pred_check_branch
        %228 = sbr.rel (%p225) target = $region12
      $region11: #{custom_2d_conv_matching.1} parent=5 // pred_region
        %s229 = ssub.s32 %s16, 1
        // Predicated region
        $region13: #{custom_2d_conv_matching.1} parent=11 // pred_check
          %p230 = pneg %p63
        $region14: #{custom_2d_conv_matching.1} parent=11 // pred_check_branch
          %232 = sbr.rel (%p230) target = $region16
        $region15: #{custom_2d_conv_matching.1} parent=11 // pred_region
          _
        $region16: #{custom_2d_conv_matching.1} parent=11 // pred_fallthru
          _
        // Predicated region
        $region17: #{custom_2d_conv_matching.1} parent=11 // pred_check
          %p233 = pneg %p84
        $region18: #{custom_2d_conv_matching.1} parent=11 // pred_check_branch
          %235 = sbr.rel (%p233) target = $region20
        $region19: #{custom_2d_conv_matching.1} parent=11 // pred_region
          _
        $region20: #{custom_2d_conv_matching.1} parent=11 // pred_fallthru
          _
        // Predicated region
        $region21: #{custom_2d_conv_matching.1} parent=11 // pred_check
          %p236 = pneg %p105
        $region22: #{custom_2d_conv_matching.1} parent=11 // pred_check_branch
          %238 = sbr.rel (%p236) target = $region24
        $region23: #{custom_2d_conv_matching.1} parent=11 // pred_region
          _
        $region24: #{custom_2d_conv_matching.1} parent=11 // pred_fallthru
          _
        // Predicated region
        $region25: #{custom_2d_conv_matching.1} parent=11 // pred_check
          %p239 = pneg %p126
        $region26: #{custom_2d_conv_matching.1} parent=11 // pred_check_branch
          %241 = sbr.rel (%p239) target = $region28
        $region27: #{custom_2d_conv_matching.1} parent=11 // pred_region
          _
        $region28: #{custom_2d_conv_matching.1} parent=11 // pred_fallthru
          _
        // Predicated region
        $region29: #{custom_2d_conv_matching.1} parent=11 // pred_check
          %p242 = pneg %p147
        $region30: #{custom_2d_conv_matching.1} parent=11 // pred_check_branch
          %244 = sbr.rel (%p242) target = $region32
        $region31: #{custom_2d_conv_matching.1} parent=11 // pred_region
          _
        $region32: #{custom_2d_conv_matching.1} parent=11 // pred_fallthru
          _
        // Predicated region
        $region33: #{custom_2d_conv_matching.1} parent=11 // pred_check
          %p245 = pneg %p168
        $region34: #{custom_2d_conv_matching.1} parent=11 // pred_check_branch
          %247 = sbr.rel (%p245) target = $region36
        $region35: #{custom_2d_conv_matching.1} parent=11 // pred_region
          _
        $region36: #{custom_2d_conv_matching.1} parent=11 // pred_fallthru
          _
        // Predicated region
        $region37: #{custom_2d_conv_matching.1} parent=11 // pred_check
          %p248 = pneg %p189
        $region38: #{custom_2d_conv_matching.1} parent=11 // pred_check_branch
          %250 = sbr.rel (%p248) target = $region40
        $region39: #{custom_2d_conv_matching.1} parent=11 // pred_region
          _
        $region40: #{custom_2d_conv_matching.1} parent=11 // pred_fallthru
          _
      $region12: #{custom_2d_conv_matching.1} parent=5 // pred_fallthru
        _
      %p251 = scmp.lt.s32.totalorder %s16, 2
      // Predicated region
      $region41: #{custom_2d_conv_matching.1} parent=5 // pred_check
        %p252 = pneg %p251
      $region42: #{custom_2d_conv_matching.1} parent=5 // pred_check_branch
        %254 = sbr.rel (%p252) target = $region44
      $region43: #{custom_2d_conv_matching.1} parent=5 // pred_region
        // Predicated region
        $region45: #{custom_2d_conv_matching.1} parent=43 // pred_check
          %p255 = pneg %p36
        $region46: #{custom_2d_conv_matching.1} parent=43 // pred_check_branch
          %257 = sbr.rel (%p255) target = $region48
        $region47: #{custom_2d_conv_matching.1} parent=43 // pred_region
          %s258 = sand.u32 %s26, 1
          %s259 = sand.u32 %s26, 1
          %s260 = smul.addr %s259, 192
          %s261 = scalar_lea.vmem [#allocation4], %s260
          %s262 = smul.u32 12, %s16
          %s263 = smul.addr %s262, 8
          %s264 = scalar_lea.vmem %s0, %s263
          // Predicated region
          $region49: #{custom_2d_conv_matching.1} parent=47 // pred_check
            _
          $region50: #{custom_2d_conv_matching.1} parent=47 // pred_check_branch
            %266 = sbr.rel (0) target = $region52
          $region51: #{custom_2d_conv_matching.1} parent=47 // pred_region
            // Predicated region
            $region53: #{custom_2d_conv_matching.1} parent=51 // pred_check
              _
            $region54: #{custom_2d_conv_matching.1} parent=51 // pred_check_branch
              %268 = sbr.rel (0) target = $region56
            $region55: #{custom_2d_conv_matching.1} parent=51 // pred_region
              loop: start=0, step=1, limit=1
              $region57: #{custom_2d_conv_matching.1} parent=55 // loop_pre_header
                _
              $region58: #{custom_2d_conv_matching.1} parent=55 // loop_header
                %s270 = sphi 0, %s274
                %p271 = scmp.ge.s32.totalorder %s270, 1
                %s275 = sphi %s264, %s264
                %s276 = sphi %s261, %s261
              $region59: #{custom_2d_conv_matching.1} parent=55 // loop_header_branch
                %273 = sbr.rel (%p271) target = $region63
              $region60: #{custom_2d_conv_matching.1} parent=55 // loop_body
                %v277 = vld [vmem:[%s275] sm:$0xff]
                %278 = vst [vmem:[%s276] sm:$0xff] %v277
                %v279 = vld [vmem:[%s275 + $0x8] sm:$0xff]
                %280 = vst [vmem:[%s276 + $0x8] sm:$0xff] %v279
                %v281 = vld [vmem:[%s275 + $0x10] sm:$0xff]
                %282 = vst [vmem:[%s276 + $0x10] sm:$0xff] %v281
                %v283 = vld [vmem:[%s275 + $0x18] sm:$0xff]
                %284 = vst [vmem:[%s276 + $0x18] sm:$0xff] %v283
                %v285 = vld [vmem:[%s275 + $0x20] sm:$0xff]
                %286 = vst [vmem:[%s276 + $0x20] sm:$0xff] %v285
                %v287 = vld [vmem:[%s275 + $0x28] sm:$0xff]
                %288 = vst [vmem:[%s276 + $0x28] sm:$0xff] %v287
                %v289 = vld [vmem:[%s275 + $0x30] sm:$0xff]
                %290 = vst [vmem:[%s276 + $0x30] sm:$0xff] %v289
                %v291 = vld [vmem:[%s275 + $0x38] sm:$0xff]
                %292 = vst [vmem:[%s276 + $0x38] sm:$0xff] %v291
                %v293 = vld [vmem:[%s275 + $0x40] sm:$0xff]
                %294 = vst [vmem:[%s276 + $0x40] sm:$0xff] %v293
                %v295 = vld [vmem:[%s275 + $0x48] sm:$0xff]
                %296 = vst [vmem:[%s276 + $0x48] sm:$0xff] %v295
                %v297 = vld [vmem:[%s275 + $0x50] sm:$0xff]
                %298 = vst [vmem:[%s276 + $0x50] sm:$0xff] %v297
                %v299 = vld [vmem:[%s275 + $0x58] sm:$0xff]
                %300 = vst [vmem:[%s276 + $0x58] sm:$0xff] %v299
                %v301 = vld [vmem:[%s275 + $0xc0] sm:$0xff]
                %302 = vst [vmem:[%s276 + $0x60] sm:$0xff] %v301
                %v303 = vld [vmem:[%s275 + $0xc8] sm:$0xff]
                %304 = vst [vmem:[%s276 + $0x68] sm:$0xff] %v303
                %v305 = vld [vmem:[%s275 + $0xd0] sm:$0xff]
                %306 = vst [vmem:[%s276 + $0x70] sm:$0xff] %v305
                %v307 = vld [vmem:[%s275 + $0xd8] sm:$0xff]
                %308 = vst [vmem:[%s276 + $0x78] sm:$0xff] %v307
                %v309 = vld [vmem:[%s275 + $0xe0] sm:$0xff]
                %310 = vst [vmem:[%s276 + $0x80] sm:$0xff] %v309
                %v311 = vld [vmem:[%s275 + $0xe8] sm:$0xff]
                %312 = vst [vmem:[%s276 + $0x88] sm:$0xff] %v311
                %v313 = vld [vmem:[%s275 + $0xf0] sm:$0xff]
                %314 = vst [vmem:[%s276 + $0x90] sm:$0xff] %v313
                %v315 = vld [vmem:[%s275 + $0xf8] sm:$0xff]
                %316 = vst [vmem:[%s276 + $0x98] sm:$0xff] %v315
                %v317 = vld [vmem:[%s275 + $0x100] sm:$0xff]
                %318 = vst [vmem:[%s276 + $0xa0] sm:$0xff] %v317
                %v319 = vld [vmem:[%s275 + $0x108] sm:$0xff]
                %320 = vst [vmem:[%s276 + $0xa8] sm:$0xff] %v319
                %v321 = vld [vmem:[%s275 + $0x110] sm:$0xff]
                %322 = vst [vmem:[%s276 + $0xb0] sm:$0xff] %v321
                %v323 = vld [vmem:[%s275 + $0x118] sm:$0xff]
                %324 = vst [vmem:[%s276 + $0xb8] sm:$0xff] %v323
              $region61: #{custom_2d_conv_matching.1} parent=55 // loop_footer
                %s274 = sadd.s32 1, %s270
              $region62: #{custom_2d_conv_matching.1} parent=55 // loop_footer_branch
                %269 = sbr.rel target = $region58
              $region63: #{custom_2d_conv_matching.1} parent=55 // loop_exit
                _
            $region56: #{custom_2d_conv_matching.1} parent=51 // pred_fallthru
              _
            // Predicated region
            $region64: #{custom_2d_conv_matching.1} parent=51 // pred_check
              _
            $region65: #{custom_2d_conv_matching.1} parent=51 // pred_check_branch
              %326 = sbr.rel target = $region67
            $region66: #{custom_2d_conv_matching.1} parent=51 // pred_region
              _
            $region67: #{custom_2d_conv_matching.1} parent=51 // pred_fallthru
              _
          $region52: #{custom_2d_conv_matching.1} parent=47 // pred_fallthru
            _
          %327 = vnop
        $region48: #{custom_2d_conv_matching.1} parent=43 // pred_fallthru
          _
      $region44: #{custom_2d_conv_matching.1} parent=5 // pred_fallthru
        _
      %p328 = scmp.le.s32.totalorder 1, %s16
      %p329 = scmp.lt.s32.totalorder %s16, 3
      %p330 = pnand %p328, %p329
      %p331 = pneg %p330
      // Predicated region
      $region68: #{custom_2d_conv_matching.1} parent=5 // pred_check
        _
      $region69: #{custom_2d_conv_matching.1} parent=5 // pred_check_branch
        %333 = sbr.rel (%p330) target = $region71
      $region70: #{custom_2d_conv_matching.1} parent=5 // pred_region
        %s334 = ssub.s32 %s16, 1
        %s335 = sand.u32 %s29, 1
        %s336 = sand.u32 %s29, 1
        %s337 = smul.addr %s336, 192
        %s338 = scalar_lea.vmem [#allocation4], %s337
        // Predicated region
        $region72: #{custom_2d_conv_matching.1} parent=70 // pred_check
          %p339 = pneg %p42
        $region73: #{custom_2d_conv_matching.1} parent=70 // pred_check_branch
          %341 = sbr.rel (%p339) target = $region75
        $region74: #{custom_2d_conv_matching.1} parent=70 // pred_region
          _
        $region75: #{custom_2d_conv_matching.1} parent=70 // pred_fallthru
          _
        %s342 = sand.u32 %s29, 1
        %s343 = sand.u32 %s29, 1
        %s344 = smul.addr %s343, 192
        %s345 = scalar_lea.vmem [#allocation4], %s344
        %p346 = pneg %p42
        %p347 = pneg %p39
        %p348 = pneg %p63
        %p349 = pneg %p60
        %p350 = pneg %p84
        %p351 = pneg %p81
        %p352 = pneg %p105
        %p353 = pneg %p102
        %p354 = pneg %p126
        %p355 = pneg %p123
        %p356 = pneg %p147
        %p357 = pneg %p144
        %p358 = pneg %p168
        %p359 = pneg %p165
        %p360 = pneg %p189
        %p361 = pneg %p186
        %p362 = pneg %p215
        %p363 = pneg %p212
        %s364 = smul.u32 12, %s21
        %p365 = scmp.lt.s32.totalorder %s364, 23
        %s366 = scalar_select %p365, %s364, 23
        %s367 = scalar_lea.vmem %s8, %s366
        %s368 = smul.u32 12, %s21
        %s369 = smul.u32 12, %s21
        %p370 = scmp.lt.s32.totalorder %s369, 23
        %s371 = scalar_select %p370, %s369, 23
        %s372 = scalar_lea.vmem %s8, %s371
        %s373 = smul.u32 12, %s21
        %v374 = vld [vmem:[%s7] sm:$0xff]
        %v375 = vld [vmem:[%s7 + $0x8] sm:$0xf]
        %v376 = vld [vmem:[%s338] sm:$0xff]
        %v377 = vld [vmem:[%s338 + $0x8] sm:$0xff]
        %v378 = vld [vmem:[%s338 + $0x10] sm:$0xff]
        %v379 = vld [vmem:[%s338 + $0x18] sm:$0xff]
        %v380 = vld [vmem:[%s338 + $0x20] sm:$0xff]
        %v381 = vld [vmem:[%s338 + $0x28] sm:$0xff]
        %v382 = vld [vmem:[%s338 + $0x30] sm:$0xff]
        %v383 = vld [vmem:[%s338 + $0x38] sm:$0xff]
        %v384 = vld [vmem:[%s338 + $0x40] sm:$0xff]
        %v385 = vld [vmem:[%s338 + $0x48] sm:$0xff]
        %v386 = vld [vmem:[%s338 + $0x50] sm:$0xff]
        %v387 = vld [vmem:[%s338 + $0x58] sm:$0xff]
        %v388 = vld [vmem:[%s338 + $0x60] sm:$0xff]
        %v389 = vld [vmem:[%s338 + $0x68] sm:$0xff]
        %v390 = vld [vmem:[%s338 + $0x70] sm:$0xff]
        %v391 = vld [vmem:[%s338 + $0x78] sm:$0xff]
        %v392 = vld [vmem:[%s338 + $0x80] sm:$0xff]
        %v393 = vld [vmem:[%s338 + $0x88] sm:$0xff]
        %v394 = vld [vmem:[%s338 + $0x90] sm:$0xff]
        %v395 = vld [vmem:[%s338 + $0x98] sm:$0xff]
        %v396 = vld [vmem:[%s338 + $0xa0] sm:$0xff]
        %v397 = vld [vmem:[%s338 + $0xa8] sm:$0xff]
        %v398 = vld [vmem:[%s338 + $0xb0] sm:$0xff]
        %v399 = vld [vmem:[%s338 + $0xb8] sm:$0xff]
        %400 = vrot.lane.b32.xlu0 %v376, 19
        %v401 = vpop.permute.xlu0 %400
        %402 = vrot.lane.b32.xlu0 %v388, 19
        %v403 = vpop.permute.xlu0 %402
        %404 = vrot.lane.b32.xlu0 %v377, 19
        %v405 = vpop.permute.xlu0 %404
        %406 = vrot.lane.b32.xlu0 %v389, 19
        %v407 = vpop.permute.xlu0 %406
        %408 = vrot.lane.b32.xlu0 %v378, 19
        %v409 = vpop.permute.xlu0 %408
        %410 = vrot.lane.b32.xlu0 %v390, 19
        %v411 = vpop.permute.xlu0 %410
        %412 = vrot.lane.b32.xlu0 %v379, 19
        %v413 = vpop.permute.xlu0 %412
        %414 = vrot.lane.b32.xlu0 %v391, 19
        %v415 = vpop.permute.xlu0 %414
        %416 = vrot.lane.b32.xlu0 %v380, 19
        %v417 = vpop.permute.xlu0 %416
        %418 = vrot.lane.b32.xlu0 %v392, 19
        %v419 = vpop.permute.xlu0 %418
        %420 = vrot.lane.b32.xlu0 %v381, 19
        %v421 = vpop.permute.xlu0 %420
        %422 = vrot.lane.b32.xlu0 %v393, 19
        %v423 = vpop.permute.xlu0 %422
        %424 = vrot.lane.b32.xlu0 %v382, 19
        %v425 = vpop.permute.xlu0 %424
        %426 = vrot.lane.b32.xlu0 %v394, 19
        %v427 = vpop.permute.xlu0 %426
        %428 = vrot.lane.b32.xlu0 %v383, 19
        %v429 = vpop.permute.xlu0 %428
        %430 = vrot.lane.b32.xlu0 %v395, 19
        %v431 = vpop.permute.xlu0 %430
        %432 = vrot.lane.b32.xlu0 %v384, 19
        %v433 = vpop.permute.xlu0 %432
        %434 = vrot.lane.b32.xlu0 %v396, 19
        %v435 = vpop.permute.xlu0 %434
        %436 = vrot.lane.b32.xlu0 %v385, 19
        %v437 = vpop.permute.xlu0 %436
        %438 = vrot.lane.b32.xlu0 %v397, 19
        %v439 = vpop.permute.xlu0 %438
        %440 = vrot.lane.b32.xlu0 %v386, 19
        %v441 = vpop.permute.xlu0 %440
        %442 = vrot.lane.b32.xlu0 %v398, 19
        %v443 = vpop.permute.xlu0 %442
        %444 = vrot.lane.b32.xlu0 %v387, 19
        %v445 = vpop.permute.xlu0 %444
        %446 = vrot.lane.b32.xlu0 %v399, 19
        %v447 = vpop.permute.xlu0 %446
        %v448 = vlaneseq
        %v449 = vand.u32 %v448, 127
        %vm450 = vcmp.lt.s32.totalorder %v449, 19
        %v451 = vsel %vm450, %v441, %v445
        %v452 = vsel %vm450, %v443, %v447
        %v453 = vsel %vm450, %v437, %v441
        %v454 = vsel %vm450, %v439, %v443
        %v455 = vsel %vm450, %v433, %v437
        %v456 = vsel %vm450, %v435, %v439
        %v457 = vsel %vm450, %v429, %v433
        %v458 = vsel %vm450, %v431, %v435
        %v459 = vsel %vm450, %v425, %v429
        %v460 = vsel %vm450, %v427, %v431
        %v461 = vsel %vm450, %v421, %v425
        %v462 = vsel %vm450, %v423, %v427
        %v463 = vsel %vm450, %v417, %v421
        %v464 = vsel %vm450, %v419, %v423
        %v465 = vsel %vm450, %v413, %v417
        %v466 = vsel %vm450, %v415, %v419
        %v467 = vsel %vm450, %v409, %v413
        %v468 = vsel %vm450, %v411, %v415
        %v469 = vsel %vm450, %v405, %v409
        %v470 = vsel %vm450, %v407, %v411
        %v471 = vsel %vm450, %v401, %v405
        %v472 = vsel %vm450, %v403, %v407
        %v473 = vsel %vm450, %v445, %v401
        %v474 = vsel %vm450, %v447, %v403
        %475 = vst [vmem:[#allocation2] sm:$0xff] %v473
        %476 = vst [vmem:[#allocation2 + $0x8] sm:$0xff] %v471
        %477 = vst [vmem:[#allocation2 + $0x10] sm:$0xff] %v469
        %478 = vst [vmem:[#allocation2 + $0x18] sm:$0xff] %v467
        %479 = vst [vmem:[#allocation2 + $0x20] sm:$0xff] %v465
        %480 = vst [vmem:[#allocation2 + $0x28] sm:$0xff] %v463
        %481 = vst [vmem:[#allocation2 + $0x30] sm:$0xff] %v461
        %482 = vst [vmem:[#allocation2 + $0x38] sm:$0xff] %v459
        %483 = vst [vmem:[#allocation2 + $0x40] sm:$0xff] %v457
        %484 = vst [vmem:[#allocation2 + $0x48] sm:$0xff] %v455
        %485 = vst [vmem:[#allocation2 + $0x50] sm:$0xff] %v453
        %486 = vst [vmem:[#allocation2 + $0x58] sm:$0xff] %v451
        %487 = vst [vmem:[#allocation2 + $0x60] sm:$0xff] %v474
        %488 = vst [vmem:[#allocation2 + $0x68] sm:$0xff] %v472
        %489 = vst [vmem:[#allocation2 + $0x70] sm:$0xff] %v470
        %490 = vst [vmem:[#allocation2 + $0x78] sm:$0xff] %v468
        %491 = vst [vmem:[#allocation2 + $0x80] sm:$0xff] %v466
        %492 = vst [vmem:[#allocation2 + $0x88] sm:$0xff] %v464
        %493 = vst [vmem:[#allocation2 + $0x90] sm:$0xff] %v462
        %494 = vst [vmem:[#allocation2 + $0x98] sm:$0xff] %v460
        %495 = vst [vmem:[#allocation2 + $0xa0] sm:$0xff] %v458
        %496 = vst [vmem:[#allocation2 + $0xa8] sm:$0xff] %v456
        %497 = vst [vmem:[#allocation2 + $0xb0] sm:$0xff] %v454
        %498 = vst [vmem:[#allocation2 + $0xb8] sm:$0xff] %v452
        %499 = vrot.lane.b32.xlu0 %v376, 18
        %v500 = vpop.permute.xlu0 %499
        %501 = vrot.lane.b32.xlu0 %v388, 18
        %v502 = vpop.permute.xlu0 %501
        %503 = vrot.lane.b32.xlu0 %v377, 18
        %v504 = vpop.permute.xlu0 %503
        %505 = vrot.lane.b32.xlu0 %v389, 18
        %v506 = vpop.permute.xlu0 %505
        %507 = vrot.lane.b32.xlu0 %v378, 18
        %v508 = vpop.permute.xlu0 %507
        %509 = vrot.lane.b32.xlu0 %v390, 18
        %v510 = vpop.permute.xlu0 %509
        %511 = vrot.lane.b32.xlu0 %v379, 18
        %v512 = vpop.permute.xlu0 %511
        %513 = vrot.lane.b32.xlu0 %v391, 18
        %v514 = vpop.permute.xlu0 %513
        %515 = vrot.lane.b32.xlu0 %v380, 18
        %v516 = vpop.permute.xlu0 %515
        %517 = vrot.lane.b32.xlu0 %v392, 18
        %v518 = vpop.permute.xlu0 %517
        %519 = vrot.lane.b32.xlu0 %v381, 18
        %v520 = vpop.permute.xlu0 %519
        %521 = vrot.lane.b32.xlu0 %v393, 18
        %v522 = vpop.permute.xlu0 %521
        %523 = vrot.lane.b32.xlu0 %v382, 18
        %v524 = vpop.permute.xlu0 %523
        %525 = vrot.lane.b32.xlu0 %v394, 18
        %v526 = vpop.permute.xlu0 %525
        %527 = vrot.lane.b32.xlu0 %v383, 18
        %v528 = vpop.permute.xlu0 %527
        %529 = vrot.lane.b32.xlu0 %v395, 18
        %v530 = vpop.permute.xlu0 %529
        %531 = vrot.lane.b32.xlu0 %v384, 18
        %v532 = vpop.permute.xlu0 %531
        %533 = vrot.lane.b32.xlu0 %v396, 18
        %v534 = vpop.permute.xlu0 %533
        %535 = vrot.lane.b32.xlu0 %v385, 18
        %v536 = vpop.permute.xlu0 %535
        %537 = vrot.lane.b32.xlu0 %v397, 18
        %v538 = vpop.permute.xlu0 %537
        %539 = vrot.lane.b32.xlu0 %v386, 18
        %v540 = vpop.permute.xlu0 %539
        %541 = vrot.lane.b32.xlu0 %v398, 18
        %v542 = vpop.permute.xlu0 %541
        %543 = vrot.lane.b32.xlu0 %v387, 18
        %v544 = vpop.permute.xlu0 %543
        %545 = vrot.lane.b32.xlu0 %v399, 18
        %v546 = vpop.permute.xlu0 %545
        %vm547 = vcmp.lt.s32.totalorder %v449, 18
        %v548 = vsel %vm547, %v540, %v544
        %v549 = vsel %vm547, %v542, %v546
        %v550 = vsel %vm547, %v536, %v540
        %v551 = vsel %vm547, %v538, %v542
        %v552 = vsel %vm547, %v532, %v536
        %v553 = vsel %vm547, %v534, %v538
        %v554 = vsel %vm547, %v528, %v532
        %v555 = vsel %vm547, %v530, %v534
        %v556 = vsel %vm547, %v524, %v528
        %v557 = vsel %vm547, %v526, %v530
        %v558 = vsel %vm547, %v520, %v524
        %v559 = vsel %vm547, %v522, %v526
        %v560 = vsel %vm547, %v516, %v520
        %v561 = vsel %vm547, %v518, %v522
        %v562 = vsel %vm547, %v512, %v516
        %v563 = vsel %vm547, %v514, %v518
        %v564 = vsel %vm547, %v508, %v512
        %v565 = vsel %vm547, %v510, %v514
        %v566 = vsel %vm547, %v504, %v508
        %v567 = vsel %vm547, %v506, %v510
        %v568 = vsel %vm547, %v500, %v504
        %v569 = vsel %vm547, %v502, %v506
        %v570 = vsel %vm547, %v544, %v500
        %v571 = vsel %vm547, %v546, %v502
        %572 = vst [vmem:[#allocation2 + $0xc0] sm:$0xff] %v570
        %573 = vst [vmem:[#allocation2 + $0xc8] sm:$0xff] %v568
        %574 = vst [vmem:[#allocation2 + $0xd0] sm:$0xff] %v566
        %575 = vst [vmem:[#allocation2 + $0xd8] sm:$0xff] %v564
        %576 = vst [vmem:[#allocation2 + $0xe0] sm:$0xff] %v562
        %577 = vst [vmem:[#allocation2 + $0xe8] sm:$0xff] %v560
        %578 = vst [vmem:[#allocation2 + $0xf0] sm:$0xff] %v558
        %579 = vst [vmem:[#allocation2 + $0xf8] sm:$0xff] %v556
        %580 = vst [vmem:[#allocation2 + $0x100] sm:$0xff] %v554
        %581 = vst [vmem:[#allocation2 + $0x108] sm:$0xff] %v552
        %582 = vst [vmem:[#allocation2 + $0x110] sm:$0xff] %v550
        %583 = vst [vmem:[#allocation2 + $0x118] sm:$0xff] %v548
        %584 = vst [vmem:[#allocation2 + $0x120] sm:$0xff] %v571
        %585 = vst [vmem:[#allocation2 + $0x128] sm:$0xff] %v569
        %586 = vst [vmem:[#allocation2 + $0x130] sm:$0xff] %v567
        %587 = vst [vmem:[#allocation2 + $0x138] sm:$0xff] %v565
        %588 = vst [vmem:[#allocation2 + $0x140] sm:$0xff] %v563
        %589 = vst [vmem:[#allocation2 + $0x148] sm:$0xff] %v561
        %590 = vst [vmem:[#allocation2 + $0x150] sm:$0xff] %v559
        %591 = vst [vmem:[#allocation2 + $0x158] sm:$0xff] %v557
        %592 = vst [vmem:[#allocation2 + $0x160] sm:$0xff] %v555
        %593 = vst [vmem:[#allocation2 + $0x168] sm:$0xff] %v553
        %594 = vst [vmem:[#allocation2 + $0x170] sm:$0xff] %v551
        %595 = vst [vmem:[#allocation2 + $0x178] sm:$0xff] %v549
        %596 = vrot.lane.b32.xlu0 %v376, 17
        %v597 = vpop.permute.xlu0 %596
        %598 = vrot.lane.b32.xlu0 %v388, 17
        %v599 = vpop.permute.xlu0 %598
        %600 = vrot.lane.b32.xlu0 %v377, 17
        %v601 = vpop.permute.xlu0 %600
        %602 = vrot.lane.b32.xlu0 %v389, 17
        %v603 = vpop.permute.xlu0 %602
        %604 = vrot.lane.b32.xlu0 %v378, 17
        %v605 = vpop.permute.xlu0 %604
        %606 = vrot.lane.b32.xlu0 %v390, 17
        %v607 = vpop.permute.xlu0 %606
        %608 = vrot.lane.b32.xlu0 %v379, 17
        %v609 = vpop.permute.xlu0 %608
        %610 = vrot.lane.b32.xlu0 %v391, 17
        %v611 = vpop.permute.xlu0 %610
        %612 = vrot.lane.b32.xlu0 %v380, 17
        %v613 = vpop.permute.xlu0 %612
        %614 = vrot.lane.b32.xlu0 %v392, 17
        %v615 = vpop.permute.xlu0 %614
        %616 = vrot.lane.b32.xlu0 %v381, 17
        %v617 = vpop.permute.xlu0 %616
        %618 = vrot.lane.b32.xlu0 %v393, 17
        %v619 = vpop.permute.xlu0 %618
        %620 = vrot.lane.b32.xlu0 %v382, 17
        %v621 = vpop.permute.xlu0 %620
        %622 = vrot.lane.b32.xlu0 %v394, 17
        %v623 = vpop.permute.xlu0 %622
        %624 = vrot.lane.b32.xlu0 %v383, 17
        %v625 = vpop.permute.xlu0 %624
        %626 = vrot.lane.b32.xlu0 %v395, 17
        %v627 = vpop.permute.xlu0 %626
        %628 = vrot.lane.b32.xlu0 %v384, 17
        %v629 = vpop.permute.xlu0 %628
        %630 = vrot.lane.b32.xlu0 %v396, 17
        %v631 = vpop.permute.xlu0 %630
        %632 = vrot.lane.b32.xlu0 %v385, 17
        %v633 = vpop.permute.xlu0 %632
        %634 = vrot.lane.b32.xlu0 %v397, 17
        %v635 = vpop.permute.xlu0 %634
        %636 = vrot.lane.b32.xlu0 %v386, 17
        %v637 = vpop.permute.xlu0 %636
        %638 = vrot.lane.b32.xlu0 %v398, 17
        %v639 = vpop.permute.xlu0 %638
        %640 = vrot.lane.b32.xlu0 %v387, 17
        %v641 = vpop.permute.xlu0 %640
        %642 = vrot.lane.b32.xlu0 %v399, 17
        %v643 = vpop.permute.xlu0 %642
        %vm644 = vcmp.lt.s32.totalorder %v449, 17
        %v645 = vsel %vm644, %v637, %v641
        %v646 = vsel %vm644, %v639, %v643
        %v647 = vsel %vm644, %v633, %v637
        %v648 = vsel %vm644, %v635, %v639
        %v649 = vsel %vm644, %v629, %v633
        %v650 = vsel %vm644, %v631, %v635
        %v651 = vsel %vm644, %v625, %v629
        %v652 = vsel %vm644, %v627, %v631
        %v653 = vsel %vm644, %v621, %v625
        %v654 = vsel %vm644, %v623, %v627
        %v655 = vsel %vm644, %v617, %v621
        %v656 = vsel %vm644, %v619, %v623
        %v657 = vsel %vm644, %v613, %v617
        %v658 = vsel %vm644, %v615, %v619
        %v659 = vsel %vm644, %v609, %v613
        %v660 = vsel %vm644, %v611, %v615
        %v661 = vsel %vm644, %v605, %v609
        %v662 = vsel %vm644, %v607, %v611
        %v663 = vsel %vm644, %v601, %v605
        %v664 = vsel %vm644, %v603, %v607
        %v665 = vsel %vm644, %v597, %v601
        %v666 = vsel %vm644, %v599, %v603
        %v667 = vsel %vm644, %v641, %v597
        %v668 = vsel %vm644, %v643, %v599
        %669 = vst [vmem:[#allocation2 + $0x180] sm:$0xff] %v667
        %670 = vst [vmem:[#allocation2 + $0x188] sm:$0xff] %v665
        %671 = vst [vmem:[#allocation2 + $0x190] sm:$0xff] %v663
        %672 = vst [vmem:[#allocation2 + $0x198] sm:$0xff] %v661
        %673 = vst [vmem:[#allocation2 + $0x1a0] sm:$0xff] %v659
        %674 = vst [vmem:[#allocation2 + $0x1a8] sm:$0xff] %v657
        %675 = vst [vmem:[#allocation2 + $0x1b0] sm:$0xff] %v655
        %676 = vst [vmem:[#allocation2 + $0x1b8] sm:$0xff] %v653
        %677 = vst [vmem:[#allocation2 + $0x1c0] sm:$0xff] %v651
        %678 = vst [vmem:[#allocation2 + $0x1c8] sm:$0xff] %v649
        %679 = vst [vmem:[#allocation2 + $0x1d0] sm:$0xff] %v647
        %680 = vst [vmem:[#allocation2 + $0x1d8] sm:$0xff] %v645
        %681 = vst [vmem:[#allocation2 + $0x1e0] sm:$0xff] %v668
        %682 = vst [vmem:[#allocation2 + $0x1e8] sm:$0xff] %v666
        %683 = vst [vmem:[#allocation2 + $0x1f0] sm:$0xff] %v664
        %684 = vst [vmem:[#allocation2 + $0x1f8] sm:$0xff] %v662
        %685 = vst [vmem:[#allocation2 + $0x200] sm:$0xff] %v660
        %686 = vst [vmem:[#allocation2 + $0x208] sm:$0xff] %v658
        %687 = vst [vmem:[#allocation2 + $0x210] sm:$0xff] %v656
        %688 = vst [vmem:[#allocation2 + $0x218] sm:$0xff] %v654
        %689 = vst [vmem:[#allocation2 + $0x220] sm:$0xff] %v652
        %690 = vst [vmem:[#allocation2 + $0x228] sm:$0xff] %v650
        %691 = vst [vmem:[#allocation2 + $0x230] sm:$0xff] %v648
        %692 = vst [vmem:[#allocation2 + $0x238] sm:$0xff] %v646
        %693 = vrot.lane.b32.xlu0 %v376, 1
        %v694 = vpop.permute.xlu0 %693
        %695 = vrot.lane.b32.xlu0 %v388, 1
        %v696 = vpop.permute.xlu0 %695
        %697 = vrot.lane.b32.xlu0 %v377, 1
        %v698 = vpop.permute.xlu0 %697
        %699 = vrot.lane.b32.xlu0 %v389, 1
        %v700 = vpop.permute.xlu0 %699
        %701 = vrot.lane.b32.xlu0 %v378, 1
        %v702 = vpop.permute.xlu0 %701
        %703 = vrot.lane.b32.xlu0 %v390, 1
        %v704 = vpop.permute.xlu0 %703
        %705 = vrot.lane.b32.xlu0 %v379, 1
        %v706 = vpop.permute.xlu0 %705
        %707 = vrot.lane.b32.xlu0 %v391, 1
        %v708 = vpop.permute.xlu0 %707
        %709 = vrot.lane.b32.xlu0 %v380, 1
        %v710 = vpop.permute.xlu0 %709
        %711 = vrot.lane.b32.xlu0 %v392, 1
        %v712 = vpop.permute.xlu0 %711
        %713 = vrot.lane.b32.xlu0 %v381, 1
        %v714 = vpop.permute.xlu0 %713
        %715 = vrot.lane.b32.xlu0 %v393, 1
        %v716 = vpop.permute.xlu0 %715
        %717 = vrot.lane.b32.xlu0 %v382, 1
        %v718 = vpop.permute.xlu0 %717
        %719 = vrot.lane.b32.xlu0 %v394, 1
        %v720 = vpop.permute.xlu0 %719
        %721 = vrot.lane.b32.xlu0 %v383, 1
        %v722 = vpop.permute.xlu0 %721
        %723 = vrot.lane.b32.xlu0 %v395, 1
        %v724 = vpop.permute.xlu0 %723
        %725 = vrot.lane.b32.xlu0 %v384, 1
        %v726 = vpop.permute.xlu0 %725
        %727 = vrot.lane.b32.xlu0 %v396, 1
        %v728 = vpop.permute.xlu0 %727
        %729 = vrot.lane.b32.xlu0 %v385, 1
        %v730 = vpop.permute.xlu0 %729
        %731 = vrot.lane.b32.xlu0 %v397, 1
        %v732 = vpop.permute.xlu0 %731
        %733 = vrot.lane.b32.xlu0 %v386, 1
        %v734 = vpop.permute.xlu0 %733
        %735 = vrot.lane.b32.xlu0 %v398, 1
        %v736 = vpop.permute.xlu0 %735
        %737 = vrot.lane.b32.xlu0 %v387, 1
        %v738 = vpop.permute.xlu0 %737
        %739 = vrot.lane.b32.xlu0 %v399, 1
        %v740 = vpop.permute.xlu0 %739
        %vm741 = vcmp.lt.s32.totalorder %v449, 1
        %v742 = vsel %vm741, %v734, %v738
        %v743 = vsel %vm741, %v736, %v740
        %v744 = vsel %vm741, %v730, %v734
        %v745 = vsel %vm741, %v732, %v736
        %v746 = vsel %vm741, %v726, %v730
        %v747 = vsel %vm741, %v728, %v732
        %v748 = vsel %vm741, %v722, %v726
        %v749 = vsel %vm741, %v724, %v728
        %v750 = vsel %vm741, %v718, %v722
        %v751 = vsel %vm741, %v720, %v724
        %v752 = vsel %vm741, %v714, %v718
        %v753 = vsel %vm741, %v716, %v720
        %v754 = vsel %vm741, %v710, %v714
        %v755 = vsel %vm741, %v712, %v716
        %v756 = vsel %vm741, %v706, %v710
        %v757 = vsel %vm741, %v708, %v712
        %v758 = vsel %vm741, %v702, %v706
        %v759 = vsel %vm741, %v704, %v708
        %v760 = vsel %vm741, %v698, %v702
        %v761 = vsel %vm741, %v700, %v704
        %v762 = vsel %vm741, %v694, %v698
        %v763 = vsel %vm741, %v696, %v700
        %v764 = vsel %vm741, %v738, %v694
        %v765 = vsel %vm741, %v740, %v696
        %766 = vst [vmem:[#allocation2 + $0x240] sm:$0xff] %v764
        %767 = vst [vmem:[#allocation2 + $0x248] sm:$0xff] %v762
        %768 = vst [vmem:[#allocation2 + $0x250] sm:$0xff] %v760
        %769 = vst [vmem:[#allocation2 + $0x258] sm:$0xff] %v758
        %770 = vst [vmem:[#allocation2 + $0x260] sm:$0xff] %v756
        %771 = vst [vmem:[#allocation2 + $0x268] sm:$0xff] %v754
        %772 = vst [vmem:[#allocation2 + $0x270] sm:$0xff] %v752
        %773 = vst [vmem:[#allocation2 + $0x278] sm:$0xff] %v750
        %774 = vst [vmem:[#allocation2 + $0x280] sm:$0xff] %v748
        %775 = vst [vmem:[#allocation2 + $0x288] sm:$0xff] %v746
        %776 = vst [vmem:[#allocation2 + $0x290] sm:$0xff] %v744
        %777 = vst [vmem:[#allocation2 + $0x298] sm:$0xff] %v742
        %778 = vst [vmem:[#allocation2 + $0x2a0] sm:$0xff] %v765
        %779 = vst [vmem:[#allocation2 + $0x2a8] sm:$0xff] %v763
        %780 = vst [vmem:[#allocation2 + $0x2b0] sm:$0xff] %v761
        %781 = vst [vmem:[#allocation2 + $0x2b8] sm:$0xff] %v759
        %782 = vst [vmem:[#allocation2 + $0x2c0] sm:$0xff] %v757
        %783 = vst [vmem:[#allocation2 + $0x2c8] sm:$0xff] %v755
        %784 = vst [vmem:[#allocation2 + $0x2d0] sm:$0xff] %v753
        %785 = vst [vmem:[#allocation2 + $0x2d8] sm:$0xff] %v751
        %786 = vst [vmem:[#allocation2 + $0x2e0] sm:$0xff] %v749
        %787 = vst [vmem:[#allocation2 + $0x2e8] sm:$0xff] %v747
        %788 = vst [vmem:[#allocation2 + $0x2f0] sm:$0xff] %v745
        %789 = vst [vmem:[#allocation2 + $0x2f8] sm:$0xff] %v743
        %790 = vst [vmem:[#allocation2 + $0x300] sm:$0xff] %v376
        %791 = vst [vmem:[#allocation2 + $0x308] sm:$0xff] %v377
        %792 = vst [vmem:[#allocation2 + $0x310] sm:$0xff] %v378
        %793 = vst [vmem:[#allocation2 + $0x318] sm:$0xff] %v379
        %794 = vst [vmem:[#allocation2 + $0x320] sm:$0xff] %v380
        %795 = vst [vmem:[#allocation2 + $0x328] sm:$0xff] %v381
        %796 = vst [vmem:[#allocation2 + $0x330] sm:$0xff] %v382
        %797 = vst [vmem:[#allocation2 + $0x338] sm:$0xff] %v383
        %798 = vst [vmem:[#allocation2 + $0x340] sm:$0xff] %v384
        %799 = vst [vmem:[#allocation2 + $0x348] sm:$0xff] %v385
        %800 = vst [vmem:[#allocation2 + $0x350] sm:$0xff] %v386
        %801 = vst [vmem:[#allocation2 + $0x358] sm:$0xff] %v387
        %802 = vst [vmem:[#allocation2 + $0x360] sm:$0xff] %v388
        %803 = vst [vmem:[#allocation2 + $0x368] sm:$0xff] %v389
        %804 = vst [vmem:[#allocation2 + $0x370] sm:$0xff] %v390
        %805 = vst [vmem:[#allocation2 + $0x378] sm:$0xff] %v391
        %806 = vst [vmem:[#allocation2 + $0x380] sm:$0xff] %v392
        %807 = vst [vmem:[#allocation2 + $0x388] sm:$0xff] %v393
        %808 = vst [vmem:[#allocation2 + $0x390] sm:$0xff] %v394
        %809 = vst [vmem:[#allocation2 + $0x398] sm:$0xff] %v395
        %810 = vst [vmem:[#allocation2 + $0x3a0] sm:$0xff] %v396
        %811 = vst [vmem:[#allocation2 + $0x3a8] sm:$0xff] %v397
        %812 = vst [vmem:[#allocation2 + $0x3b0] sm:$0xff] %v398
        %813 = vst [vmem:[#allocation2 + $0x3b8] sm:$0xff] %v399
        %814 = vrot.lane.b32.xlu0 %v376, 127
        %v815 = vpop.permute.xlu0 %814
        %816 = vrot.lane.b32.xlu0 %v388, 127
        %v817 = vpop.permute.xlu0 %816
        %818 = vrot.lane.b32.xlu0 %v377, 127
        %v819 = vpop.permute.xlu0 %818
        %820 = vrot.lane.b32.xlu0 %v389, 127
        %v821 = vpop.permute.xlu0 %820
        %822 = vrot.lane.b32.xlu0 %v378, 127
        %v823 = vpop.permute.xlu0 %822
        %824 = vrot.lane.b32.xlu0 %v390, 127
        %v825 = vpop.permute.xlu0 %824
        %826 = vrot.lane.b32.xlu0 %v379, 127
        %v827 = vpop.permute.xlu0 %826
        %828 = vrot.lane.b32.xlu0 %v391, 127
        %v829 = vpop.permute.xlu0 %828
        %830 = vrot.lane.b32.xlu0 %v380, 127
        %v831 = vpop.permute.xlu0 %830
        %832 = vrot.lane.b32.xlu0 %v392, 127
        %v833 = vpop.permute.xlu0 %832
        %834 = vrot.lane.b32.xlu0 %v381, 127
        %v835 = vpop.permute.xlu0 %834
        %836 = vrot.lane.b32.xlu0 %v393, 127
        %v837 = vpop.permute.xlu0 %836
        %838 = vrot.lane.b32.xlu0 %v382, 127
        %v839 = vpop.permute.xlu0 %838
        %840 = vrot.lane.b32.xlu0 %v394, 127
        %v841 = vpop.permute.xlu0 %840
        %842 = vrot.lane.b32.xlu0 %v383, 127
        %v843 = vpop.permute.xlu0 %842
        %844 = vrot.lane.b32.xlu0 %v395, 127
        %v845 = vpop.permute.xlu0 %844
        %846 = vrot.lane.b32.xlu0 %v384, 127
        %v847 = vpop.permute.xlu0 %846
        %848 = vrot.lane.b32.xlu0 %v396, 127
        %v849 = vpop.permute.xlu0 %848
        %850 = vrot.lane.b32.xlu0 %v385, 127
        %v851 = vpop.permute.xlu0 %850
        %852 = vrot.lane.b32.xlu0 %v397, 127
        %v853 = vpop.permute.xlu0 %852
        %854 = vrot.lane.b32.xlu0 %v386, 127
        %v855 = vpop.permute.xlu0 %854
        %856 = vrot.lane.b32.xlu0 %v398, 127
        %v857 = vpop.permute.xlu0 %856
        %858 = vrot.lane.b32.xlu0 %v387, 127
        %v859 = vpop.permute.xlu0 %858
        %860 = vrot.lane.b32.xlu0 %v399, 127
        %v861 = vpop.permute.xlu0 %860
        %vm862 = vcmp.lt.s32.totalorder %v449, 127
        %v863 = vsel %vm862, %v855, %v859
        %v864 = vsel %vm862, %v857, %v861
        %v865 = vsel %vm862, %v851, %v855
        %v866 = vsel %vm862, %v853, %v857
        %v867 = vsel %vm862, %v847, %v851
        %v868 = vsel %vm862, %v849, %v853
        %v869 = vsel %vm862, %v843, %v847
        %v870 = vsel %vm862, %v845, %v849
        %v871 = vsel %vm862, %v839, %v843
        %v872 = vsel %vm862, %v841, %v845
        %v873 = vsel %vm862, %v835, %v839
        %v874 = vsel %vm862, %v837, %v841
        %v875 = vsel %vm862, %v831, %v835
        %v876 = vsel %vm862, %v833, %v837
        %v877 = vsel %vm862, %v827, %v831
        %v878 = vsel %vm862, %v829, %v833
        %v879 = vsel %vm862, %v823, %v827
        %v880 = vsel %vm862, %v825, %v829
        %v881 = vsel %vm862, %v819, %v823
        %v882 = vsel %vm862, %v821, %v825
        %v883 = vsel %vm862, %v815, %v819
        %v884 = vsel %vm862, %v817, %v821
        %v885 = vsel %vm862, %v859, %v815
        %v886 = vsel %vm862, %v861, %v817
        %887 = vst [vmem:[#allocation2 + $0x3c0] sm:$0xff] %v883
        %888 = vst [vmem:[#allocation2 + $0x3c8] sm:$0xff] %v881
        %889 = vst [vmem:[#allocation2 + $0x3d0] sm:$0xff] %v879
        %890 = vst [vmem:[#allocation2 + $0x3d8] sm:$0xff] %v877
        %891 = vst [vmem:[#allocation2 + $0x3e0] sm:$0xff] %v875
        %892 = vst [vmem:[#allocation2 + $0x3e8] sm:$0xff] %v873
        %893 = vst [vmem:[#allocation2 + $0x3f0] sm:$0xff] %v871
        %894 = vst [vmem:[#allocation2 + $0x3f8] sm:$0xff] %v869
        %895 = vst [vmem:[#allocation2 + $0x400] sm:$0xff] %v867
        %896 = vst [vmem:[#allocation2 + $0x408] sm:$0xff] %v865
        %897 = vst [vmem:[#allocation2 + $0x410] sm:$0xff] %v863
        %898 = vst [vmem:[#allocation2 + $0x418] sm:$0xff] %v885
        %899 = vst [vmem:[#allocation2 + $0x420] sm:$0xff] %v884
        %900 = vst [vmem:[#allocation2 + $0x428] sm:$0xff] %v882
        %901 = vst [vmem:[#allocation2 + $0x430] sm:$0xff] %v880
        %902 = vst [vmem:[#allocation2 + $0x438] sm:$0xff] %v878
        %903 = vst [vmem:[#allocation2 + $0x440] sm:$0xff] %v876
        %904 = vst [vmem:[#allocation2 + $0x448] sm:$0xff] %v874
        %905 = vst [vmem:[#allocation2 + $0x450] sm:$0xff] %v872
        %906 = vst [vmem:[#allocation2 + $0x458] sm:$0xff] %v870
        %907 = vst [vmem:[#allocation2 + $0x460] sm:$0xff] %v868
        %908 = vst [vmem:[#allocation2 + $0x468] sm:$0xff] %v866
        %909 = vst [vmem:[#allocation2 + $0x470] sm:$0xff] %v864
        %910 = vst [vmem:[#allocation2 + $0x478] sm:$0xff] %v886
        %911 = vrot.lane.b32.xlu0 %v376, 111
        %v912 = vpop.permute.xlu0 %911
        %913 = vrot.lane.b32.xlu0 %v388, 111
        %v914 = vpop.permute.xlu0 %913
        %915 = vrot.lane.b32.xlu0 %v377, 111
        %v916 = vpop.permute.xlu0 %915
        %917 = vrot.lane.b32.xlu0 %v389, 111
        %v918 = vpop.permute.xlu0 %917
        %919 = vrot.lane.b32.xlu0 %v378, 111
        %v920 = vpop.permute.xlu0 %919
        %921 = vrot.lane.b32.xlu0 %v390, 111
        %v922 = vpop.permute.xlu0 %921
        %923 = vrot.lane.b32.xlu0 %v379, 111
        %v924 = vpop.permute.xlu0 %923
        %925 = vrot.lane.b32.xlu0 %v391, 111
        %v926 = vpop.permute.xlu0 %925
        %927 = vrot.lane.b32.xlu0 %v380, 111
        %v928 = vpop.permute.xlu0 %927
        %929 = vrot.lane.b32.xlu0 %v392, 111
        %v930 = vpop.permute.xlu0 %929
        %931 = vrot.lane.b32.xlu0 %v381, 111
        %v932 = vpop.permute.xlu0 %931
        %933 = vrot.lane.b32.xlu0 %v393, 111
        %v934 = vpop.permute.xlu0 %933
        %935 = vrot.lane.b32.xlu0 %v382, 111
        %v936 = vpop.permute.xlu0 %935
        %937 = vrot.lane.b32.xlu0 %v394, 111
        %v938 = vpop.permute.xlu0 %937
        %939 = vrot.lane.b32.xlu0 %v383, 111
        %v940 = vpop.permute.xlu0 %939
        %941 = vrot.lane.b32.xlu0 %v395, 111
        %v942 = vpop.permute.xlu0 %941
        %943 = vrot.lane.b32.xlu0 %v384, 111
        %v944 = vpop.permute.xlu0 %943
        %945 = vrot.lane.b32.xlu0 %v396, 111
        %v946 = vpop.permute.xlu0 %945
        %947 = vrot.lane.b32.xlu0 %v385, 111
        %v948 = vpop.permute.xlu0 %947
        %949 = vrot.lane.b32.xlu0 %v397, 111
        %v950 = vpop.permute.xlu0 %949
        %951 = vrot.lane.b32.xlu0 %v386, 111
        %v952 = vpop.permute.xlu0 %951
        %953 = vrot.lane.b32.xlu0 %v398, 111
        %v954 = vpop.permute.xlu0 %953
        %955 = vrot.lane.b32.xlu0 %v387, 111
        %v956 = vpop.permute.xlu0 %955
        %957 = vrot.lane.b32.xlu0 %v399, 111
        %v958 = vpop.permute.xlu0 %957
        %vm959 = vcmp.lt.s32.totalorder %v449, 111
        %v960 = vsel %vm959, %v952, %v956
        %v961 = vsel %vm959, %v954, %v958
        %v962 = vsel %vm959, %v948, %v952
        %v963 = vsel %vm959, %v950, %v954
        %v964 = vsel %vm959, %v944, %v948
        %v965 = vsel %vm959, %v946, %v950
        %v966 = vsel %vm959, %v940, %v944
        %v967 = vsel %vm959, %v942, %v946
        %v968 = vsel %vm959, %v936, %v940
        %v969 = vsel %vm959, %v938, %v942
        %v970 = vsel %vm959, %v932, %v936
        %v971 = vsel %vm959, %v934, %v938
        %v972 = vsel %vm959, %v928, %v932
        %v973 = vsel %vm959, %v930, %v934
        %v974 = vsel %vm959, %v924, %v928
        %v975 = vsel %vm959, %v926, %v930
        %v976 = vsel %vm959, %v920, %v924
        %v977 = vsel %vm959, %v922, %v926
        %v978 = vsel %vm959, %v916, %v920
        %v979 = vsel %vm959, %v918, %v922
        %v980 = vsel %vm959, %v912, %v916
        %v981 = vsel %vm959, %v914, %v918
        %v982 = vsel %vm959, %v956, %v912
        %v983 = vsel %vm959, %v958, %v914
        %984 = vst [vmem:[#allocation2 + $0x480] sm:$0xff] %v980
        %985 = vst [vmem:[#allocation2 + $0x488] sm:$0xff] %v978
        %986 = vst [vmem:[#allocation2 + $0x490] sm:$0xff] %v976
        %987 = vst [vmem:[#allocation2 + $0x498] sm:$0xff] %v974
        %988 = vst [vmem:[#allocation2 + $0x4a0] sm:$0xff] %v972
        %989 = vst [vmem:[#allocation2 + $0x4a8] sm:$0xff] %v970
        %990 = vst [vmem:[#allocation2 + $0x4b0] sm:$0xff] %v968
        %991 = vst [vmem:[#allocation2 + $0x4b8] sm:$0xff] %v966
        %992 = vst [vmem:[#allocation2 + $0x4c0] sm:$0xff] %v964
        %993 = vst [vmem:[#allocation2 + $0x4c8] sm:$0xff] %v962
        %994 = vst [vmem:[#allocation2 + $0x4d0] sm:$0xff] %v960
        %995 = vst [vmem:[#allocation2 + $0x4d8] sm:$0xff] %v982
        %996 = vst [vmem:[#allocation2 + $0x4e0] sm:$0xff] %v981
        %997 = vst [vmem:[#allocation2 + $0x4e8] sm:$0xff] %v979
        %998 = vst [vmem:[#allocation2 + $0x4f0] sm:$0xff] %v977
        %999 = vst [vmem:[#allocation2 + $0x4f8] sm:$0xff] %v975
        %1000 = vst [vmem:[#allocation2 + $0x500] sm:$0xff] %v973
        %1001 = vst [vmem:[#allocation2 + $0x508] sm:$0xff] %v971
        %1002 = vst [vmem:[#allocation2 + $0x510] sm:$0xff] %v969
        %1003 = vst [vmem:[#allocation2 + $0x518] sm:$0xff] %v967
        %1004 = vst [vmem:[#allocation2 + $0x520] sm:$0xff] %v965
        %1005 = vst [vmem:[#allocation2 + $0x528] sm:$0xff] %v963
        %1006 = vst [vmem:[#allocation2 + $0x530] sm:$0xff] %v961
        %1007 = vst [vmem:[#allocation2 + $0x538] sm:$0xff] %v983
        %1008 = vrot.lane.b32.xlu0 %v376, 110
        %v1009 = vpop.permute.xlu0 %1008
        %1010 = vrot.lane.b32.xlu0 %v388, 110
        %v1011 = vpop.permute.xlu0 %1010
        %1012 = vrot.lane.b32.xlu0 %v377, 110
        %v1013 = vpop.permute.xlu0 %1012
        %1014 = vrot.lane.b32.xlu0 %v389, 110
        %v1015 = vpop.permute.xlu0 %1014
        %1016 = vrot.lane.b32.xlu0 %v378, 110
        %v1017 = vpop.permute.xlu0 %1016
        %1018 = vrot.lane.b32.xlu0 %v390, 110
        %v1019 = vpop.permute.xlu0 %1018
        %1020 = vrot.lane.b32.xlu0 %v379, 110
        %v1021 = vpop.permute.xlu0 %1020
        %1022 = vrot.lane.b32.xlu0 %v391, 110
        %v1023 = vpop.permute.xlu0 %1022
        %1024 = vrot.lane.b32.xlu0 %v380, 110
        %v1025 = vpop.permute.xlu0 %1024
        %1026 = vrot.lane.b32.xlu0 %v392, 110
        %v1027 = vpop.permute.xlu0 %1026
        %1028 = vrot.lane.b32.xlu0 %v381, 110
        %v1029 = vpop.permute.xlu0 %1028
        %1030 = vrot.lane.b32.xlu0 %v393, 110
        %v1031 = vpop.permute.xlu0 %1030
        %1032 = vrot.lane.b32.xlu0 %v382, 110
        %v1033 = vpop.permute.xlu0 %1032
        %1034 = vrot.lane.b32.xlu0 %v394, 110
        %v1035 = vpop.permute.xlu0 %1034
        %1036 = vrot.lane.b32.xlu0 %v383, 110
        %v1037 = vpop.permute.xlu0 %1036
        %1038 = vrot.lane.b32.xlu0 %v395, 110
        %v1039 = vpop.permute.xlu0 %1038
        %1040 = vrot.lane.b32.xlu0 %v384, 110
        %v1041 = vpop.permute.xlu0 %1040
        %1042 = vrot.lane.b32.xlu0 %v396, 110
        %v1043 = vpop.permute.xlu0 %1042
        %1044 = vrot.lane.b32.xlu0 %v385, 110
        %v1045 = vpop.permute.xlu0 %1044
        %1046 = vrot.lane.b32.xlu0 %v397, 110
        %v1047 = vpop.permute.xlu0 %1046
        %1048 = vrot.lane.b32.xlu0 %v386, 110
        %v1049 = vpop.permute.xlu0 %1048
        %1050 = vrot.lane.b32.xlu0 %v398, 110
        %v1051 = vpop.permute.xlu0 %1050
        %1052 = vrot.lane.b32.xlu0 %v387, 110
        %v1053 = vpop.permute.xlu0 %1052
        %1054 = vrot.lane.b32.xlu0 %v399, 110
        %v1055 = vpop.permute.xlu0 %1054
        %vm1056 = vcmp.lt.s32.totalorder %v449, 110
        %v1057 = vsel %vm1056, %v1049, %v1053
        %v1058 = vsel %vm1056, %v1051, %v1055
        %v1059 = vsel %vm1056, %v1045, %v1049
        %v1060 = vsel %vm1056, %v1047, %v1051
        %v1061 = vsel %vm1056, %v1041, %v1045
        %v1062 = vsel %vm1056, %v1043, %v1047
        %v1063 = vsel %vm1056, %v1037, %v1041
        %v1064 = vsel %vm1056, %v1039, %v1043
        %v1065 = vsel %vm1056, %v1033, %v1037
        %v1066 = vsel %vm1056, %v1035, %v1039
        %v1067 = vsel %vm1056, %v1029, %v1033
        %v1068 = vsel %vm1056, %v1031, %v1035
        %v1069 = vsel %vm1056, %v1025, %v1029
        %v1070 = vsel %vm1056, %v1027, %v1031
        %v1071 = vsel %vm1056, %v1021, %v1025
        %v1072 = vsel %vm1056, %v1023, %v1027
        %v1073 = vsel %vm1056, %v1017, %v1021
        %v1074 = vsel %vm1056, %v1019, %v1023
        %v1075 = vsel %vm1056, %v1013, %v1017
        %v1076 = vsel %vm1056, %v1015, %v1019
        %v1077 = vsel %vm1056, %v1009, %v1013
        %v1078 = vsel %vm1056, %v1011, %v1015
        %v1079 = vsel %vm1056, %v1053, %v1009
        %v1080 = vsel %vm1056, %v1055, %v1011
        %1081 = vst [vmem:[#allocation2 + $0x540] sm:$0xff] %v1077
        %1082 = vst [vmem:[#allocation2 + $0x548] sm:$0xff] %v1075
        %1083 = vst [vmem:[#allocation2 + $0x550] sm:$0xff] %v1073
        %1084 = vst [vmem:[#allocation2 + $0x558] sm:$0xff] %v1071
        %1085 = vst [vmem:[#allocation2 + $0x560] sm:$0xff] %v1069
        %1086 = vst [vmem:[#allocation2 + $0x568] sm:$0xff] %v1067
        %1087 = vst [vmem:[#allocation2 + $0x570] sm:$0xff] %v1065
        %1088 = vst [vmem:[#allocation2 + $0x578] sm:$0xff] %v1063
        %1089 = vst [vmem:[#allocation2 + $0x580] sm:$0xff] %v1061
        %1090 = vst [vmem:[#allocation2 + $0x588] sm:$0xff] %v1059
        %1091 = vst [vmem:[#allocation2 + $0x590] sm:$0xff] %v1057
        %1092 = vst [vmem:[#allocation2 + $0x598] sm:$0xff] %v1079
        %1093 = vst [vmem:[#allocation2 + $0x5a0] sm:$0xff] %v1078
        %1094 = vst [vmem:[#allocation2 + $0x5a8] sm:$0xff] %v1076
        %1095 = vst [vmem:[#allocation2 + $0x5b0] sm:$0xff] %v1074
        %1096 = vst [vmem:[#allocation2 + $0x5b8] sm:$0xff] %v1072
        %1097 = vst [vmem:[#allocation2 + $0x5c0] sm:$0xff] %v1070
        %1098 = vst [vmem:[#allocation2 + $0x5c8] sm:$0xff] %v1068
        %1099 = vst [vmem:[#allocation2 + $0x5d0] sm:$0xff] %v1066
        %1100 = vst [vmem:[#allocation2 + $0x5d8] sm:$0xff] %v1064
        %1101 = vst [vmem:[#allocation2 + $0x5e0] sm:$0xff] %v1062
        %1102 = vst [vmem:[#allocation2 + $0x5e8] sm:$0xff] %v1060
        %1103 = vst [vmem:[#allocation2 + $0x5f0] sm:$0xff] %v1058
        %1104 = vst [vmem:[#allocation2 + $0x5f8] sm:$0xff] %v1080
        %1105 = vrot.lane.b32.xlu0 %v376, 109
        %v1106 = vpop.permute.xlu0 %1105
        %1107 = vrot.lane.b32.xlu0 %v388, 109
        %v1108 = vpop.permute.xlu0 %1107
        %1109 = vrot.lane.b32.xlu0 %v377, 109
        %v1110 = vpop.permute.xlu0 %1109
        %1111 = vrot.lane.b32.xlu0 %v389, 109
        %v1112 = vpop.permute.xlu0 %1111
        %1113 = vrot.lane.b32.xlu0 %v378, 109
        %v1114 = vpop.permute.xlu0 %1113
        %1115 = vrot.lane.b32.xlu0 %v390, 109
        %v1116 = vpop.permute.xlu0 %1115
        %1117 = vrot.lane.b32.xlu0 %v379, 109
        %v1118 = vpop.permute.xlu0 %1117
        %1119 = vrot.lane.b32.xlu0 %v391, 109
        %v1120 = vpop.permute.xlu0 %1119
        %1121 = vrot.lane.b32.xlu0 %v380, 109
        %v1122 = vpop.permute.xlu0 %1121
        %1123 = vrot.lane.b32.xlu0 %v392, 109
        %v1124 = vpop.permute.xlu0 %1123
        %1125 = vrot.lane.b32.xlu0 %v381, 109
        %v1126 = vpop.permute.xlu0 %1125
        %1127 = vrot.lane.b32.xlu0 %v393, 109
        %v1128 = vpop.permute.xlu0 %1127
        %1129 = vrot.lane.b32.xlu0 %v382, 109
        %v1130 = vpop.permute.xlu0 %1129
        %1131 = vrot.lane.b32.xlu0 %v394, 109
        %v1132 = vpop.permute.xlu0 %1131
        %1133 = vrot.lane.b32.xlu0 %v383, 109
        %v1134 = vpop.permute.xlu0 %1133
        %1135 = vrot.lane.b32.xlu0 %v395, 109
        %v1136 = vpop.permute.xlu0 %1135
        %1137 = vrot.lane.b32.xlu0 %v384, 109
        %v1138 = vpop.permute.xlu0 %1137
        %1139 = vrot.lane.b32.xlu0 %v396, 109
        %v1140 = vpop.permute.xlu0 %1139
        %1141 = vrot.lane.b32.xlu0 %v385, 109
        %v1142 = vpop.permute.xlu0 %1141
        %1143 = vrot.lane.b32.xlu0 %v397, 109
        %v1144 = vpop.permute.xlu0 %1143
        %1145 = vrot.lane.b32.xlu0 %v386, 109
        %v1146 = vpop.permute.xlu0 %1145
        %1147 = vrot.lane.b32.xlu0 %v398, 109
        %v1148 = vpop.permute.xlu0 %1147
        %1149 = vrot.lane.b32.xlu0 %v387, 109
        %v1150 = vpop.permute.xlu0 %1149
        %1151 = vrot.lane.b32.xlu0 %v399, 109
        %v1152 = vpop.permute.xlu0 %1151
        %vm1153 = vcmp.lt.s32.totalorder %v449, 109
        %v1154 = vsel %vm1153, %v1146, %v1150
        %v1155 = vsel %vm1153, %v1148, %v1152
        %v1156 = vsel %vm1153, %v1142, %v1146
        %v1157 = vsel %vm1153, %v1144, %v1148
        %v1158 = vsel %vm1153, %v1138, %v1142
        %v1159 = vsel %vm1153, %v1140, %v1144
        %v1160 = vsel %vm1153, %v1134, %v1138
        %v1161 = vsel %vm1153, %v1136, %v1140
        %v1162 = vsel %vm1153, %v1130, %v1134
        %v1163 = vsel %vm1153, %v1132, %v1136
        %v1164 = vsel %vm1153, %v1126, %v1130
        %v1165 = vsel %vm1153, %v1128, %v1132
        %v1166 = vsel %vm1153, %v1122, %v1126
        %v1167 = vsel %vm1153, %v1124, %v1128
        %v1168 = vsel %vm1153, %v1118, %v1122
        %v1169 = vsel %vm1153, %v1120, %v1124
        %v1170 = vsel %vm1153, %v1114, %v1118
        %v1171 = vsel %vm1153, %v1116, %v1120
        %v1172 = vsel %vm1153, %v1110, %v1114
        %v1173 = vsel %vm1153, %v1112, %v1116
        %v1174 = vsel %vm1153, %v1106, %v1110
        %v1175 = vsel %vm1153, %v1108, %v1112
        %v1176 = vsel %vm1153, %v1150, %v1106
        %v1177 = vsel %vm1153, %v1152, %v1108
        %1178 = vst [vmem:[#allocation2 + $0x600] sm:$0xff] %v1174
        %1179 = vst [vmem:[#allocation2 + $0x608] sm:$0xff] %v1172
        %1180 = vst [vmem:[#allocation2 + $0x610] sm:$0xff] %v1170
        %1181 = vst [vmem:[#allocation2 + $0x618] sm:$0xff] %v1168
        %1182 = vst [vmem:[#allocation2 + $0x620] sm:$0xff] %v1166
        %1183 = vst [vmem:[#allocation2 + $0x628] sm:$0xff] %v1164
        %1184 = vst [vmem:[#allocation2 + $0x630] sm:$0xff] %v1162
        %1185 = vst [vmem:[#allocation2 + $0x638] sm:$0xff] %v1160
        %1186 = vst [vmem:[#allocation2 + $0x640] sm:$0xff] %v1158
        %1187 = vst [vmem:[#allocation2 + $0x648] sm:$0xff] %v1156
        %1188 = vst [vmem:[#allocation2 + $0x650] sm:$0xff] %v1154
        %1189 = vst [vmem:[#allocation2 + $0x658] sm:$0xff] %v1176
        %1190 = vst [vmem:[#allocation2 + $0x660] sm:$0xff] %v1175
        %1191 = vst [vmem:[#allocation2 + $0x668] sm:$0xff] %v1173
        %1192 = vst [vmem:[#allocation2 + $0x670] sm:$0xff] %v1171
        %1193 = vst [vmem:[#allocation2 + $0x678] sm:$0xff] %v1169
        %1194 = vst [vmem:[#allocation2 + $0x680] sm:$0xff] %v1167
        %1195 = vst [vmem:[#allocation2 + $0x688] sm:$0xff] %v1165
        %1196 = vst [vmem:[#allocation2 + $0x690] sm:$0xff] %v1163
        %1197 = vst [vmem:[#allocation2 + $0x698] sm:$0xff] %v1161
        %1198 = vst [vmem:[#allocation2 + $0x6a0] sm:$0xff] %v1159
        %1199 = vst [vmem:[#allocation2 + $0x6a8] sm:$0xff] %v1157
        %1200 = vst [vmem:[#allocation2 + $0x6b0] sm:$0xff] %v1155
        %1201 = vst [vmem:[#allocation2 + $0x6b8] sm:$0xff] %v1177
        %v1202 = vld [vmem:[#allocation2] sm:$0xff]
        %v1203 = vld [vmem:[#allocation2 + $0x8] sm:$0xff]
        %v1204 = vld [vmem:[#allocation2 + $0x10] sm:$0xff]
        %v1205 = vld [vmem:[#allocation2 + $0x18] sm:$0xff]
        %v1206 = vld [vmem:[#allocation2 + $0x20] sm:$0xff]
        %v1207 = vld [vmem:[#allocation2 + $0x28] sm:$0xff]
        %v1208 = vld [vmem:[#allocation2 + $0x30] sm:$0xff]
        %v1209 = vld [vmem:[#allocation2 + $0x38] sm:$0xff]
        %v1210 = vld [vmem:[#allocation2 + $0x40] sm:$0xff]
        %v1211 = vld [vmem:[#allocation2 + $0x48] sm:$0xff]
        %v1212 = vld [vmem:[#allocation2 + $0x50] sm:$0xff]
        %v1213 = vld [vmem:[#allocation2 + $0x58] sm:$0xff]
        %v1214 = vld [vmem:[#allocation2 + $0x60] sm:$0xff]
        %v1215 = vld [vmem:[#allocation2 + $0x68] sm:$0xff]
        %v1216 = vld [vmem:[#allocation2 + $0x70] sm:$0xff]
        %v1217 = vld [vmem:[#allocation2 + $0x78] sm:$0xff]
        %v1218 = vld [vmem:[#allocation2 + $0x80] sm:$0xff]
        %v1219 = vld [vmem:[#allocation2 + $0x88] sm:$0xff]
        %v1220 = vld [vmem:[#allocation2 + $0x90] sm:$0xff]
        %v1221 = vld [vmem:[#allocation2 + $0x98] sm:$0xff]
        %v1222 = vld [vmem:[#allocation2 + $0xa0] sm:$0xff]
        %v1223 = vld [vmem:[#allocation2 + $0xa8] sm:$0xff]
        %v1224 = vld [vmem:[#allocation2 + $0xb0] sm:$0xff]
        %v1225 = vld [vmem:[#allocation2 + $0xb8] sm:$0xff]
        %v1226 = vld [vmem:[#allocation2 + $0xc0] sm:$0xff]
        %v1227 = vld [vmem:[#allocation2 + $0xc8] sm:$0xff]
        %v1228 = vld [vmem:[#allocation2 + $0xd0] sm:$0xff]
        %v1229 = vld [vmem:[#allocation2 + $0xd8] sm:$0xff]
        %v1230 = vld [vmem:[#allocation2 + $0xe0] sm:$0xff]
        %v1231 = vld [vmem:[#allocation2 + $0xe8] sm:$0xff]
        %v1232 = vld [vmem:[#allocation2 + $0xf0] sm:$0xff]
        %v1233 = vld [vmem:[#allocation2 + $0xf8] sm:$0xff]
        %v1234 = vld [vmem:[#allocation2 + $0x100] sm:$0xff]
        %v1235 = vld [vmem:[#allocation2 + $0x108] sm:$0xff]
        %v1236 = vld [vmem:[#allocation2 + $0x110] sm:$0xff]
        %v1237 = vld [vmem:[#allocation2 + $0x118] sm:$0xff]
        %v1238 = vld [vmem:[#allocation2 + $0x120] sm:$0xff]
        %v1239 = vld [vmem:[#allocation2 + $0x128] sm:$0xff]
        %v1240 = vld [vmem:[#allocation2 + $0x130] sm:$0xff]
        %v1241 = vld [vmem:[#allocation2 + $0x138] sm:$0xff]
        %v1242 = vld [vmem:[#allocation2 + $0x140] sm:$0xff]
        %v1243 = vld [vmem:[#allocation2 + $0x148] sm:$0xff]
        %v1244 = vld [vmem:[#allocation2 + $0x150] sm:$0xff]
        %v1245 = vld [vmem:[#allocation2 + $0x158] sm:$0xff]
        %v1246 = vld [vmem:[#allocation2 + $0x160] sm:$0xff]
        %v1247 = vld [vmem:[#allocation2 + $0x168] sm:$0xff]
        %v1248 = vld [vmem:[#allocation2 + $0x170] sm:$0xff]
        %v1249 = vld [vmem:[#allocation2 + $0x178] sm:$0xff]
        %v1250 = vld [vmem:[#allocation2 + $0x180] sm:$0xff]
        %v1251 = vld [vmem:[#allocation2 + $0x188] sm:$0xff]
        %v1252 = vld [vmem:[#allocation2 + $0x190] sm:$0xff]
        %v1253 = vld [vmem:[#allocation2 + $0x198] sm:$0xff]
        %v1254 = vld [vmem:[#allocation2 + $0x1a0] sm:$0xff]
        %v1255 = vld [vmem:[#allocation2 + $0x1a8] sm:$0xff]
        %v1256 = vld [vmem:[#allocation2 + $0x1b0] sm:$0xff]
        %v1257 = vld [vmem:[#allocation2 + $0x1b8] sm:$0xff]
        %v1258 = vld [vmem:[#allocation2 + $0x1c0] sm:$0xff]
        %v1259 = vld [vmem:[#allocation2 + $0x1c8] sm:$0xff]
        %v1260 = vld [vmem:[#allocation2 + $0x1d0] sm:$0xff]
        %v1261 = vld [vmem:[#allocation2 + $0x1d8] sm:$0xff]
        %v1262 = vld [vmem:[#allocation2 + $0x1e0] sm:$0xff]
        %v1263 = vld [vmem:[#allocation2 + $0x1e8] sm:$0xff]
        %v1264 = vld [vmem:[#allocation2 + $0x1f0] sm:$0xff]
        %v1265 = vld [vmem:[#allocation2 + $0x1f8] sm:$0xff]
        %v1266 = vld [vmem:[#allocation2 + $0x200] sm:$0xff]
        %v1267 = vld [vmem:[#allocation2 + $0x208] sm:$0xff]
        %v1268 = vld [vmem:[#allocation2 + $0x210] sm:$0xff]
        %v1269 = vld [vmem:[#allocation2 + $0x218] sm:$0xff]
        %v1270 = vld [vmem:[#allocation2 + $0x220] sm:$0xff]
        %v1271 = vld [vmem:[#allocation2 + $0x228] sm:$0xff]
        %v1272 = vld [vmem:[#allocation2 + $0x230] sm:$0xff]
        %v1273 = vld [vmem:[#allocation2 + $0x238] sm:$0xff]
        %v1274 = vld [vmem:[#allocation2 + $0x240] sm:$0xff]
        %v1275 = vld [vmem:[#allocation2 + $0x248] sm:$0xff]
        %v1276 = vld [vmem:[#allocation2 + $0x250] sm:$0xff]
        %v1277 = vld [vmem:[#allocation2 + $0x258] sm:$0xff]
        %v1278 = vld [vmem:[#allocation2 + $0x260] sm:$0xff]
        %v1279 = vld [vmem:[#allocation2 + $0x268] sm:$0xff]
        %v1280 = vld [vmem:[#allocation2 + $0x270] sm:$0xff]
        %v1281 = vld [vmem:[#allocation2 + $0x278] sm:$0xff]
        %v1282 = vld [vmem:[#allocation2 + $0x280] sm:$0xff]
        %v1283 = vld [vmem:[#allocation2 + $0x288] sm:$0xff]
        %v1284 = vld [vmem:[#allocation2 + $0x290] sm:$0xff]
        %v1285 = vld [vmem:[#allocation2 + $0x298] sm:$0xff]
        %v1286 = vld [vmem:[#allocation2 + $0x2a0] sm:$0xff]
        %v1287 = vld [vmem:[#allocation2 + $0x2a8] sm:$0xff]
        %v1288 = vld [vmem:[#allocation2 + $0x2b0] sm:$0xff]
        %v1289 = vld [vmem:[#allocation2 + $0x2b8] sm:$0xff]
        %v1290 = vld [vmem:[#allocation2 + $0x2c0] sm:$0xff]
        %v1291 = vld [vmem:[#allocation2 + $0x2c8] sm:$0xff]
        %v1292 = vld [vmem:[#allocation2 + $0x2d0] sm:$0xff]
        %v1293 = vld [vmem:[#allocation2 + $0x2d8] sm:$0xff]
        %v1294 = vld [vmem:[#allocation2 + $0x2e0] sm:$0xff]
        %v1295 = vld [vmem:[#allocation2 + $0x2e8] sm:$0xff]
        %v1296 = vld [vmem:[#allocation2 + $0x2f0] sm:$0xff]
        %v1297 = vld [vmem:[#allocation2 + $0x2f8] sm:$0xff]
        %v1298 = vld [vmem:[#allocation2 + $0x300] sm:$0xff]
        %v1299 = vld [vmem:[#allocation2 + $0x308] sm:$0xff]
        %v1300 = vld [vmem:[#allocation2 + $0x310] sm:$0xff]
        %v1301 = vld [vmem:[#allocation2 + $0x318] sm:$0xff]
        %v1302 = vld [vmem:[#allocation2 + $0x320] sm:$0xff]
        %v1303 = vld [vmem:[#allocation2 + $0x328] sm:$0xff]
        %v1304 = vld [vmem:[#allocation2 + $0x330] sm:$0xff]
        %v1305 = vld [vmem:[#allocation2 + $0x338] sm:$0xff]
        %v1306 = vld [vmem:[#allocation2 + $0x340] sm:$0xff]
        %v1307 = vld [vmem:[#allocation2 + $0x348] sm:$0xff]
        %v1308 = vld [vmem:[#allocation2 + $0x350] sm:$0xff]
        %v1309 = vld [vmem:[#allocation2 + $0x358] sm:$0xff]
        %v1310 = vld [vmem:[#allocation2 + $0x360] sm:$0xff]
        %v1311 = vld [vmem:[#allocation2 + $0x368] sm:$0xff]
        %v1312 = vld [vmem:[#allocation2 + $0x370] sm:$0xff]
        %v1313 = vld [vmem:[#allocation2 + $0x378] sm:$0xff]
        %v1314 = vld [vmem:[#allocation2 + $0x380] sm:$0xff]
        %v1315 = vld [vmem:[#allocation2 + $0x388] sm:$0xff]
        %v1316 = vld [vmem:[#allocation2 + $0x390] sm:$0xff]
        %v1317 = vld [vmem:[#allocation2 + $0x398] sm:$0xff]
        %v1318 = vld [vmem:[#allocation2 + $0x3a0] sm:$0xff]
        %v1319 = vld [vmem:[#allocation2 + $0x3a8] sm:$0xff]
        %v1320 = vld [vmem:[#allocation2 + $0x3b0] sm:$0xff]
        %v1321 = vld [vmem:[#allocation2 + $0x3b8] sm:$0xff]
        %v1322 = vld [vmem:[#allocation2 + $0x3c0] sm:$0xff]
        %v1323 = vld [vmem:[#allocation2 + $0x3c8] sm:$0xff]
        %v1324 = vld [vmem:[#allocation2 + $0x3d0] sm:$0xff]
        %v1325 = vld [vmem:[#allocation2 + $0x3d8] sm:$0xff]
        %v1326 = vld [vmem:[#allocation2 + $0x3e0] sm:$0xff]
        %v1327 = vld [vmem:[#allocation2 + $0x3e8] sm:$0xff]
        %v1328 = vld [vmem:[#allocation2 + $0x3f0] sm:$0xff]
        %v1329 = vld [vmem:[#allocation2 + $0x3f8] sm:$0xff]
        %v1330 = vld [vmem:[#allocation2 + $0x400] sm:$0xff]
        %v1331 = vld [vmem:[#allocation2 + $0x408] sm:$0xff]
        %v1332 = vld [vmem:[#allocation2 + $0x410] sm:$0xff]
        %v1333 = vld [vmem:[#allocation2 + $0x418] sm:$0xff]
        %v1334 = vld [vmem:[#allocation2 + $0x420] sm:$0xff]
        %v1335 = vld [vmem:[#allocation2 + $0x428] sm:$0xff]
        %v1336 = vld [vmem:[#allocation2 + $0x430] sm:$0xff]
        %v1337 = vld [vmem:[#allocation2 + $0x438] sm:$0xff]
        %v1338 = vld [vmem:[#allocation2 + $0x440] sm:$0xff]
        %v1339 = vld [vmem:[#allocation2 + $0x448] sm:$0xff]
        %v1340 = vld [vmem:[#allocation2 + $0x450] sm:$0xff]
        %v1341 = vld [vmem:[#allocation2 + $0x458] sm:$0xff]
        %v1342 = vld [vmem:[#allocation2 + $0x460] sm:$0xff]
        %v1343 = vld [vmem:[#allocation2 + $0x468] sm:$0xff]
        %v1344 = vld [vmem:[#allocation2 + $0x470] sm:$0xff]
        %v1345 = vld [vmem:[#allocation2 + $0x478] sm:$0xff]
        %v1346 = vld [vmem:[#allocation2 + $0x480] sm:$0xff]
        %v1347 = vld [vmem:[#allocation2 + $0x488] sm:$0xff]
        %v1348 = vld [vmem:[#allocation2 + $0x490] sm:$0xff]
        %v1349 = vld [vmem:[#allocation2 + $0x498] sm:$0xff]
        %v1350 = vld [vmem:[#allocation2 + $0x4a0] sm:$0xff]
        %v1351 = vld [vmem:[#allocation2 + $0x4a8] sm:$0xff]
        %v1352 = vld [vmem:[#allocation2 + $0x4b0] sm:$0xff]
        %v1353 = vld [vmem:[#allocation2 + $0x4b8] sm:$0xff]
        %v1354 = vld [vmem:[#allocation2 + $0x4c0] sm:$0xff]
        %v1355 = vld [vmem:[#allocation2 + $0x4c8] sm:$0xff]
        %v1356 = vld [vmem:[#allocation2 + $0x4d0] sm:$0xff]
        %v1357 = vld [vmem:[#allocation2 + $0x4d8] sm:$0xff]
        %v1358 = vld [vmem:[#allocation2 + $0x4e0] sm:$0xff]
        %v1359 = vld [vmem:[#allocation2 + $0x4e8] sm:$0xff]
        %v1360 = vld [vmem:[#allocation2 + $0x4f0] sm:$0xff]
        %v1361 = vld [vmem:[#allocation2 + $0x4f8] sm:$0xff]
        %v1362 = vld [vmem:[#allocation2 + $0x500] sm:$0xff]
        %v1363 = vld [vmem:[#allocation2 + $0x508] sm:$0xff]
        %v1364 = vld [vmem:[#allocation2 + $0x510] sm:$0xff]
        %v1365 = vld [vmem:[#allocation2 + $0x518] sm:$0xff]
        %v1366 = vld [vmem:[#allocation2 + $0x520] sm:$0xff]
        %v1367 = vld [vmem:[#allocation2 + $0x528] sm:$0xff]
        %v1368 = vld [vmem:[#allocation2 + $0x530] sm:$0xff]
        %v1369 = vld [vmem:[#allocation2 + $0x538] sm:$0xff]
        %v1370 = vld [vmem:[#allocation2 + $0x540] sm:$0xff]
        %v1371 = vld [vmem:[#allocation2 + $0x548] sm:$0xff]
        %v1372 = vld [vmem:[#allocation2 + $0x550] sm:$0xff]
        %v1373 = vld [vmem:[#allocation2 + $0x558] sm:$0xff]
        %v1374 = vld [vmem:[#allocation2 + $0x560] sm:$0xff]
        %v1375 = vld [vmem:[#allocation2 + $0x568] sm:$0xff]
        %v1376 = vld [vmem:[#allocation2 + $0x570] sm:$0xff]
        %v1377 = vld [vmem:[#allocation2 + $0x578] sm:$0xff]
        %v1378 = vld [vmem:[#allocation2 + $0x580] sm:$0xff]
        %v1379 = vld [vmem:[#allocation2 + $0x588] sm:$0xff]
        %v1380 = vld [vmem:[#allocation2 + $0x590] sm:$0xff]
        %v1381 = vld [vmem:[#allocation2 + $0x598] sm:$0xff]
        %v1382 = vld [vmem:[#allocation2 + $0x5a0] sm:$0xff]
        %v1383 = vld [vmem:[#allocation2 + $0x5a8] sm:$0xff]
        %v1384 = vld [vmem:[#allocation2 + $0x5b0] sm:$0xff]
        %v1385 = vld [vmem:[#allocation2 + $0x5b8] sm:$0xff]
        %v1386 = vld [vmem:[#allocation2 + $0x5c0] sm:$0xff]
        %v1387 = vld [vmem:[#allocation2 + $0x5c8] sm:$0xff]
        %v1388 = vld [vmem:[#allocation2 + $0x5d0] sm:$0xff]
        %v1389 = vld [vmem:[#allocation2 + $0x5d8] sm:$0xff]
        %v1390 = vld [vmem:[#allocation2 + $0x5e0] sm:$0xff]
        %v1391 = vld [vmem:[#allocation2 + $0x5e8] sm:$0xff]
        %v1392 = vld [vmem:[#allocation2 + $0x5f0] sm:$0xff]
        %v1393 = vld [vmem:[#allocation2 + $0x5f8] sm:$0xff]
        %v1394 = vld [vmem:[#allocation2 + $0x600] sm:$0xff]
        %v1395 = vld [vmem:[#allocation2 + $0x608] sm:$0xff]
        %v1396 = vld [vmem:[#allocation2 + $0x610] sm:$0xff]
        %v1397 = vld [vmem:[#allocation2 + $0x618] sm:$0xff]
        %v1398 = vld [vmem:[#allocation2 + $0x620] sm:$0xff]
        %v1399 = vld [vmem:[#allocation2 + $0x628] sm:$0xff]
        %v1400 = vld [vmem:[#allocation2 + $0x630] sm:$0xff]
        %v1401 = vld [vmem:[#allocation2 + $0x638] sm:$0xff]
        %v1402 = vld [vmem:[#allocation2 + $0x640] sm:$0xff]
        %v1403 = vld [vmem:[#allocation2 + $0x648] sm:$0xff]
        %v1404 = vld [vmem:[#allocation2 + $0x650] sm:$0xff]
        %v1405 = vld [vmem:[#allocation2 + $0x658] sm:$0xff]
        %v1406 = vld [vmem:[#allocation2 + $0x660] sm:$0xff]
        %v1407 = vld [vmem:[#allocation2 + $0x668] sm:$0xff]
        %v1408 = vld [vmem:[#allocation2 + $0x670] sm:$0xff]
        %v1409 = vld [vmem:[#allocation2 + $0x678] sm:$0xff]
        %v1410 = vld [vmem:[#allocation2 + $0x680] sm:$0xff]
        %v1411 = vld [vmem:[#allocation2 + $0x688] sm:$0xff]
        %v1412 = vld [vmem:[#allocation2 + $0x690] sm:$0xff]
        %v1413 = vld [vmem:[#allocation2 + $0x698] sm:$0xff]
        %v1414 = vld [vmem:[#allocation2 + $0x6a0] sm:$0xff]
        %v1415 = vld [vmem:[#allocation2 + $0x6a8] sm:$0xff]
        %v1416 = vld [vmem:[#allocation2 + $0x6b0] sm:$0xff]
        %v1417 = vld [vmem:[#allocation2 + $0x6b8] sm:$0xff]
        %v1418 = vld [vmem:[%s1] sm:$0xff]
        %v1419 = vld [vmem:[%s1 + $0x8] sm:$0xff]
        %v1420 = vld [vmem:[%s1 + $0x10] sm:$0xff]
        %v1421 = vld [vmem:[%s1 + $0x18] sm:$0xff]
        %v1422 = vld [vmem:[%s1 + $0x20] sm:$0xff]
        %v1423 = vld [vmem:[%s1 + $0x28] sm:$0xff]
        %v1424 = vld [vmem:[%s1 + $0x30] sm:$0xff]
        %v1425 = vld [vmem:[%s1 + $0x38] sm:$0xff]
        %v1426 = vld [vmem:[%s2] sm:$0xff]
        %v1427 = vld [vmem:[%s2 + $0x8] sm:$0xff]
        %v1428 = vld [vmem:[%s2 + $0x10] sm:$0xff]
        %v1429 = vld [vmem:[%s2 + $0x18] sm:$0xff]
        %1431 = vset.pattern.permute.xlu0 0
        %1432 = vperm.xlu0 %1431, %v1426
        %v1433 = vpop.permute.xlu0 %1432
        %1436 = vset.pattern.permute.xlu0 0
        %1437 = vperm.xlu0 %1436, %v1427
        %v1438 = vpop.permute.xlu0 %1437
        %1441 = vset.pattern.permute.xlu0 0
        %1442 = vperm.xlu0 %1441, %v1428
        %v1443 = vpop.permute.xlu0 %1442
        %1446 = vset.pattern.permute.xlu0 0
        %1447 = vperm.xlu0 %1446, %v1429
        %v1448 = vpop.permute.xlu0 %1447
        %vm1450 = vcmask 130048
        %v1452 = vsel %vm1450, %v1419, 0
        %v1455 = vsel %vm1450, %v1421, 0
        %v1458 = vsel %vm1450, %v1423, 0
        %v1461 = vsel %vm1450, %v1425, 0
        %1463 = vmatprep.subr.mxu0 %v1203
        %1464 = vmatpush1.msra.mxu0 %v1202
        %1465 = vmatprep.subr.mxu0 %v1215
        %1466 = vmatpush1.msra.mxu0 %v1214
        %1467 = vmatprep.subr.mxu0 %v1227
        %1468 = vmatpush1.msra.mxu0 %v1226
        %1469 = vmatprep.subr.mxu0 %v1239
        %1470 = vmatpush1.msra.mxu0 %v1238
        %1471 = vmatprep.subr.mxu0 %v1251
        %1472 = vmatpush1.msra.mxu0 %v1250
        %1473 = vmatprep.subr.mxu0 %v1263
        %1474 = vmatpush1.msra.mxu0 %v1262
        %1475 = vmatprep.subr.mxu0 %v1275
        %1476 = vmatpush1.msra.mxu0 %v1274
        %1477 = vmatprep.subr.mxu0 %v1287
        %1478 = vmatpush1.msra.mxu0 %v1286
        %1479 = vmatprep.subr.mxu0 %v1299
        %1480 = vmatpush1.msra.mxu0 %v1298
        %1481 = vmatprep.subr.mxu0 %v1311
        %1482 = vmatpush1.msra.mxu0 %v1310
        %1483 = vmatprep.subr.mxu0 %v1323
        %1484 = vmatpush1.msra.mxu0 %v1322
        %1485 = vmatprep.subr.mxu0 %v1335
        %1486 = vmatpush1.msra.mxu0 %v1334
        %1487 = vmatprep.subr.mxu0 %v1347
        %1488 = vmatpush1.msra.mxu0 %v1346
        %1489 = vmatprep.subr.mxu0 %v1359
        %1490 = vmatpush1.msra.mxu0 %v1358
        %1491 = vmatprep.subr.mxu0 %v1371
        %1492 = vmatpush1.msra.mxu0 %v1370
        %1493 = vmatprep.subr.mxu0 %v1383
        %1494 = vmatpush1.msra.mxu0 %v1382
        %1495 = vmatprep.subr.mxu0 %v1395
        %1496 = vmatpush1.msra.mxu0 %v1394
        %1497 = vmatprep.subr.mxu0 %v1407
        %1498 = vmatpush1.msra.mxu0 %v1406
        %1499 = vmatprep.subr.mxu0 0.0
        %1500 = vmatpush1.msra.mxu0 0.0
        %1501 = vmatprep.subr.mxu0 0.0
        %1502 = vmatpush1.msra.mxu0 0.0
        %1503 = vmatprep.subr.mxu0 0.0
        %1504 = vmatpush1.msra.mxu0 0.0
        %1505 = vmatprep.subr.mxu0 0.0
        %1506 = vmatpush1.msra.mxu0 0.0
        %1507 = vmatprep.subr.mxu0 0.0
        %1508 = vmatpush1.msra.mxu0 0.0
        %1509 = vmatprep.subr.mxu0 0.0
        %1510 = vmatpush1.msra.mxu0 0.0
        %1511 = vmatprep.subr.mxu0 0.0
        %1512 = vmatpush1.msra.mxu0 0.0
        %1513 = vmatprep.subr.mxu0 0.0
        %1514 = vmatpush1.msra.mxu0 0.0
        %1515 = vmatprep.subr.mxu0 0.0
        %1516 = vmatpush1.msra.mxu0 0.0
        %1517 = vmatprep.subr.mxu0 0.0
        %1518 = vmatpush1.msra.mxu0 0.0
        %1519 = vmatprep.subr.mxu0 0.0
        %1520 = vmatpush1.msra.mxu0 0.0
        %1521 = vmatprep.subr.mxu0 0.0
        %1522 = vmatpush1.msra.mxu0 0.0
        %1523 = vmatprep.subr.mxu0 0.0
        %1524 = vmatpush1.msra.mxu0 0.0
        %1525 = vmatprep.subr.mxu0 0.0
        %1526 = vmatpush1.msra.mxu0 0.0
        %1527 = vmatprep.mubr.f32.mxu0 %v1452
        %1528 = vmatmul.mubr.f32.gmra.mrb[0].mxu0 %v1418
        %v1529 = vpop.f32.mrb[0].mxu0
        %v1530 = vadd.f32 %v1433, %v1529
        %v1531 = vpop.f32.mrb[0].mxu0
        %v1532 = vadd.f32 %v1433, %v1531
        %1533 = vmatprep.mubr.f32.mxu0 %v1455
        %1534 = vmatmul.mubr.f32.gmra.mrb[0].mxu0 %v1420
        %v1535 = vpop.f32.mrb[0].mxu0
        %v1536 = vadd.f32 %v1438, %v1535
        %v1537 = vpop.f32.mrb[0].mxu0
        %v1538 = vadd.f32 %v1438, %v1537
        %1539 = vmatprep.mubr.f32.mxu0 %v1458
        %1540 = vmatmul.mubr.f32.gmra.mrb[0].mxu0 %v1422
        %v1541 = vpop.f32.mrb[0].mxu0
        %v1542 = vadd.f32 %v1443, %v1541
        %v1543 = vpop.f32.mrb[0].mxu0
        %v1544 = vadd.f32 %v1443, %v1543
        %1545 = vmatprep.mubr.f32.mxu0 %v1461
        %1546 = vmatmul.mubr.f32.gmra.mrb[0].mxu0 %v1424
        %v1547 = vpop.f32.mrb[0].mxu0
        %v1548 = vadd.f32 %v1448, %v1547
        %v1549 = vpop.f32.mrb[0].mxu0
        %v1550 = vadd.f32 %v1448, %v1549
        %1551 = vdwg.mxu0
        %1552 = vmatprep.subr.mxu0 %v1205
        %1553 = vmatpush1.msra.mxu0 %v1204
        %1554 = vmatprep.subr.mxu0 %v1217
        %1555 = vmatpush1.msra.mxu0 %v1216
        %1556 = vmatprep.subr.mxu0 %v1229
        %1557 = vmatpush1.msra.mxu0 %v1228
        %1558 = vmatprep.subr.mxu0 %v1241
        %1559 = vmatpush1.msra.mxu0 %v1240
        %1560 = vmatprep.subr.mxu0 %v1253
        %1561 = vmatpush1.msra.mxu0 %v1252
        %1562 = vmatprep.subr.mxu0 %v1265
        %1563 = vmatpush1.msra.mxu0 %v1264
        %1564 = vmatprep.subr.mxu0 %v1277
        %1565 = vmatpush1.msra.mxu0 %v1276
        %1566 = vmatprep.subr.mxu0 %v1289
        %1567 = vmatpush1.msra.mxu0 %v1288
        %1568 = vmatprep.subr.mxu0 %v1301
        %1569 = vmatpush1.msra.mxu0 %v1300
        %1570 = vmatprep.subr.mxu0 %v1313
        %1571 = vmatpush1.msra.mxu0 %v1312
        %1572 = vmatprep.subr.mxu0 %v1325
        %1573 = vmatpush1.msra.mxu0 %v1324
        %1574 = vmatprep.subr.mxu0 %v1337
        %1575 = vmatpush1.msra.mxu0 %v1336
        %1576 = vmatprep.subr.mxu0 %v1349
        %1577 = vmatpush1.msra.mxu0 %v1348
        %1578 = vmatprep.subr.mxu0 %v1361
        %1579 = vmatpush1.msra.mxu0 %v1360
        %1580 = vmatprep.subr.mxu0 %v1373
        %1581 = vmatpush1.msra.mxu0 %v1372
        %1582 = vmatprep.subr.mxu0 %v1385
        %1583 = vmatpush1.msra.mxu0 %v1384
        %1584 = vmatprep.subr.mxu0 %v1397
        %1585 = vmatpush1.msra.mxu0 %v1396
        %1586 = vmatprep.subr.mxu0 %v1409
        %1587 = vmatpush1.msra.mxu0 %v1408
        %1588 = vmatprep.subr.mxu0 0.0
        %1589 = vmatpush1.msra.mxu0 0.0
        %1590 = vmatprep.subr.mxu0 0.0
        %1591 = vmatpush1.msra.mxu0 0.0
        %1592 = vmatprep.subr.mxu0 0.0
        %1593 = vmatpush1.msra.mxu0 0.0
        %1594 = vmatprep.subr.mxu0 0.0
        %1595 = vmatpush1.msra.mxu0 0.0
        %1596 = vmatprep.subr.mxu0 0.0
        %1597 = vmatpush1.msra.mxu0 0.0
        %1598 = vmatprep.subr.mxu0 0.0
        %1599 = vmatpush1.msra.mxu0 0.0
        %1600 = vmatprep.subr.mxu0 0.0
        %1601 = vmatpush1.msra.mxu0 0.0
        %1602 = vmatprep.subr.mxu0 0.0
        %1603 = vmatpush1.msra.mxu0 0.0
        %1604 = vmatprep.subr.mxu0 0.0
        %1605 = vmatpush1.msra.mxu0 0.0
        %1606 = vmatprep.subr.mxu0 0.0
        %1607 = vmatpush1.msra.mxu0 0.0
        %1608 = vmatprep.subr.mxu0 0.0
        %1609 = vmatpush1.msra.mxu0 0.0
        %1610 = vmatprep.subr.mxu0 0.0
        %1611 = vmatpush1.msra.mxu0 0.0
        %1612 = vmatprep.subr.mxu0 0.0
        %1613 = vmatpush1.msra.mxu0 0.0
        %1614 = vmatprep.subr.mxu0 0.0
        %1615 = vmatpush1.msra.mxu0 0.0
        %1616 = vmatprep.mubr.f32.mxu0 %v1452
        %1617 = vmatmul.mubr.f32.gmra.mrb[0].mxu0 %v1418
        %v1618 = vpop.f32.mrb[0].mxu0
        %v1619 = vadd.f32 %v1433, %v1618
        %v1620 = vpop.f32.mrb[0].mxu0
        %v1621 = vadd.f32 %v1433, %v1620
        %1622 = vmatprep.mubr.f32.mxu0 %v1455
        %1623 = vmatmul.mubr.f32.gmra.mrb[0].mxu0 %v1420
        %v1624 = vpop.f32.mrb[0].mxu0
        %v1625 = vadd.f32 %v1438, %v1624
        %v1626 = vpop.f32.mrb[0].mxu0
        %v1627 = vadd.f32 %v1438, %v1626
        %1628 = vmatprep.mubr.f32.mxu0 %v1458
        %1629 = vmatmul.mubr.f32.gmra.mrb[0].mxu0 %v1422
        %v1630 = vpop.f32.mrb[0].mxu0
        %v1631 = vadd.f32 %v1443, %v1630
        %v1632 = vpop.f32.mrb[0].mxu0
        %v1633 = vadd.f32 %v1443, %v1632
        %1634 = vmatprep.mubr.f32.mxu0 %v1461
        %1635 = vmatmul.mubr.f32.gmra.mrb[0].mxu0 %v1424
        %v1636 = vpop.f32.mrb[0].mxu0
        %v1637 = vadd.f32 %v1448, %v1636
        %v1638 = vpop.f32.mrb[0].mxu0
        %v1639 = vadd.f32 %v1448, %v1638
        %1640 = vdwg.mxu0
        %1641 = vmatprep.subr.mxu0 %v1207
        %1642 = vmatpush1.msra.mxu0 %v1206
        %1643 = vmatprep.subr.mxu0 %v1219
        %1644 = vmatpush1.msra.mxu0 %v1218
        %1645 = vmatprep.subr.mxu0 %v1231
        %1646 = vmatpush1.msra.mxu0 %v1230
        %1647 = vmatprep.subr.mxu0 %v1243
        %1648 = vmatpush1.msra.mxu0 %v1242
        %1649 = vmatprep.subr.mxu0 %v1255
        %1650 = vmatpush1.msra.mxu0 %v1254
        %1651 = vmatprep.subr.mxu0 %v1267
        %1652 = vmatpush1.msra.mxu0 %v1266
        %1653 = vmatprep.subr.mxu0 %v1279
        %1654 = vmatpush1.msra.mxu0 %v1278
        %1655 = vmatprep.subr.mxu0 %v1291
        %1656 = vmatpush1.msra.mxu0 %v1290
        %1657 = vmatprep.subr.mxu0 %v1303
        %1658 = vmatpush1.msra.mxu0 %v1302
        %1659 = vmatprep.subr.mxu0 %v1315
        %1660 = vmatpush1.msra.mxu0 %v1314
        %1661 = vmatprep.subr.mxu0 %v1327
        %1662 = vmatpush1.msra.mxu0 %v1326
        %1663 = vmatprep.subr.mxu0 %v1339
        %1664 = vmatpush1.msra.mxu0 %v1338
        %1665 = vmatprep.subr.mxu0 %v1351
        %1666 = vmatpush1.msra.mxu0 %v1350
        %1667 = vmatprep.subr.mxu0 %v1363
        %1668 = vmatpush1.msra.mxu0 %v1362
        %1669 = vmatprep.subr.mxu0 %v1375
        %1670 = vmatpush1.msra.mxu0 %v1374
        %1671 = vmatprep.subr.mxu0 %v1387
        %1672 = vmatpush1.msra.mxu0 %v1386
        %1673 = vmatprep.subr.mxu0 %v1399
        %1674 = vmatpush1.msra.mxu0 %v1398
        %1675 = vmatprep.subr.mxu0 %v1411
        %1676 = vmatpush1.msra.mxu0 %v1410
        %1677 = vmatprep.subr.mxu0 0.0
        %1678 = vmatpush1.msra.mxu0 0.0
        %1679 = vmatprep.subr.mxu0 0.0
        %1680 = vmatpush1.msra.mxu0 0.0
        %1681 = vmatprep.subr.mxu0 0.0
        %1682 = vmatpush1.msra.mxu0 0.0
        %1683 = vmatprep.subr.mxu0 0.0
        %1684 = vmatpush1.msra.mxu0 0.0
        %1685 = vmatprep.subr.mxu0 0.0
        %1686 = vmatpush1.msra.mxu0 0.0
        %1687 = vmatprep.subr.mxu0 0.0
        %1688 = vmatpush1.msra.mxu0 0.0
        %1689 = vmatprep.subr.mxu0 0.0
        %1690 = vmatpush1.msra.mxu0 0.0
        %1691 = vmatprep.subr.mxu0 0.0
        %1692 = vmatpush1.msra.mxu0 0.0
        %1693 = vmatprep.subr.mxu0 0.0
        %1694 = vmatpush1.msra.mxu0 0.0
        %1695 = vmatprep.subr.mxu0 0.0
        %1696 = vmatpush1.msra.mxu0 0.0
        %1697 = vmatprep.subr.mxu0 0.0
        %1698 = vmatpush1.msra.mxu0 0.0
        %1699 = vmatprep.subr.mxu0 0.0
        %1700 = vmatpush1.msra.mxu0 0.0
        %1701 = vmatprep.subr.mxu0 0.0
        %1702 = vmatpush1.msra.mxu0 0.0
        %1703 = vmatprep.subr.mxu0 0.0
        %1704 = vmatpush1.msra.mxu0 0.0
        %1705 = vmatprep.mubr.f32.mxu0 %v1452
        %1706 = vmatmul.mubr.f32.gmra.mrb[0].mxu0 %v1418
        %v1707 = vpop.f32.mrb[0].mxu0
        %v1708 = vadd.f32 %v1433, %v1707
        %v1709 = vpop.f32.mrb[0].mxu0
        %v1710 = vadd.f32 %v1433, %v1709
        %1711 = vmatprep.mubr.f32.mxu0 %v1455
        %1712 = vmatmul.mubr.f32.gmra.mrb[0].mxu0 %v1420
        %v1713 = vpop.f32.mrb[0].mxu0
        %v1714 = vadd.f32 %v1438, %v1713
        %v1715 = vpop.f32.mrb[0].mxu0
        %v1716 = vadd.f32 %v1438, %v1715
        %1717 = vmatprep.mubr.f32.mxu0 %v1458
        %1718 = vmatmul.mubr.f32.gmra.mrb[0].mxu0 %v1422
        %v1719 = vpop.f32.mrb[0].mxu0
        %v1720 = vadd.f32 %v1443, %v1719
        %v1721 = vpop.f32.mrb[0].mxu0
        %v1722 = vadd.f32 %v1443, %v1721
        %1723 = vmatprep.mubr.f32.mxu0 %v1461
        %1724 = vmatmul.mubr.f32.gmra.mrb[0].mxu0 %v1424
        %v1725 = vpop.f32.mrb[0].mxu0
        %v1726 = vadd.f32 %v1448, %v1725
        %v1727 = vpop.f32.mrb[0].mxu0
        %v1728 = vadd.f32 %v1448, %v1727
        %1729 = vdwg.mxu0
        %1730 = vmatprep.subr.mxu0 %v1209
        %1731 = vmatpush1.msra.mxu0 %v1208
        %1732 = vmatprep.subr.mxu0 %v1221
        %1733 = vmatpush1.msra.mxu0 %v1220
        %1734 = vmatprep.subr.mxu0 %v1233
        %1735 = vmatpush1.msra.mxu0 %v1232
        %1736 = vmatprep.subr.mxu0 %v1245
        %1737 = vmatpush1.msra.mxu0 %v1244
        %1738 = vmatprep.subr.mxu0 %v1257
        %1739 = vmatpush1.msra.mxu0 %v1256
        %1740 = vmatprep.subr.mxu0 %v1269
        %1741 = vmatpush1.msra.mxu0 %v1268
        %1742 = vmatprep.subr.mxu0 %v1281
        %1743 = vmatpush1.msra.mxu0 %v1280
        %1744 = vmatprep.subr.mxu0 %v1293
        %1745 = vmatpush1.msra.mxu0 %v1292
        %1746 = vmatprep.subr.mxu0 %v1305
        %1747 = vmatpush1.msra.mxu0 %v1304
        %1748 = vmatprep.subr.mxu0 %v1317
        %1749 = vmatpush1.msra.mxu0 %v1316
        %1750 = vmatprep.subr.mxu0 %v1329
        %1751 = vmatpush1.msra.mxu0 %v1328
        %1752 = vmatprep.subr.mxu0 %v1341
        %1753 = vmatpush1.msra.mxu0 %v1340
        %1754 = vmatprep.subr.mxu0 %v1353
        %1755 = vmatpush1.msra.mxu0 %v1352
        %1756 = vmatprep.subr.mxu0 %v1365
        %1757 = vmatpush1.msra.mxu0 %v1364
        %1758 = vmatprep.subr.mxu0 %v1377
        %1759 = vmatpush1.msra.mxu0 %v1376
        %1760 = vmatprep.subr.mxu0 %v1389
        %1761 = vmatpush1.msra.mxu0 %v1388
        %1762 = vmatprep.subr.mxu0 %v1401
        %1763 = vmatpush1.msra.mxu0 %v1400
        %1764 = vmatprep.subr.mxu0 %v1413
        %1765 = vmatpush1.msra.mxu0 %v1412
        %1766 = vmatprep.subr.mxu0 0.0
        %1767 = vmatpush1.msra.mxu0 0.0
        %1768 = vmatprep.subr.mxu0 0.0
        %1769 = vmatpush1.msra.mxu0 0.0
        %1770 = vmatprep.subr.mxu0 0.0
        %1771 = vmatpush1.msra.mxu0 0.0
        %1772 = vmatprep.subr.mxu0 0.0
        %1773 = vmatpush1.msra.mxu0 0.0
        %1774 = vmatprep.subr.mxu0 0.0
        %1775 = vmatpush1.msra.mxu0 0.0
        %1776 = vmatprep.subr.mxu0 0.0
        %1777 = vmatpush1.msra.mxu0 0.0
        %1778 = vmatprep.subr.mxu0 0.0
        %1779 = vmatpush1.msra.mxu0 0.0
        %1780 = vmatprep.subr.mxu0 0.0
        %1781 = vmatpush1.msra.mxu0 0.0
        %1782 = vmatprep.subr.mxu0 0.0
        %1783 = vmatpush1.msra.mxu0 0.0
        %1784 = vmatprep.subr.mxu0 0.0
        %1785 = vmatpush1.msra.mxu0 0.0
        %1786 = vmatprep.subr.mxu0 0.0
        %1787 = vmatpush1.msra.mxu0 0.0
        %1788 = vmatprep.subr.mxu0 0.0
        %1789 = vmatpush1.msra.mxu0 0.0
        %1790 = vmatprep.subr.mxu0 0.0
        %1791 = vmatpush1.msra.mxu0 0.0
        %1792 = vmatprep.subr.mxu0 0.0
        %1793 = vmatpush1.msra.mxu0 0.0
        %1794 = vmatprep.mubr.f32.mxu0 %v1452
        %1795 = vmatmul.mubr.f32.gmra.mrb[0].mxu0 %v1418
        %v1796 = vpop.f32.mrb[0].mxu0
        %v1797 = vadd.f32 %v1433, %v1796
        %v1798 = vpop.f32.mrb[0].mxu0
        %v1799 = vadd.f32 %v1433, %v1798
        %1800 = vmatprep.mubr.f32.mxu0 %v1455
        %1801 = vmatmul.mubr.f32.gmra.mrb[0].mxu0 %v1420
        %v1802 = vpop.f32.mrb[0].mxu0
        %v1803 = vadd.f32 %v1438, %v1802
        %v1804 = vpop.f32.mrb[0].mxu0
        %v1805 = vadd.f32 %v1438, %v1804
        %1806 = vmatprep.mubr.f32.mxu0 %v1458
        %1807 = vmatmul.mubr.f32.gmra.mrb[0].mxu0 %v1422
        %v1808 = vpop.f32.mrb[0].mxu0
        %v1809 = vadd.f32 %v1443, %v1808
        %v1810 = vpop.f32.mrb[0].mxu0
        %v1811 = vadd.f32 %v1443, %v1810
        %1812 = vmatprep.mubr.f32.mxu0 %v1461
        %1813 = vmatmul.mubr.f32.gmra.mrb[0].mxu0 %v1424
        %v1814 = vpop.f32.mrb[0].mxu0
        %v1815 = vadd.f32 %v1448, %v1814
        %v1816 = vpop.f32.mrb[0].mxu0
        %v1817 = vadd.f32 %v1448, %v1816
        %1818 = vdwg.mxu0
        %1819 = vmatprep.subr.mxu0 %v1211
        %1820 = vmatpush1.msra.mxu0 %v1210
        %1821 = vmatprep.subr.mxu0 %v1223
        %1822 = vmatpush1.msra.mxu0 %v1222
        %1823 = vmatprep.subr.mxu0 %v1235
        %1824 = vmatpush1.msra.mxu0 %v1234
        %1825 = vmatprep.subr.mxu0 %v1247
        %1826 = vmatpush1.msra.mxu0 %v1246
        %1827 = vmatprep.subr.mxu0 %v1259
        %1828 = vmatpush1.msra.mxu0 %v1258
        %1829 = vmatprep.subr.mxu0 %v1271
        %1830 = vmatpush1.msra.mxu0 %v1270
        %1831 = vmatprep.subr.mxu0 %v1283
        %1832 = vmatpush1.msra.mxu0 %v1282
        %1833 = vmatprep.subr.mxu0 %v1295
        %1834 = vmatpush1.msra.mxu0 %v1294
        %1835 = vmatprep.subr.mxu0 %v1307
        %1836 = vmatpush1.msra.mxu0 %v1306
        %1837 = vmatprep.subr.mxu0 %v1319
        %1838 = vmatpush1.msra.mxu0 %v1318
        %1839 = vmatprep.subr.mxu0 %v1331
        %1840 = vmatpush1.msra.mxu0 %v1330
        %1841 = vmatprep.subr.mxu0 %v1343
        %1842 = vmatpush1.msra.mxu0 %v1342
        %1843 = vmatprep.subr.mxu0 %v1355
        %1844 = vmatpush1.msra.mxu0 %v1354
        %1845 = vmatprep.subr.mxu0 %v1367
        %1846 = vmatpush1.msra.mxu0 %v1366
        %1847 = vmatprep.subr.mxu0 %v1379
        %1848 = vmatpush1.msra.mxu0 %v1378
        %1849 = vmatprep.subr.mxu0 %v1391
        %1850 = vmatpush1.msra.mxu0 %v1390
        %1851 = vmatprep.subr.mxu0 %v1403
        %1852 = vmatpush1.msra.mxu0 %v1402
        %1853 = vmatprep.subr.mxu0 %v1415
        %1854 = vmatpush1.msra.mxu0 %v1414
        %1855 = vmatprep.subr.mxu0 0.0
        %1856 = vmatpush1.msra.mxu0 0.0
        %1857 = vmatprep.subr.mxu0 0.0
        %1858 = vmatpush1.msra.mxu0 0.0
        %1859 = vmatprep.subr.mxu0 0.0
        %1860 = vmatpush1.msra.mxu0 0.0
        %1861 = vmatprep.subr.mxu0 0.0
        %1862 = vmatpush1.msra.mxu0 0.0
        %1863 = vmatprep.subr.mxu0 0.0
        %1864 = vmatpush1.msra.mxu0 0.0
        %1865 = vmatprep.subr.mxu0 0.0
        %1866 = vmatpush1.msra.mxu0 0.0
        %1867 = vmatprep.subr.mxu0 0.0
        %1868 = vmatpush1.msra.mxu0 0.0
        %1869 = vmatprep.subr.mxu0 0.0
        %1870 = vmatpush1.msra.mxu0 0.0
        %1871 = vmatprep.subr.mxu0 0.0
        %1872 = vmatpush1.msra.mxu0 0.0
        %1873 = vmatprep.subr.mxu0 0.0
        %1874 = vmatpush1.msra.mxu0 0.0
        %1875 = vmatprep.subr.mxu0 0.0
        %1876 = vmatpush1.msra.mxu0 0.0
        %1877 = vmatprep.subr.mxu0 0.0
        %1878 = vmatpush1.msra.mxu0 0.0
        %1879 = vmatprep.subr.mxu0 0.0
        %1880 = vmatpush1.msra.mxu0 0.0
        %1881 = vmatprep.subr.mxu0 0.0
        %1882 = vmatpush1.msra.mxu0 0.0
        %1883 = vmatprep.mubr.f32.mxu0 %v1452
        %1884 = vmatmul.mubr.f32.gmra.mrb[0].mxu0 %v1418
        %v1885 = vpop.f32.mrb[0].mxu0
        %v1886 = vadd.f32 %v1433, %v1885
        %v1887 = vpop.f32.mrb[0].mxu0
        %v1888 = vadd.f32 %v1433, %v1887
        %1889 = vmatprep.mubr.f32.mxu0 %v1455
        %1890 = vmatmul.mubr.f32.gmra.mrb[0].mxu0 %v1420
        %v1891 = vpop.f32.mrb[0].mxu0
        %v1892 = vadd.f32 %v1438, %v1891
        %v1893 = vpop.f32.mrb[0].mxu0
        %v1894 = vadd.f32 %v1438, %v1893
        %1895 = vmatprep.mubr.f32.mxu0 %v1458
        %1896 = vmatmul.mubr.f32.gmra.mrb[0].mxu0 %v1422
        %v1897 = vpop.f32.mrb[0].mxu0
        %v1898 = vadd.f32 %v1443, %v1897
        %v1899 = vpop.f32.mrb[0].mxu0
        %v1900 = vadd.f32 %v1443, %v1899
        %1901 = vmatprep.mubr.f32.mxu0 %v1461
        %1902 = vmatmul.mubr.f32.gmra.mrb[0].mxu0 %v1424
        %v1903 = vpop.f32.mrb[0].mxu0
        %v1904 = vadd.f32 %v1448, %v1903
        %v1905 = vpop.f32.mrb[0].mxu0
        %v1906 = vadd.f32 %v1448, %v1905
        %1907 = vdwg.mxu0
        %1908 = vmatprep.subr.mxu0 %v1213
        %1909 = vmatpush1.msra.mxu0 %v1212
        %1910 = vmatprep.subr.mxu0 %v1225
        %1911 = vmatpush1.msra.mxu0 %v1224
        %1912 = vmatprep.subr.mxu0 %v1237
        %1913 = vmatpush1.msra.mxu0 %v1236
        %1914 = vmatprep.subr.mxu0 %v1249
        %1915 = vmatpush1.msra.mxu0 %v1248
        %1916 = vmatprep.subr.mxu0 %v1261
        %1917 = vmatpush1.msra.mxu0 %v1260
        %1918 = vmatprep.subr.mxu0 %v1273
        %1919 = vmatpush1.msra.mxu0 %v1272
        %1920 = vmatprep.subr.mxu0 %v1285
        %1921 = vmatpush1.msra.mxu0 %v1284
        %1922 = vmatprep.subr.mxu0 %v1297
        %1923 = vmatpush1.msra.mxu0 %v1296
        %1924 = vmatprep.subr.mxu0 %v1309
        %1925 = vmatpush1.msra.mxu0 %v1308
        %1926 = vmatprep.subr.mxu0 %v1321
        %1927 = vmatpush1.msra.mxu0 %v1320
        %1928 = vmatprep.subr.mxu0 %v1333
        %1929 = vmatpush1.msra.mxu0 %v1332
        %1930 = vmatprep.subr.mxu0 %v1345
        %1931 = vmatpush1.msra.mxu0 %v1344
        %1932 = vmatprep.subr.mxu0 %v1357
        %1933 = vmatpush1.msra.mxu0 %v1356
        %1934 = vmatprep.subr.mxu0 %v1369
        %1935 = vmatpush1.msra.mxu0 %v1368
        %1936 = vmatprep.subr.mxu0 %v1381
        %1937 = vmatpush1.msra.mxu0 %v1380
        %1938 = vmatprep.subr.mxu0 %v1393
        %1939 = vmatpush1.msra.mxu0 %v1392
        %1940 = vmatprep.subr.mxu0 %v1405
        %1941 = vmatpush1.msra.mxu0 %v1404
        %1942 = vmatprep.subr.mxu0 %v1417
        %1943 = vmatpush1.msra.mxu0 %v1416
        %1944 = vmatprep.subr.mxu0 0.0
        %1945 = vmatpush1.msra.mxu0 0.0
        %1946 = vmatprep.subr.mxu0 0.0
        %1947 = vmatpush1.msra.mxu0 0.0
        %1948 = vmatprep.subr.mxu0 0.0
        %1949 = vmatpush1.msra.mxu0 0.0
        %1950 = vmatprep.subr.mxu0 0.0
        %1951 = vmatpush1.msra.mxu0 0.0
        %1952 = vmatprep.subr.mxu0 0.0
        %1953 = vmatpush1.msra.mxu0 0.0
        %1954 = vmatprep.subr.mxu0 0.0
        %1955 = vmatpush1.msra.mxu0 0.0
        %1956 = vmatprep.subr.mxu0 0.0
        %1957 = vmatpush1.msra.mxu0 0.0
        %1958 = vmatprep.subr.mxu0 0.0
        %1959 = vmatpush1.msra.mxu0 0.0
        %1960 = vmatprep.subr.mxu0 0.0
        %1961 = vmatpush1.msra.mxu0 0.0
        %1962 = vmatprep.subr.mxu0 0.0
        %1963 = vmatpush1.msra.mxu0 0.0
        %1964 = vmatprep.subr.mxu0 0.0
        %1965 = vmatpush1.msra.mxu0 0.0
        %1966 = vmatprep.subr.mxu0 0.0
        %1967 = vmatpush1.msra.mxu0 0.0
        %1968 = vmatprep.subr.mxu0 0.0
        %1969 = vmatpush1.msra.mxu0 0.0
        %1970 = vmatprep.subr.mxu0 0.0
        %1971 = vmatpush1.msra.mxu0 0.0
        %1972 = vmatprep.mubr.f32.mxu0 %v1452
        %1973 = vmatmul.mubr.f32.gmra.mrb[0].mxu0 %v1418
        %v1974 = vpop.f32.mrb[0].mxu0
        %v1975 = vadd.f32 %v1433, %v1974
        %v1976 = vpop.f32.mrb[0].mxu0
        %v1977 = vadd.f32 %v1433, %v1976
        %1978 = vmatprep.mubr.f32.mxu0 %v1455
        %1979 = vmatmul.mubr.f32.gmra.mrb[0].mxu0 %v1420
        %v1980 = vpop.f32.mrb[0].mxu0
        %v1981 = vadd.f32 %v1438, %v1980
        %v1982 = vpop.f32.mrb[0].mxu0
        %v1983 = vadd.f32 %v1438, %v1982
        %1984 = vmatprep.mubr.f32.mxu0 %v1458
        %1985 = vmatmul.mubr.f32.gmra.mrb[0].mxu0 %v1422
        %v1986 = vpop.f32.mrb[0].mxu0
        %v1987 = vadd.f32 %v1443, %v1986
        %v1988 = vpop.f32.mrb[0].mxu0
        %v1989 = vadd.f32 %v1443, %v1988
        %1990 = vmatprep.mubr.f32.mxu0 %v1461
        %1991 = vmatmul.mubr.f32.gmra.mrb[0].mxu0 %v1424
        %v1992 = vpop.f32.mrb[0].mxu0
        %v1993 = vadd.f32 %v1448, %v1992
        %v1994 = vpop.f32.mrb[0].mxu0
        %v1995 = vadd.f32 %v1448, %v1994
        %1996 = vdwg.mxu0
        %v1997 = vmax.f32 %v1530, 0.0
        %v1998 = vmax.f32 %v1532, 0.0
        %v1999 = vmax.f32 %v1619, 0.0
        %v2000 = vmax.f32 %v1621, 0.0
        %v2001 = vmax.f32 %v1708, 0.0
        %v2002 = vmax.f32 %v1710, 0.0
        %v2003 = vmax.f32 %v1797, 0.0
        %v2004 = vmax.f32 %v1799, 0.0
        %v2005 = vmax.f32 %v1886, 0.0
        %v2006 = vmax.f32 %v1888, 0.0
        %v2007 = vmax.f32 %v1975, 0.0
        %v2008 = vmax.f32 %v1977, 0.0
        %v2009 = vmax.f32 %v1536, 0.0
        %v2010 = vmax.f32 %v1538, 0.0
        %v2011 = vmax.f32 %v1625, 0.0
        %v2012 = vmax.f32 %v1627, 0.0
        %v2013 = vmax.f32 %v1714, 0.0
        %v2014 = vmax.f32 %v1716, 0.0
        %v2015 = vmax.f32 %v1803, 0.0
        %v2016 = vmax.f32 %v1805, 0.0
        %v2017 = vmax.f32 %v1892, 0.0
        %v2018 = vmax.f32 %v1894, 0.0
        %v2019 = vmax.f32 %v1981, 0.0
        %v2020 = vmax.f32 %v1983, 0.0
        %v2021 = vmax.f32 %v1542, 0.0
        %v2022 = vmax.f32 %v1544, 0.0
        %v2023 = vmax.f32 %v1631, 0.0
        %v2024 = vmax.f32 %v1633, 0.0
        %v2025 = vmax.f32 %v1720, 0.0
        %v2026 = vmax.f32 %v1722, 0.0
        %v2027 = vmax.f32 %v1809, 0.0
        %v2028 = vmax.f32 %v1811, 0.0
        %v2029 = vmax.f32 %v1898, 0.0
        %v2030 = vmax.f32 %v1900, 0.0
        %v2031 = vmax.f32 %v1987, 0.0
        %v2032 = vmax.f32 %v1989, 0.0
        %v2033 = vmax.f32 %v1548, 0.0
        %v2034 = vmax.f32 %v1550, 0.0
        %v2035 = vmax.f32 %v1637, 0.0
        %v2036 = vmax.f32 %v1639, 0.0
        %v2037 = vmax.f32 %v1726, 0.0
        %v2038 = vmax.f32 %v1728, 0.0
        %v2039 = vmax.f32 %v1815, 0.0
        %v2040 = vmax.f32 %v1817, 0.0
        %v2041 = vmax.f32 %v1904, 0.0
        %v2042 = vmax.f32 %v1906, 0.0
        %v2043 = vmax.f32 %v1993, 0.0
        %v2044 = vmax.f32 %v1995, 0.0
        %v2047 = vlaneseq
        %v2048 = vshrl.u32 %v2047, 7
        %v2049 = vsub.s32 0, %v2048
        %v2050 = vrot.slane %v374, %v2049
        %v2051 = vlaneseq
        %v2052 = vshrl.u32 %v2051, 7
        %v2053 = vsub.s32 1, %v2052
        %v2054 = vrot.slane %v374, %v2053
        %v2055 = vlaneseq
        %v2056 = vshrl.u32 %v2055, 7
        %v2057 = vsub.s32 2, %v2056
        %v2058 = vrot.slane %v374, %v2057
        %v2059 = vlaneseq
        %v2060 = vshrl.u32 %v2059, 7
        %v2061 = vsub.s32 3, %v2060
        %v2062 = vrot.slane %v374, %v2061
        %v2063 = vlaneseq
        %v2064 = vshrl.u32 %v2063, 7
        %v2065 = vsub.s32 4, %v2064
        %v2066 = vrot.slane %v374, %v2065
        %v2067 = vlaneseq
        %v2068 = vshrl.u32 %v2067, 7
        %v2069 = vsub.s32 5, %v2068
        %v2070 = vrot.slane %v374, %v2069
        %v2071 = vlaneseq
        %v2072 = vshrl.u32 %v2071, 7
        %v2073 = vsub.s32 6, %v2072
        %v2074 = vrot.slane %v374, %v2073
        %v2075 = vlaneseq
        %v2076 = vshrl.u32 %v2075, 7
        %v2077 = vsub.s32 7, %v2076
        %v2078 = vrot.slane %v374, %v2077
        %v2079 = vlaneseq
        %v2080 = vshrl.u32 %v2079, 7
        %v2081 = vsub.s32 0, %v2080
        %v2082 = vrot.slane %v375, %v2081
        %v2083 = vlaneseq
        %v2084 = vshrl.u32 %v2083, 7
        %v2085 = vsub.s32 1, %v2084
        %v2086 = vrot.slane %v375, %v2085
        %v2087 = vlaneseq
        %v2088 = vshrl.u32 %v2087, 7
        %v2089 = vsub.s32 2, %v2088
        %v2090 = vrot.slane %v375, %v2089
        %v2091 = vlaneseq
        %v2092 = vshrl.u32 %v2091, 7
        %v2093 = vsub.s32 3, %v2092
        %v2094 = vrot.slane %v375, %v2093
        %v2107 = vmul.f32 %v1997, %v2050
        %v2108 = vmul.f32 %v1998, %v2054
        %v2109 = vmul.f32 %v1999, %v2058
        %v2110 = vmul.f32 %v2000, %v2062
        %v2111 = vmul.f32 %v2001, %v2066
        %v2112 = vmul.f32 %v2002, %v2070
        %v2113 = vmul.f32 %v2003, %v2074
        %v2114 = vmul.f32 %v2004, %v2078
        %v2115 = vmul.f32 %v2005, %v2082
        %v2116 = vmul.f32 %v2006, %v2086
        %v2117 = vmul.f32 %v2007, %v2090
        %v2118 = vmul.f32 %v2008, %v2094
        %v2119 = vmul.f32 %v2009, %v2050
        %v2120 = vmul.f32 %v2010, %v2054
        %v2121 = vmul.f32 %v2011, %v2058
        %v2122 = vmul.f32 %v2012, %v2062
        %v2123 = vmul.f32 %v2013, %v2066
        %v2124 = vmul.f32 %v2014, %v2070
        %v2125 = vmul.f32 %v2015, %v2074
        %v2126 = vmul.f32 %v2016, %v2078
        %v2127 = vmul.f32 %v2017, %v2082
        %v2128 = vmul.f32 %v2018, %v2086
        %v2129 = vmul.f32 %v2019, %v2090
        %v2130 = vmul.f32 %v2020, %v2094
        %v2131 = vmul.f32 %v2021, %v2050
        %v2132 = vmul.f32 %v2022, %v2054
        %v2133 = vmul.f32 %v2023, %v2058
        %v2134 = vmul.f32 %v2024, %v2062
        %v2135 = vmul.f32 %v2025, %v2066
        %v2136 = vmul.f32 %v2026, %v2070
        %v2137 = vmul.f32 %v2027, %v2074
        %v2138 = vmul.f32 %v2028, %v2078
        %v2139 = vmul.f32 %v2029, %v2082
        %v2140 = vmul.f32 %v2030, %v2086
        %v2141 = vmul.f32 %v2031, %v2090
        %v2142 = vmul.f32 %v2032, %v2094
        %v2143 = vmul.f32 %v2033, %v2050
        %v2144 = vmul.f32 %v2034, %v2054
        %v2145 = vmul.f32 %v2035, %v2058
        %v2146 = vmul.f32 %v2036, %v2062
        %v2147 = vmul.f32 %v2037, %v2066
        %v2148 = vmul.f32 %v2038, %v2070
        %v2149 = vmul.f32 %v2039, %v2074
        %v2150 = vmul.f32 %v2040, %v2078
        %v2151 = vmul.f32 %v2041, %v2082
        %v2152 = vmul.f32 %v2042, %v2086
        %v2153 = vmul.f32 %v2043, %v2090
        %v2154 = vmul.f32 %v2044, %v2094
        %2155 = vrot.lane.b32.xlu0 %v2107, 19
        %v2156 = vpop.permute.xlu0 %2155
        %2157 = vrot.lane.b32.xlu0 %v2119, 19
        %v2158 = vpop.permute.xlu0 %2157
        %2159 = vrot.lane.b32.xlu0 %v2131, 19
        %v2160 = vpop.permute.xlu0 %2159
        %2161 = vrot.lane.b32.xlu0 %v2143, 19
        %v2162 = vpop.permute.xlu0 %2161
        %2163 = vrot.lane.b32.xlu0 %v2108, 19
        %v2164 = vpop.permute.xlu0 %2163
        %2165 = vrot.lane.b32.xlu0 %v2120, 19
        %v2166 = vpop.permute.xlu0 %2165
        %2167 = vrot.lane.b32.xlu0 %v2132, 19
        %v2168 = vpop.permute.xlu0 %2167
        %2169 = vrot.lane.b32.xlu0 %v2144, 19
        %v2170 = vpop.permute.xlu0 %2169
        %2171 = vrot.lane.b32.xlu0 %v2109, 19
        %v2172 = vpop.permute.xlu0 %2171
        %2173 = vrot.lane.b32.xlu0 %v2121, 19
        %v2174 = vpop.permute.xlu0 %2173
        %2175 = vrot.lane.b32.xlu0 %v2133, 19
        %v2176 = vpop.permute.xlu0 %2175
        %2177 = vrot.lane.b32.xlu0 %v2145, 19
        %v2178 = vpop.permute.xlu0 %2177
        %2179 = vrot.lane.b32.xlu0 %v2110, 19
        %v2180 = vpop.permute.xlu0 %2179
        %2181 = vrot.lane.b32.xlu0 %v2122, 19
        %v2182 = vpop.permute.xlu0 %2181
        %2183 = vrot.lane.b32.xlu0 %v2134, 19
        %v2184 = vpop.permute.xlu0 %2183
        %2185 = vrot.lane.b32.xlu0 %v2146, 19
        %v2186 = vpop.permute.xlu0 %2185
        %2187 = vrot.lane.b32.xlu0 %v2111, 19
        %v2188 = vpop.permute.xlu0 %2187
        %2189 = vrot.lane.b32.xlu0 %v2123, 19
        %v2190 = vpop.permute.xlu0 %2189
        %2191 = vrot.lane.b32.xlu0 %v2135, 19
        %v2192 = vpop.permute.xlu0 %2191
        %2193 = vrot.lane.b32.xlu0 %v2147, 19
        %v2194 = vpop.permute.xlu0 %2193
        %2195 = vrot.lane.b32.xlu0 %v2112, 19
        %v2196 = vpop.permute.xlu0 %2195
        %2197 = vrot.lane.b32.xlu0 %v2124, 19
        %v2198 = vpop.permute.xlu0 %2197
        %2199 = vrot.lane.b32.xlu0 %v2136, 19
        %v2200 = vpop.permute.xlu0 %2199
        %2201 = vrot.lane.b32.xlu0 %v2148, 19
        %v2202 = vpop.permute.xlu0 %2201
        %2203 = vrot.lane.b32.xlu0 %v2113, 19
        %v2204 = vpop.permute.xlu0 %2203
        %2205 = vrot.lane.b32.xlu0 %v2125, 19
        %v2206 = vpop.permute.xlu0 %2205
        %2207 = vrot.lane.b32.xlu0 %v2137, 19
        %v2208 = vpop.permute.xlu0 %2207
        %2209 = vrot.lane.b32.xlu0 %v2149, 19
        %v2210 = vpop.permute.xlu0 %2209
        %2211 = vrot.lane.b32.xlu0 %v2114, 19
        %v2212 = vpop.permute.xlu0 %2211
        %2213 = vrot.lane.b32.xlu0 %v2126, 19
        %v2214 = vpop.permute.xlu0 %2213
        %2215 = vrot.lane.b32.xlu0 %v2138, 19
        %v2216 = vpop.permute.xlu0 %2215
        %2217 = vrot.lane.b32.xlu0 %v2150, 19
        %v2218 = vpop.permute.xlu0 %2217
        %2219 = vrot.lane.b32.xlu0 %v2115, 19
        %v2220 = vpop.permute.xlu0 %2219
        %2221 = vrot.lane.b32.xlu0 %v2127, 19
        %v2222 = vpop.permute.xlu0 %2221
        %2223 = vrot.lane.b32.xlu0 %v2139, 19
        %v2224 = vpop.permute.xlu0 %2223
        %2225 = vrot.lane.b32.xlu0 %v2151, 19
        %v2226 = vpop.permute.xlu0 %2225
        %2227 = vrot.lane.b32.xlu0 %v2116, 19
        %v2228 = vpop.permute.xlu0 %2227
        %2229 = vrot.lane.b32.xlu0 %v2128, 19
        %v2230 = vpop.permute.xlu0 %2229
        %2231 = vrot.lane.b32.xlu0 %v2140, 19
        %v2232 = vpop.permute.xlu0 %2231
        %2233 = vrot.lane.b32.xlu0 %v2152, 19
        %v2234 = vpop.permute.xlu0 %2233
        %2235 = vrot.lane.b32.xlu0 %v2117, 19
        %v2236 = vpop.permute.xlu0 %2235
        %2237 = vrot.lane.b32.xlu0 %v2129, 19
        %v2238 = vpop.permute.xlu0 %2237
        %2239 = vrot.lane.b32.xlu0 %v2141, 19
        %v2240 = vpop.permute.xlu0 %2239
        %2241 = vrot.lane.b32.xlu0 %v2153, 19
        %v2242 = vpop.permute.xlu0 %2241
        %2243 = vrot.lane.b32.xlu0 %v2118, 19
        %v2244 = vpop.permute.xlu0 %2243
        %2245 = vrot.lane.b32.xlu0 %v2130, 19
        %v2246 = vpop.permute.xlu0 %2245
        %2247 = vrot.lane.b32.xlu0 %v2142, 19
        %v2248 = vpop.permute.xlu0 %2247
        %2249 = vrot.lane.b32.xlu0 %v2154, 19
        %v2250 = vpop.permute.xlu0 %2249
        %v2251 = vsel %vm450, %v2236, %v2244
        %v2252 = vsel %vm450, %v2238, %v2246
        %v2253 = vsel %vm450, %v2240, %v2248
        %v2254 = vsel %vm450, %v2242, %v2250
        %v2255 = vsel %vm450, %v2228, %v2236
        %v2256 = vsel %vm450, %v2230, %v2238
        %v2257 = vsel %vm450, %v2232, %v2240
        %v2258 = vsel %vm450, %v2234, %v2242
        %v2259 = vsel %vm450, %v2220, %v2228
        %v2260 = vsel %vm450, %v2222, %v2230
        %v2261 = vsel %vm450, %v2224, %v2232
        %v2262 = vsel %vm450, %v2226, %v2234
        %v2263 = vsel %vm450, %v2212, %v2220
        %v2264 = vsel %vm450, %v2214, %v2222
        %v2265 = vsel %vm450, %v2216, %v2224
        %v2266 = vsel %vm450, %v2218, %v2226
        %v2267 = vsel %vm450, %v2204, %v2212
        %v2268 = vsel %vm450, %v2206, %v2214
        %v2269 = vsel %vm450, %v2208, %v2216
        %v2270 = vsel %vm450, %v2210, %v2218
        %v2271 = vsel %vm450, %v2196, %v2204
        %v2272 = vsel %vm450, %v2198, %v2206
        %v2273 = vsel %vm450, %v2200, %v2208
        %v2274 = vsel %vm450, %v2202, %v2210
        %v2275 = vsel %vm450, %v2188, %v2196
        %v2276 = vsel %vm450, %v2190, %v2198
        %v2277 = vsel %vm450, %v2192, %v2200
        %v2278 = vsel %vm450, %v2194, %v2202
        %v2279 = vsel %vm450, %v2180, %v2188
        %v2280 = vsel %vm450, %v2182, %v2190
        %v2281 = vsel %vm450, %v2184, %v2192
        %v2282 = vsel %vm450, %v2186, %v2194
        %v2283 = vsel %vm450, %v2172, %v2180
        %v2284 = vsel %vm450, %v2174, %v2182
        %v2285 = vsel %vm450, %v2176, %v2184
        %v2286 = vsel %vm450, %v2178, %v2186
        %v2287 = vsel %vm450, %v2164, %v2172
        %v2288 = vsel %vm450, %v2166, %v2174
        %v2289 = vsel %vm450, %v2168, %v2176
        %v2290 = vsel %vm450, %v2170, %v2178
        %v2291 = vsel %vm450, %v2156, %v2164
        %v2292 = vsel %vm450, %v2158, %v2166
        %v2293 = vsel %vm450, %v2160, %v2168
        %v2294 = vsel %vm450, %v2162, %v2170
        %v2295 = vsel %vm450, %v2244, %v2156
        %v2296 = vsel %vm450, %v2246, %v2158
        %v2297 = vsel %vm450, %v2248, %v2160
        %v2298 = vsel %vm450, %v2250, %v2162
        %2299 = vst [vmem:[#allocation2] sm:$0xff] %v2295
        %2300 = vst [vmem:[#allocation2 + $0x8] sm:$0xff] %v2291
        %2301 = vst [vmem:[#allocation2 + $0x10] sm:$0xff] %v2287
        %2302 = vst [vmem:[#allocation2 + $0x18] sm:$0xff] %v2283
        %2303 = vst [vmem:[#allocation2 + $0x20] sm:$0xff] %v2279
        %2304 = vst [vmem:[#allocation2 + $0x28] sm:$0xff] %v2275
        %2305 = vst [vmem:[#allocation2 + $0x30] sm:$0xff] %v2271
        %2306 = vst [vmem:[#allocation2 + $0x38] sm:$0xff] %v2267
        %2307 = vst [vmem:[#allocation2 + $0x40] sm:$0xff] %v2263
        %2308 = vst [vmem:[#allocation2 + $0x48] sm:$0xff] %v2259
        %2309 = vst [vmem:[#allocation2 + $0x50] sm:$0xff] %v2255
        %2310 = vst [vmem:[#allocation2 + $0x58] sm:$0xff] %v2251
        %2311 = vst [vmem:[#allocation2 + $0x60] sm:$0xff] %v2296
        %2312 = vst [vmem:[#allocation2 + $0x68] sm:$0xff] %v2292
        %2313 = vst [vmem:[#allocation2 + $0x70] sm:$0xff] %v2288
        %2314 = vst [vmem:[#allocation2 + $0x78] sm:$0xff] %v2284
        %2315 = vst [vmem:[#allocation2 + $0x80] sm:$0xff] %v2280
        %2316 = vst [vmem:[#allocation2 + $0x88] sm:$0xff] %v2276
        %2317 = vst [vmem:[#allocation2 + $0x90] sm:$0xff] %v2272
        %2318 = vst [vmem:[#allocation2 + $0x98] sm:$0xff] %v2268
        %2319 = vst [vmem:[#allocation2 + $0xa0] sm:$0xff] %v2264
        %2320 = vst [vmem:[#allocation2 + $0xa8] sm:$0xff] %v2260
        %2321 = vst [vmem:[#allocation2 + $0xb0] sm:$0xff] %v2256
        %2322 = vst [vmem:[#allocation2 + $0xb8] sm:$0xff] %v2252
        %2323 = vst [vmem:[#allocation2 + $0xc0] sm:$0xff] %v2297
        %2324 = vst [vmem:[#allocation2 + $0xc8] sm:$0xff] %v2293
        %2325 = vst [vmem:[#allocation2 + $0xd0] sm:$0xff] %v2289
        %2326 = vst [vmem:[#allocation2 + $0xd8] sm:$0xff] %v2285
        %2327 = vst [vmem:[#allocation2 + $0xe0] sm:$0xff] %v2281
        %2328 = vst [vmem:[#allocation2 + $0xe8] sm:$0xff] %v2277
        %2329 = vst [vmem:[#allocation2 + $0xf0] sm:$0xff] %v2273
        %2330 = vst [vmem:[#allocation2 + $0xf8] sm:$0xff] %v2269
        %2331 = vst [vmem:[#allocation2 + $0x100] sm:$0xff] %v2265
        %2332 = vst [vmem:[#allocation2 + $0x108] sm:$0xff] %v2261
        %2333 = vst [vmem:[#allocation2 + $0x110] sm:$0xff] %v2257
        %2334 = vst [vmem:[#allocation2 + $0x118] sm:$0xff] %v2253
        %2335 = vst [vmem:[#allocation2 + $0x120] sm:$0xff] %v2298
        %2336 = vst [vmem:[#allocation2 + $0x128] sm:$0xff] %v2294
        %2337 = vst [vmem:[#allocation2 + $0x130] sm:$0xff] %v2290
        %2338 = vst [vmem:[#allocation2 + $0x138] sm:$0xff] %v2286
        %2339 = vst [vmem:[#allocation2 + $0x140] sm:$0xff] %v2282
        %2340 = vst [vmem:[#allocation2 + $0x148] sm:$0xff] %v2278
        %2341 = vst [vmem:[#allocation2 + $0x150] sm:$0xff] %v2274
        %2342 = vst [vmem:[#allocation2 + $0x158] sm:$0xff] %v2270
        %2343 = vst [vmem:[#allocation2 + $0x160] sm:$0xff] %v2266
        %2344 = vst [vmem:[#allocation2 + $0x168] sm:$0xff] %v2262
        %2345 = vst [vmem:[#allocation2 + $0x170] sm:$0xff] %v2258
        %2346 = vst [vmem:[#allocation2 + $0x178] sm:$0xff] %v2254
        %2347 = vrot.lane.b32.xlu0 %v2107, 18
        %v2348 = vpop.permute.xlu0 %2347
        %2349 = vrot.lane.b32.xlu0 %v2119, 18
        %v2350 = vpop.permute.xlu0 %2349
        %2351 = vrot.lane.b32.xlu0 %v2131, 18
        %v2352 = vpop.permute.xlu0 %2351
        %2353 = vrot.lane.b32.xlu0 %v2143, 18
        %v2354 = vpop.permute.xlu0 %2353
        %2355 = vrot.lane.b32.xlu0 %v2108, 18
        %v2356 = vpop.permute.xlu0 %2355
        %2357 = vrot.lane.b32.xlu0 %v2120, 18
        %v2358 = vpop.permute.xlu0 %2357
        %2359 = vrot.lane.b32.xlu0 %v2132, 18
        %v2360 = vpop.permute.xlu0 %2359
        %2361 = vrot.lane.b32.xlu0 %v2144, 18
        %v2362 = vpop.permute.xlu0 %2361
        %2363 = vrot.lane.b32.xlu0 %v2109, 18
        %v2364 = vpop.permute.xlu0 %2363
        %2365 = vrot.lane.b32.xlu0 %v2121, 18
        %v2366 = vpop.permute.xlu0 %2365
        %2367 = vrot.lane.b32.xlu0 %v2133, 18
        %v2368 = vpop.permute.xlu0 %2367
        %2369 = vrot.lane.b32.xlu0 %v2145, 18
        %v2370 = vpop.permute.xlu0 %2369
        %2371 = vrot.lane.b32.xlu0 %v2110, 18
        %v2372 = vpop.permute.xlu0 %2371
        %2373 = vrot.lane.b32.xlu0 %v2122, 18
        %v2374 = vpop.permute.xlu0 %2373
        %2375 = vrot.lane.b32.xlu0 %v2134, 18
        %v2376 = vpop.permute.xlu0 %2375
        %2377 = vrot.lane.b32.xlu0 %v2146, 18
        %v2378 = vpop.permute.xlu0 %2377
        %2379 = vrot.lane.b32.xlu0 %v2111, 18
        %v2380 = vpop.permute.xlu0 %2379
        %2381 = vrot.lane.b32.xlu0 %v2123, 18
        %v2382 = vpop.permute.xlu0 %2381
        %2383 = vrot.lane.b32.xlu0 %v2135, 18
        %v2384 = vpop.permute.xlu0 %2383
        %2385 = vrot.lane.b32.xlu0 %v2147, 18
        %v2386 = vpop.permute.xlu0 %2385
        %2387 = vrot.lane.b32.xlu0 %v2112, 18
        %v2388 = vpop.permute.xlu0 %2387
        %2389 = vrot.lane.b32.xlu0 %v2124, 18
        %v2390 = vpop.permute.xlu0 %2389
        %2391 = vrot.lane.b32.xlu0 %v2136, 18
        %v2392 = vpop.permute.xlu0 %2391
        %2393 = vrot.lane.b32.xlu0 %v2148, 18
        %v2394 = vpop.permute.xlu0 %2393
        %2395 = vrot.lane.b32.xlu0 %v2113, 18
        %v2396 = vpop.permute.xlu0 %2395
        %2397 = vrot.lane.b32.xlu0 %v2125, 18
        %v2398 = vpop.permute.xlu0 %2397
        %2399 = vrot.lane.b32.xlu0 %v2137, 18
        %v2400 = vpop.permute.xlu0 %2399
        %2401 = vrot.lane.b32.xlu0 %v2149, 18
        %v2402 = vpop.permute.xlu0 %2401
        %2403 = vrot.lane.b32.xlu0 %v2114, 18
        %v2404 = vpop.permute.xlu0 %2403
        %2405 = vrot.lane.b32.xlu0 %v2126, 18
        %v2406 = vpop.permute.xlu0 %2405
        %2407 = vrot.lane.b32.xlu0 %v2138, 18
        %v2408 = vpop.permute.xlu0 %2407
        %2409 = vrot.lane.b32.xlu0 %v2150, 18
        %v2410 = vpop.permute.xlu0 %2409
        %2411 = vrot.lane.b32.xlu0 %v2115, 18
        %v2412 = vpop.permute.xlu0 %2411
        %2413 = vrot.lane.b32.xlu0 %v2127, 18
        %v2414 = vpop.permute.xlu0 %2413
        %2415 = vrot.lane.b32.xlu0 %v2139, 18
        %v2416 = vpop.permute.xlu0 %2415
        %2417 = vrot.lane.b32.xlu0 %v2151, 18
        %v2418 = vpop.permute.xlu0 %2417
        %2419 = vrot.lane.b32.xlu0 %v2116, 18
        %v2420 = vpop.permute.xlu0 %2419
        %2421 = vrot.lane.b32.xlu0 %v2128, 18
        %v2422 = vpop.permute.xlu0 %2421
        %2423 = vrot.lane.b32.xlu0 %v2140, 18
        %v2424 = vpop.permute.xlu0 %2423
        %2425 = vrot.lane.b32.xlu0 %v2152, 18
        %v2426 = vpop.permute.xlu0 %2425
        %2427 = vrot.lane.b32.xlu0 %v2117, 18
        %v2428 = vpop.permute.xlu0 %2427
        %2429 = vrot.lane.b32.xlu0 %v2129, 18
        %v2430 = vpop.permute.xlu0 %2429
        %2431 = vrot.lane.b32.xlu0 %v2141, 18
        %v2432 = vpop.permute.xlu0 %2431
        %2433 = vrot.lane.b32.xlu0 %v2153, 18
        %v2434 = vpop.permute.xlu0 %2433
        %2435 = vrot.lane.b32.xlu0 %v2118, 18
        %v2436 = vpop.permute.xlu0 %2435
        %2437 = vrot.lane.b32.xlu0 %v2130, 18
        %v2438 = vpop.permute.xlu0 %2437
        %2439 = vrot.lane.b32.xlu0 %v2142, 18
        %v2440 = vpop.permute.xlu0 %2439
        %2441 = vrot.lane.b32.xlu0 %v2154, 18
        %v2442 = vpop.permute.xlu0 %2441
        %v2443 = vsel %vm547, %v2428, %v2436
        %v2444 = vsel %vm547, %v2430, %v2438
        %v2445 = vsel %vm547, %v2432, %v2440
        %v2446 = vsel %vm547, %v2434, %v2442
        %v2447 = vsel %vm547, %v2420, %v2428
        %v2448 = vsel %vm547, %v2422, %v2430
        %v2449 = vsel %vm547, %v2424, %v2432
        %v2450 = vsel %vm547, %v2426, %v2434
        %v2451 = vsel %vm547, %v2412, %v2420
        %v2452 = vsel %vm547, %v2414, %v2422
        %v2453 = vsel %vm547, %v2416, %v2424
        %v2454 = vsel %vm547, %v2418, %v2426
        %v2455 = vsel %vm547, %v2404, %v2412
        %v2456 = vsel %vm547, %v2406, %v2414
        %v2457 = vsel %vm547, %v2408, %v2416
        %v2458 = vsel %vm547, %v2410, %v2418
        %v2459 = vsel %vm547, %v2396, %v2404
        %v2460 = vsel %vm547, %v2398, %v2406
        %v2461 = vsel %vm547, %v2400, %v2408
        %v2462 = vsel %vm547, %v2402, %v2410
        %v2463 = vsel %vm547, %v2388, %v2396
        %v2464 = vsel %vm547, %v2390, %v2398
        %v2465 = vsel %vm547, %v2392, %v2400
        %v2466 = vsel %vm547, %v2394, %v2402
        %v2467 = vsel %vm547, %v2380, %v2388
        %v2468 = vsel %vm547, %v2382, %v2390
        %v2469 = vsel %vm547, %v2384, %v2392
        %v2470 = vsel %vm547, %v2386, %v2394
        %v2471 = vsel %vm547, %v2372, %v2380
        %v2472 = vsel %vm547, %v2374, %v2382
        %v2473 = vsel %vm547, %v2376, %v2384
        %v2474 = vsel %vm547, %v2378, %v2386
        %v2475 = vsel %vm547, %v2364, %v2372
        %v2476 = vsel %vm547, %v2366, %v2374
        %v2477 = vsel %vm547, %v2368, %v2376
        %v2478 = vsel %vm547, %v2370, %v2378
        %v2479 = vsel %vm547, %v2356, %v2364
        %v2480 = vsel %vm547, %v2358, %v2366
        %v2481 = vsel %vm547, %v2360, %v2368
        %v2482 = vsel %vm547, %v2362, %v2370
        %v2483 = vsel %vm547, %v2348, %v2356
        %v2484 = vsel %vm547, %v2350, %v2358
        %v2485 = vsel %vm547, %v2352, %v2360
        %v2486 = vsel %vm547, %v2354, %v2362
        %v2487 = vsel %vm547, %v2436, %v2348
        %v2488 = vsel %vm547, %v2438, %v2350
        %v2489 = vsel %vm547, %v2440, %v2352
        %v2490 = vsel %vm547, %v2442, %v2354
        %2491 = vst [vmem:[#allocation2 + $0x180] sm:$0xff] %v2487
        %2492 = vst [vmem:[#allocation2 + $0x188] sm:$0xff] %v2483
        %2493 = vst [vmem:[#allocation2 + $0x190] sm:$0xff] %v2479
        %2494 = vst [vmem:[#allocation2 + $0x198] sm:$0xff] %v2475
        %2495 = vst [vmem:[#allocation2 + $0x1a0] sm:$0xff] %v2471
        %2496 = vst [vmem:[#allocation2 + $0x1a8] sm:$0xff] %v2467
        %2497 = vst [vmem:[#allocation2 + $0x1b0] sm:$0xff] %v2463
        %2498 = vst [vmem:[#allocation2 + $0x1b8] sm:$0xff] %v2459
        %2499 = vst [vmem:[#allocation2 + $0x1c0] sm:$0xff] %v2455
        %2500 = vst [vmem:[#allocation2 + $0x1c8] sm:$0xff] %v2451
        %2501 = vst [vmem:[#allocation2 + $0x1d0] sm:$0xff] %v2447
        %2502 = vst [vmem:[#allocation2 + $0x1d8] sm:$0xff] %v2443
        %2503 = vst [vmem:[#allocation2 + $0x1e0] sm:$0xff] %v2488
        %2504 = vst [vmem:[#allocation2 + $0x1e8] sm:$0xff] %v2484
        %2505 = vst [vmem:[#allocation2 + $0x1f0] sm:$0xff] %v2480
        %2506 = vst [vmem:[#allocation2 + $0x1f8] sm:$0xff] %v2476
        %2507 = vst [vmem:[#allocation2 + $0x200] sm:$0xff] %v2472
        %2508 = vst [vmem:[#allocation2 + $0x208] sm:$0xff] %v2468
        %2509 = vst [vmem:[#allocation2 + $0x210] sm:$0xff] %v2464
        %2510 = vst [vmem:[#allocation2 + $0x218] sm:$0xff] %v2460
        %2511 = vst [vmem:[#allocation2 + $0x220] sm:$0xff] %v2456
        %2512 = vst [vmem:[#allocation2 + $0x228] sm:$0xff] %v2452
        %2513 = vst [vmem:[#allocation2 + $0x230] sm:$0xff] %v2448
        %2514 = vst [vmem:[#allocation2 + $0x238] sm:$0xff] %v2444
        %2515 = vst [vmem:[#allocation2 + $0x240] sm:$0xff] %v2489
        %2516 = vst [vmem:[#allocation2 + $0x248] sm:$0xff] %v2485
        %2517 = vst [vmem:[#allocation2 + $0x250] sm:$0xff] %v2481
        %2518 = vst [vmem:[#allocation2 + $0x258] sm:$0xff] %v2477
        %2519 = vst [vmem:[#allocation2 + $0x260] sm:$0xff] %v2473
        %2520 = vst [vmem:[#allocation2 + $0x268] sm:$0xff] %v2469
        %2521 = vst [vmem:[#allocation2 + $0x270] sm:$0xff] %v2465
        %2522 = vst [vmem:[#allocation2 + $0x278] sm:$0xff] %v2461
        %2523 = vst [vmem:[#allocation2 + $0x280] sm:$0xff] %v2457
        %2524 = vst [vmem:[#allocation2 + $0x288] sm:$0xff] %v2453
        %2525 = vst [vmem:[#allocation2 + $0x290] sm:$0xff] %v2449
        %2526 = vst [vmem:[#allocation2 + $0x298] sm:$0xff] %v2445
        %2527 = vst [vmem:[#allocation2 + $0x2a0] sm:$0xff] %v2490
        %2528 = vst [vmem:[#allocation2 + $0x2a8] sm:$0xff] %v2486
        %2529 = vst [vmem:[#allocation2 + $0x2b0] sm:$0xff] %v2482
        %2530 = vst [vmem:[#allocation2 + $0x2b8] sm:$0xff] %v2478
        %2531 = vst [vmem:[#allocation2 + $0x2c0] sm:$0xff] %v2474
        %2532 = vst [vmem:[#allocation2 + $0x2c8] sm:$0xff] %v2470
        %2533 = vst [vmem:[#allocation2 + $0x2d0] sm:$0xff] %v2466
        %2534 = vst [vmem:[#allocation2 + $0x2d8] sm:$0xff] %v2462
        %2535 = vst [vmem:[#allocation2 + $0x2e0] sm:$0xff] %v2458
        %2536 = vst [vmem:[#allocation2 + $0x2e8] sm:$0xff] %v2454
        %2537 = vst [vmem:[#allocation2 + $0x2f0] sm:$0xff] %v2450
        %2538 = vst [vmem:[#allocation2 + $0x2f8] sm:$0xff] %v2446
        %2539 = vrot.lane.b32.xlu0 %v2107, 17
        %v2540 = vpop.permute.xlu0 %2539
        %2541 = vrot.lane.b32.xlu0 %v2119, 17
        %v2542 = vpop.permute.xlu0 %2541
        %2543 = vrot.lane.b32.xlu0 %v2131, 17
        %v2544 = vpop.permute.xlu0 %2543
        %2545 = vrot.lane.b32.xlu0 %v2143, 17
        %v2546 = vpop.permute.xlu0 %2545
        %2547 = vrot.lane.b32.xlu0 %v2108, 17
        %v2548 = vpop.permute.xlu0 %2547
        %2549 = vrot.lane.b32.xlu0 %v2120, 17
        %v2550 = vpop.permute.xlu0 %2549
        %2551 = vrot.lane.b32.xlu0 %v2132, 17
        %v2552 = vpop.permute.xlu0 %2551
        %2553 = vrot.lane.b32.xlu0 %v2144, 17
        %v2554 = vpop.permute.xlu0 %2553
        %2555 = vrot.lane.b32.xlu0 %v2109, 17
        %v2556 = vpop.permute.xlu0 %2555
        %2557 = vrot.lane.b32.xlu0 %v2121, 17
        %v2558 = vpop.permute.xlu0 %2557
        %2559 = vrot.lane.b32.xlu0 %v2133, 17
        %v2560 = vpop.permute.xlu0 %2559
        %2561 = vrot.lane.b32.xlu0 %v2145, 17
        %v2562 = vpop.permute.xlu0 %2561
        %2563 = vrot.lane.b32.xlu0 %v2110, 17
        %v2564 = vpop.permute.xlu0 %2563
        %2565 = vrot.lane.b32.xlu0 %v2122, 17
        %v2566 = vpop.permute.xlu0 %2565
        %2567 = vrot.lane.b32.xlu0 %v2134, 17
        %v2568 = vpop.permute.xlu0 %2567
        %2569 = vrot.lane.b32.xlu0 %v2146, 17
        %v2570 = vpop.permute.xlu0 %2569
        %2571 = vrot.lane.b32.xlu0 %v2111, 17
        %v2572 = vpop.permute.xlu0 %2571
        %2573 = vrot.lane.b32.xlu0 %v2123, 17
        %v2574 = vpop.permute.xlu0 %2573
        %2575 = vrot.lane.b32.xlu0 %v2135, 17
        %v2576 = vpop.permute.xlu0 %2575
        %2577 = vrot.lane.b32.xlu0 %v2147, 17
        %v2578 = vpop.permute.xlu0 %2577
        %2579 = vrot.lane.b32.xlu0 %v2112, 17
        %v2580 = vpop.permute.xlu0 %2579
        %2581 = vrot.lane.b32.xlu0 %v2124, 17
        %v2582 = vpop.permute.xlu0 %2581
        %2583 = vrot.lane.b32.xlu0 %v2136, 17
        %v2584 = vpop.permute.xlu0 %2583
        %2585 = vrot.lane.b32.xlu0 %v2148, 17
        %v2586 = vpop.permute.xlu0 %2585
        %2587 = vrot.lane.b32.xlu0 %v2113, 17
        %v2588 = vpop.permute.xlu0 %2587
        %2589 = vrot.lane.b32.xlu0 %v2125, 17
        %v2590 = vpop.permute.xlu0 %2589
        %2591 = vrot.lane.b32.xlu0 %v2137, 17
        %v2592 = vpop.permute.xlu0 %2591
        %2593 = vrot.lane.b32.xlu0 %v2149, 17
        %v2594 = vpop.permute.xlu0 %2593
        %2595 = vrot.lane.b32.xlu0 %v2114, 17
        %v2596 = vpop.permute.xlu0 %2595
        %2597 = vrot.lane.b32.xlu0 %v2126, 17
        %v2598 = vpop.permute.xlu0 %2597
        %2599 = vrot.lane.b32.xlu0 %v2138, 17
        %v2600 = vpop.permute.xlu0 %2599
        %2601 = vrot.lane.b32.xlu0 %v2150, 17
        %v2602 = vpop.permute.xlu0 %2601
        %2603 = vrot.lane.b32.xlu0 %v2115, 17
        %v2604 = vpop.permute.xlu0 %2603
        %2605 = vrot.lane.b32.xlu0 %v2127, 17
        %v2606 = vpop.permute.xlu0 %2605
        %2607 = vrot.lane.b32.xlu0 %v2139, 17
        %v2608 = vpop.permute.xlu0 %2607
        %2609 = vrot.lane.b32.xlu0 %v2151, 17
        %v2610 = vpop.permute.xlu0 %2609
        %2611 = vrot.lane.b32.xlu0 %v2116, 17
        %v2612 = vpop.permute.xlu0 %2611
        %2613 = vrot.lane.b32.xlu0 %v2128, 17
        %v2614 = vpop.permute.xlu0 %2613
        %2615 = vrot.lane.b32.xlu0 %v2140, 17
        %v2616 = vpop.permute.xlu0 %2615
        %2617 = vrot.lane.b32.xlu0 %v2152, 17
        %v2618 = vpop.permute.xlu0 %2617
        %2619 = vrot.lane.b32.xlu0 %v2117, 17
        %v2620 = vpop.permute.xlu0 %2619
        %2621 = vrot.lane.b32.xlu0 %v2129, 17
        %v2622 = vpop.permute.xlu0 %2621
        %2623 = vrot.lane.b32.xlu0 %v2141, 17
        %v2624 = vpop.permute.xlu0 %2623
        %2625 = vrot.lane.b32.xlu0 %v2153, 17
        %v2626 = vpop.permute.xlu0 %2625
        %2627 = vrot.lane.b32.xlu0 %v2118, 17
        %v2628 = vpop.permute.xlu0 %2627
        %2629 = vrot.lane.b32.xlu0 %v2130, 17
        %v2630 = vpop.permute.xlu0 %2629
        %2631 = vrot.lane.b32.xlu0 %v2142, 17
        %v2632 = vpop.permute.xlu0 %2631
        %2633 = vrot.lane.b32.xlu0 %v2154, 17
        %v2634 = vpop.permute.xlu0 %2633
        %v2635 = vsel %vm644, %v2620, %v2628
        %v2636 = vsel %vm644, %v2622, %v2630
        %v2637 = vsel %vm644, %v2624, %v2632
        %v2638 = vsel %vm644, %v2626, %v2634
        %v2639 = vsel %vm644, %v2612, %v2620
        %v2640 = vsel %vm644, %v2614, %v2622
        %v2641 = vsel %vm644, %v2616, %v2624
        %v2642 = vsel %vm644, %v2618, %v2626
        %v2643 = vsel %vm644, %v2604, %v2612
        %v2644 = vsel %vm644, %v2606, %v2614
        %v2645 = vsel %vm644, %v2608, %v2616
        %v2646 = vsel %vm644, %v2610, %v2618
        %v2647 = vsel %vm644, %v2596, %v2604
        %v2648 = vsel %vm644, %v2598, %v2606
        %v2649 = vsel %vm644, %v2600, %v2608
        %v2650 = vsel %vm644, %v2602, %v2610
        %v2651 = vsel %vm644, %v2588, %v2596
        %v2652 = vsel %vm644, %v2590, %v2598
        %v2653 = vsel %vm644, %v2592, %v2600
        %v2654 = vsel %vm644, %v2594, %v2602
        %v2655 = vsel %vm644, %v2580, %v2588
        %v2656 = vsel %vm644, %v2582, %v2590
        %v2657 = vsel %vm644, %v2584, %v2592
        %v2658 = vsel %vm644, %v2586, %v2594
        %v2659 = vsel %vm644, %v2572, %v2580
        %v2660 = vsel %vm644, %v2574, %v2582
        %v2661 = vsel %vm644, %v2576, %v2584
        %v2662 = vsel %vm644, %v2578, %v2586
        %v2663 = vsel %vm644, %v2564, %v2572
        %v2664 = vsel %vm644, %v2566, %v2574
        %v2665 = vsel %vm644, %v2568, %v2576
        %v2666 = vsel %vm644, %v2570, %v2578
        %v2667 = vsel %vm644, %v2556, %v2564
        %v2668 = vsel %vm644, %v2558, %v2566
        %v2669 = vsel %vm644, %v2560, %v2568
        %v2670 = vsel %vm644, %v2562, %v2570
        %v2671 = vsel %vm644, %v2548, %v2556
        %v2672 = vsel %vm644, %v2550, %v2558
        %v2673 = vsel %vm644, %v2552, %v2560
        %v2674 = vsel %vm644, %v2554, %v2562
        %v2675 = vsel %vm644, %v2540, %v2548
        %v2676 = vsel %vm644, %v2542, %v2550
        %v2677 = vsel %vm644, %v2544, %v2552
        %v2678 = vsel %vm644, %v2546, %v2554
        %v2679 = vsel %vm644, %v2628, %v2540
        %v2680 = vsel %vm644, %v2630, %v2542
        %v2681 = vsel %vm644, %v2632, %v2544
        %v2682 = vsel %vm644, %v2634, %v2546
        %2683 = vst [vmem:[#allocation2 + $0x300] sm:$0xff] %v2679
        %2684 = vst [vmem:[#allocation2 + $0x308] sm:$0xff] %v2675
        %2685 = vst [vmem:[#allocation2 + $0x310] sm:$0xff] %v2671
        %2686 = vst [vmem:[#allocation2 + $0x318] sm:$0xff] %v2667
        %2687 = vst [vmem:[#allocation2 + $0x320] sm:$0xff] %v2663
        %2688 = vst [vmem:[#allocation2 + $0x328] sm:$0xff] %v2659
        %2689 = vst [vmem:[#allocation2 + $0x330] sm:$0xff] %v2655
        %2690 = vst [vmem:[#allocation2 + $0x338] sm:$0xff] %v2651
        %2691 = vst [vmem:[#allocation2 + $0x340] sm:$0xff] %v2647
        %2692 = vst [vmem:[#allocation2 + $0x348] sm:$0xff] %v2643
        %2693 = vst [vmem:[#allocation2 + $0x350] sm:$0xff] %v2639
        %2694 = vst [vmem:[#allocation2 + $0x358] sm:$0xff] %v2635
        %2695 = vst [vmem:[#allocation2 + $0x360] sm:$0xff] %v2680
        %2696 = vst [vmem:[#allocation2 + $0x368] sm:$0xff] %v2676
        %2697 = vst [vmem:[#allocation2 + $0x370] sm:$0xff] %v2672
        %2698 = vst [vmem:[#allocation2 + $0x378] sm:$0xff] %v2668
        %2699 = vst [vmem:[#allocation2 + $0x380] sm:$0xff] %v2664
        %2700 = vst [vmem:[#allocation2 + $0x388] sm:$0xff] %v2660
        %2701 = vst [vmem:[#allocation2 + $0x390] sm:$0xff] %v2656
        %2702 = vst [vmem:[#allocation2 + $0x398] sm:$0xff] %v2652
        %2703 = vst [vmem:[#allocation2 + $0x3a0] sm:$0xff] %v2648
        %2704 = vst [vmem:[#allocation2 + $0x3a8] sm:$0xff] %v2644
        %2705 = vst [vmem:[#allocation2 + $0x3b0] sm:$0xff] %v2640
        %2706 = vst [vmem:[#allocation2 + $0x3b8] sm:$0xff] %v2636
        %2707 = vst [vmem:[#allocation2 + $0x3c0] sm:$0xff] %v2681
        %2708 = vst [vmem:[#allocation2 + $0x3c8] sm:$0xff] %v2677
        %2709 = vst [vmem:[#allocation2 + $0x3d0] sm:$0xff] %v2673
        %2710 = vst [vmem:[#allocation2 + $0x3d8] sm:$0xff] %v2669
        %2711 = vst [vmem:[#allocation2 + $0x3e0] sm:$0xff] %v2665
        %2712 = vst [vmem:[#allocation2 + $0x3e8] sm:$0xff] %v2661
        %2713 = vst [vmem:[#allocation2 + $0x3f0] sm:$0xff] %v2657
        %2714 = vst [vmem:[#allocation2 + $0x3f8] sm:$0xff] %v2653
        %2715 = vst [vmem:[#allocation2 + $0x400] sm:$0xff] %v2649
        %2716 = vst [vmem:[#allocation2 + $0x408] sm:$0xff] %v2645
        %2717 = vst [vmem:[#allocation2 + $0x410] sm:$0xff] %v2641
        %2718 = vst [vmem:[#allocation2 + $0x418] sm:$0xff] %v2637
        %2719 = vst [vmem:[#allocation2 + $0x420] sm:$0xff] %v2682
        %2720 = vst [vmem:[#allocation2 + $0x428] sm:$0xff] %v2678
        %2721 = vst [vmem:[#allocation2 + $0x430] sm:$0xff] %v2674
        %2722 = vst [vmem:[#allocation2 + $0x438] sm:$0xff] %v2670
        %2723 = vst [vmem:[#allocation2 + $0x440] sm:$0xff] %v2666
        %2724 = vst [vmem:[#allocation2 + $0x448] sm:$0xff] %v2662
        %2725 = vst [vmem:[#allocation2 + $0x450] sm:$0xff] %v2658
        %2726 = vst [vmem:[#allocation2 + $0x458] sm:$0xff] %v2654
        %2727 = vst [vmem:[#allocation2 + $0x460] sm:$0xff] %v2650
        %2728 = vst [vmem:[#allocation2 + $0x468] sm:$0xff] %v2646
        %2729 = vst [vmem:[#allocation2 + $0x470] sm:$0xff] %v2642
        %2730 = vst [vmem:[#allocation2 + $0x478] sm:$0xff] %v2638
        %2731 = vrot.lane.b32.xlu0 %v2107, 1
        %v2732 = vpop.permute.xlu0 %2731
        %2733 = vrot.lane.b32.xlu0 %v2119, 1
        %v2734 = vpop.permute.xlu0 %2733
        %2735 = vrot.lane.b32.xlu0 %v2131, 1
        %v2736 = vpop.permute.xlu0 %2735
        %2737 = vrot.lane.b32.xlu0 %v2143, 1
        %v2738 = vpop.permute.xlu0 %2737
        %2739 = vrot.lane.b32.xlu0 %v2108, 1
        %v2740 = vpop.permute.xlu0 %2739
        %2741 = vrot.lane.b32.xlu0 %v2120, 1
        %v2742 = vpop.permute.xlu0 %2741
        %2743 = vrot.lane.b32.xlu0 %v2132, 1
        %v2744 = vpop.permute.xlu0 %2743
        %2745 = vrot.lane.b32.xlu0 %v2144, 1
        %v2746 = vpop.permute.xlu0 %2745
        %2747 = vrot.lane.b32.xlu0 %v2109, 1
        %v2748 = vpop.permute.xlu0 %2747
        %2749 = vrot.lane.b32.xlu0 %v2121, 1
        %v2750 = vpop.permute.xlu0 %2749
        %2751 = vrot.lane.b32.xlu0 %v2133, 1
        %v2752 = vpop.permute.xlu0 %2751
        %2753 = vrot.lane.b32.xlu0 %v2145, 1
        %v2754 = vpop.permute.xlu0 %2753
        %2755 = vrot.lane.b32.xlu0 %v2110, 1
        %v2756 = vpop.permute.xlu0 %2755
        %2757 = vrot.lane.b32.xlu0 %v2122, 1
        %v2758 = vpop.permute.xlu0 %2757
        %2759 = vrot.lane.b32.xlu0 %v2134, 1
        %v2760 = vpop.permute.xlu0 %2759
        %2761 = vrot.lane.b32.xlu0 %v2146, 1
        %v2762 = vpop.permute.xlu0 %2761
        %2763 = vrot.lane.b32.xlu0 %v2111, 1
        %v2764 = vpop.permute.xlu0 %2763
        %2765 = vrot.lane.b32.xlu0 %v2123, 1
        %v2766 = vpop.permute.xlu0 %2765
        %2767 = vrot.lane.b32.xlu0 %v2135, 1
        %v2768 = vpop.permute.xlu0 %2767
        %2769 = vrot.lane.b32.xlu0 %v2147, 1
        %v2770 = vpop.permute.xlu0 %2769
        %2771 = vrot.lane.b32.xlu0 %v2112, 1
        %v2772 = vpop.permute.xlu0 %2771
        %2773 = vrot.lane.b32.xlu0 %v2124, 1
        %v2774 = vpop.permute.xlu0 %2773
        %2775 = vrot.lane.b32.xlu0 %v2136, 1
        %v2776 = vpop.permute.xlu0 %2775
        %2777 = vrot.lane.b32.xlu0 %v2148, 1
        %v2778 = vpop.permute.xlu0 %2777
        %2779 = vrot.lane.b32.xlu0 %v2113, 1
        %v2780 = vpop.permute.xlu0 %2779
        %2781 = vrot.lane.b32.xlu0 %v2125, 1
        %v2782 = vpop.permute.xlu0 %2781
        %2783 = vrot.lane.b32.xlu0 %v2137, 1
        %v2784 = vpop.permute.xlu0 %2783
        %2785 = vrot.lane.b32.xlu0 %v2149, 1
        %v2786 = vpop.permute.xlu0 %2785
        %2787 = vrot.lane.b32.xlu0 %v2114, 1
        %v2788 = vpop.permute.xlu0 %2787
        %2789 = vrot.lane.b32.xlu0 %v2126, 1
        %v2790 = vpop.permute.xlu0 %2789
        %2791 = vrot.lane.b32.xlu0 %v2138, 1
        %v2792 = vpop.permute.xlu0 %2791
        %2793 = vrot.lane.b32.xlu0 %v2150, 1
        %v2794 = vpop.permute.xlu0 %2793
        %2795 = vrot.lane.b32.xlu0 %v2115, 1
        %v2796 = vpop.permute.xlu0 %2795
        %2797 = vrot.lane.b32.xlu0 %v2127, 1
        %v2798 = vpop.permute.xlu0 %2797
        %2799 = vrot.lane.b32.xlu0 %v2139, 1
        %v2800 = vpop.permute.xlu0 %2799
        %2801 = vrot.lane.b32.xlu0 %v2151, 1
        %v2802 = vpop.permute.xlu0 %2801
        %2803 = vrot.lane.b32.xlu0 %v2116, 1
        %v2804 = vpop.permute.xlu0 %2803
        %2805 = vrot.lane.b32.xlu0 %v2128, 1
        %v2806 = vpop.permute.xlu0 %2805
        %2807 = vrot.lane.b32.xlu0 %v2140, 1
        %v2808 = vpop.permute.xlu0 %2807
        %2809 = vrot.lane.b32.xlu0 %v2152, 1
        %v2810 = vpop.permute.xlu0 %2809
        %2811 = vrot.lane.b32.xlu0 %v2117, 1
        %v2812 = vpop.permute.xlu0 %2811
        %2813 = vrot.lane.b32.xlu0 %v2129, 1
        %v2814 = vpop.permute.xlu0 %2813
        %2815 = vrot.lane.b32.xlu0 %v2141, 1
        %v2816 = vpop.permute.xlu0 %2815
        %2817 = vrot.lane.b32.xlu0 %v2153, 1
        %v2818 = vpop.permute.xlu0 %2817
        %2819 = vrot.lane.b32.xlu0 %v2118, 1
        %v2820 = vpop.permute.xlu0 %2819
        %2821 = vrot.lane.b32.xlu0 %v2130, 1
        %v2822 = vpop.permute.xlu0 %2821
        %2823 = vrot.lane.b32.xlu0 %v2142, 1
        %v2824 = vpop.permute.xlu0 %2823
        %2825 = vrot.lane.b32.xlu0 %v2154, 1
        %v2826 = vpop.permute.xlu0 %2825
        %v2827 = vsel %vm741, %v2812, %v2820
        %v2828 = vsel %vm741, %v2814, %v2822
        %v2829 = vsel %vm741, %v2816, %v2824
        %v2830 = vsel %vm741, %v2818, %v2826
        %v2831 = vsel %vm741, %v2804, %v2812
        %v2832 = vsel %vm741, %v2806, %v2814
        %v2833 = vsel %vm741, %v2808, %v2816
        %v2834 = vsel %vm741, %v2810, %v2818
        %v2835 = vsel %vm741, %v2796, %v2804
        %v2836 = vsel %vm741, %v2798, %v2806
        %v2837 = vsel %vm741, %v2800, %v2808
        %v2838 = vsel %vm741, %v2802, %v2810
        %v2839 = vsel %vm741, %v2788, %v2796
        %v2840 = vsel %vm741, %v2790, %v2798
        %v2841 = vsel %vm741, %v2792, %v2800
        %v2842 = vsel %vm741, %v2794, %v2802
        %v2843 = vsel %vm741, %v2780, %v2788
        %v2844 = vsel %vm741, %v2782, %v2790
        %v2845 = vsel %vm741, %v2784, %v2792
        %v2846 = vsel %vm741, %v2786, %v2794
        %v2847 = vsel %vm741, %v2772, %v2780
        %v2848 = vsel %vm741, %v2774, %v2782
        %v2849 = vsel %vm741, %v2776, %v2784
        %v2850 = vsel %vm741, %v2778, %v2786
        %v2851 = vsel %vm741, %v2764, %v2772
        %v2852 = vsel %vm741, %v2766, %v2774
        %v2853 = vsel %vm741, %v2768, %v2776
        %v2854 = vsel %vm741, %v2770, %v2778
        %v2855 = vsel %vm741, %v2756, %v2764
        %v2856 = vsel %vm741, %v2758, %v2766
        %v2857 = vsel %vm741, %v2760, %v2768
        %v2858 = vsel %vm741, %v2762, %v2770
        %v2859 = vsel %vm741, %v2748, %v2756
        %v2860 = vsel %vm741, %v2750, %v2758
        %v2861 = vsel %vm741, %v2752, %v2760
        %v2862 = vsel %vm741, %v2754, %v2762
        %v2863 = vsel %vm741, %v2740, %v2748
        %v2864 = vsel %vm741, %v2742, %v2750
        %v2865 = vsel %vm741, %v2744, %v2752
        %v2866 = vsel %vm741, %v2746, %v2754
        %v2867 = vsel %vm741, %v2732, %v2740
        %v2868 = vsel %vm741, %v2734, %v2742
        %v2869 = vsel %vm741, %v2736, %v2744
        %v2870 = vsel %vm741, %v2738, %v2746
        %v2871 = vsel %vm741, %v2820, %v2732
        %v2872 = vsel %vm741, %v2822, %v2734
        %v2873 = vsel %vm741, %v2824, %v2736
        %v2874 = vsel %vm741, %v2826, %v2738
        %2875 = vst [vmem:[#allocation2 + $0x480] sm:$0xff] %v2871
        %2876 = vst [vmem:[#allocation2 + $0x488] sm:$0xff] %v2867
        %2877 = vst [vmem:[#allocation2 + $0x490] sm:$0xff] %v2863
        %2878 = vst [vmem:[#allocation2 + $0x498] sm:$0xff] %v2859
        %2879 = vst [vmem:[#allocation2 + $0x4a0] sm:$0xff] %v2855
        %2880 = vst [vmem:[#allocation2 + $0x4a8] sm:$0xff] %v2851
        %2881 = vst [vmem:[#allocation2 + $0x4b0] sm:$0xff] %v2847
        %2882 = vst [vmem:[#allocation2 + $0x4b8] sm:$0xff] %v2843
        %2883 = vst [vmem:[#allocation2 + $0x4c0] sm:$0xff] %v2839
        %2884 = vst [vmem:[#allocation2 + $0x4c8] sm:$0xff] %v2835
        %2885 = vst [vmem:[#allocation2 + $0x4d0] sm:$0xff] %v2831
        %2886 = vst [vmem:[#allocation2 + $0x4d8] sm:$0xff] %v2827
        %2887 = vst [vmem:[#allocation2 + $0x4e0] sm:$0xff] %v2872
        %2888 = vst [vmem:[#allocation2 + $0x4e8] sm:$0xff] %v2868
        %2889 = vst [vmem:[#allocation2 + $0x4f0] sm:$0xff] %v2864
        %2890 = vst [vmem:[#allocation2 + $0x4f8] sm:$0xff] %v2860
        %2891 = vst [vmem:[#allocation2 + $0x500] sm:$0xff] %v2856
        %2892 = vst [vmem:[#allocation2 + $0x508] sm:$0xff] %v2852
        %2893 = vst [vmem:[#allocation2 + $0x510] sm:$0xff] %v2848
        %2894 = vst [vmem:[#allocation2 + $0x518] sm:$0xff] %v2844
        %2895 = vst [vmem:[#allocation2 + $0x520] sm:$0xff] %v2840
        %2896 = vst [vmem:[#allocation2 + $0x528] sm:$0xff] %v2836
        %2897 = vst [vmem:[#allocation2 + $0x530] sm:$0xff] %v2832
        %2898 = vst [vmem:[#allocation2 + $0x538] sm:$0xff] %v2828
        %2899 = vst [vmem:[#allocation2 + $0x540] sm:$0xff] %v2873
        %2900 = vst [vmem:[#allocation2 + $0x548] sm:$0xff] %v2869
        %2901 = vst [vmem:[#allocation2 + $0x550] sm:$0xff] %v2865
        %2902 = vst [vmem:[#allocation2 + $0x558] sm:$0xff] %v2861
        %2903 = vst [vmem:[#allocation2 + $0x560] sm:$0xff] %v2857
        %2904 = vst [vmem:[#allocation2 + $0x568] sm:$0xff] %v2853
        %2905 = vst [vmem:[#allocation2 + $0x570] sm:$0xff] %v2849
        %2906 = vst [vmem:[#allocation2 + $0x578] sm:$0xff] %v2845
        %2907 = vst [vmem:[#allocation2 + $0x580] sm:$0xff] %v2841
        %2908 = vst [vmem:[#allocation2 + $0x588] sm:$0xff] %v2837
        %2909 = vst [vmem:[#allocation2 + $0x590] sm:$0xff] %v2833
        %2910 = vst [vmem:[#allocation2 + $0x598] sm:$0xff] %v2829
        %2911 = vst [vmem:[#allocation2 + $0x5a0] sm:$0xff] %v2874
        %2912 = vst [vmem:[#allocation2 + $0x5a8] sm:$0xff] %v2870
        %2913 = vst [vmem:[#allocation2 + $0x5b0] sm:$0xff] %v2866
        %2914 = vst [vmem:[#allocation2 + $0x5b8] sm:$0xff] %v2862
        %2915 = vst [vmem:[#allocation2 + $0x5c0] sm:$0xff] %v2858
        %2916 = vst [vmem:[#allocation2 + $0x5c8] sm:$0xff] %v2854
        %2917 = vst [vmem:[#allocation2 + $0x5d0] sm:$0xff] %v2850
        %2918 = vst [vmem:[#allocation2 + $0x5d8] sm:$0xff] %v2846
        %2919 = vst [vmem:[#allocation2 + $0x5e0] sm:$0xff] %v2842
        %2920 = vst [vmem:[#allocation2 + $0x5e8] sm:$0xff] %v2838
        %2921 = vst [vmem:[#allocation2 + $0x5f0] sm:$0xff] %v2834
        %2922 = vst [vmem:[#allocation2 + $0x5f8] sm:$0xff] %v2830
        %2923 = vst [vmem:[#allocation2 + $0x600] sm:$0xff] %v2107
        %2924 = vst [vmem:[#allocation2 + $0x608] sm:$0xff] %v2108
        %2925 = vst [vmem:[#allocation2 + $0x610] sm:$0xff] %v2109
        %2926 = vst [vmem:[#allocation2 + $0x618] sm:$0xff] %v2110
        %2927 = vst [vmem:[#allocation2 + $0x620] sm:$0xff] %v2111
        %2928 = vst [vmem:[#allocation2 + $0x628] sm:$0xff] %v2112
        %2929 = vst [vmem:[#allocation2 + $0x630] sm:$0xff] %v2113
        %2930 = vst [vmem:[#allocation2 + $0x638] sm:$0xff] %v2114
        %2931 = vst [vmem:[#allocation2 + $0x640] sm:$0xff] %v2115
        %2932 = vst [vmem:[#allocation2 + $0x648] sm:$0xff] %v2116
        %2933 = vst [vmem:[#allocation2 + $0x650] sm:$0xff] %v2117
        %2934 = vst [vmem:[#allocation2 + $0x658] sm:$0xff] %v2118
        %2935 = vst [vmem:[#allocation2 + $0x660] sm:$0xff] %v2119
        %2936 = vst [vmem:[#allocation2 + $0x668] sm:$0xff] %v2120
        %2937 = vst [vmem:[#allocation2 + $0x670] sm:$0xff] %v2121
        %2938 = vst [vmem:[#allocation2 + $0x678] sm:$0xff] %v2122
        %2939 = vst [vmem:[#allocation2 + $0x680] sm:$0xff] %v2123
        %2940 = vst [vmem:[#allocation2 + $0x688] sm:$0xff] %v2124
        %2941 = vst [vmem:[#allocation2 + $0x690] sm:$0xff] %v2125
        %2942 = vst [vmem:[#allocation2 + $0x698] sm:$0xff] %v2126
        %2943 = vst [vmem:[#allocation2 + $0x6a0] sm:$0xff] %v2127
        %2944 = vst [vmem:[#allocation2 + $0x6a8] sm:$0xff] %v2128
        %2945 = vst [vmem:[#allocation2 + $0x6b0] sm:$0xff] %v2129
        %2946 = vst [vmem:[#allocation2 + $0x6b8] sm:$0xff] %v2130
        %2947 = vst [vmem:[#allocation2 + $0x6c0] sm:$0xff] %v2131
        %2948 = vst [vmem:[#allocation2 + $0x6c8] sm:$0xff] %v2132
        %2949 = vst [vmem:[#allocation2 + $0x6d0] sm:$0xff] %v2133
        %2950 = vst [vmem:[#allocation2 + $0x6d8] sm:$0xff] %v2134
        %2951 = vst [vmem:[#allocation2 + $0x6e0] sm:$0xff] %v2135
        %2952 = vst [vmem:[#allocation2 + $0x6e8] sm:$0xff] %v2136
        %2953 = vst [vmem:[#allocation2 + $0x6f0] sm:$0xff] %v2137
        %2954 = vst [vmem:[#allocation2 + $0x6f8] sm:$0xff] %v2138
        %2955 = vst [vmem:[#allocation2 + $0x700] sm:$0xff] %v2139
        %2956 = vst [vmem:[#allocation2 + $0x708] sm:$0xff] %v2140
        %2957 = vst [vmem:[#allocation2 + $0x710] sm:$0xff] %v2141
        %2958 = vst [vmem:[#allocation2 + $0x718] sm:$0xff] %v2142
        %2959 = vst [vmem:[#allocation2 + $0x720] sm:$0xff] %v2143
        %2960 = vst [vmem:[#allocation2 + $0x728] sm:$0xff] %v2144
        %2961 = vst [vmem:[#allocation2 + $0x730] sm:$0xff] %v2145
        %2962 = vst [vmem:[#allocation2 + $0x738] sm:$0xff] %v2146
        %2963 = vst [vmem:[#allocation2 + $0x740] sm:$0xff] %v2147
        %2964 = vst [vmem:[#allocation2 + $0x748] sm:$0xff] %v2148
        %2965 = vst [vmem:[#allocation2 + $0x750] sm:$0xff] %v2149
        %2966 = vst [vmem:[#allocation2 + $0x758] sm:$0xff] %v2150
        %2967 = vst [vmem:[#allocation2 + $0x760] sm:$0xff] %v2151
        %2968 = vst [vmem:[#allocation2 + $0x768] sm:$0xff] %v2152
        %2969 = vst [vmem:[#allocation2 + $0x770] sm:$0xff] %v2153
        %2970 = vst [vmem:[#allocation2 + $0x778] sm:$0xff] %v2154
        %2971 = vrot.lane.b32.xlu0 %v2107, 127
        %v2972 = vpop.permute.xlu0 %2971
        %2973 = vrot.lane.b32.xlu0 %v2119, 127
        %v2974 = vpop.permute.xlu0 %2973
        %2975 = vrot.lane.b32.xlu0 %v2131, 127
        %v2976 = vpop.permute.xlu0 %2975
        %2977 = vrot.lane.b32.xlu0 %v2143, 127
        %v2978 = vpop.permute.xlu0 %2977
        %2979 = vrot.lane.b32.xlu0 %v2108, 127
        %v2980 = vpop.permute.xlu0 %2979
        %2981 = vrot.lane.b32.xlu0 %v2120, 127
        %v2982 = vpop.permute.xlu0 %2981
        %2983 = vrot.lane.b32.xlu0 %v2132, 127
        %v2984 = vpop.permute.xlu0 %2983
        %2985 = vrot.lane.b32.xlu0 %v2144, 127
        %v2986 = vpop.permute.xlu0 %2985
        %2987 = vrot.lane.b32.xlu0 %v2109, 127
        %v2988 = vpop.permute.xlu0 %2987
        %2989 = vrot.lane.b32.xlu0 %v2121, 127
        %v2990 = vpop.permute.xlu0 %2989
        %2991 = vrot.lane.b32.xlu0 %v2133, 127
        %v2992 = vpop.permute.xlu0 %2991
        %2993 = vrot.lane.b32.xlu0 %v2145, 127
        %v2994 = vpop.permute.xlu0 %2993
        %2995 = vrot.lane.b32.xlu0 %v2110, 127
        %v2996 = vpop.permute.xlu0 %2995
        %2997 = vrot.lane.b32.xlu0 %v2122, 127
        %v2998 = vpop.permute.xlu0 %2997
        %2999 = vrot.lane.b32.xlu0 %v2134, 127
        %v3000 = vpop.permute.xlu0 %2999
        %3001 = vrot.lane.b32.xlu0 %v2146, 127
        %v3002 = vpop.permute.xlu0 %3001
        %3003 = vrot.lane.b32.xlu0 %v2111, 127
        %v3004 = vpop.permute.xlu0 %3003
        %3005 = vrot.lane.b32.xlu0 %v2123, 127
        %v3006 = vpop.permute.xlu0 %3005
        %3007 = vrot.lane.b32.xlu0 %v2135, 127
        %v3008 = vpop.permute.xlu0 %3007
        %3009 = vrot.lane.b32.xlu0 %v2147, 127
        %v3010 = vpop.permute.xlu0 %3009
        %3011 = vrot.lane.b32.xlu0 %v2112, 127
        %v3012 = vpop.permute.xlu0 %3011
        %3013 = vrot.lane.b32.xlu0 %v2124, 127
        %v3014 = vpop.permute.xlu0 %3013
        %3015 = vrot.lane.b32.xlu0 %v2136, 127
        %v3016 = vpop.permute.xlu0 %3015
        %3017 = vrot.lane.b32.xlu0 %v2148, 127
        %v3018 = vpop.permute.xlu0 %3017
        %3019 = vrot.lane.b32.xlu0 %v2113, 127
        %v3020 = vpop.permute.xlu0 %3019
        %3021 = vrot.lane.b32.xlu0 %v2125, 127
        %v3022 = vpop.permute.xlu0 %3021
        %3023 = vrot.lane.b32.xlu0 %v2137, 127
        %v3024 = vpop.permute.xlu0 %3023
        %3025 = vrot.lane.b32.xlu0 %v2149, 127
        %v3026 = vpop.permute.xlu0 %3025
        %3027 = vrot.lane.b32.xlu0 %v2114, 127
        %v3028 = vpop.permute.xlu0 %3027
        %3029 = vrot.lane.b32.xlu0 %v2126, 127
        %v3030 = vpop.permute.xlu0 %3029
        %3031 = vrot.lane.b32.xlu0 %v2138, 127
        %v3032 = vpop.permute.xlu0 %3031
        %3033 = vrot.lane.b32.xlu0 %v2150, 127
        %v3034 = vpop.permute.xlu0 %3033
        %3035 = vrot.lane.b32.xlu0 %v2115, 127
        %v3036 = vpop.permute.xlu0 %3035
        %3037 = vrot.lane.b32.xlu0 %v2127, 127
        %v3038 = vpop.permute.xlu0 %3037
        %3039 = vrot.lane.b32.xlu0 %v2139, 127
        %v3040 = vpop.permute.xlu0 %3039
        %3041 = vrot.lane.b32.xlu0 %v2151, 127
        %v3042 = vpop.permute.xlu0 %3041
        %3043 = vrot.lane.b32.xlu0 %v2116, 127
        %v3044 = vpop.permute.xlu0 %3043
        %3045 = vrot.lane.b32.xlu0 %v2128, 127
        %v3046 = vpop.permute.xlu0 %3045
        %3047 = vrot.lane.b32.xlu0 %v2140, 127
        %v3048 = vpop.permute.xlu0 %3047
        %3049 = vrot.lane.b32.xlu0 %v2152, 127
        %v3050 = vpop.permute.xlu0 %3049
        %3051 = vrot.lane.b32.xlu0 %v2117, 127
        %v3052 = vpop.permute.xlu0 %3051
        %3053 = vrot.lane.b32.xlu0 %v2129, 127
        %v3054 = vpop.permute.xlu0 %3053
        %3055 = vrot.lane.b32.xlu0 %v2141, 127
        %v3056 = vpop.permute.xlu0 %3055
        %3057 = vrot.lane.b32.xlu0 %v2153, 127
        %v3058 = vpop.permute.xlu0 %3057
        %3059 = vrot.lane.b32.xlu0 %v2118, 127
        %v3060 = vpop.permute.xlu0 %3059
        %3061 = vrot.lane.b32.xlu0 %v2130, 127
        %v3062 = vpop.permute.xlu0 %3061
        %3063 = vrot.lane.b32.xlu0 %v2142, 127
        %v3064 = vpop.permute.xlu0 %3063
        %3065 = vrot.lane.b32.xlu0 %v2154, 127
        %v3066 = vpop.permute.xlu0 %3065
        %v3067 = vsel %vm862, %v3052, %v3060
        %v3068 = vsel %vm862, %v3054, %v3062
        %v3069 = vsel %vm862, %v3056, %v3064
        %v3070 = vsel %vm862, %v3058, %v3066
        %v3071 = vsel %vm862, %v3044, %v3052
        %v3072 = vsel %vm862, %v3046, %v3054
        %v3073 = vsel %vm862, %v3048, %v3056
        %v3074 = vsel %vm862, %v3050, %v3058
        %v3075 = vsel %vm862, %v3036, %v3044
        %v3076 = vsel %vm862, %v3038, %v3046
        %v3077 = vsel %vm862, %v3040, %v3048
        %v3078 = vsel %vm862, %v3042, %v3050
        %v3079 = vsel %vm862, %v3028, %v3036
        %v3080 = vsel %vm862, %v3030, %v3038
        %v3081 = vsel %vm862, %v3032, %v3040
        %v3082 = vsel %vm862, %v3034, %v3042
        %v3083 = vsel %vm862, %v3020, %v3028
        %v3084 = vsel %vm862, %v3022, %v3030
        %v3085 = vsel %vm862, %v3024, %v3032
        %v3086 = vsel %vm862, %v3026, %v3034
        %v3087 = vsel %vm862, %v3012, %v3020
        %v3088 = vsel %vm862, %v3014, %v3022
        %v3089 = vsel %vm862, %v3016, %v3024
        %v3090 = vsel %vm862, %v3018, %v3026
        %v3091 = vsel %vm862, %v3004, %v3012
        %v3092 = vsel %vm862, %v3006, %v3014
        %v3093 = vsel %vm862, %v3008, %v3016
        %v3094 = vsel %vm862, %v3010, %v3018
        %v3095 = vsel %vm862, %v2996, %v3004
        %v3096 = vsel %vm862, %v2998, %v3006
        %v3097 = vsel %vm862, %v3000, %v3008
        %v3098 = vsel %vm862, %v3002, %v3010
        %v3099 = vsel %vm862, %v2988, %v2996
        %v3100 = vsel %vm862, %v2990, %v2998
        %v3101 = vsel %vm862, %v2992, %v3000
        %v3102 = vsel %vm862, %v2994, %v3002
        %v3103 = vsel %vm862, %v2980, %v2988
        %v3104 = vsel %vm862, %v2982, %v2990
        %v3105 = vsel %vm862, %v2984, %v2992
        %v3106 = vsel %vm862, %v2986, %v2994
        %v3107 = vsel %vm862, %v2972, %v2980
        %v3108 = vsel %vm862, %v2974, %v2982
        %v3109 = vsel %vm862, %v2976, %v2984
        %v3110 = vsel %vm862, %v2978, %v2986
        %v3111 = vsel %vm862, %v3060, %v2972
        %v3112 = vsel %vm862, %v3062, %v2974
        %v3113 = vsel %vm862, %v3064, %v2976
        %v3114 = vsel %vm862, %v3066, %v2978
        %3115 = vst [vmem:[#allocation2 + $0x780] sm:$0xff] %v3107
        %3116 = vst [vmem:[#allocation2 + $0x788] sm:$0xff] %v3103
        %3117 = vst [vmem:[#allocation2 + $0x790] sm:$0xff] %v3099
        %3118 = vst [vmem:[#allocation2 + $0x798] sm:$0xff] %v3095
        %3119 = vst [vmem:[#allocation2 + $0x7a0] sm:$0xff] %v3091
        %3120 = vst [vmem:[#allocation2 + $0x7a8] sm:$0xff] %v3087
        %3121 = vst [vmem:[#allocation2 + $0x7b0] sm:$0xff] %v3083
        %3122 = vst [vmem:[#allocation2 + $0x7b8] sm:$0xff] %v3079
        %3123 = vst [vmem:[#allocation2 + $0x7c0] sm:$0xff] %v3075
        %3124 = vst [vmem:[#allocation2 + $0x7c8] sm:$0xff] %v3071
        %3125 = vst [vmem:[#allocation2 + $0x7d0] sm:$0xff] %v3067
        %3126 = vst [vmem:[#allocation2 + $0x7d8] sm:$0xff] %v3111
        %3127 = vst [vmem:[#allocation2 + $0x7e0] sm:$0xff] %v3108
        %3128 = vst [vmem:[#allocation2 + $0x7e8] sm:$0xff] %v3104
        %3129 = vst [vmem:[#allocation2 + $0x7f0] sm:$0xff] %v3100
        %3130 = vst [vmem:[#allocation2 + $0x7f8] sm:$0xff] %v3096
        %3131 = vst [vmem:[#allocation2 + $0x800] sm:$0xff] %v3092
        %3132 = vst [vmem:[#allocation2 + $0x808] sm:$0xff] %v3088
        %3133 = vst [vmem:[#allocation2 + $0x810] sm:$0xff] %v3084
        %3134 = vst [vmem:[#allocation2 + $0x818] sm:$0xff] %v3080
        %3135 = vst [vmem:[#allocation2 + $0x820] sm:$0xff] %v3076
        %3136 = vst [vmem:[#allocation2 + $0x828] sm:$0xff] %v3072
        %3137 = vst [vmem:[#allocation2 + $0x830] sm:$0xff] %v3068
        %3138 = vst [vmem:[#allocation2 + $0x838] sm:$0xff] %v3112
        %3139 = vst [vmem:[#allocation2 + $0x840] sm:$0xff] %v3109
        %3140 = vst [vmem:[#allocation2 + $0x848] sm:$0xff] %v3105
        %3141 = vst [vmem:[#allocation2 + $0x850] sm:$0xff] %v3101
        %3142 = vst [vmem:[#allocation2 + $0x858] sm:$0xff] %v3097
        %3143 = vst [vmem:[#allocation2 + $0x860] sm:$0xff] %v3093
        %3144 = vst [vmem:[#allocation2 + $0x868] sm:$0xff] %v3089
        %3145 = vst [vmem:[#allocation2 + $0x870] sm:$0xff] %v3085
        %3146 = vst [vmem:[#allocation2 + $0x878] sm:$0xff] %v3081
        %3147 = vst [vmem:[#allocation2 + $0x880] sm:$0xff] %v3077
        %3148 = vst [vmem:[#allocation2 + $0x888] sm:$0xff] %v3073
        %3149 = vst [vmem:[#allocation2 + $0x890] sm:$0xff] %v3069
        %3150 = vst [vmem:[#allocation2 + $0x898] sm:$0xff] %v3113
        %3151 = vst [vmem:[#allocation2 + $0x8a0] sm:$0xff] %v3110
        %3152 = vst [vmem:[#allocation2 + $0x8a8] sm:$0xff] %v3106
        %3153 = vst [vmem:[#allocation2 + $0x8b0] sm:$0xff] %v3102
        %3154 = vst [vmem:[#allocation2 + $0x8b8] sm:$0xff] %v3098
        %3155 = vst [vmem:[#allocation2 + $0x8c0] sm:$0xff] %v3094
        %3156 = vst [vmem:[#allocation2 + $0x8c8] sm:$0xff] %v3090
        %3157 = vst [vmem:[#allocation2 + $0x8d0] sm:$0xff] %v3086
        %3158 = vst [vmem:[#allocation2 + $0x8d8] sm:$0xff] %v3082
        %3159 = vst [vmem:[#allocation2 + $0x8e0] sm:$0xff] %v3078
        %3160 = vst [vmem:[#allocation2 + $0x8e8] sm:$0xff] %v3074
        %3161 = vst [vmem:[#allocation2 + $0x8f0] sm:$0xff] %v3070
        %3162 = vst [vmem:[#allocation2 + $0x8f8] sm:$0xff] %v3114
        %3163 = vrot.lane.b32.xlu0 %v2107, 111
        %v3164 = vpop.permute.xlu0 %3163
        %3165 = vrot.lane.b32.xlu0 %v2119, 111
        %v3166 = vpop.permute.xlu0 %3165
        %3167 = vrot.lane.b32.xlu0 %v2131, 111
        %v3168 = vpop.permute.xlu0 %3167
        %3169 = vrot.lane.b32.xlu0 %v2143, 111
        %v3170 = vpop.permute.xlu0 %3169
        %3171 = vrot.lane.b32.xlu0 %v2108, 111
        %v3172 = vpop.permute.xlu0 %3171
        %3173 = vrot.lane.b32.xlu0 %v2120, 111
        %v3174 = vpop.permute.xlu0 %3173
        %3175 = vrot.lane.b32.xlu0 %v2132, 111
        %v3176 = vpop.permute.xlu0 %3175
        %3177 = vrot.lane.b32.xlu0 %v2144, 111
        %v3178 = vpop.permute.xlu0 %3177
        %3179 = vrot.lane.b32.xlu0 %v2109, 111
        %v3180 = vpop.permute.xlu0 %3179
        %3181 = vrot.lane.b32.xlu0 %v2121, 111
        %v3182 = vpop.permute.xlu0 %3181
        %3183 = vrot.lane.b32.xlu0 %v2133, 111
        %v3184 = vpop.permute.xlu0 %3183
        %3185 = vrot.lane.b32.xlu0 %v2145, 111
        %v3186 = vpop.permute.xlu0 %3185
        %3187 = vrot.lane.b32.xlu0 %v2110, 111
        %v3188 = vpop.permute.xlu0 %3187
        %3189 = vrot.lane.b32.xlu0 %v2122, 111
        %v3190 = vpop.permute.xlu0 %3189
        %3191 = vrot.lane.b32.xlu0 %v2134, 111
        %v3192 = vpop.permute.xlu0 %3191
        %3193 = vrot.lane.b32.xlu0 %v2146, 111
        %v3194 = vpop.permute.xlu0 %3193
        %3195 = vrot.lane.b32.xlu0 %v2111, 111
        %v3196 = vpop.permute.xlu0 %3195
        %3197 = vrot.lane.b32.xlu0 %v2123, 111
        %v3198 = vpop.permute.xlu0 %3197
        %3199 = vrot.lane.b32.xlu0 %v2135, 111
        %v3200 = vpop.permute.xlu0 %3199
        %3201 = vrot.lane.b32.xlu0 %v2147, 111
        %v3202 = vpop.permute.xlu0 %3201
        %3203 = vrot.lane.b32.xlu0 %v2112, 111
        %v3204 = vpop.permute.xlu0 %3203
        %3205 = vrot.lane.b32.xlu0 %v2124, 111
        %v3206 = vpop.permute.xlu0 %3205
        %3207 = vrot.lane.b32.xlu0 %v2136, 111
        %v3208 = vpop.permute.xlu0 %3207
        %3209 = vrot.lane.b32.xlu0 %v2148, 111
        %v3210 = vpop.permute.xlu0 %3209
        %3211 = vrot.lane.b32.xlu0 %v2113, 111
        %v3212 = vpop.permute.xlu0 %3211
        %3213 = vrot.lane.b32.xlu0 %v2125, 111
        %v3214 = vpop.permute.xlu0 %3213
        %3215 = vrot.lane.b32.xlu0 %v2137, 111
        %v3216 = vpop.permute.xlu0 %3215
        %3217 = vrot.lane.b32.xlu0 %v2149, 111
        %v3218 = vpop.permute.xlu0 %3217
        %3219 = vrot.lane.b32.xlu0 %v2114, 111
        %v3220 = vpop.permute.xlu0 %3219
        %3221 = vrot.lane.b32.xlu0 %v2126, 111
        %v3222 = vpop.permute.xlu0 %3221
        %3223 = vrot.lane.b32.xlu0 %v2138, 111
        %v3224 = vpop.permute.xlu0 %3223
        %3225 = vrot.lane.b32.xlu0 %v2150, 111
        %v3226 = vpop.permute.xlu0 %3225
        %3227 = vrot.lane.b32.xlu0 %v2115, 111
        %v3228 = vpop.permute.xlu0 %3227
        %3229 = vrot.lane.b32.xlu0 %v2127, 111
        %v3230 = vpop.permute.xlu0 %3229
        %3231 = vrot.lane.b32.xlu0 %v2139, 111
        %v3232 = vpop.permute.xlu0 %3231
        %3233 = vrot.lane.b32.xlu0 %v2151, 111
        %v3234 = vpop.permute.xlu0 %3233
        %3235 = vrot.lane.b32.xlu0 %v2116, 111
        %v3236 = vpop.permute.xlu0 %3235
        %3237 = vrot.lane.b32.xlu0 %v2128, 111
        %v3238 = vpop.permute.xlu0 %3237
        %3239 = vrot.lane.b32.xlu0 %v2140, 111
        %v3240 = vpop.permute.xlu0 %3239
        %3241 = vrot.lane.b32.xlu0 %v2152, 111
        %v3242 = vpop.permute.xlu0 %3241
        %3243 = vrot.lane.b32.xlu0 %v2117, 111
        %v3244 = vpop.permute.xlu0 %3243
        %3245 = vrot.lane.b32.xlu0 %v2129, 111
        %v3246 = vpop.permute.xlu0 %3245
        %3247 = vrot.lane.b32.xlu0 %v2141, 111
        %v3248 = vpop.permute.xlu0 %3247
        %3249 = vrot.lane.b32.xlu0 %v2153, 111
        %v3250 = vpop.permute.xlu0 %3249
        %3251 = vrot.lane.b32.xlu0 %v2118, 111
        %v3252 = vpop.permute.xlu0 %3251
        %3253 = vrot.lane.b32.xlu0 %v2130, 111
        %v3254 = vpop.permute.xlu0 %3253
        %3255 = vrot.lane.b32.xlu0 %v2142, 111
        %v3256 = vpop.permute.xlu0 %3255
        %3257 = vrot.lane.b32.xlu0 %v2154, 111
        %v3258 = vpop.permute.xlu0 %3257
        %v3259 = vsel %vm959, %v3244, %v3252
        %v3260 = vsel %vm959, %v3246, %v3254
        %v3261 = vsel %vm959, %v3248, %v3256
        %v3262 = vsel %vm959, %v3250, %v3258
        %v3263 = vsel %vm959, %v3236, %v3244
        %v3264 = vsel %vm959, %v3238, %v3246
        %v3265 = vsel %vm959, %v3240, %v3248
        %v3266 = vsel %vm959, %v3242, %v3250
        %v3267 = vsel %vm959, %v3228, %v3236
        %v3268 = vsel %vm959, %v3230, %v3238
        %v3269 = vsel %vm959, %v3232, %v3240
        %v3270 = vsel %vm959, %v3234, %v3242
        %v3271 = vsel %vm959, %v3220, %v3228
        %v3272 = vsel %vm959, %v3222, %v3230
        %v3273 = vsel %vm959, %v3224, %v3232
        %v3274 = vsel %vm959, %v3226, %v3234
        %v3275 = vsel %vm959, %v3212, %v3220
        %v3276 = vsel %vm959, %v3214, %v3222
        %v3277 = vsel %vm959, %v3216, %v3224
        %v3278 = vsel %vm959, %v3218, %v3226
        %v3279 = vsel %vm959, %v3204, %v3212
        %v3280 = vsel %vm959, %v3206, %v3214
        %v3281 = vsel %vm959, %v3208, %v3216
        %v3282 = vsel %vm959, %v3210, %v3218
        %v3283 = vsel %vm959, %v3196, %v3204
        %v3284 = vsel %vm959, %v3198, %v3206
        %v3285 = vsel %vm959, %v3200, %v3208
        %v3286 = vsel %vm959, %v3202, %v3210
        %v3287 = vsel %vm959, %v3188, %v3196
        %v3288 = vsel %vm959, %v3190, %v3198
        %v3289 = vsel %vm959, %v3192, %v3200
        %v3290 = vsel %vm959, %v3194, %v3202
        %v3291 = vsel %vm959, %v3180, %v3188
        %v3292 = vsel %vm959, %v3182, %v3190
        %v3293 = vsel %vm959, %v3184, %v3192
        %v3294 = vsel %vm959, %v3186, %v3194
        %v3295 = vsel %vm959, %v3172, %v3180
        %v3296 = vsel %vm959, %v3174, %v3182
        %v3297 = vsel %vm959, %v3176, %v3184
        %v3298 = vsel %vm959, %v3178, %v3186
        %v3299 = vsel %vm959, %v3164, %v3172
        %v3300 = vsel %vm959, %v3166, %v3174
        %v3301 = vsel %vm959, %v3168, %v3176
        %v3302 = vsel %vm959, %v3170, %v3178
        %v3303 = vsel %vm959, %v3252, %v3164
        %v3304 = vsel %vm959, %v3254, %v3166
        %v3305 = vsel %vm959, %v3256, %v3168
        %v3306 = vsel %vm959, %v3258, %v3170
        %3307 = vst [vmem:[#allocation2 + $0x900] sm:$0xff] %v3299
        %3308 = vst [vmem:[#allocation2 + $0x908] sm:$0xff] %v3295
        %3309 = vst [vmem:[#allocation2 + $0x910] sm:$0xff] %v3291
        %3310 = vst [vmem:[#allocation2 + $0x918] sm:$0xff] %v3287
        %3311 = vst [vmem:[#allocation2 + $0x920] sm:$0xff] %v3283
        %3312 = vst [vmem:[#allocation2 + $0x928] sm:$0xff] %v3279
        %3313 = vst [vmem:[#allocation2 + $0x930] sm:$0xff] %v3275
        %3314 = vst [vmem:[#allocation2 + $0x938] sm:$0xff] %v3271
        %3315 = vst [vmem:[#allocation2 + $0x940] sm:$0xff] %v3267
        %3316 = vst [vmem:[#allocation2 + $0x948] sm:$0xff] %v3263
        %3317 = vst [vmem:[#allocation2 + $0x950] sm:$0xff] %v3259
        %3318 = vst [vmem:[#allocation2 + $0x958] sm:$0xff] %v3303
        %3319 = vst [vmem:[#allocation2 + $0x960] sm:$0xff] %v3300
        %3320 = vst [vmem:[#allocation2 + $0x968] sm:$0xff] %v3296
        %3321 = vst [vmem:[#allocation2 + $0x970] sm:$0xff] %v3292
        %3322 = vst [vmem:[#allocation2 + $0x978] sm:$0xff] %v3288
        %3323 = vst [vmem:[#allocation2 + $0x980] sm:$0xff] %v3284
        %3324 = vst [vmem:[#allocation2 + $0x988] sm:$0xff] %v3280
        %3325 = vst [vmem:[#allocation2 + $0x990] sm:$0xff] %v3276
        %3326 = vst [vmem:[#allocation2 + $0x998] sm:$0xff] %v3272
        %3327 = vst [vmem:[#allocation2 + $0x9a0] sm:$0xff] %v3268
        %3328 = vst [vmem:[#allocation2 + $0x9a8] sm:$0xff] %v3264
        %3329 = vst [vmem:[#allocation2 + $0x9b0] sm:$0xff] %v3260
        %3330 = vst [vmem:[#allocation2 + $0x9b8] sm:$0xff] %v3304
        %3331 = vst [vmem:[#allocation2 + $0x9c0] sm:$0xff] %v3301
        %3332 = vst [vmem:[#allocation2 + $0x9c8] sm:$0xff] %v3297
        %3333 = vst [vmem:[#allocation2 + $0x9d0] sm:$0xff] %v3293
        %3334 = vst [vmem:[#allocation2 + $0x9d8] sm:$0xff] %v3289
        %3335 = vst [vmem:[#allocation2 + $0x9e0] sm:$0xff] %v3285
        %3336 = vst [vmem:[#allocation2 + $0x9e8] sm:$0xff] %v3281
        %3337 = vst [vmem:[#allocation2 + $0x9f0] sm:$0xff] %v3277
        %3338 = vst [vmem:[#allocation2 + $0x9f8] sm:$0xff] %v3273
        %3339 = vst [vmem:[#allocation2 + $0xa00] sm:$0xff] %v3269
        %3340 = vst [vmem:[#allocation2 + $0xa08] sm:$0xff] %v3265
        %3341 = vst [vmem:[#allocation2 + $0xa10] sm:$0xff] %v3261
        %3342 = vst [vmem:[#allocation2 + $0xa18] sm:$0xff] %v3305
        %3343 = vst [vmem:[#allocation2 + $0xa20] sm:$0xff] %v3302
        %3344 = vst [vmem:[#allocation2 + $0xa28] sm:$0xff] %v3298
        %3345 = vst [vmem:[#allocation2 + $0xa30] sm:$0xff] %v3294
        %3346 = vst [vmem:[#allocation2 + $0xa38] sm:$0xff] %v3290
        %3347 = vst [vmem:[#allocation2 + $0xa40] sm:$0xff] %v3286
        %3348 = vst [vmem:[#allocation2 + $0xa48] sm:$0xff] %v3282
        %3349 = vst [vmem:[#allocation2 + $0xa50] sm:$0xff] %v3278
        %3350 = vst [vmem:[#allocation2 + $0xa58] sm:$0xff] %v3274
        %3351 = vst [vmem:[#allocation2 + $0xa60] sm:$0xff] %v3270
        %3352 = vst [vmem:[#allocation2 + $0xa68] sm:$0xff] %v3266
        %3353 = vst [vmem:[#allocation2 + $0xa70] sm:$0xff] %v3262
        %3354 = vst [vmem:[#allocation2 + $0xa78] sm:$0xff] %v3306
        %3355 = vrot.lane.b32.xlu0 %v2107, 110
        %v3356 = vpop.permute.xlu0 %3355
        %3357 = vrot.lane.b32.xlu0 %v2119, 110
        %v3358 = vpop.permute.xlu0 %3357
        %3359 = vrot.lane.b32.xlu0 %v2131, 110
        %v3360 = vpop.permute.xlu0 %3359
        %3361 = vrot.lane.b32.xlu0 %v2143, 110
        %v3362 = vpop.permute.xlu0 %3361
        %3363 = vrot.lane.b32.xlu0 %v2108, 110
        %v3364 = vpop.permute.xlu0 %3363
        %3365 = vrot.lane.b32.xlu0 %v2120, 110
        %v3366 = vpop.permute.xlu0 %3365
        %3367 = vrot.lane.b32.xlu0 %v2132, 110
        %v3368 = vpop.permute.xlu0 %3367
        %3369 = vrot.lane.b32.xlu0 %v2144, 110
        %v3370 = vpop.permute.xlu0 %3369
        %3371 = vrot.lane.b32.xlu0 %v2109, 110
        %v3372 = vpop.permute.xlu0 %3371
        %3373 = vrot.lane.b32.xlu0 %v2121, 110
        %v3374 = vpop.permute.xlu0 %3373
        %3375 = vrot.lane.b32.xlu0 %v2133, 110
        %v3376 = vpop.permute.xlu0 %3375
        %3377 = vrot.lane.b32.xlu0 %v2145, 110
        %v3378 = vpop.permute.xlu0 %3377
        %3379 = vrot.lane.b32.xlu0 %v2110, 110
        %v3380 = vpop.permute.xlu0 %3379
        %3381 = vrot.lane.b32.xlu0 %v2122, 110
        %v3382 = vpop.permute.xlu0 %3381
        %3383 = vrot.lane.b32.xlu0 %v2134, 110
        %v3384 = vpop.permute.xlu0 %3383
        %3385 = vrot.lane.b32.xlu0 %v2146, 110
        %v3386 = vpop.permute.xlu0 %3385
        %3387 = vrot.lane.b32.xlu0 %v2111, 110
        %v3388 = vpop.permute.xlu0 %3387
        %3389 = vrot.lane.b32.xlu0 %v2123, 110
        %v3390 = vpop.permute.xlu0 %3389
        %3391 = vrot.lane.b32.xlu0 %v2135, 110
        %v3392 = vpop.permute.xlu0 %3391
        %3393 = vrot.lane.b32.xlu0 %v2147, 110
        %v3394 = vpop.permute.xlu0 %3393
        %3395 = vrot.lane.b32.xlu0 %v2112, 110
        %v3396 = vpop.permute.xlu0 %3395
        %3397 = vrot.lane.b32.xlu0 %v2124, 110
        %v3398 = vpop.permute.xlu0 %3397
        %3399 = vrot.lane.b32.xlu0 %v2136, 110
        %v3400 = vpop.permute.xlu0 %3399
        %3401 = vrot.lane.b32.xlu0 %v2148, 110
        %v3402 = vpop.permute.xlu0 %3401
        %3403 = vrot.lane.b32.xlu0 %v2113, 110
        %v3404 = vpop.permute.xlu0 %3403
        %3405 = vrot.lane.b32.xlu0 %v2125, 110
        %v3406 = vpop.permute.xlu0 %3405
        %3407 = vrot.lane.b32.xlu0 %v2137, 110
        %v3408 = vpop.permute.xlu0 %3407
        %3409 = vrot.lane.b32.xlu0 %v2149, 110
        %v3410 = vpop.permute.xlu0 %3409
        %3411 = vrot.lane.b32.xlu0 %v2114, 110
        %v3412 = vpop.permute.xlu0 %3411
        %3413 = vrot.lane.b32.xlu0 %v2126, 110
        %v3414 = vpop.permute.xlu0 %3413
        %3415 = vrot.lane.b32.xlu0 %v2138, 110
        %v3416 = vpop.permute.xlu0 %3415
        %3417 = vrot.lane.b32.xlu0 %v2150, 110
        %v3418 = vpop.permute.xlu0 %3417
        %3419 = vrot.lane.b32.xlu0 %v2115, 110
        %v3420 = vpop.permute.xlu0 %3419
        %3421 = vrot.lane.b32.xlu0 %v2127, 110
        %v3422 = vpop.permute.xlu0 %3421
        %3423 = vrot.lane.b32.xlu0 %v2139, 110
        %v3424 = vpop.permute.xlu0 %3423
        %3425 = vrot.lane.b32.xlu0 %v2151, 110
        %v3426 = vpop.permute.xlu0 %3425
        %3427 = vrot.lane.b32.xlu0 %v2116, 110
        %v3428 = vpop.permute.xlu0 %3427
        %3429 = vrot.lane.b32.xlu0 %v2128, 110
        %v3430 = vpop.permute.xlu0 %3429
        %3431 = vrot.lane.b32.xlu0 %v2140, 110
        %v3432 = vpop.permute.xlu0 %3431
        %3433 = vrot.lane.b32.xlu0 %v2152, 110
        %v3434 = vpop.permute.xlu0 %3433
        %3435 = vrot.lane.b32.xlu0 %v2117, 110
        %v3436 = vpop.permute.xlu0 %3435
        %3437 = vrot.lane.b32.xlu0 %v2129, 110
        %v3438 = vpop.permute.xlu0 %3437
        %3439 = vrot.lane.b32.xlu0 %v2141, 110
        %v3440 = vpop.permute.xlu0 %3439
        %3441 = vrot.lane.b32.xlu0 %v2153, 110
        %v3442 = vpop.permute.xlu0 %3441
        %3443 = vrot.lane.b32.xlu0 %v2118, 110
        %v3444 = vpop.permute.xlu0 %3443
        %3445 = vrot.lane.b32.xlu0 %v2130, 110
        %v3446 = vpop.permute.xlu0 %3445
        %3447 = vrot.lane.b32.xlu0 %v2142, 110
        %v3448 = vpop.permute.xlu0 %3447
        %3449 = vrot.lane.b32.xlu0 %v2154, 110
        %v3450 = vpop.permute.xlu0 %3449
        %v3451 = vsel %vm1056, %v3436, %v3444
        %v3452 = vsel %vm1056, %v3438, %v3446
        %v3453 = vsel %vm1056, %v3440, %v3448
        %v3454 = vsel %vm1056, %v3442, %v3450
        %v3455 = vsel %vm1056, %v3428, %v3436
        %v3456 = vsel %vm1056, %v3430, %v3438
        %v3457 = vsel %vm1056, %v3432, %v3440
        %v3458 = vsel %vm1056, %v3434, %v3442
        %v3459 = vsel %vm1056, %v3420, %v3428
        %v3460 = vsel %vm1056, %v3422, %v3430
        %v3461 = vsel %vm1056, %v3424, %v3432
        %v3462 = vsel %vm1056, %v3426, %v3434
        %v3463 = vsel %vm1056, %v3412, %v3420
        %v3464 = vsel %vm1056, %v3414, %v3422
        %v3465 = vsel %vm1056, %v3416, %v3424
        %v3466 = vsel %vm1056, %v3418, %v3426
        %v3467 = vsel %vm1056, %v3404, %v3412
        %v3468 = vsel %vm1056, %v3406, %v3414
        %v3469 = vsel %vm1056, %v3408, %v3416
        %v3470 = vsel %vm1056, %v3410, %v3418
        %v3471 = vsel %vm1056, %v3396, %v3404
        %v3472 = vsel %vm1056, %v3398, %v3406
        %v3473 = vsel %vm1056, %v3400, %v3408
        %v3474 = vsel %vm1056, %v3402, %v3410
        %v3475 = vsel %vm1056, %v3388, %v3396
        %v3476 = vsel %vm1056, %v3390, %v3398
        %v3477 = vsel %vm1056, %v3392, %v3400
        %v3478 = vsel %vm1056, %v3394, %v3402
        %v3479 = vsel %vm1056, %v3380, %v3388
        %v3480 = vsel %vm1056, %v3382, %v3390
        %v3481 = vsel %vm1056, %v3384, %v3392
        %v3482 = vsel %vm1056, %v3386, %v3394
        %v3483 = vsel %vm1056, %v3372, %v3380
        %v3484 = vsel %vm1056, %v3374, %v3382
        %v3485 = vsel %vm1056, %v3376, %v3384
        %v3486 = vsel %vm1056, %v3378, %v3386
        %v3487 = vsel %vm1056, %v3364, %v3372
        %v3488 = vsel %vm1056, %v3366, %v3374
        %v3489 = vsel %vm1056, %v3368, %v3376
        %v3490 = vsel %vm1056, %v3370, %v3378
        %v3491 = vsel %vm1056, %v3356, %v3364
        %v3492 = vsel %vm1056, %v3358, %v3366
        %v3493 = vsel %vm1056, %v3360, %v3368
        %v3494 = vsel %vm1056, %v3362, %v3370
        %v3495 = vsel %vm1056, %v3444, %v3356
        %v3496 = vsel %vm1056, %v3446, %v3358
        %v3497 = vsel %vm1056, %v3448, %v3360
        %v3498 = vsel %vm1056, %v3450, %v3362
        %3499 = vst [vmem:[#allocation2 + $0xa80] sm:$0xff] %v3491
        %3500 = vst [vmem:[#allocation2 + $0xa88] sm:$0xff] %v3487
        %3501 = vst [vmem:[#allocation2 + $0xa90] sm:$0xff] %v3483
        %3502 = vst [vmem:[#allocation2 + $0xa98] sm:$0xff] %v3479
        %3503 = vst [vmem:[#allocation2 + $0xaa0] sm:$0xff] %v3475
        %3504 = vst [vmem:[#allocation2 + $0xaa8] sm:$0xff] %v3471
        %3505 = vst [vmem:[#allocation2 + $0xab0] sm:$0xff] %v3467
        %3506 = vst [vmem:[#allocation2 + $0xab8] sm:$0xff] %v3463
        %3507 = vst [vmem:[#allocation2 + $0xac0] sm:$0xff] %v3459
        %3508 = vst [vmem:[#allocation2 + $0xac8] sm:$0xff] %v3455
        %3509 = vst [vmem:[#allocation2 + $0xad0] sm:$0xff] %v3451
        %3510 = vst [vmem:[#allocation2 + $0xad8] sm:$0xff] %v3495
        %3511 = vst [vmem:[#allocation2 + $0xae0] sm:$0xff] %v3492
        %3512 = vst [vmem:[#allocation2 + $0xae8] sm:$0xff] %v3488
        %3513 = vst [vmem:[#allocation2 + $0xaf0] sm:$0xff] %v3484
        %3514 = vst [vmem:[#allocation2 + $0xaf8] sm:$0xff] %v3480
        %3515 = vst [vmem:[#allocation2 + $0xb00] sm:$0xff] %v3476
        %3516 = vst [vmem:[#allocation2 + $0xb08] sm:$0xff] %v3472
        %3517 = vst [vmem:[#allocation2 + $0xb10] sm:$0xff] %v3468
        %3518 = vst [vmem:[#allocation2 + $0xb18] sm:$0xff] %v3464
        %3519 = vst [vmem:[#allocation2 + $0xb20] sm:$0xff] %v3460
        %3520 = vst [vmem:[#allocation2 + $0xb28] sm:$0xff] %v3456
        %3521 = vst [vmem:[#allocation2 + $0xb30] sm:$0xff] %v3452
        %3522 = vst [vmem:[#allocation2 + $0xb38] sm:$0xff] %v3496
        %3523 = vst [vmem:[#allocation2 + $0xb40] sm:$0xff] %v3493
        %3524 = vst [vmem:[#allocation2 + $0xb48] sm:$0xff] %v3489
        %3525 = vst [vmem:[#allocation2 + $0xb50] sm:$0xff] %v3485
        %3526 = vst [vmem:[#allocation2 + $0xb58] sm:$0xff] %v3481
        %3527 = vst [vmem:[#allocation2 + $0xb60] sm:$0xff] %v3477
        %3528 = vst [vmem:[#allocation2 + $0xb68] sm:$0xff] %v3473
        %3529 = vst [vmem:[#allocation2 + $0xb70] sm:$0xff] %v3469
        %3530 = vst [vmem:[#allocation2 + $0xb78] sm:$0xff] %v3465
        %3531 = vst [vmem:[#allocation2 + $0xb80] sm:$0xff] %v3461
        %3532 = vst [vmem:[#allocation2 + $0xb88] sm:$0xff] %v3457
        %3533 = vst [vmem:[#allocation2 + $0xb90] sm:$0xff] %v3453
        %3534 = vst [vmem:[#allocation2 + $0xb98] sm:$0xff] %v3497
        %3535 = vst [vmem:[#allocation2 + $0xba0] sm:$0xff] %v3494
        %3536 = vst [vmem:[#allocation2 + $0xba8] sm:$0xff] %v3490
        %3537 = vst [vmem:[#allocation2 + $0xbb0] sm:$0xff] %v3486
        %3538 = vst [vmem:[#allocation2 + $0xbb8] sm:$0xff] %v3482
        %3539 = vst [vmem:[#allocation2 + $0xbc0] sm:$0xff] %v3478
        %3540 = vst [vmem:[#allocation2 + $0xbc8] sm:$0xff] %v3474
        %3541 = vst [vmem:[#allocation2 + $0xbd0] sm:$0xff] %v3470
        %3542 = vst [vmem:[#allocation2 + $0xbd8] sm:$0xff] %v3466
        %3543 = vst [vmem:[#allocation2 + $0xbe0] sm:$0xff] %v3462
        %3544 = vst [vmem:[#allocation2 + $0xbe8] sm:$0xff] %v3458
        %3545 = vst [vmem:[#allocation2 + $0xbf0] sm:$0xff] %v3454
        %3546 = vst [vmem:[#allocation2 + $0xbf8] sm:$0xff] %v3498
        %3547 = vrot.lane.b32.xlu0 %v2107, 109
        %v3548 = vpop.permute.xlu0 %3547
        %3549 = vrot.lane.b32.xlu0 %v2119, 109
        %v3550 = vpop.permute.xlu0 %3549
        %3551 = vrot.lane.b32.xlu0 %v2131, 109
        %v3552 = vpop.permute.xlu0 %3551
        %3553 = vrot.lane.b32.xlu0 %v2143, 109
        %v3554 = vpop.permute.xlu0 %3553
        %3555 = vrot.lane.b32.xlu0 %v2108, 109
        %v3556 = vpop.permute.xlu0 %3555
        %3557 = vrot.lane.b32.xlu0 %v2120, 109
        %v3558 = vpop.permute.xlu0 %3557
        %3559 = vrot.lane.b32.xlu0 %v2132, 109
        %v3560 = vpop.permute.xlu0 %3559
        %3561 = vrot.lane.b32.xlu0 %v2144, 109
        %v3562 = vpop.permute.xlu0 %3561
        %3563 = vrot.lane.b32.xlu0 %v2109, 109
        %v3564 = vpop.permute.xlu0 %3563
        %3565 = vrot.lane.b32.xlu0 %v2121, 109
        %v3566 = vpop.permute.xlu0 %3565
        %3567 = vrot.lane.b32.xlu0 %v2133, 109
        %v3568 = vpop.permute.xlu0 %3567
        %3569 = vrot.lane.b32.xlu0 %v2145, 109
        %v3570 = vpop.permute.xlu0 %3569
        %3571 = vrot.lane.b32.xlu0 %v2110, 109
        %v3572 = vpop.permute.xlu0 %3571
        %3573 = vrot.lane.b32.xlu0 %v2122, 109
        %v3574 = vpop.permute.xlu0 %3573
        %3575 = vrot.lane.b32.xlu0 %v2134, 109
        %v3576 = vpop.permute.xlu0 %3575
        %3577 = vrot.lane.b32.xlu0 %v2146, 109
        %v3578 = vpop.permute.xlu0 %3577
        %3579 = vrot.lane.b32.xlu0 %v2111, 109
        %v3580 = vpop.permute.xlu0 %3579
        %3581 = vrot.lane.b32.xlu0 %v2123, 109
        %v3582 = vpop.permute.xlu0 %3581
        %3583 = vrot.lane.b32.xlu0 %v2135, 109
        %v3584 = vpop.permute.xlu0 %3583
        %3585 = vrot.lane.b32.xlu0 %v2147, 109
        %v3586 = vpop.permute.xlu0 %3585
        %3587 = vrot.lane.b32.xlu0 %v2112, 109
        %v3588 = vpop.permute.xlu0 %3587
        %3589 = vrot.lane.b32.xlu0 %v2124, 109
        %v3590 = vpop.permute.xlu0 %3589
        %3591 = vrot.lane.b32.xlu0 %v2136, 109
        %v3592 = vpop.permute.xlu0 %3591
        %3593 = vrot.lane.b32.xlu0 %v2148, 109
        %v3594 = vpop.permute.xlu0 %3593
        %3595 = vrot.lane.b32.xlu0 %v2113, 109
        %v3596 = vpop.permute.xlu0 %3595
        %3597 = vrot.lane.b32.xlu0 %v2125, 109
        %v3598 = vpop.permute.xlu0 %3597
        %3599 = vrot.lane.b32.xlu0 %v2137, 109
        %v3600 = vpop.permute.xlu0 %3599
        %3601 = vrot.lane.b32.xlu0 %v2149, 109
        %v3602 = vpop.permute.xlu0 %3601
        %3603 = vrot.lane.b32.xlu0 %v2114, 109
        %v3604 = vpop.permute.xlu0 %3603
        %3605 = vrot.lane.b32.xlu0 %v2126, 109
        %v3606 = vpop.permute.xlu0 %3605
        %3607 = vrot.lane.b32.xlu0 %v2138, 109
        %v3608 = vpop.permute.xlu0 %3607
        %3609 = vrot.lane.b32.xlu0 %v2150, 109
        %v3610 = vpop.permute.xlu0 %3609
        %3611 = vrot.lane.b32.xlu0 %v2115, 109
        %v3612 = vpop.permute.xlu0 %3611
        %3613 = vrot.lane.b32.xlu0 %v2127, 109
        %v3614 = vpop.permute.xlu0 %3613
        %3615 = vrot.lane.b32.xlu0 %v2139, 109
        %v3616 = vpop.permute.xlu0 %3615
        %3617 = vrot.lane.b32.xlu0 %v2151, 109
        %v3618 = vpop.permute.xlu0 %3617
        %3619 = vrot.lane.b32.xlu0 %v2116, 109
        %v3620 = vpop.permute.xlu0 %3619
        %3621 = vrot.lane.b32.xlu0 %v2128, 109
        %v3622 = vpop.permute.xlu0 %3621
        %3623 = vrot.lane.b32.xlu0 %v2140, 109
        %v3624 = vpop.permute.xlu0 %3623
        %3625 = vrot.lane.b32.xlu0 %v2152, 109
        %v3626 = vpop.permute.xlu0 %3625
        %3627 = vrot.lane.b32.xlu0 %v2117, 109
        %v3628 = vpop.permute.xlu0 %3627
        %3629 = vrot.lane.b32.xlu0 %v2129, 109
        %v3630 = vpop.permute.xlu0 %3629
        %3631 = vrot.lane.b32.xlu0 %v2141, 109
        %v3632 = vpop.permute.xlu0 %3631
        %3633 = vrot.lane.b32.xlu0 %v2153, 109
        %v3634 = vpop.permute.xlu0 %3633
        %3635 = vrot.lane.b32.xlu0 %v2118, 109
        %v3636 = vpop.permute.xlu0 %3635
        %3637 = vrot.lane.b32.xlu0 %v2130, 109
        %v3638 = vpop.permute.xlu0 %3637
        %3639 = vrot.lane.b32.xlu0 %v2142, 109
        %v3640 = vpop.permute.xlu0 %3639
        %3641 = vrot.lane.b32.xlu0 %v2154, 109
        %v3642 = vpop.permute.xlu0 %3641
        %v3643 = vsel %vm1153, %v3628, %v3636
        %v3644 = vsel %vm1153, %v3630, %v3638
        %v3645 = vsel %vm1153, %v3632, %v3640
        %v3646 = vsel %vm1153, %v3634, %v3642
        %v3647 = vsel %vm1153, %v3620, %v3628
        %v3648 = vsel %vm1153, %v3622, %v3630
        %v3649 = vsel %vm1153, %v3624, %v3632
        %v3650 = vsel %vm1153, %v3626, %v3634
        %v3651 = vsel %vm1153, %v3612, %v3620
        %v3652 = vsel %vm1153, %v3614, %v3622
        %v3653 = vsel %vm1153, %v3616, %v3624
        %v3654 = vsel %vm1153, %v3618, %v3626
        %v3655 = vsel %vm1153, %v3604, %v3612
        %v3656 = vsel %vm1153, %v3606, %v3614
        %v3657 = vsel %vm1153, %v3608, %v3616
        %v3658 = vsel %vm1153, %v3610, %v3618
        %v3659 = vsel %vm1153, %v3596, %v3604
        %v3660 = vsel %vm1153, %v3598, %v3606
        %v3661 = vsel %vm1153, %v3600, %v3608
        %v3662 = vsel %vm1153, %v3602, %v3610
        %v3663 = vsel %vm1153, %v3588, %v3596
        %v3664 = vsel %vm1153, %v3590, %v3598
        %v3665 = vsel %vm1153, %v3592, %v3600
        %v3666 = vsel %vm1153, %v3594, %v3602
        %v3667 = vsel %vm1153, %v3580, %v3588
        %v3668 = vsel %vm1153, %v3582, %v3590
        %v3669 = vsel %vm1153, %v3584, %v3592
        %v3670 = vsel %vm1153, %v3586, %v3594
        %v3671 = vsel %vm1153, %v3572, %v3580
        %v3672 = vsel %vm1153, %v3574, %v3582
        %v3673 = vsel %vm1153, %v3576, %v3584
        %v3674 = vsel %vm1153, %v3578, %v3586
        %v3675 = vsel %vm1153, %v3564, %v3572
        %v3676 = vsel %vm1153, %v3566, %v3574
        %v3677 = vsel %vm1153, %v3568, %v3576
        %v3678 = vsel %vm1153, %v3570, %v3578
        %v3679 = vsel %vm1153, %v3556, %v3564
        %v3680 = vsel %vm1153, %v3558, %v3566
        %v3681 = vsel %vm1153, %v3560, %v3568
        %v3682 = vsel %vm1153, %v3562, %v3570
        %v3683 = vsel %vm1153, %v3548, %v3556
        %v3684 = vsel %vm1153, %v3550, %v3558
        %v3685 = vsel %vm1153, %v3552, %v3560
        %v3686 = vsel %vm1153, %v3554, %v3562
        %v3687 = vsel %vm1153, %v3636, %v3548
        %v3688 = vsel %vm1153, %v3638, %v3550
        %v3689 = vsel %vm1153, %v3640, %v3552
        %v3690 = vsel %vm1153, %v3642, %v3554
        %3691 = vst [vmem:[#allocation2 + $0xc00] sm:$0xff] %v3683
        %3692 = vst [vmem:[#allocation2 + $0xc08] sm:$0xff] %v3679
        %3693 = vst [vmem:[#allocation2 + $0xc10] sm:$0xff] %v3675
        %3694 = vst [vmem:[#allocation2 + $0xc18] sm:$0xff] %v3671
        %3695 = vst [vmem:[#allocation2 + $0xc20] sm:$0xff] %v3667
        %3696 = vst [vmem:[#allocation2 + $0xc28] sm:$0xff] %v3663
        %3697 = vst [vmem:[#allocation2 + $0xc30] sm:$0xff] %v3659
        %3698 = vst [vmem:[#allocation2 + $0xc38] sm:$0xff] %v3655
        %3699 = vst [vmem:[#allocation2 + $0xc40] sm:$0xff] %v3651
        %3700 = vst [vmem:[#allocation2 + $0xc48] sm:$0xff] %v3647
        %3701 = vst [vmem:[#allocation2 + $0xc50] sm:$0xff] %v3643
        %3702 = vst [vmem:[#allocation2 + $0xc58] sm:$0xff] %v3687
        %3703 = vst [vmem:[#allocation2 + $0xc60] sm:$0xff] %v3684
        %3704 = vst [vmem:[#allocation2 + $0xc68] sm:$0xff] %v3680
        %3705 = vst [vmem:[#allocation2 + $0xc70] sm:$0xff] %v3676
        %3706 = vst [vmem:[#allocation2 + $0xc78] sm:$0xff] %v3672
        %3707 = vst [vmem:[#allocation2 + $0xc80] sm:$0xff] %v3668
        %3708 = vst [vmem:[#allocation2 + $0xc88] sm:$0xff] %v3664
        %3709 = vst [vmem:[#allocation2 + $0xc90] sm:$0xff] %v3660
        %3710 = vst [vmem:[#allocation2 + $0xc98] sm:$0xff] %v3656
        %3711 = vst [vmem:[#allocation2 + $0xca0] sm:$0xff] %v3652
        %3712 = vst [vmem:[#allocation2 + $0xca8] sm:$0xff] %v3648
        %3713 = vst [vmem:[#allocation2 + $0xcb0] sm:$0xff] %v3644
        %3714 = vst [vmem:[#allocation2 + $0xcb8] sm:$0xff] %v3688
        %3715 = vst [vmem:[#allocation2 + $0xcc0] sm:$0xff] %v3685
        %3716 = vst [vmem:[#allocation2 + $0xcc8] sm:$0xff] %v3681
        %3717 = vst [vmem:[#allocation2 + $0xcd0] sm:$0xff] %v3677
        %3718 = vst [vmem:[#allocation2 + $0xcd8] sm:$0xff] %v3673
        %3719 = vst [vmem:[#allocation2 + $0xce0] sm:$0xff] %v3669
        %3720 = vst [vmem:[#allocation2 + $0xce8] sm:$0xff] %v3665
        %3721 = vst [vmem:[#allocation2 + $0xcf0] sm:$0xff] %v3661
        %3722 = vst [vmem:[#allocation2 + $0xcf8] sm:$0xff] %v3657
        %3723 = vst [vmem:[#allocation2 + $0xd00] sm:$0xff] %v3653
        %3724 = vst [vmem:[#allocation2 + $0xd08] sm:$0xff] %v3649
        %3725 = vst [vmem:[#allocation2 + $0xd10] sm:$0xff] %v3645
        %3726 = vst [vmem:[#allocation2 + $0xd18] sm:$0xff] %v3689
        %3727 = vst [vmem:[#allocation2 + $0xd20] sm:$0xff] %v3686
        %3728 = vst [vmem:[#allocation2 + $0xd28] sm:$0xff] %v3682
        %3729 = vst [vmem:[#allocation2 + $0xd30] sm:$0xff] %v3678
        %3730 = vst [vmem:[#allocation2 + $0xd38] sm:$0xff] %v3674
        %3731 = vst [vmem:[#allocation2 + $0xd40] sm:$0xff] %v3670
        %3732 = vst [vmem:[#allocation2 + $0xd48] sm:$0xff] %v3666
        %3733 = vst [vmem:[#allocation2 + $0xd50] sm:$0xff] %v3662
        %3734 = vst [vmem:[#allocation2 + $0xd58] sm:$0xff] %v3658
        %3735 = vst [vmem:[#allocation2 + $0xd60] sm:$0xff] %v3654
        %3736 = vst [vmem:[#allocation2 + $0xd68] sm:$0xff] %v3650
        %3737 = vst [vmem:[#allocation2 + $0xd70] sm:$0xff] %v3646
        %3738 = vst [vmem:[#allocation2 + $0xd78] sm:$0xff] %v3690
        %v3739 = vld [vmem:[#allocation2] sm:$0xff]
        %v3740 = vld [vmem:[#allocation2 + $0x8] sm:$0xff]
        %v3741 = vld [vmem:[#allocation2 + $0x10] sm:$0xff]
        %v3742 = vld [vmem:[#allocation2 + $0x18] sm:$0xff]
        %v3743 = vld [vmem:[#allocation2 + $0x20] sm:$0xff]
        %v3744 = vld [vmem:[#allocation2 + $0x28] sm:$0xff]
        %v3745 = vld [vmem:[#allocation2 + $0x30] sm:$0xff]
        %v3746 = vld [vmem:[#allocation2 + $0x38] sm:$0xff]
        %v3747 = vld [vmem:[#allocation2 + $0x40] sm:$0xff]
        %v3748 = vld [vmem:[#allocation2 + $0x48] sm:$0xff]
        %v3749 = vld [vmem:[#allocation2 + $0x50] sm:$0xff]
        %v3750 = vld [vmem:[#allocation2 + $0x58] sm:$0xff]
        %v3751 = vld [vmem:[#allocation2 + $0x60] sm:$0xff]
        %v3752 = vld [vmem:[#allocation2 + $0x68] sm:$0xff]
        %v3753 = vld [vmem:[#allocation2 + $0x70] sm:$0xff]
        %v3754 = vld [vmem:[#allocation2 + $0x78] sm:$0xff]
        %v3755 = vld [vmem:[#allocation2 + $0x80] sm:$0xff]
        %v3756 = vld [vmem:[#allocation2 + $0x88] sm:$0xff]
        %v3757 = vld [vmem:[#allocation2 + $0x90] sm:$0xff]
        %v3758 = vld [vmem:[#allocation2 + $0x98] sm:$0xff]
        %v3759 = vld [vmem:[#allocation2 + $0xa0] sm:$0xff]
        %v3760 = vld [vmem:[#allocation2 + $0xa8] sm:$0xff]
        %v3761 = vld [vmem:[#allocation2 + $0xb0] sm:$0xff]
        %v3762 = vld [vmem:[#allocation2 + $0xb8] sm:$0xff]
        %v3763 = vld [vmem:[#allocation2 + $0xc0] sm:$0xff]
        %v3764 = vld [vmem:[#allocation2 + $0xc8] sm:$0xff]
        %v3765 = vld [vmem:[#allocation2 + $0xd0] sm:$0xff]
        %v3766 = vld [vmem:[#allocation2 + $0xd8] sm:$0xff]
        %v3767 = vld [vmem:[#allocation2 + $0xe0] sm:$0xff]
        %v3768 = vld [vmem:[#allocation2 + $0xe8] sm:$0xff]
        %v3769 = vld [vmem:[#allocation2 + $0xf0] sm:$0xff]
        %v3770 = vld [vmem:[#allocation2 + $0xf8] sm:$0xff]
        %v3771 = vld [vmem:[#allocation2 + $0x100] sm:$0xff]
        %v3772 = vld [vmem:[#allocation2 + $0x108] sm:$0xff]
        %v3773 = vld [vmem:[#allocation2 + $0x110] sm:$0xff]
        %v3774 = vld [vmem:[#allocation2 + $0x118] sm:$0xff]
        %v3775 = vld [vmem:[#allocation2 + $0x120] sm:$0xff]
        %v3776 = vld [vmem:[#allocation2 + $0x128] sm:$0xff]
        %v3777 = vld [vmem:[#allocation2 + $0x130] sm:$0xff]
        %v3778 = vld [vmem:[#allocation2 + $0x138] sm:$0xff]
        %v3779 = vld [vmem:[#allocation2 + $0x140] sm:$0xff]
        %v3780 = vld [vmem:[#allocation2 + $0x148] sm:$0xff]
        %v3781 = vld [vmem:[#allocation2 + $0x150] sm:$0xff]
        %v3782 = vld [vmem:[#allocation2 + $0x158] sm:$0xff]
        %v3783 = vld [vmem:[#allocation2 + $0x160] sm:$0xff]
        %v3784 = vld [vmem:[#allocation2 + $0x168] sm:$0xff]
        %v3785 = vld [vmem:[#allocation2 + $0x170] sm:$0xff]
        %v3786 = vld [vmem:[#allocation2 + $0x178] sm:$0xff]
        %v3787 = vld [vmem:[#allocation2 + $0x180] sm:$0xff]
        %v3788 = vld [vmem:[#allocation2 + $0x188] sm:$0xff]
        %v3789 = vld [vmem:[#allocation2 + $0x190] sm:$0xff]
        %v3790 = vld [vmem:[#allocation2 + $0x198] sm:$0xff]
        %v3791 = vld [vmem:[#allocation2 + $0x1a0] sm:$0xff]
        %v3792 = vld [vmem:[#allocation2 + $0x1a8] sm:$0xff]
        %v3793 = vld [vmem:[#allocation2 + $0x1b0] sm:$0xff]
        %v3794 = vld [vmem:[#allocation2 + $0x1b8] sm:$0xff]
        %v3795 = vld [vmem:[#allocation2 + $0x1c0] sm:$0xff]
        %v3796 = vld [vmem:[#allocation2 + $0x1c8] sm:$0xff]
        %v3797 = vld [vmem:[#allocation2 + $0x1d0] sm:$0xff]
        %v3798 = vld [vmem:[#allocation2 + $0x1d8] sm:$0xff]
        %v3799 = vld [vmem:[#allocation2 + $0x1e0] sm:$0xff]
        %v3800 = vld [vmem:[#allocation2 + $0x1e8] sm:$0xff]
        %v3801 = vld [vmem:[#allocation2 + $0x1f0] sm:$0xff]
        %v3802 = vld [vmem:[#allocation2 + $0x1f8] sm:$0xff]
        %v3803 = vld [vmem:[#allocation2 + $0x200] sm:$0xff]
        %v3804 = vld [vmem:[#allocation2 + $0x208] sm:$0xff]
        %v3805 = vld [vmem:[#allocation2 + $0x210] sm:$0xff]
        %v3806 = vld [vmem:[#allocation2 + $0x218] sm:$0xff]
        %v3807 = vld [vmem:[#allocation2 + $0x220] sm:$0xff]
        %v3808 = vld [vmem:[#allocation2 + $0x228] sm:$0xff]
        %v3809 = vld [vmem:[#allocation2 + $0x230] sm:$0xff]
        %v3810 = vld [vmem:[#allocation2 + $0x238] sm:$0xff]
        %v3811 = vld [vmem:[#allocation2 + $0x240] sm:$0xff]
        %v3812 = vld [vmem:[#allocation2 + $0x248] sm:$0xff]
        %v3813 = vld [vmem:[#allocation2 + $0x250] sm:$0xff]
        %v3814 = vld [vmem:[#allocation2 + $0x258] sm:$0xff]
        %v3815 = vld [vmem:[#allocation2 + $0x260] sm:$0xff]
        %v3816 = vld [vmem:[#allocation2 + $0x268] sm:$0xff]
        %v3817 = vld [vmem:[#allocation2 + $0x270] sm:$0xff]
        %v3818 = vld [vmem:[#allocation2 + $0x278] sm:$0xff]
        %v3819 = vld [vmem:[#allocation2 + $0x280] sm:$0xff]
        %v3820 = vld [vmem:[#allocation2 + $0x288] sm:$0xff]
        %v3821 = vld [vmem:[#allocation2 + $0x290] sm:$0xff]
        %v3822 = vld [vmem:[#allocation2 + $0x298] sm:$0xff]
        %v3823 = vld [vmem:[#allocation2 + $0x2a0] sm:$0xff]
        %v3824 = vld [vmem:[#allocation2 + $0x2a8] sm:$0xff]
        %v3825 = vld [vmem:[#allocation2 + $0x2b0] sm:$0xff]
        %v3826 = vld [vmem:[#allocation2 + $0x2b8] sm:$0xff]
        %v3827 = vld [vmem:[#allocation2 + $0x2c0] sm:$0xff]
        %v3828 = vld [vmem:[#allocation2 + $0x2c8] sm:$0xff]
        %v3829 = vld [vmem:[#allocation2 + $0x2d0] sm:$0xff]
        %v3830 = vld [vmem:[#allocation2 + $0x2d8] sm:$0xff]
        %v3831 = vld [vmem:[#allocation2 + $0x2e0] sm:$0xff]
        %v3832 = vld [vmem:[#allocation2 + $0x2e8] sm:$0xff]
        %v3833 = vld [vmem:[#allocation2 + $0x2f0] sm:$0xff]
        %v3834 = vld [vmem:[#allocation2 + $0x2f8] sm:$0xff]
        %v3835 = vld [vmem:[#allocation2 + $0x300] sm:$0xff]
        %v3836 = vld [vmem:[#allocation2 + $0x308] sm:$0xff]
        %v3837 = vld [vmem:[#allocation2 + $0x310] sm:$0xff]
        %v3838 = vld [vmem:[#allocation2 + $0x318] sm:$0xff]
        %v3839 = vld [vmem:[#allocation2 + $0x320] sm:$0xff]
        %v3840 = vld [vmem:[#allocation2 + $0x328] sm:$0xff]
        %v3841 = vld [vmem:[#allocation2 + $0x330] sm:$0xff]
        %v3842 = vld [vmem:[#allocation2 + $0x338] sm:$0xff]
        %v3843 = vld [vmem:[#allocation2 + $0x340] sm:$0xff]
        %v3844 = vld [vmem:[#allocation2 + $0x348] sm:$0xff]
        %v3845 = vld [vmem:[#allocation2 + $0x350] sm:$0xff]
        %v3846 = vld [vmem:[#allocation2 + $0x358] sm:$0xff]
        %v3847 = vld [vmem:[#allocation2 + $0x360] sm:$0xff]
        %v3848 = vld [vmem:[#allocation2 + $0x368] sm:$0xff]
        %v3849 = vld [vmem:[#allocation2 + $0x370] sm:$0xff]
        %v3850 = vld [vmem:[#allocation2 + $0x378] sm:$0xff]
        %v3851 = vld [vmem:[#allocation2 + $0x380] sm:$0xff]
        %v3852 = vld [vmem:[#allocation2 + $0x388] sm:$0xff]
        %v3853 = vld [vmem:[#allocation2 + $0x390] sm:$0xff]
        %v3854 = vld [vmem:[#allocation2 + $0x398] sm:$0xff]
        %v3855 = vld [vmem:[#allocation2 + $0x3a0] sm:$0xff]
        %v3856 = vld [vmem:[#allocation2 + $0x3a8] sm:$0xff]
        %v3857 = vld [vmem:[#allocation2 + $0x3b0] sm:$0xff]
        %v3858 = vld [vmem:[#allocation2 + $0x3b8] sm:$0xff]
        %v3859 = vld [vmem:[#allocation2 + $0x3c0] sm:$0xff]
        %v3860 = vld [vmem:[#allocation2 + $0x3c8] sm:$0xff]
        %v3861 = vld [vmem:[#allocation2 + $0x3d0] sm:$0xff]
        %v3862 = vld [vmem:[#allocation2 + $0x3d8] sm:$0xff]
        %v3863 = vld [vmem:[#allocation2 + $0x3e0] sm:$0xff]
        %v3864 = vld [vmem:[#allocation2 + $0x3e8] sm:$0xff]
        %v3865 = vld [vmem:[#allocation2 + $0x3f0] sm:$0xff]
        %v3866 = vld [vmem:[#allocation2 + $0x3f8] sm:$0xff]
        %v3867 = vld [vmem:[#allocation2 + $0x400] sm:$0xff]
        %v3868 = vld [vmem:[#allocation2 + $0x408] sm:$0xff]
        %v3869 = vld [vmem:[#allocation2 + $0x410] sm:$0xff]
        %v3870 = vld [vmem:[#allocation2 + $0x418] sm:$0xff]
        %v3871 = vld [vmem:[#allocation2 + $0x420] sm:$0xff]
        %v3872 = vld [vmem:[#allocation2 + $0x428] sm:$0xff]
        %v3873 = vld [vmem:[#allocation2 + $0x430] sm:$0xff]
        %v3874 = vld [vmem:[#allocation2 + $0x438] sm:$0xff]
        %v3875 = vld [vmem:[#allocation2 + $0x440] sm:$0xff]
        %v3876 = vld [vmem:[#allocation2 + $0x448] sm:$0xff]
        %v3877 = vld [vmem:[#allocation2 + $0x450] sm:$0xff]
        %v3878 = vld [vmem:[#allocation2 + $0x458] sm:$0xff]
        %v3879 = vld [vmem:[#allocation2 + $0x460] sm:$0xff]
        %v3880 = vld [vmem:[#allocation2 + $0x468] sm:$0xff]
        %v3881 = vld [vmem:[#allocation2 + $0x470] sm:$0xff]
        %v3882 = vld [vmem:[#allocation2 + $0x478] sm:$0xff]
        %v3883 = vld [vmem:[#allocation2 + $0x480] sm:$0xff]
        %v3884 = vld [vmem:[#allocation2 + $0x488] sm:$0xff]
        %v3885 = vld [vmem:[#allocation2 + $0x490] sm:$0xff]
        %v3886 = vld [vmem:[#allocation2 + $0x498] sm:$0xff]
        %v3887 = vld [vmem:[#allocation2 + $0x4a0] sm:$0xff]
        %v3888 = vld [vmem:[#allocation2 + $0x4a8] sm:$0xff]
        %v3889 = vld [vmem:[#allocation2 + $0x4b0] sm:$0xff]
        %v3890 = vld [vmem:[#allocation2 + $0x4b8] sm:$0xff]
        %v3891 = vld [vmem:[#allocation2 + $0x4c0] sm:$0xff]
        %v3892 = vld [vmem:[#allocation2 + $0x4c8] sm:$0xff]
        %v3893 = vld [vmem:[#allocation2 + $0x4d0] sm:$0xff]
        %v3894 = vld [vmem:[#allocation2 + $0x4d8] sm:$0xff]
        %v3895 = vld [vmem:[#allocation2 + $0x4e0] sm:$0xff]
        %v3896 = vld [vmem:[#allocation2 + $0x4e8] sm:$0xff]
        %v3897 = vld [vmem:[#allocation2 + $0x4f0] sm:$0xff]
        %v3898 = vld [vmem:[#allocation2 + $0x4f8] sm:$0xff]
        %v3899 = vld [vmem:[#allocation2 + $0x500] sm:$0xff]
        %v3900 = vld [vmem:[#allocation2 + $0x508] sm:$0xff]
        %v3901 = vld [vmem:[#allocation2 + $0x510] sm:$0xff]
        %v3902 = vld [vmem:[#allocation2 + $0x518] sm:$0xff]
        %v3903 = vld [vmem:[#allocation2 + $0x520] sm:$0xff]
        %v3904 = vld [vmem:[#allocation2 + $0x528] sm:$0xff]
        %v3905 = vld [vmem:[#allocation2 + $0x530] sm:$0xff]
        %v3906 = vld [vmem:[#allocation2 + $0x538] sm:$0xff]
        %v3907 = vld [vmem:[#allocation2 + $0x540] sm:$0xff]
        %v3908 = vld [vmem:[#allocation2 + $0x548] sm:$0xff]
        %v3909 = vld [vmem:[#allocation2 + $0x550] sm:$0xff]
        %v3910 = vld [vmem:[#allocation2 + $0x558] sm:$0xff]
        %v3911 = vld [vmem:[#allocation2 + $0x560] sm:$0xff]
        %v3912 = vld [vmem:[#allocation2 + $0x568] sm:$0xff]
        %v3913 = vld [vmem:[#allocation2 + $0x570] sm:$0xff]
        %v3914 = vld [vmem:[#allocation2 + $0x578] sm:$0xff]
        %v3915 = vld [vmem:[#allocation2 + $0x580] sm:$0xff]
        %v3916 = vld [vmem:[#allocation2 + $0x588] sm:$0xff]
        %v3917 = vld [vmem:[#allocation2 + $0x590] sm:$0xff]
        %v3918 = vld [vmem:[#allocation2 + $0x598] sm:$0xff]
        %v3919 = vld [vmem:[#allocation2 + $0x5a0] sm:$0xff]
        %v3920 = vld [vmem:[#allocation2 + $0x5a8] sm:$0xff]
        %v3921 = vld [vmem:[#allocation2 + $0x5b0] sm:$0xff]
        %v3922 = vld [vmem:[#allocation2 + $0x5b8] sm:$0xff]
        %v3923 = vld [vmem:[#allocation2 + $0x5c0] sm:$0xff]
        %v3924 = vld [vmem:[#allocation2 + $0x5c8] sm:$0xff]
        %v3925 = vld [vmem:[#allocation2 + $0x5d0] sm:$0xff]
        %v3926 = vld [vmem:[#allocation2 + $0x5d8] sm:$0xff]
        %v3927 = vld [vmem:[#allocation2 + $0x5e0] sm:$0xff]
        %v3928 = vld [vmem:[#allocation2 + $0x5e8] sm:$0xff]
        %v3929 = vld [vmem:[#allocation2 + $0x5f0] sm:$0xff]
        %v3930 = vld [vmem:[#allocation2 + $0x5f8] sm:$0xff]
        %v3931 = vld [vmem:[#allocation2 + $0x600] sm:$0xff]
        %v3932 = vld [vmem:[#allocation2 + $0x608] sm:$0xff]
        %v3933 = vld [vmem:[#allocation2 + $0x610] sm:$0xff]
        %v3934 = vld [vmem:[#allocation2 + $0x618] sm:$0xff]
        %v3935 = vld [vmem:[#allocation2 + $0x620] sm:$0xff]
        %v3936 = vld [vmem:[#allocation2 + $0x628] sm:$0xff]
        %v3937 = vld [vmem:[#allocation2 + $0x630] sm:$0xff]
        %v3938 = vld [vmem:[#allocation2 + $0x638] sm:$0xff]
        %v3939 = vld [vmem:[#allocation2 + $0x640] sm:$0xff]
        %v3940 = vld [vmem:[#allocation2 + $0x648] sm:$0xff]
        %v3941 = vld [vmem:[#allocation2 + $0x650] sm:$0xff]
        %v3942 = vld [vmem:[#allocation2 + $0x658] sm:$0xff]
        %v3943 = vld [vmem:[#allocation2 + $0x660] sm:$0xff]
        %v3944 = vld [vmem:[#allocation2 + $0x668] sm:$0xff]
        %v3945 = vld [vmem:[#allocation2 + $0x670] sm:$0xff]
        %v3946 = vld [vmem:[#allocation2 + $0x678] sm:$0xff]
        %v3947 = vld [vmem:[#allocation2 + $0x680] sm:$0xff]
        %v3948 = vld [vmem:[#allocation2 + $0x688] sm:$0xff]
        %v3949 = vld [vmem:[#allocation2 + $0x690] sm:$0xff]
        %v3950 = vld [vmem:[#allocation2 + $0x698] sm:$0xff]
        %v3951 = vld [vmem:[#allocation2 + $0x6a0] sm:$0xff]
        %v3952 = vld [vmem:[#allocation2 + $0x6a8] sm:$0xff]
        %v3953 = vld [vmem:[#allocation2 + $0x6b0] sm:$0xff]
        %v3954 = vld [vmem:[#allocation2 + $0x6b8] sm:$0xff]
        %v3955 = vld [vmem:[#allocation2 + $0x6c0] sm:$0xff]
        %v3956 = vld [vmem:[#allocation2 + $0x6c8] sm:$0xff]
        %v3957 = vld [vmem:[#allocation2 + $0x6d0] sm:$0xff]
        %v3958 = vld [vmem:[#allocation2 + $0x6d8] sm:$0xff]
        %v3959 = vld [vmem:[#allocation2 + $0x6e0] sm:$0xff]
        %v3960 = vld [vmem:[#allocation2 + $0x6e8] sm:$0xff]
        %v3961 = vld [vmem:[#allocation2 + $0x6f0] sm:$0xff]
        %v3962 = vld [vmem:[#allocation2 + $0x6f8] sm:$0xff]
        %v3963 = vld [vmem:[#allocation2 + $0x700] sm:$0xff]
        %v3964 = vld [vmem:[#allocation2 + $0x708] sm:$0xff]
        %v3965 = vld [vmem:[#allocation2 + $0x710] sm:$0xff]
        %v3966 = vld [vmem:[#allocation2 + $0x718] sm:$0xff]
        %v3967 = vld [vmem:[#allocation2 + $0x720] sm:$0xff]
        %v3968 = vld [vmem:[#allocation2 + $0x728] sm:$0xff]
        %v3969 = vld [vmem:[#allocation2 + $0x730] sm:$0xff]
        %v3970 = vld [vmem:[#allocation2 + $0x738] sm:$0xff]
        %v3971 = vld [vmem:[#allocation2 + $0x740] sm:$0xff]
        %v3972 = vld [vmem:[#allocation2 + $0x748] sm:$0xff]
        %v3973 = vld [vmem:[#allocation2 + $0x750] sm:$0xff]
        %v3974 = vld [vmem:[#allocation2 + $0x758] sm:$0xff]
        %v3975 = vld [vmem:[#allocation2 + $0x760] sm:$0xff]
        %v3976 = vld [vmem:[#allocation2 + $0x768] sm:$0xff]
        %v3977 = vld [vmem:[#allocation2 + $0x770] sm:$0xff]
        %v3978 = vld [vmem:[#allocation2 + $0x778] sm:$0xff]
        %v3979 = vld [vmem:[#allocation2 + $0x780] sm:$0xff]
        %v3980 = vld [vmem:[#allocation2 + $0x788] sm:$0xff]
        %v3981 = vld [vmem:[#allocation2 + $0x790] sm:$0xff]
        %v3982 = vld [vmem:[#allocation2 + $0x798] sm:$0xff]
        %v3983 = vld [vmem:[#allocation2 + $0x7a0] sm:$0xff]
        %v3984 = vld [vmem:[#allocation2 + $0x7a8] sm:$0xff]
        %v3985 = vld [vmem:[#allocation2 + $0x7b0] sm:$0xff]
        %v3986 = vld [vmem:[#allocation2 + $0x7b8] sm:$0xff]
        %v3987 = vld [vmem:[#allocation2 + $0x7c0] sm:$0xff]
        %v3988 = vld [vmem:[#allocation2 + $0x7c8] sm:$0xff]
        %v3989 = vld [vmem:[#allocation2 + $0x7d0] sm:$0xff]
        %v3990 = vld [vmem:[#allocation2 + $0x7d8] sm:$0xff]
        %v3991 = vld [vmem:[#allocation2 + $0x7e0] sm:$0xff]
        %v3992 = vld [vmem:[#allocation2 + $0x7e8] sm:$0xff]
        %v3993 = vld [vmem:[#allocation2 + $0x7f0] sm:$0xff]
        %v3994 = vld [vmem:[#allocation2 + $0x7f8] sm:$0xff]
        %v3995 = vld [vmem:[#allocation2 + $0x800] sm:$0xff]
        %v3996 = vld [vmem:[#allocation2 + $0x808] sm:$0xff]
        %v3997 = vld [vmem:[#allocation2 + $0x810] sm:$0xff]
        %v3998 = vld [vmem:[#allocation2 + $0x818] sm:$0xff]
        %v3999 = vld [vmem:[#allocation2 + $0x820] sm:$0xff]
        %v4000 = vld [vmem:[#allocation2 + $0x828] sm:$0xff]
        %v4001 = vld [vmem:[#allocation2 + $0x830] sm:$0xff]
        %v4002 = vld [vmem:[#allocation2 + $0x838] sm:$0xff]
        %v4003 = vld [vmem:[#allocation2 + $0x840] sm:$0xff]
        %v4004 = vld [vmem:[#allocation2 + $0x848] sm:$0xff]
        %v4005 = vld [vmem:[#allocation2 + $0x850] sm:$0xff]
        %v4006 = vld [vmem:[#allocation2 + $0x858] sm:$0xff]
        %v4007 = vld [vmem:[#allocation2 + $0x860] sm:$0xff]
        %v4008 = vld [vmem:[#allocation2 + $0x868] sm:$0xff]
        %v4009 = vld [vmem:[#allocation2 + $0x870] sm:$0xff]
        %v4010 = vld [vmem:[#allocation2 + $0x878] sm:$0xff]
        %v4011 = vld [vmem:[#allocation2 + $0x880] sm:$0xff]
        %v4012 = vld [vmem:[#allocation2 + $0x888] sm:$0xff]
        %v4013 = vld [vmem:[#allocation2 + $0x890] sm:$0xff]
        %v4014 = vld [vmem:[#allocation2 + $0x898] sm:$0xff]
        %v4015 = vld [vmem:[#allocation2 + $0x8a0] sm:$0xff]
        %v4016 = vld [vmem:[#allocation2 + $0x8a8] sm:$0xff]
        %v4017 = vld [vmem:[#allocation2 + $0x8b0] sm:$0xff]
        %v4018 = vld [vmem:[#allocation2 + $0x8b8] sm:$0xff]
        %v4019 = vld [vmem:[#allocation2 + $0x8c0] sm:$0xff]
        %v4020 = vld [vmem:[#allocation2 + $0x8c8] sm:$0xff]
        %v4021 = vld [vmem:[#allocation2 + $0x8d0] sm:$0xff]
        %v4022 = vld [vmem:[#allocation2 + $0x8d8] sm:$0xff]
        %v4023 = vld [vmem:[#allocation2 + $0x8e0] sm:$0xff]
        %v4024 = vld [vmem:[#allocation2 + $0x8e8] sm:$0xff]
        %v4025 = vld [vmem:[#allocation2 + $0x8f0] sm:$0xff]
        %v4026 = vld [vmem:[#allocation2 + $0x8f8] sm:$0xff]
        %v4027 = vld [vmem:[#allocation2 + $0x900] sm:$0xff]
        %v4028 = vld [vmem:[#allocation2 + $0x908] sm:$0xff]
        %v4029 = vld [vmem:[#allocation2 + $0x910] sm:$0xff]
        %v4030 = vld [vmem:[#allocation2 + $0x918] sm:$0xff]
        %v4031 = vld [vmem:[#allocation2 + $0x920] sm:$0xff]
        %v4032 = vld [vmem:[#allocation2 + $0x928] sm:$0xff]
        %v4033 = vld [vmem:[#allocation2 + $0x930] sm:$0xff]
        %v4034 = vld [vmem:[#allocation2 + $0x938] sm:$0xff]
        %v4035 = vld [vmem:[#allocation2 + $0x940] sm:$0xff]
        %v4036 = vld [vmem:[#allocation2 + $0x948] sm:$0xff]
        %v4037 = vld [vmem:[#allocation2 + $0x950] sm:$0xff]
        %v4038 = vld [vmem:[#allocation2 + $0x958] sm:$0xff]
        %v4039 = vld [vmem:[#allocation2 + $0x960] sm:$0xff]
        %v4040 = vld [vmem:[#allocation2 + $0x968] sm:$0xff]
        %v4041 = vld [vmem:[#allocation2 + $0x970] sm:$0xff]
        %v4042 = vld [vmem:[#allocation2 + $0x978] sm:$0xff]
        %v4043 = vld [vmem:[#allocation2 + $0x980] sm:$0xff]
        %v4044 = vld [vmem:[#allocation2 + $0x988] sm:$0xff]
        %v4045 = vld [vmem:[#allocation2 + $0x990] sm:$0xff]
        %v4046 = vld [vmem:[#allocation2 + $0x998] sm:$0xff]
        %v4047 = vld [vmem:[#allocation2 + $0x9a0] sm:$0xff]
        %v4048 = vld [vmem:[#allocation2 + $0x9a8] sm:$0xff]
        %v4049 = vld [vmem:[#allocation2 + $0x9b0] sm:$0xff]
        %v4050 = vld [vmem:[#allocation2 + $0x9b8] sm:$0xff]
        %v4051 = vld [vmem:[#allocation2 + $0x9c0] sm:$0xff]
        %v4052 = vld [vmem:[#allocation2 + $0x9c8] sm:$0xff]
        %v4053 = vld [vmem:[#allocation2 + $0x9d0] sm:$0xff]
        %v4054 = vld [vmem:[#allocation2 + $0x9d8] sm:$0xff]
        %v4055 = vld [vmem:[#allocation2 + $0x9e0] sm:$0xff]
        %v4056 = vld [vmem:[#allocation2 + $0x9e8] sm:$0xff]
        %v4057 = vld [vmem:[#allocation2 + $0x9f0] sm:$0xff]
        %v4058 = vld [vmem:[#allocation2 + $0x9f8] sm:$0xff]
        %v4059 = vld [vmem:[#allocation2 + $0xa00] sm:$0xff]
        %v4060 = vld [vmem:[#allocation2 + $0xa08] sm:$0xff]
        %v4061 = vld [vmem:[#allocation2 + $0xa10] sm:$0xff]
        %v4062 = vld [vmem:[#allocation2 + $0xa18] sm:$0xff]
        %v4063 = vld [vmem:[#allocation2 + $0xa20] sm:$0xff]
        %v4064 = vld [vmem:[#allocation2 + $0xa28] sm:$0xff]
        %v4065 = vld [vmem:[#allocation2 + $0xa30] sm:$0xff]
        %v4066 = vld [vmem:[#allocation2 + $0xa38] sm:$0xff]
        %v4067 = vld [vmem:[#allocation2 + $0xa40] sm:$0xff]
        %v4068 = vld [vmem:[#allocation2 + $0xa48] sm:$0xff]
        %v4069 = vld [vmem:[#allocation2 + $0xa50] sm:$0xff]
        %v4070 = vld [vmem:[#allocation2 + $0xa58] sm:$0xff]
        %v4071 = vld [vmem:[#allocation2 + $0xa60] sm:$0xff]
        %v4072 = vld [vmem:[#allocation2 + $0xa68] sm:$0xff]
        %v4073 = vld [vmem:[#allocation2 + $0xa70] sm:$0xff]
        %v4074 = vld [vmem:[#allocation2 + $0xa78] sm:$0xff]
        %v4075 = vld [vmem:[#allocation2 + $0xa80] sm:$0xff]
        %v4076 = vld [vmem:[#allocation2 + $0xa88] sm:$0xff]
        %v4077 = vld [vmem:[#allocation2 + $0xa90] sm:$0xff]
        %v4078 = vld [vmem:[#allocation2 + $0xa98] sm:$0xff]
        %v4079 = vld [vmem:[#allocation2 + $0xaa0] sm:$0xff]
        %v4080 = vld [vmem:[#allocation2 + $0xaa8] sm:$0xff]
        %v4081 = vld [vmem:[#allocation2 + $0xab0] sm:$0xff]
        %v4082 = vld [vmem:[#allocation2 + $0xab8] sm:$0xff]
        %v4083 = vld [vmem:[#allocation2 + $0xac0] sm:$0xff]
        %v4084 = vld [vmem:[#allocation2 + $0xac8] sm:$0xff]
        %v4085 = vld [vmem:[#allocation2 + $0xad0] sm:$0xff]
        %v4086 = vld [vmem:[#allocation2 + $0xad8] sm:$0xff]
        %v4087 = vld [vmem:[#allocation2 + $0xae0] sm:$0xff]
        %v4088 = vld [vmem:[#allocation2 + $0xae8] sm:$0xff]
        %v4089 = vld [vmem:[#allocation2 + $0xaf0] sm:$0xff]
        %v4090 = vld [vmem:[#allocation2 + $0xaf8] sm:$0xff]
        %v4091 = vld [vmem:[#allocation2 + $0xb00] sm:$0xff]
        %v4092 = vld [vmem:[#allocation2 + $0xb08] sm:$0xff]
        %v4093 = vld [vmem:[#allocation2 + $0xb10] sm:$0xff]
        %v4094 = vld [vmem:[#allocation2 + $0xb18] sm:$0xff]
        %v4095 = vld [vmem:[#allocation2 + $0xb20] sm:$0xff]
        %v4096 = vld [vmem:[#allocation2 + $0xb28] sm:$0xff]
        %v4097 = vld [vmem:[#allocation2 + $0xb30] sm:$0xff]
        %v4098 = vld [vmem:[#allocation2 + $0xb38] sm:$0xff]
        %v4099 = vld [vmem:[#allocation2 + $0xb40] sm:$0xff]
        %v4100 = vld [vmem:[#allocation2 + $0xb48] sm:$0xff]
        %v4101 = vld [vmem:[#allocation2 + $0xb50] sm:$0xff]
        %v4102 = vld [vmem:[#allocation2 + $0xb58] sm:$0xff]
        %v4103 = vld [vmem:[#allocation2 + $0xb60] sm:$0xff]
        %v4104 = vld [vmem:[#allocation2 + $0xb68] sm:$0xff]
        %v4105 = vld [vmem:[#allocation2 + $0xb70] sm:$0xff]
        %v4106 = vld [vmem:[#allocation2 + $0xb78] sm:$0xff]
        %v4107 = vld [vmem:[#allocation2 + $0xb80] sm:$0xff]
        %v4108 = vld [vmem:[#allocation2 + $0xb88] sm:$0xff]
        %v4109 = vld [vmem:[#allocation2 + $0xb90] sm:$0xff]
        %v4110 = vld [vmem:[#allocation2 + $0xb98] sm:$0xff]
        %v4111 = vld [vmem:[#allocation2 + $0xba0] sm:$0xff]
        %v4112 = vld [vmem:[#allocation2 + $0xba8] sm:$0xff]
        %v4113 = vld [vmem:[#allocation2 + $0xbb0] sm:$0xff]
        %v4114 = vld [vmem:[#allocation2 + $0xbb8] sm:$0xff]
        %v4115 = vld [vmem:[#allocation2 + $0xbc0] sm:$0xff]
        %v4116 = vld [vmem:[#allocation2 + $0xbc8] sm:$0xff]
        %v4117 = vld [vmem:[#allocation2 + $0xbd0] sm:$0xff]
        %v4118 = vld [vmem:[#allocation2 + $0xbd8] sm:$0xff]
        %v4119 = vld [vmem:[#allocation2 + $0xbe0] sm:$0xff]
        %v4120 = vld [vmem:[#allocation2 + $0xbe8] sm:$0xff]
        %v4121 = vld [vmem:[#allocation2 + $0xbf0] sm:$0xff]
        %v4122 = vld [vmem:[#allocation2 + $0xbf8] sm:$0xff]
        %v4123 = vld [vmem:[#allocation2 + $0xc00] sm:$0xff]
        %v4124 = vld [vmem:[#allocation2 + $0xc08] sm:$0xff]
        %v4125 = vld [vmem:[#allocation2 + $0xc10] sm:$0xff]
        %v4126 = vld [vmem:[#allocation2 + $0xc18] sm:$0xff]
        %v4127 = vld [vmem:[#allocation2 + $0xc20] sm:$0xff]
        %v4128 = vld [vmem:[#allocation2 + $0xc28] sm:$0xff]
        %v4129 = vld [vmem:[#allocation2 + $0xc30] sm:$0xff]
        %v4130 = vld [vmem:[#allocation2 + $0xc38] sm:$0xff]
        %v4131 = vld [vmem:[#allocation2 + $0xc40] sm:$0xff]
        %v4132 = vld [vmem:[#allocation2 + $0xc48] sm:$0xff]
        %v4133 = vld [vmem:[#allocation2 + $0xc50] sm:$0xff]
        %v4134 = vld [vmem:[#allocation2 + $0xc58] sm:$0xff]
        %v4135 = vld [vmem:[#allocation2 + $0xc60] sm:$0xff]
        %v4136 = vld [vmem:[#allocation2 + $0xc68] sm:$0xff]
        %v4137 = vld [vmem:[#allocation2 + $0xc70] sm:$0xff]
        %v4138 = vld [vmem:[#allocation2 + $0xc78] sm:$0xff]
        %v4139 = vld [vmem:[#allocation2 + $0xc80] sm:$0xff]
        %v4140 = vld [vmem:[#allocation2 + $0xc88] sm:$0xff]
        %v4141 = vld [vmem:[#allocation2 + $0xc90] sm:$0xff]
        %v4142 = vld [vmem:[#allocation2 + $0xc98] sm:$0xff]
        %v4143 = vld [vmem:[#allocation2 + $0xca0] sm:$0xff]
        %v4144 = vld [vmem:[#allocation2 + $0xca8] sm:$0xff]
        %v4145 = vld [vmem:[#allocation2 + $0xcb0] sm:$0xff]
        %v4146 = vld [vmem:[#allocation2 + $0xcb8] sm:$0xff]
        %v4147 = vld [vmem:[#allocation2 + $0xcc0] sm:$0xff]
        %v4148 = vld [vmem:[#allocation2 + $0xcc8] sm:$0xff]
        %v4149 = vld [vmem:[#allocation2 + $0xcd0] sm:$0xff]
        %v4150 = vld [vmem:[#allocation2 + $0xcd8] sm:$0xff]
        %v4151 = vld [vmem:[#allocation2 + $0xce0] sm:$0xff]
        %v4152 = vld [vmem:[#allocation2 + $0xce8] sm:$0xff]
        %v4153 = vld [vmem:[#allocation2 + $0xcf0] sm:$0xff]
        %v4154 = vld [vmem:[#allocation2 + $0xcf8] sm:$0xff]
        %v4155 = vld [vmem:[#allocation2 + $0xd00] sm:$0xff]
        %v4156 = vld [vmem:[#allocation2 + $0xd08] sm:$0xff]
        %v4157 = vld [vmem:[#allocation2 + $0xd10] sm:$0xff]
        %v4158 = vld [vmem:[#allocation2 + $0xd18] sm:$0xff]
        %v4159 = vld [vmem:[#allocation2 + $0xd20] sm:$0xff]
        %v4160 = vld [vmem:[#allocation2 + $0xd28] sm:$0xff]
        %v4161 = vld [vmem:[#allocation2 + $0xd30] sm:$0xff]
        %v4162 = vld [vmem:[#allocation2 + $0xd38] sm:$0xff]
        %v4163 = vld [vmem:[#allocation2 + $0xd40] sm:$0xff]
        %v4164 = vld [vmem:[#allocation2 + $0xd48] sm:$0xff]
        %v4165 = vld [vmem:[#allocation2 + $0xd50] sm:$0xff]
        %v4166 = vld [vmem:[#allocation2 + $0xd58] sm:$0xff]
        %v4167 = vld [vmem:[#allocation2 + $0xd60] sm:$0xff]
        %v4168 = vld [vmem:[#allocation2 + $0xd68] sm:$0xff]
        %v4169 = vld [vmem:[#allocation2 + $0xd70] sm:$0xff]
        %v4170 = vld [vmem:[#allocation2 + $0xd78] sm:$0xff]
        %v4171 = vld [vmem:[%s3] sm:$0xff]
        %v4172 = vld [vmem:[%s3 + $0x8] sm:$0xff]
        %v4173 = vld [vmem:[%s3 + $0x10] sm:$0xff]
        %v4174 = vld [vmem:[%s3 + $0x18] sm:$0xff]
        %v4175 = vld [vmem:[%s3 + $0x20] sm:$0xff]
        %v4176 = vld [vmem:[%s3 + $0x28] sm:$0xff]
        %v4177 = vld [vmem:[%s4] sm:$0xff]
        %v4178 = vld [vmem:[%s4 + $0x8] sm:$0xff]
        %4180 = vset.pattern.permute.xlu0 0
        %4181 = vperm.xlu0 %4180, %v4177
        %v4182 = vpop.permute.xlu0 %4181
        %4185 = vset.pattern.permute.xlu0 0
        %4186 = vperm.xlu0 %4185, %v4178
        %v4187 = vpop.permute.xlu0 %4186
        %vm4189 = vcmask 261120
        %v4191 = vsel %vm4189, %v4173, 0
        %v4194 = vsel %vm4189, %v4176, 0
        %4196 = vmatprep.subr.mxu0 %v3740
        %4197 = vmatpush1.msra.mxu0 %v3739
        %4198 = vmatprep.subr.mxu0 %v3752
        %4199 = vmatpush1.msra.mxu0 %v3751
        %4200 = vmatprep.subr.mxu0 %v3764
        %4201 = vmatpush1.msra.mxu0 %v3763
        %4202 = vmatprep.subr.mxu0 %v3776
        %4203 = vmatpush1.msra.mxu0 %v3775
        %4204 = vmatprep.subr.mxu0 %v3788
        %4205 = vmatpush1.msra.mxu0 %v3787
        %4206 = vmatprep.subr.mxu0 %v3800
        %4207 = vmatpush1.msra.mxu0 %v3799
        %4208 = vmatprep.subr.mxu0 %v3812
        %4209 = vmatpush1.msra.mxu0 %v3811
        %4210 = vmatprep.subr.mxu0 %v3824
        %4211 = vmatpush1.msra.mxu0 %v3823
        %4212 = vmatprep.subr.mxu0 %v3836
        %4213 = vmatpush1.msra.mxu0 %v3835
        %4214 = vmatprep.subr.mxu0 %v3848
        %4215 = vmatpush1.msra.mxu0 %v3847
        %4216 = vmatprep.subr.mxu0 %v3860
        %4217 = vmatpush1.msra.mxu0 %v3859
        %4218 = vmatprep.subr.mxu0 %v3872
        %4219 = vmatpush1.msra.mxu0 %v3871
        %4220 = vmatprep.subr.mxu0 %v3884
        %4221 = vmatpush1.msra.mxu0 %v3883
        %4222 = vmatprep.subr.mxu0 %v3896
        %4223 = vmatpush1.msra.mxu0 %v3895
        %4224 = vmatprep.subr.mxu0 %v3908
        %4225 = vmatpush1.msra.mxu0 %v3907
        %4226 = vmatprep.subr.mxu0 %v3920
        %4227 = vmatpush1.msra.mxu0 %v3919
        %4228 = vmatprep.subr.mxu0 %v3932
        %4229 = vmatpush1.msra.mxu0 %v3931
        %4230 = vmatprep.subr.mxu0 %v3944
        %4231 = vmatpush1.msra.mxu0 %v3943
        %4232 = vmatprep.subr.mxu0 %v3956
        %4233 = vmatpush1.msra.mxu0 %v3955
        %4234 = vmatprep.subr.mxu0 %v3968
        %4235 = vmatpush1.msra.mxu0 %v3967
        %4236 = vmatprep.subr.mxu0 %v3980
        %4237 = vmatpush1.msra.mxu0 %v3979
        %4238 = vmatprep.subr.mxu0 %v3992
        %4239 = vmatpush1.msra.mxu0 %v3991
        %4240 = vmatprep.subr.mxu0 %v4004
        %4241 = vmatpush1.msra.mxu0 %v4003
        %4242 = vmatprep.subr.mxu0 %v4016
        %4243 = vmatpush1.msra.mxu0 %v4015
        %4244 = vmatprep.subr.mxu0 %v4028
        %4245 = vmatpush1.msra.mxu0 %v4027
        %4246 = vmatprep.subr.mxu0 %v4040
        %4247 = vmatpush1.msra.mxu0 %v4039
        %4248 = vmatprep.subr.mxu0 %v4052
        %4249 = vmatpush1.msra.mxu0 %v4051
        %4250 = vmatprep.subr.mxu0 %v4064
        %4251 = vmatpush1.msra.mxu0 %v4063
        %4252 = vmatprep.subr.mxu0 %v4076
        %4253 = vmatpush1.msra.mxu0 %v4075
        %4254 = vmatprep.subr.mxu0 %v4088
        %4255 = vmatpush1.msra.mxu0 %v4087
        %4256 = vmatprep.subr.mxu0 %v4100
        %4257 = vmatpush1.msra.mxu0 %v4099
        %4258 = vmatprep.subr.mxu0 %v4112
        %4259 = vmatpush1.msra.mxu0 %v4111
        %4260 = vmatprep.mubr.f32.mxu0 %v4172
        %4261 = vmatmul.mubr.f32.gmra.mrb[0].mxu0 %v4171
        %v4262 = vpop.f32.mrb[0].mxu0
        %v4263 = vadd.f32 %v4182, %v4262
        %v4264 = vpop.f32.mrb[0].mxu0
        %v4265 = vadd.f32 %v4182, %v4264
        %4266 = vmatprep.mubr.f32.mxu0 %v4175
        %4267 = vmatmul.mubr.f32.gmra.mrb[0].mxu0 %v4174
        %v4268 = vpop.f32.mrb[0].mxu0
        %v4269 = vadd.f32 %v4187, %v4268
        %v4270 = vpop.f32.mrb[0].mxu0
        %v4271 = vadd.f32 %v4187, %v4270
        %4272 = vdwg.mxu0
        %4273 = vmatprep.subr.mxu0 %v4124
        %4274 = vmatpush1.msra.mxu0 %v4123
        %4275 = vmatprep.subr.mxu0 %v4136
        %4276 = vmatpush1.msra.mxu0 %v4135
        %4277 = vmatprep.subr.mxu0 %v4148
        %4278 = vmatpush1.msra.mxu0 %v4147
        %4279 = vmatprep.subr.mxu0 %v4160
        %4280 = vmatpush1.msra.mxu0 %v4159
        %4281 = vmatprep.subr.mxu0 0.0
        %4282 = vmatpush1.msra.mxu0 0.0
        %4283 = vmatprep.subr.mxu0 0.0
        %4284 = vmatpush1.msra.mxu0 0.0
        %4285 = vmatprep.subr.mxu0 0.0
        %4286 = vmatpush1.msra.mxu0 0.0
        %4287 = vmatprep.subr.mxu0 0.0
        %4288 = vmatpush1.msra.mxu0 0.0
        %4289 = vmatprep.subr.mxu0 0.0
        %4290 = vmatpush1.msra.mxu0 0.0
        %4291 = vmatprep.subr.mxu0 0.0
        %4292 = vmatpush1.msra.mxu0 0.0
        %4293 = vmatprep.subr.mxu0 0.0
        %4294 = vmatpush1.msra.mxu0 0.0
        %4295 = vmatprep.subr.mxu0 0.0
        %4296 = vmatpush1.msra.mxu0 0.0
        %4297 = vmatprep.subr.mxu0 0.0
        %4298 = vmatpush1.msra.mxu0 0.0
        %4299 = vmatprep.subr.mxu0 0.0
        %4300 = vmatpush1.msra.mxu0 0.0
        %4301 = vmatprep.subr.mxu0 0.0
        %4302 = vmatpush1.msra.mxu0 0.0
        %4303 = vmatprep.subr.mxu0 0.0
        %4304 = vmatpush1.msra.mxu0 0.0
        %4305 = vmatprep.subr.mxu0 0.0
        %4306 = vmatpush1.msra.mxu0 0.0
        %4307 = vmatprep.subr.mxu0 0.0
        %4308 = vmatpush1.msra.mxu0 0.0
        %4309 = vmatprep.subr.mxu0 0.0
        %4310 = vmatpush1.msra.mxu0 0.0
        %4311 = vmatprep.subr.mxu0 0.0
        %4312 = vmatpush1.msra.mxu0 0.0
        %4313 = vmatprep.subr.mxu0 0.0
        %4314 = vmatpush1.msra.mxu0 0.0
        %4315 = vmatprep.subr.mxu0 0.0
        %4316 = vmatpush1.msra.mxu0 0.0
        %4317 = vmatprep.subr.mxu0 0.0
        %4318 = vmatpush1.msra.mxu0 0.0
        %4319 = vmatprep.subr.mxu0 0.0
        %4320 = vmatpush1.msra.mxu0 0.0
        %4321 = vmatprep.subr.mxu0 0.0
        %4322 = vmatpush1.msra.mxu0 0.0
        %4323 = vmatprep.subr.mxu0 0.0
        %4324 = vmatpush1.msra.mxu0 0.0
        %4325 = vmatprep.subr.mxu0 0.0
        %4326 = vmatpush1.msra.mxu0 0.0
        %4327 = vmatprep.subr.mxu0 0.0
        %4328 = vmatpush1.msra.mxu0 0.0
        %4329 = vmatprep.subr.mxu0 0.0
        %4330 = vmatpush1.msra.mxu0 0.0
        %4331 = vmatprep.subr.mxu0 0.0
        %4332 = vmatpush1.msra.mxu0 0.0
        %4333 = vmatprep.subr.mxu0 0.0
        %4334 = vmatpush1.msra.mxu0 0.0
        %4335 = vmatprep.subr.mxu0 0.0
        %4336 = vmatpush1.msra.mxu0 0.0
        %4337 = vmatprep.mubr.f32.mxu0 0.0
        %4338 = vmatmul.mubr.f32.gmra.mrb[0].mxu0 %v4191
        %v4339 = vpop.f32.mrb[0].mxu0
        %v4340 = vadd.f32 %v4263, %v4339
        %v4341 = vpop.f32.mrb[0].mxu0
        %v4342 = vadd.f32 %v4265, %v4341
        %4343 = vmatprep.mubr.f32.mxu0 0.0
        %4344 = vmatmul.mubr.f32.gmra.mrb[0].mxu0 %v4194
        %v4345 = vpop.f32.mrb[0].mxu0
        %v4346 = vadd.f32 %v4269, %v4345
        %v4347 = vpop.f32.mrb[0].mxu0
        %v4348 = vadd.f32 %v4271, %v4347
        %4349 = vdwg.mxu0
        %4350 = vmatprep.subr.mxu0 %v3742
        %4351 = vmatpush1.msra.mxu0 %v3741
        %4352 = vmatprep.subr.mxu0 %v3754
        %4353 = vmatpush1.msra.mxu0 %v3753
        %4354 = vmatprep.subr.mxu0 %v3766
        %4355 = vmatpush1.msra.mxu0 %v3765
        %4356 = vmatprep.subr.mxu0 %v3778
        %4357 = vmatpush1.msra.mxu0 %v3777
        %4358 = vmatprep.subr.mxu0 %v3790
        %4359 = vmatpush1.msra.mxu0 %v3789
        %4360 = vmatprep.subr.mxu0 %v3802
        %4361 = vmatpush1.msra.mxu0 %v3801
        %4362 = vmatprep.subr.mxu0 %v3814
        %4363 = vmatpush1.msra.mxu0 %v3813
        %4364 = vmatprep.subr.mxu0 %v3826
        %4365 = vmatpush1.msra.mxu0 %v3825
        %4366 = vmatprep.subr.mxu0 %v3838
        %4367 = vmatpush1.msra.mxu0 %v3837
        %4368 = vmatprep.subr.mxu0 %v3850
        %4369 = vmatpush1.msra.mxu0 %v3849
        %4370 = vmatprep.subr.mxu0 %v3862
        %4371 = vmatpush1.msra.mxu0 %v3861
        %4372 = vmatprep.subr.mxu0 %v3874
        %4373 = vmatpush1.msra.mxu0 %v3873
        %4374 = vmatprep.subr.mxu0 %v3886
        %4375 = vmatpush1.msra.mxu0 %v3885
        %4376 = vmatprep.subr.mxu0 %v3898
        %4377 = vmatpush1.msra.mxu0 %v3897
        %4378 = vmatprep.subr.mxu0 %v3910
        %4379 = vmatpush1.msra.mxu0 %v3909
        %4380 = vmatprep.subr.mxu0 %v3922
        %4381 = vmatpush1.msra.mxu0 %v3921
        %4382 = vmatprep.subr.mxu0 %v3934
        %4383 = vmatpush1.msra.mxu0 %v3933
        %4384 = vmatprep.subr.mxu0 %v3946
        %4385 = vmatpush1.msra.mxu0 %v3945
        %4386 = vmatprep.subr.mxu0 %v3958
        %4387 = vmatpush1.msra.mxu0 %v3957
        %4388 = vmatprep.subr.mxu0 %v3970
        %4389 = vmatpush1.msra.mxu0 %v3969
        %4390 = vmatprep.subr.mxu0 %v3982
        %4391 = vmatpush1.msra.mxu0 %v3981
        %4392 = vmatprep.subr.mxu0 %v3994
        %4393 = vmatpush1.msra.mxu0 %v3993
        %4394 = vmatprep.subr.mxu0 %v4006
        %4395 = vmatpush1.msra.mxu0 %v4005
        %4396 = vmatprep.subr.mxu0 %v4018
        %4397 = vmatpush1.msra.mxu0 %v4017
        %4398 = vmatprep.subr.mxu0 %v4030
        %4399 = vmatpush1.msra.mxu0 %v4029
        %4400 = vmatprep.subr.mxu0 %v4042
        %4401 = vmatpush1.msra.mxu0 %v4041
        %4402 = vmatprep.subr.mxu0 %v4054
        %4403 = vmatpush1.msra.mxu0 %v4053
        %4404 = vmatprep.subr.mxu0 %v4066
        %4405 = vmatpush1.msra.mxu0 %v4065
        %4406 = vmatprep.subr.mxu0 %v4078
        %4407 = vmatpush1.msra.mxu0 %v4077
        %4408 = vmatprep.subr.mxu0 %v4090
        %4409 = vmatpush1.msra.mxu0 %v4089
        %4410 = vmatprep.subr.mxu0 %v4102
        %4411 = vmatpush1.msra.mxu0 %v4101
        %4412 = vmatprep.subr.mxu0 %v4114
        %4413 = vmatpush1.msra.mxu0 %v4113
        %4414 = vmatprep.mubr.f32.mxu0 %v4172
        %4415 = vmatmul.mubr.f32.gmra.mrb[0].mxu0 %v4171
        %v4416 = vpop.f32.mrb[0].mxu0
        %v4417 = vadd.f32 %v4182, %v4416
        %v4418 = vpop.f32.mrb[0].mxu0
        %v4419 = vadd.f32 %v4182, %v4418
        %4420 = vmatprep.mubr.f32.mxu0 %v4175
        %4421 = vmatmul.mubr.f32.gmra.mrb[0].mxu0 %v4174
        %v4422 = vpop.f32.mrb[0].mxu0
        %v4423 = vadd.f32 %v4187, %v4422
        %v4424 = vpop.f32.mrb[0].mxu0
        %v4425 = vadd.f32 %v4187, %v4424
        %4426 = vdwg.mxu0
        %4427 = vmatprep.subr.mxu0 %v4126
        %4428 = vmatpush1.msra.mxu0 %v4125
        %4429 = vmatprep.subr.mxu0 %v4138
        %4430 = vmatpush1.msra.mxu0 %v4137
        %4431 = vmatprep.subr.mxu0 %v4150
        %4432 = vmatpush1.msra.mxu0 %v4149
        %4433 = vmatprep.subr.mxu0 %v4162
        %4434 = vmatpush1.msra.mxu0 %v4161
        %4435 = vmatprep.subr.mxu0 0.0
        %4436 = vmatpush1.msra.mxu0 0.0
        %4437 = vmatprep.subr.mxu0 0.0
        %4438 = vmatpush1.msra.mxu0 0.0
        %4439 = vmatprep.subr.mxu0 0.0
        %4440 = vmatpush1.msra.mxu0 0.0
        %4441 = vmatprep.subr.mxu0 0.0
        %4442 = vmatpush1.msra.mxu0 0.0
        %4443 = vmatprep.subr.mxu0 0.0
        %4444 = vmatpush1.msra.mxu0 0.0
        %4445 = vmatprep.subr.mxu0 0.0
        %4446 = vmatpush1.msra.mxu0 0.0
        %4447 = vmatprep.subr.mxu0 0.0
        %4448 = vmatpush1.msra.mxu0 0.0
        %4449 = vmatprep.subr.mxu0 0.0
        %4450 = vmatpush1.msra.mxu0 0.0
        %4451 = vmatprep.subr.mxu0 0.0
        %4452 = vmatpush1.msra.mxu0 0.0
        %4453 = vmatprep.subr.mxu0 0.0
        %4454 = vmatpush1.msra.mxu0 0.0
        %4455 = vmatprep.subr.mxu0 0.0
        %4456 = vmatpush1.msra.mxu0 0.0
        %4457 = vmatprep.subr.mxu0 0.0
        %4458 = vmatpush1.msra.mxu0 0.0
        %4459 = vmatprep.subr.mxu0 0.0
        %4460 = vmatpush1.msra.mxu0 0.0
        %4461 = vmatprep.subr.mxu0 0.0
        %4462 = vmatpush1.msra.mxu0 0.0
        %4463 = vmatprep.subr.mxu0 0.0
        %4464 = vmatpush1.msra.mxu0 0.0
        %4465 = vmatprep.subr.mxu0 0.0
        %4466 = vmatpush1.msra.mxu0 0.0
        %4467 = vmatprep.subr.mxu0 0.0
        %4468 = vmatpush1.msra.mxu0 0.0
        %4469 = vmatprep.subr.mxu0 0.0
        %4470 = vmatpush1.msra.mxu0 0.0
        %4471 = vmatprep.subr.mxu0 0.0
        %4472 = vmatpush1.msra.mxu0 0.0
        %4473 = vmatprep.subr.mxu0 0.0
        %4474 = vmatpush1.msra.mxu0 0.0
        %4475 = vmatprep.subr.mxu0 0.0
        %4476 = vmatpush1.msra.mxu0 0.0
        %4477 = vmatprep.subr.mxu0 0.0
        %4478 = vmatpush1.msra.mxu0 0.0
        %4479 = vmatprep.subr.mxu0 0.0
        %4480 = vmatpush1.msra.mxu0 0.0
        %4481 = vmatprep.subr.mxu0 0.0
        %4482 = vmatpush1.msra.mxu0 0.0
        %4483 = vmatprep.subr.mxu0 0.0
        %4484 = vmatpush1.msra.mxu0 0.0
        %4485 = vmatprep.subr.mxu0 0.0
        %4486 = vmatpush1.msra.mxu0 0.0
        %4487 = vmatprep.subr.mxu0 0.0
        %4488 = vmatpush1.msra.mxu0 0.0
        %4489 = vmatprep.subr.mxu0 0.0
        %4490 = vmatpush1.msra.mxu0 0.0
        %4491 = vmatprep.mubr.f32.mxu0 0.0
        %4492 = vmatmul.mubr.f32.gmra.mrb[0].mxu0 %v4191
        %v4493 = vpop.f32.mrb[0].mxu0
        %v4494 = vadd.f32 %v4417, %v4493
        %v4495 = vpop.f32.mrb[0].mxu0
        %v4496 = vadd.f32 %v4419, %v4495
        %4497 = vmatprep.mubr.f32.mxu0 0.0
        %4498 = vmatmul.mubr.f32.gmra.mrb[0].mxu0 %v4194
        %v4499 = vpop.f32.mrb[0].mxu0
        %v4500 = vadd.f32 %v4423, %v4499
        %v4501 = vpop.f32.mrb[0].mxu0
        %v4502 = vadd.f32 %v4425, %v4501
        %4503 = vdwg.mxu0
        %4504 = vmatprep.subr.mxu0 %v3744
        %4505 = vmatpush1.msra.mxu0 %v3743
        %4506 = vmatprep.subr.mxu0 %v3756
        %4507 = vmatpush1.msra.mxu0 %v3755
        %4508 = vmatprep.subr.mxu0 %v3768
        %4509 = vmatpush1.msra.mxu0 %v3767
        %4510 = vmatprep.subr.mxu0 %v3780
        %4511 = vmatpush1.msra.mxu0 %v3779
        %4512 = vmatprep.subr.mxu0 %v3792
        %4513 = vmatpush1.msra.mxu0 %v3791
        %4514 = vmatprep.subr.mxu0 %v3804
        %4515 = vmatpush1.msra.mxu0 %v3803
        %4516 = vmatprep.subr.mxu0 %v3816
        %4517 = vmatpush1.msra.mxu0 %v3815
        %4518 = vmatprep.subr.mxu0 %v3828
        %4519 = vmatpush1.msra.mxu0 %v3827
        %4520 = vmatprep.subr.mxu0 %v3840
        %4521 = vmatpush1.msra.mxu0 %v3839
        %4522 = vmatprep.subr.mxu0 %v3852
        %4523 = vmatpush1.msra.mxu0 %v3851
        %4524 = vmatprep.subr.mxu0 %v3864
        %4525 = vmatpush1.msra.mxu0 %v3863
        %4526 = vmatprep.subr.mxu0 %v3876
        %4527 = vmatpush1.msra.mxu0 %v3875
        %4528 = vmatprep.subr.mxu0 %v3888
        %4529 = vmatpush1.msra.mxu0 %v3887
        %4530 = vmatprep.subr.mxu0 %v3900
        %4531 = vmatpush1.msra.mxu0 %v3899
        %4532 = vmatprep.subr.mxu0 %v3912
        %4533 = vmatpush1.msra.mxu0 %v3911
        %4534 = vmatprep.subr.mxu0 %v3924
        %4535 = vmatpush1.msra.mxu0 %v3923
        %4536 = vmatprep.subr.mxu0 %v3936
        %4537 = vmatpush1.msra.mxu0 %v3935
        %4538 = vmatprep.subr.mxu0 %v3948
        %4539 = vmatpush1.msra.mxu0 %v3947
        %4540 = vmatprep.subr.mxu0 %v3960
        %4541 = vmatpush1.msra.mxu0 %v3959
        %4542 = vmatprep.subr.mxu0 %v3972
        %4543 = vmatpush1.msra.mxu0 %v3971
        %4544 = vmatprep.subr.mxu0 %v3984
        %4545 = vmatpush1.msra.mxu0 %v3983
        %4546 = vmatprep.subr.mxu0 %v3996
        %4547 = vmatpush1.msra.mxu0 %v3995
        %4548 = vmatprep.subr.mxu0 %v4008
        %4549 = vmatpush1.msra.mxu0 %v4007
        %4550 = vmatprep.subr.mxu0 %v4020
        %4551 = vmatpush1.msra.mxu0 %v4019
        %4552 = vmatprep.subr.mxu0 %v4032
        %4553 = vmatpush1.msra.mxu0 %v4031
        %4554 = vmatprep.subr.mxu0 %v4044
        %4555 = vmatpush1.msra.mxu0 %v4043
        %4556 = vmatprep.subr.mxu0 %v4056
        %4557 = vmatpush1.msra.mxu0 %v4055
        %4558 = vmatprep.subr.mxu0 %v4068
        %4559 = vmatpush1.msra.mxu0 %v4067
        %4560 = vmatprep.subr.mxu0 %v4080
        %4561 = vmatpush1.msra.mxu0 %v4079
        %4562 = vmatprep.subr.mxu0 %v4092
        %4563 = vmatpush1.msra.mxu0 %v4091
        %4564 = vmatprep.subr.mxu0 %v4104
        %4565 = vmatpush1.msra.mxu0 %v4103
        %4566 = vmatprep.subr.mxu0 %v4116
        %4567 = vmatpush1.msra.mxu0 %v4115
        %4568 = vmatprep.mubr.f32.mxu0 %v4172
        %4569 = vmatmul.mubr.f32.gmra.mrb[0].mxu0 %v4171
        %v4570 = vpop.f32.mrb[0].mxu0
        %v4571 = vadd.f32 %v4182, %v4570
        %v4572 = vpop.f32.mrb[0].mxu0
        %v4573 = vadd.f32 %v4182, %v4572
        %4574 = vmatprep.mubr.f32.mxu0 %v4175
        %4575 = vmatmul.mubr.f32.gmra.mrb[0].mxu0 %v4174
        %v4576 = vpop.f32.mrb[0].mxu0
        %v4577 = vadd.f32 %v4187, %v4576
        %v4578 = vpop.f32.mrb[0].mxu0
        %v4579 = vadd.f32 %v4187, %v4578
        %4580 = vdwg.mxu0
        %4581 = vmatprep.subr.mxu0 %v4128
        %4582 = vmatpush1.msra.mxu0 %v4127
        %4583 = vmatprep.subr.mxu0 %v4140
        %4584 = vmatpush1.msra.mxu0 %v4139
        %4585 = vmatprep.subr.mxu0 %v4152
        %4586 = vmatpush1.msra.mxu0 %v4151
        %4587 = vmatprep.subr.mxu0 %v4164
        %4588 = vmatpush1.msra.mxu0 %v4163
        %4589 = vmatprep.subr.mxu0 0.0
        %4590 = vmatpush1.msra.mxu0 0.0
        %4591 = vmatprep.subr.mxu0 0.0
        %4592 = vmatpush1.msra.mxu0 0.0
        %4593 = vmatprep.subr.mxu0 0.0
        %4594 = vmatpush1.msra.mxu0 0.0
        %4595 = vmatprep.subr.mxu0 0.0
        %4596 = vmatpush1.msra.mxu0 0.0
        %4597 = vmatprep.subr.mxu0 0.0
        %4598 = vmatpush1.msra.mxu0 0.0
        %4599 = vmatprep.subr.mxu0 0.0
        %4600 = vmatpush1.msra.mxu0 0.0
        %4601 = vmatprep.subr.mxu0 0.0
        %4602 = vmatpush1.msra.mxu0 0.0
        %4603 = vmatprep.subr.mxu0 0.0
        %4604 = vmatpush1.msra.mxu0 0.0
        %4605 = vmatprep.subr.mxu0 0.0
        %4606 = vmatpush1.msra.mxu0 0.0
        %4607 = vmatprep.subr.mxu0 0.0
        %4608 = vmatpush1.msra.mxu0 0.0
        %4609 = vmatprep.subr.mxu0 0.0
        %4610 = vmatpush1.msra.mxu0 0.0
        %4611 = vmatprep.subr.mxu0 0.0
        %4612 = vmatpush1.msra.mxu0 0.0
        %4613 = vmatprep.subr.mxu0 0.0
        %4614 = vmatpush1.msra.mxu0 0.0
        %4615 = vmatprep.subr.mxu0 0.0
        %4616 = vmatpush1.msra.mxu0 0.0
        %4617 = vmatprep.subr.mxu0 0.0
        %4618 = vmatpush1.msra.mxu0 0.0
        %4619 = vmatprep.subr.mxu0 0.0
        %4620 = vmatpush1.msra.mxu0 0.0
        %4621 = vmatprep.subr.mxu0 0.0
        %4622 = vmatpush1.msra.mxu0 0.0
        %4623 = vmatprep.subr.mxu0 0.0
        %4624 = vmatpush1.msra.mxu0 0.0
        %4625 = vmatprep.subr.mxu0 0.0
        %4626 = vmatpush1.msra.mxu0 0.0
        %4627 = vmatprep.subr.mxu0 0.0
        %4628 = vmatpush1.msra.mxu0 0.0
        %4629 = vmatprep.subr.mxu0 0.0
        %4630 = vmatpush1.msra.mxu0 0.0
        %4631 = vmatprep.subr.mxu0 0.0
        %4632 = vmatpush1.msra.mxu0 0.0
        %4633 = vmatprep.subr.mxu0 0.0
        %4634 = vmatpush1.msra.mxu0 0.0
        %4635 = vmatprep.subr.mxu0 0.0
        %4636 = vmatpush1.msra.mxu0 0.0
        %4637 = vmatprep.subr.mxu0 0.0
        %4638 = vmatpush1.msra.mxu0 0.0
        %4639 = vmatprep.subr.mxu0 0.0
        %4640 = vmatpush1.msra.mxu0 0.0
        %4641 = vmatprep.subr.mxu0 0.0
        %4642 = vmatpush1.msra.mxu0 0.0
        %4643 = vmatprep.subr.mxu0 0.0
        %4644 = vmatpush1.msra.mxu0 0.0
        %4645 = vmatprep.mubr.f32.mxu0 0.0
        %4646 = vmatmul.mubr.f32.gmra.mrb[0].mxu0 %v4191
        %v4647 = vpop.f32.mrb[0].mxu0
        %v4648 = vadd.f32 %v4571, %v4647
        %v4649 = vpop.f32.mrb[0].mxu0
        %v4650 = vadd.f32 %v4573, %v4649
        %4651 = vmatprep.mubr.f32.mxu0 0.0
        %4652 = vmatmul.mubr.f32.gmra.mrb[0].mxu0 %v4194
        %v4653 = vpop.f32.mrb[0].mxu0
        %v4654 = vadd.f32 %v4577, %v4653
        %v4655 = vpop.f32.mrb[0].mxu0
        %v4656 = vadd.f32 %v4579, %v4655
        %4657 = vdwg.mxu0
        %4658 = vmatprep.subr.mxu0 %v3746
        %4659 = vmatpush1.msra.mxu0 %v3745
        %4660 = vmatprep.subr.mxu0 %v3758
        %4661 = vmatpush1.msra.mxu0 %v3757
        %4662 = vmatprep.subr.mxu0 %v3770
        %4663 = vmatpush1.msra.mxu0 %v3769
        %4664 = vmatprep.subr.mxu0 %v3782
        %4665 = vmatpush1.msra.mxu0 %v3781
        %4666 = vmatprep.subr.mxu0 %v3794
        %4667 = vmatpush1.msra.mxu0 %v3793
        %4668 = vmatprep.subr.mxu0 %v3806
        %4669 = vmatpush1.msra.mxu0 %v3805
        %4670 = vmatprep.subr.mxu0 %v3818
        %4671 = vmatpush1.msra.mxu0 %v3817
        %4672 = vmatprep.subr.mxu0 %v3830
        %4673 = vmatpush1.msra.mxu0 %v3829
        %4674 = vmatprep.subr.mxu0 %v3842
        %4675 = vmatpush1.msra.mxu0 %v3841
        %4676 = vmatprep.subr.mxu0 %v3854
        %4677 = vmatpush1.msra.mxu0 %v3853
        %4678 = vmatprep.subr.mxu0 %v3866
        %4679 = vmatpush1.msra.mxu0 %v3865
        %4680 = vmatprep.subr.mxu0 %v3878
        %4681 = vmatpush1.msra.mxu0 %v3877
        %4682 = vmatprep.subr.mxu0 %v3890
        %4683 = vmatpush1.msra.mxu0 %v3889
        %4684 = vmatprep.subr.mxu0 %v3902
        %4685 = vmatpush1.msra.mxu0 %v3901
        %4686 = vmatprep.subr.mxu0 %v3914
        %4687 = vmatpush1.msra.mxu0 %v3913
        %4688 = vmatprep.subr.mxu0 %v3926
        %4689 = vmatpush1.msra.mxu0 %v3925
        %4690 = vmatprep.subr.mxu0 %v3938
        %4691 = vmatpush1.msra.mxu0 %v3937
        %4692 = vmatprep.subr.mxu0 %v3950
        %4693 = vmatpush1.msra.mxu0 %v3949
        %4694 = vmatprep.subr.mxu0 %v3962
        %4695 = vmatpush1.msra.mxu0 %v3961
        %4696 = vmatprep.subr.mxu0 %v3974
        %4697 = vmatpush1.msra.mxu0 %v3973
        %4698 = vmatprep.subr.mxu0 %v3986
        %4699 = vmatpush1.msra.mxu0 %v3985
        %4700 = vmatprep.subr.mxu0 %v3998
        %4701 = vmatpush1.msra.mxu0 %v3997
        %4702 = vmatprep.subr.mxu0 %v4010
        %4703 = vmatpush1.msra.mxu0 %v4009
        %4704 = vmatprep.subr.mxu0 %v4022
        %4705 = vmatpush1.msra.mxu0 %v4021
        %4706 = vmatprep.subr.mxu0 %v4034
        %4707 = vmatpush1.msra.mxu0 %v4033
        %4708 = vmatprep.subr.mxu0 %v4046
        %4709 = vmatpush1.msra.mxu0 %v4045
        %4710 = vmatprep.subr.mxu0 %v4058
        %4711 = vmatpush1.msra.mxu0 %v4057
        %4712 = vmatprep.subr.mxu0 %v4070
        %4713 = vmatpush1.msra.mxu0 %v4069
        %4714 = vmatprep.subr.mxu0 %v4082
        %4715 = vmatpush1.msra.mxu0 %v4081
        %4716 = vmatprep.subr.mxu0 %v4094
        %4717 = vmatpush1.msra.mxu0 %v4093
        %4718 = vmatprep.subr.mxu0 %v4106
        %4719 = vmatpush1.msra.mxu0 %v4105
        %4720 = vmatprep.subr.mxu0 %v4118
        %4721 = vmatpush1.msra.mxu0 %v4117
        %4722 = vmatprep.mubr.f32.mxu0 %v4172
        %4723 = vmatmul.mubr.f32.gmra.mrb[0].mxu0 %v4171
        %v4724 = vpop.f32.mrb[0].mxu0
        %v4725 = vadd.f32 %v4182, %v4724
        %v4726 = vpop.f32.mrb[0].mxu0
        %v4727 = vadd.f32 %v4182, %v4726
        %4728 = vmatprep.mubr.f32.mxu0 %v4175
        %4729 = vmatmul.mubr.f32.gmra.mrb[0].mxu0 %v4174
        %v4730 = vpop.f32.mrb[0].mxu0
        %v4731 = vadd.f32 %v4187, %v4730
        %v4732 = vpop.f32.mrb[0].mxu0
        %v4733 = vadd.f32 %v4187, %v4732
        %4734 = vdwg.mxu0
        %4735 = vmatprep.subr.mxu0 %v4130
        %4736 = vmatpush1.msra.mxu0 %v4129
        %4737 = vmatprep.subr.mxu0 %v4142
        %4738 = vmatpush1.msra.mxu0 %v4141
        %4739 = vmatprep.subr.mxu0 %v4154
        %4740 = vmatpush1.msra.mxu0 %v4153
        %4741 = vmatprep.subr.mxu0 %v4166
        %4742 = vmatpush1.msra.mxu0 %v4165
        %4743 = vmatprep.subr.mxu0 0.0
        %4744 = vmatpush1.msra.mxu0 0.0
        %4745 = vmatprep.subr.mxu0 0.0
        %4746 = vmatpush1.msra.mxu0 0.0
        %4747 = vmatprep.subr.mxu0 0.0
        %4748 = vmatpush1.msra.mxu0 0.0
        %4749 = vmatprep.subr.mxu0 0.0
        %4750 = vmatpush1.msra.mxu0 0.0
        %4751 = vmatprep.subr.mxu0 0.0
        %4752 = vmatpush1.msra.mxu0 0.0
        %4753 = vmatprep.subr.mxu0 0.0
        %4754 = vmatpush1.msra.mxu0 0.0
        %4755 = vmatprep.subr.mxu0 0.0
        %4756 = vmatpush1.msra.mxu0 0.0
        %4757 = vmatprep.subr.mxu0 0.0
        %4758 = vmatpush1.msra.mxu0 0.0
        %4759 = vmatprep.subr.mxu0 0.0
        %4760 = vmatpush1.msra.mxu0 0.0
        %4761 = vmatprep.subr.mxu0 0.0
        %4762 = vmatpush1.msra.mxu0 0.0
        %4763 = vmatprep.subr.mxu0 0.0
        %4764 = vmatpush1.msra.mxu0 0.0
        %4765 = vmatprep.subr.mxu0 0.0
        %4766 = vmatpush1.msra.mxu0 0.0
        %4767 = vmatprep.subr.mxu0 0.0
        %4768 = vmatpush1.msra.mxu0 0.0
        %4769 = vmatprep.subr.mxu0 0.0
        %4770 = vmatpush1.msra.mxu0 0.0
        %4771 = vmatprep.subr.mxu0 0.0
        %4772 = vmatpush1.msra.mxu0 0.0
        %4773 = vmatprep.subr.mxu0 0.0
        %4774 = vmatpush1.msra.mxu0 0.0
        %4775 = vmatprep.subr.mxu0 0.0
        %4776 = vmatpush1.msra.mxu0 0.0
        %4777 = vmatprep.subr.mxu0 0.0
        %4778 = vmatpush1.msra.mxu0 0.0
        %4779 = vmatprep.subr.mxu0 0.0
        %4780 = vmatpush1.msra.mxu0 0.0
        %4781 = vmatprep.subr.mxu0 0.0
        %4782 = vmatpush1.msra.mxu0 0.0
        %4783 = vmatprep.subr.mxu0 0.0
        %4784 = vmatpush1.msra.mxu0 0.0
        %4785 = vmatprep.subr.mxu0 0.0
        %4786 = vmatpush1.msra.mxu0 0.0
        %4787 = vmatprep.subr.mxu0 0.0
        %4788 = vmatpush1.msra.mxu0 0.0
        %4789 = vmatprep.subr.mxu0 0.0
        %4790 = vmatpush1.msra.mxu0 0.0
        %4791 = vmatprep.subr.mxu0 0.0
        %4792 = vmatpush1.msra.mxu0 0.0
        %4793 = vmatprep.subr.mxu0 0.0
        %4794 = vmatpush1.msra.mxu0 0.0
        %4795 = vmatprep.subr.mxu0 0.0
        %4796 = vmatpush1.msra.mxu0 0.0
        %4797 = vmatprep.subr.mxu0 0.0
        %4798 = vmatpush1.msra.mxu0 0.0
        %4799 = vmatprep.mubr.f32.mxu0 0.0
        %4800 = vmatmul.mubr.f32.gmra.mrb[0].mxu0 %v4191
        %v4801 = vpop.f32.mrb[0].mxu0
        %v4802 = vadd.f32 %v4725, %v4801
        %v4803 = vpop.f32.mrb[0].mxu0
        %v4804 = vadd.f32 %v4727, %v4803
        %4805 = vmatprep.mubr.f32.mxu0 0.0
        %4806 = vmatmul.mubr.f32.gmra.mrb[0].mxu0 %v4194
        %v4807 = vpop.f32.mrb[0].mxu0
        %v4808 = vadd.f32 %v4731, %v4807
        %v4809 = vpop.f32.mrb[0].mxu0
        %v4810 = vadd.f32 %v4733, %v4809
        %4811 = vdwg.mxu0
        %4812 = vmatprep.subr.mxu0 %v3748
        %4813 = vmatpush1.msra.mxu0 %v3747
        %4814 = vmatprep.subr.mxu0 %v3760
        %4815 = vmatpush1.msra.mxu0 %v3759
        %4816 = vmatprep.subr.mxu0 %v3772
        %4817 = vmatpush1.msra.mxu0 %v3771
        %4818 = vmatprep.subr.mxu0 %v3784
        %4819 = vmatpush1.msra.mxu0 %v3783
        %4820 = vmatprep.subr.mxu0 %v3796
        %4821 = vmatpush1.msra.mxu0 %v3795
        %4822 = vmatprep.subr.mxu0 %v3808
        %4823 = vmatpush1.msra.mxu0 %v3807
        %4824 = vmatprep.subr.mxu0 %v3820
        %4825 = vmatpush1.msra.mxu0 %v3819
        %4826 = vmatprep.subr.mxu0 %v3832
        %4827 = vmatpush1.msra.mxu0 %v3831
        %4828 = vmatprep.subr.mxu0 %v3844
        %4829 = vmatpush1.msra.mxu0 %v3843
        %4830 = vmatprep.subr.mxu0 %v3856
        %4831 = vmatpush1.msra.mxu0 %v3855
        %4832 = vmatprep.subr.mxu0 %v3868
        %4833 = vmatpush1.msra.mxu0 %v3867
        %4834 = vmatprep.subr.mxu0 %v3880
        %4835 = vmatpush1.msra.mxu0 %v3879
        %4836 = vmatprep.subr.mxu0 %v3892
        %4837 = vmatpush1.msra.mxu0 %v3891
        %4838 = vmatprep.subr.mxu0 %v3904
        %4839 = vmatpush1.msra.mxu0 %v3903
        %4840 = vmatprep.subr.mxu0 %v3916
        %4841 = vmatpush1.msra.mxu0 %v3915
        %4842 = vmatprep.subr.mxu0 %v3928
        %4843 = vmatpush1.msra.mxu0 %v3927
        %4844 = vmatprep.subr.mxu0 %v3940
        %4845 = vmatpush1.msra.mxu0 %v3939
        %4846 = vmatprep.subr.mxu0 %v3952
        %4847 = vmatpush1.msra.mxu0 %v3951
        %4848 = vmatprep.subr.mxu0 %v3964
        %4849 = vmatpush1.msra.mxu0 %v3963
        %4850 = vmatprep.subr.mxu0 %v3976
        %4851 = vmatpush1.msra.mxu0 %v3975
        %4852 = vmatprep.subr.mxu0 %v3988
        %4853 = vmatpush1.msra.mxu0 %v3987
        %4854 = vmatprep.subr.mxu0 %v4000
        %4855 = vmatpush1.msra.mxu0 %v3999
        %4856 = vmatprep.subr.mxu0 %v4012
        %4857 = vmatpush1.msra.mxu0 %v4011
        %4858 = vmatprep.subr.mxu0 %v4024
        %4859 = vmatpush1.msra.mxu0 %v4023
        %4860 = vmatprep.subr.mxu0 %v4036
        %4861 = vmatpush1.msra.mxu0 %v4035
        %4862 = vmatprep.subr.mxu0 %v4048
        %4863 = vmatpush1.msra.mxu0 %v4047
        %4864 = vmatprep.subr.mxu0 %v4060
        %4865 = vmatpush1.msra.mxu0 %v4059
        %4866 = vmatprep.subr.mxu0 %v4072
        %4867 = vmatpush1.msra.mxu0 %v4071
        %4868 = vmatprep.subr.mxu0 %v4084
        %4869 = vmatpush1.msra.mxu0 %v4083
        %4870 = vmatprep.subr.mxu0 %v4096
        %4871 = vmatpush1.msra.mxu0 %v4095
        %4872 = vmatprep.subr.mxu0 %v4108
        %4873 = vmatpush1.msra.mxu0 %v4107
        %4874 = vmatprep.subr.mxu0 %v4120
        %4875 = vmatpush1.msra.mxu0 %v4119
        %4876 = vmatprep.mubr.f32.mxu0 %v4172
        %4877 = vmatmul.mubr.f32.gmra.mrb[0].mxu0 %v4171
        %v4878 = vpop.f32.mrb[0].mxu0
        %v4879 = vadd.f32 %v4182, %v4878
        %v4880 = vpop.f32.mrb[0].mxu0
        %v4881 = vadd.f32 %v4182, %v4880
        %4882 = vmatprep.mubr.f32.mxu0 %v4175
        %4883 = vmatmul.mubr.f32.gmra.mrb[0].mxu0 %v4174
        %v4884 = vpop.f32.mrb[0].mxu0
        %v4885 = vadd.f32 %v4187, %v4884
        %v4886 = vpop.f32.mrb[0].mxu0
        %v4887 = vadd.f32 %v4187, %v4886
        %4888 = vdwg.mxu0
        %4889 = vmatprep.subr.mxu0 %v4132
        %4890 = vmatpush1.msra.mxu0 %v4131
        %4891 = vmatprep.subr.mxu0 %v4144
        %4892 = vmatpush1.msra.mxu0 %v4143
        %4893 = vmatprep.subr.mxu0 %v4156
        %4894 = vmatpush1.msra.mxu0 %v4155
        %4895 = vmatprep.subr.mxu0 %v4168
        %4896 = vmatpush1.msra.mxu0 %v4167
        %4897 = vmatprep.subr.mxu0 0.0
        %4898 = vmatpush1.msra.mxu0 0.0
        %4899 = vmatprep.subr.mxu0 0.0
        %4900 = vmatpush1.msra.mxu0 0.0
        %4901 = vmatprep.subr.mxu0 0.0
        %4902 = vmatpush1.msra.mxu0 0.0
        %4903 = vmatprep.subr.mxu0 0.0
        %4904 = vmatpush1.msra.mxu0 0.0
        %4905 = vmatprep.subr.mxu0 0.0
        %4906 = vmatpush1.msra.mxu0 0.0
        %4907 = vmatprep.subr.mxu0 0.0
        %4908 = vmatpush1.msra.mxu0 0.0
        %4909 = vmatprep.subr.mxu0 0.0
        %4910 = vmatpush1.msra.mxu0 0.0
        %4911 = vmatprep.subr.mxu0 0.0
        %4912 = vmatpush1.msra.mxu0 0.0
        %4913 = vmatprep.subr.mxu0 0.0
        %4914 = vmatpush1.msra.mxu0 0.0
        %4915 = vmatprep.subr.mxu0 0.0
        %4916 = vmatpush1.msra.mxu0 0.0
        %4917 = vmatprep.subr.mxu0 0.0
        %4918 = vmatpush1.msra.mxu0 0.0
        %4919 = vmatprep.subr.mxu0 0.0
        %4920 = vmatpush1.msra.mxu0 0.0
        %4921 = vmatprep.subr.mxu0 0.0
        %4922 = vmatpush1.msra.mxu0 0.0
        %4923 = vmatprep.subr.mxu0 0.0
        %4924 = vmatpush1.msra.mxu0 0.0
        %4925 = vmatprep.subr.mxu0 0.0
        %4926 = vmatpush1.msra.mxu0 0.0
        %4927 = vmatprep.subr.mxu0 0.0
        %4928 = vmatpush1.msra.mxu0 0.0
        %4929 = vmatprep.subr.mxu0 0.0
        %4930 = vmatpush1.msra.mxu0 0.0
        %4931 = vmatprep.subr.mxu0 0.0
        %4932 = vmatpush1.msra.mxu0 0.0
        %4933 = vmatprep.subr.mxu0 0.0
        %4934 = vmatpush1.msra.mxu0 0.0
        %4935 = vmatprep.subr.mxu0 0.0
        %4936 = vmatpush1.msra.mxu0 0.0
        %4937 = vmatprep.subr.mxu0 0.0
        %4938 = vmatpush1.msra.mxu0 0.0
        %4939 = vmatprep.subr.mxu0 0.0
        %4940 = vmatpush1.msra.mxu0 0.0
        %4941 = vmatprep.subr.mxu0 0.0
        %4942 = vmatpush1.msra.mxu0 0.0
        %4943 = vmatprep.subr.mxu0 0.0
        %4944 = vmatpush1.msra.mxu0 0.0
        %4945 = vmatprep.subr.mxu0 0.0
        %4946 = vmatpush1.msra.mxu0 0.0
        %4947 = vmatprep.subr.mxu0 0.0
        %4948 = vmatpush1.msra.mxu0 0.0
        %4949 = vmatprep.subr.mxu0 0.0
        %4950 = vmatpush1.msra.mxu0 0.0
        %4951 = vmatprep.subr.mxu0 0.0
        %4952 = vmatpush1.msra.mxu0 0.0
        %4953 = vmatprep.mubr.f32.mxu0 0.0
        %4954 = vmatmul.mubr.f32.gmra.mrb[0].mxu0 %v4191
        %v4955 = vpop.f32.mrb[0].mxu0
        %v4956 = vadd.f32 %v4879, %v4955
        %v4957 = vpop.f32.mrb[0].mxu0
        %v4958 = vadd.f32 %v4881, %v4957
        %4959 = vmatprep.mubr.f32.mxu0 0.0
        %4960 = vmatmul.mubr.f32.gmra.mrb[0].mxu0 %v4194
        %v4961 = vpop.f32.mrb[0].mxu0
        %v4962 = vadd.f32 %v4885, %v4961
        %v4963 = vpop.f32.mrb[0].mxu0
        %v4964 = vadd.f32 %v4887, %v4963
        %4965 = vdwg.mxu0
        %4966 = vmatprep.subr.mxu0 %v3750
        %4967 = vmatpush1.msra.mxu0 %v3749
        %4968 = vmatprep.subr.mxu0 %v3762
        %4969 = vmatpush1.msra.mxu0 %v3761
        %4970 = vmatprep.subr.mxu0 %v3774
        %4971 = vmatpush1.msra.mxu0 %v3773
        %4972 = vmatprep.subr.mxu0 %v3786
        %4973 = vmatpush1.msra.mxu0 %v3785
        %4974 = vmatprep.subr.mxu0 %v3798
        %4975 = vmatpush1.msra.mxu0 %v3797
        %4976 = vmatprep.subr.mxu0 %v3810
        %4977 = vmatpush1.msra.mxu0 %v3809
        %4978 = vmatprep.subr.mxu0 %v3822
        %4979 = vmatpush1.msra.mxu0 %v3821
        %4980 = vmatprep.subr.mxu0 %v3834
        %4981 = vmatpush1.msra.mxu0 %v3833
        %4982 = vmatprep.subr.mxu0 %v3846
        %4983 = vmatpush1.msra.mxu0 %v3845
        %4984 = vmatprep.subr.mxu0 %v3858
        %4985 = vmatpush1.msra.mxu0 %v3857
        %4986 = vmatprep.subr.mxu0 %v3870
        %4987 = vmatpush1.msra.mxu0 %v3869
        %4988 = vmatprep.subr.mxu0 %v3882
        %4989 = vmatpush1.msra.mxu0 %v3881
        %4990 = vmatprep.subr.mxu0 %v3894
        %4991 = vmatpush1.msra.mxu0 %v3893
        %4992 = vmatprep.subr.mxu0 %v3906
        %4993 = vmatpush1.msra.mxu0 %v3905
        %4994 = vmatprep.subr.mxu0 %v3918
        %4995 = vmatpush1.msra.mxu0 %v3917
        %4996 = vmatprep.subr.mxu0 %v3930
        %4997 = vmatpush1.msra.mxu0 %v3929
        %4998 = vmatprep.subr.mxu0 %v3942
        %4999 = vmatpush1.msra.mxu0 %v3941
        %5000 = vmatprep.subr.mxu0 %v3954
        %5001 = vmatpush1.msra.mxu0 %v3953
        %5002 = vmatprep.subr.mxu0 %v3966
        %5003 = vmatpush1.msra.mxu0 %v3965
        %5004 = vmatprep.subr.mxu0 %v3978
        %5005 = vmatpush1.msra.mxu0 %v3977
        %5006 = vmatprep.subr.mxu0 %v3990
        %5007 = vmatpush1.msra.mxu0 %v3989
        %5008 = vmatprep.subr.mxu0 %v4002
        %5009 = vmatpush1.msra.mxu0 %v4001
        %5010 = vmatprep.subr.mxu0 %v4014
        %5011 = vmatpush1.msra.mxu0 %v4013
        %5012 = vmatprep.subr.mxu0 %v4026
        %5013 = vmatpush1.msra.mxu0 %v4025
        %5014 = vmatprep.subr.mxu0 %v4038
        %5015 = vmatpush1.msra.mxu0 %v4037
        %5016 = vmatprep.subr.mxu0 %v4050
        %5017 = vmatpush1.msra.mxu0 %v4049
        %5018 = vmatprep.subr.mxu0 %v4062
        %5019 = vmatpush1.msra.mxu0 %v4061
        %5020 = vmatprep.subr.mxu0 %v4074
        %5021 = vmatpush1.msra.mxu0 %v4073
        %5022 = vmatprep.subr.mxu0 %v4086
        %5023 = vmatpush1.msra.mxu0 %v4085
        %5024 = vmatprep.subr.mxu0 %v4098
        %5025 = vmatpush1.msra.mxu0 %v4097
        %5026 = vmatprep.subr.mxu0 %v4110
        %5027 = vmatpush1.msra.mxu0 %v4109
        %5028 = vmatprep.subr.mxu0 %v4122
        %5029 = vmatpush1.msra.mxu0 %v4121
        %5030 = vmatprep.mubr.f32.mxu0 %v4172
        %5031 = vmatmul.mubr.f32.gmra.mrb[0].mxu0 %v4171
        %v5032 = vpop.f32.mrb[0].mxu0
        %v5033 = vadd.f32 %v4182, %v5032
        %v5034 = vpop.f32.mrb[0].mxu0
        %v5035 = vadd.f32 %v4182, %v5034
        %5036 = vmatprep.mubr.f32.mxu0 %v4175
        %5037 = vmatmul.mubr.f32.gmra.mrb[0].mxu0 %v4174
        %v5038 = vpop.f32.mrb[0].mxu0
        %v5039 = vadd.f32 %v4187, %v5038
        %v5040 = vpop.f32.mrb[0].mxu0
        %v5041 = vadd.f32 %v4187, %v5040
        %5042 = vdwg.mxu0
        %5043 = vmatprep.subr.mxu0 %v4134
        %5044 = vmatpush1.msra.mxu0 %v4133
        %5045 = vmatprep.subr.mxu0 %v4146
        %5046 = vmatpush1.msra.mxu0 %v4145
        %5047 = vmatprep.subr.mxu0 %v4158
        %5048 = vmatpush1.msra.mxu0 %v4157
        %5049 = vmatprep.subr.mxu0 %v4170
        %5050 = vmatpush1.msra.mxu0 %v4169
        %5051 = vmatprep.subr.mxu0 0.0
        %5052 = vmatpush1.msra.mxu0 0.0
        %5053 = vmatprep.subr.mxu0 0.0
        %5054 = vmatpush1.msra.mxu0 0.0
        %5055 = vmatprep.subr.mxu0 0.0
        %5056 = vmatpush1.msra.mxu0 0.0
        %5057 = vmatprep.subr.mxu0 0.0
        %5058 = vmatpush1.msra.mxu0 0.0
        %5059 = vmatprep.subr.mxu0 0.0
        %5060 = vmatpush1.msra.mxu0 0.0
        %5061 = vmatprep.subr.mxu0 0.0
        %5062 = vmatpush1.msra.mxu0 0.0
        %5063 = vmatprep.subr.mxu0 0.0
        %5064 = vmatpush1.msra.mxu0 0.0
        %5065 = vmatprep.subr.mxu0 0.0
        %5066 = vmatpush1.msra.mxu0 0.0
        %5067 = vmatprep.subr.mxu0 0.0
        %5068 = vmatpush1.msra.mxu0 0.0
        %5069 = vmatprep.subr.mxu0 0.0
        %5070 = vmatpush1.msra.mxu0 0.0
        %5071 = vmatprep.subr.mxu0 0.0
        %5072 = vmatpush1.msra.mxu0 0.0
        %5073 = vmatprep.subr.mxu0 0.0
        %5074 = vmatpush1.msra.mxu0 0.0
        %5075 = vmatprep.subr.mxu0 0.0
        %5076 = vmatpush1.msra.mxu0 0.0
        %5077 = vmatprep.subr.mxu0 0.0
        %5078 = vmatpush1.msra.mxu0 0.0
        %5079 = vmatprep.subr.mxu0 0.0
        %5080 = vmatpush1.msra.mxu0 0.0
        %5081 = vmatprep.subr.mxu0 0.0
        %5082 = vmatpush1.msra.mxu0 0.0
        %5083 = vmatprep.subr.mxu0 0.0
        %5084 = vmatpush1.msra.mxu0 0.0
        %5085 = vmatprep.subr.mxu0 0.0
        %5086 = vmatpush1.msra.mxu0 0.0
        %5087 = vmatprep.subr.mxu0 0.0
        %5088 = vmatpush1.msra.mxu0 0.0
        %5089 = vmatprep.subr.mxu0 0.0
        %5090 = vmatpush1.msra.mxu0 0.0
        %5091 = vmatprep.subr.mxu0 0.0
        %5092 = vmatpush1.msra.mxu0 0.0
        %5093 = vmatprep.subr.mxu0 0.0
        %5094 = vmatpush1.msra.mxu0 0.0
        %5095 = vmatprep.subr.mxu0 0.0
        %5096 = vmatpush1.msra.mxu0 0.0
        %5097 = vmatprep.subr.mxu0 0.0
        %5098 = vmatpush1.msra.mxu0 0.0
        %5099 = vmatprep.subr.mxu0 0.0
        %5100 = vmatpush1.msra.mxu0 0.0
        %5101 = vmatprep.subr.mxu0 0.0
        %5102 = vmatpush1.msra.mxu0 0.0
        %5103 = vmatprep.subr.mxu0 0.0
        %5104 = vmatpush1.msra.mxu0 0.0
        %5105 = vmatprep.subr.mxu0 0.0
        %5106 = vmatpush1.msra.mxu0 0.0
        %5107 = vmatprep.mubr.f32.mxu0 0.0
        %5108 = vmatmul.mubr.f32.gmra.mrb[0].mxu0 %v4191
        %v5109 = vpop.f32.mrb[0].mxu0
        %v5110 = vadd.f32 %v5033, %v5109
        %v5111 = vpop.f32.mrb[0].mxu0
        %v5112 = vadd.f32 %v5035, %v5111
        %5113 = vmatprep.mubr.f32.mxu0 0.0
        %5114 = vmatmul.mubr.f32.gmra.mrb[0].mxu0 %v4194
        %v5115 = vpop.f32.mrb[0].mxu0
        %v5116 = vadd.f32 %v5039, %v5115
        %v5117 = vpop.f32.mrb[0].mxu0
        %v5118 = vadd.f32 %v5041, %v5117
        %5119 = vdwg.mxu0
        %v5120 = vmax.f32 %v4340, 0.0
        %v5121 = vmax.f32 %v4342, 0.0
        %v5122 = vmax.f32 %v4494, 0.0
        %v5123 = vmax.f32 %v4496, 0.0
        %v5124 = vmax.f32 %v4648, 0.0
        %v5125 = vmax.f32 %v4650, 0.0
        %v5126 = vmax.f32 %v4802, 0.0
        %v5127 = vmax.f32 %v4804, 0.0
        %v5128 = vmax.f32 %v4956, 0.0
        %v5129 = vmax.f32 %v4958, 0.0
        %v5130 = vmax.f32 %v5110, 0.0
        %v5131 = vmax.f32 %v5112, 0.0
        %v5132 = vmax.f32 %v4346, 0.0
        %v5133 = vmax.f32 %v4348, 0.0
        %v5134 = vmax.f32 %v4500, 0.0
        %v5135 = vmax.f32 %v4502, 0.0
        %v5136 = vmax.f32 %v4654, 0.0
        %v5137 = vmax.f32 %v4656, 0.0
        %v5138 = vmax.f32 %v4808, 0.0
        %v5139 = vmax.f32 %v4810, 0.0
        %v5140 = vmax.f32 %v4962, 0.0
        %v5141 = vmax.f32 %v4964, 0.0
        %v5142 = vmax.f32 %v5116, 0.0
        %v5143 = vmax.f32 %v5118, 0.0
        %v5144 = vmul.f32 %v5120, %v2050
        %v5145 = vmul.f32 %v5121, %v2054
        %v5146 = vmul.f32 %v5122, %v2058
        %v5147 = vmul.f32 %v5123, %v2062
        %v5148 = vmul.f32 %v5124, %v2066
        %v5149 = vmul.f32 %v5125, %v2070
        %v5150 = vmul.f32 %v5126, %v2074
        %v5151 = vmul.f32 %v5127, %v2078
        %v5152 = vmul.f32 %v5128, %v2082
        %v5153 = vmul.f32 %v5129, %v2086
        %v5154 = vmul.f32 %v5130, %v2090
        %v5155 = vmul.f32 %v5131, %v2094
        %v5156 = vmul.f32 %v5132, %v2050
        %v5157 = vmul.f32 %v5133, %v2054
        %v5158 = vmul.f32 %v5134, %v2058
        %v5159 = vmul.f32 %v5135, %v2062
        %v5160 = vmul.f32 %v5136, %v2066
        %v5161 = vmul.f32 %v5137, %v2070
        %v5162 = vmul.f32 %v5138, %v2074
        %v5163 = vmul.f32 %v5139, %v2078
        %v5164 = vmul.f32 %v5140, %v2082
        %v5165 = vmul.f32 %v5141, %v2086
        %v5166 = vmul.f32 %v5142, %v2090
        %v5167 = vmul.f32 %v5143, %v2094
        %v5168 = vld [vmem:[%s5] sm:$0x1]
        %v5169 = vld [vmem:[#allocation3] sm:$0x1]
        %5171 = vset.pattern.permute.xlu0 0
        %5172 = vperm.xlu0 %5171, %v5169
        %v5173 = vpop.permute.xlu0 %5172
        %v5175 = vlaneseq
        %v5176 = vshrl.u32 %v5175, 7
        %v5177 = vsub.s32 0, %v5176
        %v5178 = vrot.slane %v5173, %v5177
        %v5180 = vsel %vm1450, %v5168, 0
        %5182 = vmatprep.subr.mxu0 %v5145
        %5183 = vmatpush1.msra.mxu0 %v5144
        %5184 = vmatprep.subr.mxu0 %v5157
        %5185 = vmatpush1.msra.mxu0 %v5156
        %5186 = vmatprep.subr.mxu0 0.0
        %5187 = vmatpush1.msra.mxu0 0.0
        %5188 = vmatprep.subr.mxu0 0.0
        %5189 = vmatpush1.msra.mxu0 0.0
        %5190 = vmatprep.subr.mxu0 0.0
        %5191 = vmatpush1.msra.mxu0 0.0
        %5192 = vmatprep.subr.mxu0 0.0
        %5193 = vmatpush1.msra.mxu0 0.0
        %5194 = vmatprep.subr.mxu0 0.0
        %5195 = vmatpush1.msra.mxu0 0.0
        %5196 = vmatprep.subr.mxu0 0.0
        %5197 = vmatpush1.msra.mxu0 0.0
        %5198 = vmatprep.subr.mxu0 0.0
        %5199 = vmatpush1.msra.mxu0 0.0
        %5200 = vmatprep.subr.mxu0 0.0
        %5201 = vmatpush1.msra.mxu0 0.0
        %5202 = vmatprep.subr.mxu0 0.0
        %5203 = vmatpush1.msra.mxu0 0.0
        %5204 = vmatprep.subr.mxu0 0.0
        %5205 = vmatpush1.msra.mxu0 0.0
        %5206 = vmatprep.subr.mxu0 0.0
        %5207 = vmatpush1.msra.mxu0 0.0
        %5208 = vmatprep.subr.mxu0 0.0
        %5209 = vmatpush1.msra.mxu0 0.0
        %5210 = vmatprep.subr.mxu0 0.0
        %5211 = vmatpush1.msra.mxu0 0.0
        %5212 = vmatprep.subr.mxu0 0.0
        %5213 = vmatpush1.msra.mxu0 0.0
        %5214 = vmatprep.subr.mxu0 0.0
        %5215 = vmatpush1.msra.mxu0 0.0
        %5216 = vmatprep.subr.mxu0 0.0
        %5217 = vmatpush1.msra.mxu0 0.0
        %5218 = vmatprep.subr.mxu0 0.0
        %5219 = vmatpush1.msra.mxu0 0.0
        %5220 = vmatprep.subr.mxu0 0.0
        %5221 = vmatpush1.msra.mxu0 0.0
        %5222 = vmatprep.subr.mxu0 0.0
        %5223 = vmatpush1.msra.mxu0 0.0
        %5224 = vmatprep.subr.mxu0 0.0
        %5225 = vmatpush1.msra.mxu0 0.0
        %5226 = vmatprep.subr.mxu0 0.0
        %5227 = vmatpush1.msra.mxu0 0.0
        %5228 = vmatprep.subr.mxu0 0.0
        %5229 = vmatpush1.msra.mxu0 0.0
        %5230 = vmatprep.subr.mxu0 0.0
        %5231 = vmatpush1.msra.mxu0 0.0
        %5232 = vmatprep.subr.mxu0 0.0
        %5233 = vmatpush1.msra.mxu0 0.0
        %5234 = vmatprep.subr.mxu0 0.0
        %5235 = vmatpush1.msra.mxu0 0.0
        %5236 = vmatprep.subr.mxu0 0.0
        %5237 = vmatpush1.msra.mxu0 0.0
        %5238 = vmatprep.subr.mxu0 0.0
        %5239 = vmatpush1.msra.mxu0 0.0
        %5240 = vmatprep.subr.mxu0 0.0
        %5241 = vmatpush1.msra.mxu0 0.0
        %5242 = vmatprep.subr.mxu0 0.0
        %5243 = vmatpush1.msra.mxu0 0.0
        %5244 = vmatprep.subr.mxu0 0.0
        %5245 = vmatpush1.msra.mxu0 0.0
        %5246 = vmatprep.mubr.f32.mxu0 0.0
        %5247 = vmatmul.mubr.f32.gmra.mrb[0].mxu0 %v5180
        %v5248 = vpop.f32.mrb[0].mxu0
        %v5249 = vadd.f32 %v5178, %v5248
        %v5250 = vpop.f32.mrb[0].mxu0
        %v5251 = vadd.f32 %v5178, %v5250
        %5252 = vdwg.mxu0
        %5253 = vmatprep.subr.mxu0 %v5147
        %5254 = vmatpush1.msra.mxu0 %v5146
        %5255 = vmatprep.subr.mxu0 %v5159
        %5256 = vmatpush1.msra.mxu0 %v5158
        %5257 = vmatprep.subr.mxu0 0.0
        %5258 = vmatpush1.msra.mxu0 0.0
        %5259 = vmatprep.subr.mxu0 0.0
        %5260 = vmatpush1.msra.mxu0 0.0
        %5261 = vmatprep.subr.mxu0 0.0
        %5262 = vmatpush1.msra.mxu0 0.0
        %5263 = vmatprep.subr.mxu0 0.0
        %5264 = vmatpush1.msra.mxu0 0.0
        %5265 = vmatprep.subr.mxu0 0.0
        %5266 = vmatpush1.msra.mxu0 0.0
        %5267 = vmatprep.subr.mxu0 0.0
        %5268 = vmatpush1.msra.mxu0 0.0
        %5269 = vmatprep.subr.mxu0 0.0
        %5270 = vmatpush1.msra.mxu0 0.0
        %5271 = vmatprep.subr.mxu0 0.0
        %5272 = vmatpush1.msra.mxu0 0.0
        %5273 = vmatprep.subr.mxu0 0.0
        %5274 = vmatpush1.msra.mxu0 0.0
        %5275 = vmatprep.subr.mxu0 0.0
        %5276 = vmatpush1.msra.mxu0 0.0
        %5277 = vmatprep.subr.mxu0 0.0
        %5278 = vmatpush1.msra.mxu0 0.0
        %5279 = vmatprep.subr.mxu0 0.0
        %5280 = vmatpush1.msra.mxu0 0.0
        %5281 = vmatprep.subr.mxu0 0.0
        %5282 = vmatpush1.msra.mxu0 0.0
        %5283 = vmatprep.subr.mxu0 0.0
        %5284 = vmatpush1.msra.mxu0 0.0
        %5285 = vmatprep.subr.mxu0 0.0
        %5286 = vmatpush1.msra.mxu0 0.0
        %5287 = vmatprep.subr.mxu0 0.0
        %5288 = vmatpush1.msra.mxu0 0.0
        %5289 = vmatprep.subr.mxu0 0.0
        %5290 = vmatpush1.msra.mxu0 0.0
        %5291 = vmatprep.subr.mxu0 0.0
        %5292 = vmatpush1.msra.mxu0 0.0
        %5293 = vmatprep.subr.mxu0 0.0
        %5294 = vmatpush1.msra.mxu0 0.0
        %5295 = vmatprep.subr.mxu0 0.0
        %5296 = vmatpush1.msra.mxu0 0.0
        %5297 = vmatprep.subr.mxu0 0.0
        %5298 = vmatpush1.msra.mxu0 0.0
        %5299 = vmatprep.subr.mxu0 0.0
        %5300 = vmatpush1.msra.mxu0 0.0
        %5301 = vmatprep.subr.mxu0 0.0
        %5302 = vmatpush1.msra.mxu0 0.0
        %5303 = vmatprep.subr.mxu0 0.0
        %5304 = vmatpush1.msra.mxu0 0.0
        %5305 = vmatprep.subr.mxu0 0.0
        %5306 = vmatpush1.msra.mxu0 0.0
        %5307 = vmatprep.subr.mxu0 0.0
        %5308 = vmatpush1.msra.mxu0 0.0
        %5309 = vmatprep.subr.mxu0 0.0
        %5310 = vmatpush1.msra.mxu0 0.0
        %5311 = vmatprep.subr.mxu0 0.0
        %5312 = vmatpush1.msra.mxu0 0.0
        %5313 = vmatprep.subr.mxu0 0.0
        %5314 = vmatpush1.msra.mxu0 0.0
        %5315 = vmatprep.subr.mxu0 0.0
        %5316 = vmatpush1.msra.mxu0 0.0
        %5317 = vmatprep.mubr.f32.mxu0 0.0
        %5318 = vmatmul.mubr.f32.gmra.mrb[0].mxu0 %v5180
        %v5319 = vpop.f32.mrb[0].mxu0
        %v5320 = vadd.f32 %v5178, %v5319
        %v5321 = vpop.f32.mrb[0].mxu0
        %v5322 = vadd.f32 %v5178, %v5321
        %5323 = vdwg.mxu0
        %5324 = vmatprep.subr.mxu0 %v5149
        %5325 = vmatpush1.msra.mxu0 %v5148
        %5326 = vmatprep.subr.mxu0 %v5161
        %5327 = vmatpush1.msra.mxu0 %v5160
        %5328 = vmatprep.subr.mxu0 0.0
        %5329 = vmatpush1.msra.mxu0 0.0
        %5330 = vmatprep.subr.mxu0 0.0
        %5331 = vmatpush1.msra.mxu0 0.0
        %5332 = vmatprep.subr.mxu0 0.0
        %5333 = vmatpush1.msra.mxu0 0.0
        %5334 = vmatprep.subr.mxu0 0.0
        %5335 = vmatpush1.msra.mxu0 0.0
        %5336 = vmatprep.subr.mxu0 0.0
        %5337 = vmatpush1.msra.mxu0 0.0
        %5338 = vmatprep.subr.mxu0 0.0
        %5339 = vmatpush1.msra.mxu0 0.0
        %5340 = vmatprep.subr.mxu0 0.0
        %5341 = vmatpush1.msra.mxu0 0.0
        %5342 = vmatprep.subr.mxu0 0.0
        %5343 = vmatpush1.msra.mxu0 0.0
        %5344 = vmatprep.subr.mxu0 0.0
        %5345 = vmatpush1.msra.mxu0 0.0
        %5346 = vmatprep.subr.mxu0 0.0
        %5347 = vmatpush1.msra.mxu0 0.0
        %5348 = vmatprep.subr.mxu0 0.0
        %5349 = vmatpush1.msra.mxu0 0.0
        %5350 = vmatprep.subr.mxu0 0.0
        %5351 = vmatpush1.msra.mxu0 0.0
        %5352 = vmatprep.subr.mxu0 0.0
        %5353 = vmatpush1.msra.mxu0 0.0
        %5354 = vmatprep.subr.mxu0 0.0
        %5355 = vmatpush1.msra.mxu0 0.0
        %5356 = vmatprep.subr.mxu0 0.0
        %5357 = vmatpush1.msra.mxu0 0.0
        %5358 = vmatprep.subr.mxu0 0.0
        %5359 = vmatpush1.msra.mxu0 0.0
        %5360 = vmatprep.subr.mxu0 0.0
        %5361 = vmatpush1.msra.mxu0 0.0
        %5362 = vmatprep.subr.mxu0 0.0
        %5363 = vmatpush1.msra.mxu0 0.0
        %5364 = vmatprep.subr.mxu0 0.0
        %5365 = vmatpush1.msra.mxu0 0.0
        %5366 = vmatprep.subr.mxu0 0.0
        %5367 = vmatpush1.msra.mxu0 0.0
        %5368 = vmatprep.subr.mxu0 0.0
        %5369 = vmatpush1.msra.mxu0 0.0
        %5370 = vmatprep.subr.mxu0 0.0
        %5371 = vmatpush1.msra.mxu0 0.0
        %5372 = vmatprep.subr.mxu0 0.0
        %5373 = vmatpush1.msra.mxu0 0.0
        %5374 = vmatprep.subr.mxu0 0.0
        %5375 = vmatpush1.msra.mxu0 0.0
        %5376 = vmatprep.subr.mxu0 0.0
        %5377 = vmatpush1.msra.mxu0 0.0
        %5378 = vmatprep.subr.mxu0 0.0
        %5379 = vmatpush1.msra.mxu0 0.0
        %5380 = vmatprep.subr.mxu0 0.0
        %5381 = vmatpush1.msra.mxu0 0.0
        %5382 = vmatprep.subr.mxu0 0.0
        %5383 = vmatpush1.msra.mxu0 0.0
        %5384 = vmatprep.subr.mxu0 0.0
        %5385 = vmatpush1.msra.mxu0 0.0
        %5386 = vmatprep.subr.mxu0 0.0
        %5387 = vmatpush1.msra.mxu0 0.0
        %5388 = vmatprep.mubr.f32.mxu0 0.0
        %5389 = vmatmul.mubr.f32.gmra.mrb[0].mxu0 %v5180
        %v5390 = vpop.f32.mrb[0].mxu0
        %v5391 = vadd.f32 %v5178, %v5390
        %v5392 = vpop.f32.mrb[0].mxu0
        %v5393 = vadd.f32 %v5178, %v5392
        %5394 = vdwg.mxu0
        %5395 = vmatprep.subr.mxu0 %v5151
        %5396 = vmatpush1.msra.mxu0 %v5150
        %5397 = vmatprep.subr.mxu0 %v5163
        %5398 = vmatpush1.msra.mxu0 %v5162
        %5399 = vmatprep.subr.mxu0 0.0
        %5400 = vmatpush1.msra.mxu0 0.0
        %5401 = vmatprep.subr.mxu0 0.0
        %5402 = vmatpush1.msra.mxu0 0.0
        %5403 = vmatprep.subr.mxu0 0.0
        %5404 = vmatpush1.msra.mxu0 0.0
        %5405 = vmatprep.subr.mxu0 0.0
        %5406 = vmatpush1.msra.mxu0 0.0
        %5407 = vmatprep.subr.mxu0 0.0
        %5408 = vmatpush1.msra.mxu0 0.0
        %5409 = vmatprep.subr.mxu0 0.0
        %5410 = vmatpush1.msra.mxu0 0.0
        %5411 = vmatprep.subr.mxu0 0.0
        %5412 = vmatpush1.msra.mxu0 0.0
        %5413 = vmatprep.subr.mxu0 0.0
        %5414 = vmatpush1.msra.mxu0 0.0
        %5415 = vmatprep.subr.mxu0 0.0
        %5416 = vmatpush1.msra.mxu0 0.0
        %5417 = vmatprep.subr.mxu0 0.0
        %5418 = vmatpush1.msra.mxu0 0.0
        %5419 = vmatprep.subr.mxu0 0.0
        %5420 = vmatpush1.msra.mxu0 0.0
        %5421 = vmatprep.subr.mxu0 0.0
        %5422 = vmatpush1.msra.mxu0 0.0
        %5423 = vmatprep.subr.mxu0 0.0
        %5424 = vmatpush1.msra.mxu0 0.0
        %5425 = vmatprep.subr.mxu0 0.0
        %5426 = vmatpush1.msra.mxu0 0.0
        %5427 = vmatprep.subr.mxu0 0.0
        %5428 = vmatpush1.msra.mxu0 0.0
        %5429 = vmatprep.subr.mxu0 0.0
        %5430 = vmatpush1.msra.mxu0 0.0
        %5431 = vmatprep.subr.mxu0 0.0
        %5432 = vmatpush1.msra.mxu0 0.0
        %5433 = vmatprep.subr.mxu0 0.0
        %5434 = vmatpush1.msra.mxu0 0.0
        %5435 = vmatprep.subr.mxu0 0.0
        %5436 = vmatpush1.msra.mxu0 0.0
        %5437 = vmatprep.subr.mxu0 0.0
        %5438 = vmatpush1.msra.mxu0 0.0
        %5439 = vmatprep.subr.mxu0 0.0
        %5440 = vmatpush1.msra.mxu0 0.0
        %5441 = vmatprep.subr.mxu0 0.0
        %5442 = vmatpush1.msra.mxu0 0.0
        %5443 = vmatprep.subr.mxu0 0.0
        %5444 = vmatpush1.msra.mxu0 0.0
        %5445 = vmatprep.subr.mxu0 0.0
        %5446 = vmatpush1.msra.mxu0 0.0
        %5447 = vmatprep.subr.mxu0 0.0
        %5448 = vmatpush1.msra.mxu0 0.0
        %5449 = vmatprep.subr.mxu0 0.0
        %5450 = vmatpush1.msra.mxu0 0.0
        %5451 = vmatprep.subr.mxu0 0.0
        %5452 = vmatpush1.msra.mxu0 0.0
        %5453 = vmatprep.subr.mxu0 0.0
        %5454 = vmatpush1.msra.mxu0 0.0
        %5455 = vmatprep.subr.mxu0 0.0
        %5456 = vmatpush1.msra.mxu0 0.0
        %5457 = vmatprep.subr.mxu0 0.0
        %5458 = vmatpush1.msra.mxu0 0.0
        %5459 = vmatprep.mubr.f32.mxu0 0.0
        %5460 = vmatmul.mubr.f32.gmra.mrb[0].mxu0 %v5180
        %v5461 = vpop.f32.mrb[0].mxu0
        %v5462 = vadd.f32 %v5178, %v5461
        %v5463 = vpop.f32.mrb[0].mxu0
        %v5464 = vadd.f32 %v5178, %v5463
        %5465 = vdwg.mxu0
        %5466 = vmatprep.subr.mxu0 %v5153
        %5467 = vmatpush1.msra.mxu0 %v5152
        %5468 = vmatprep.subr.mxu0 %v5165
        %5469 = vmatpush1.msra.mxu0 %v5164
        %5470 = vmatprep.subr.mxu0 0.0
        %5471 = vmatpush1.msra.mxu0 0.0
        %5472 = vmatprep.subr.mxu0 0.0
        %5473 = vmatpush1.msra.mxu0 0.0
        %5474 = vmatprep.subr.mxu0 0.0
        %5475 = vmatpush1.msra.mxu0 0.0
        %5476 = vmatprep.subr.mxu0 0.0
        %5477 = vmatpush1.msra.mxu0 0.0
        %5478 = vmatprep.subr.mxu0 0.0
        %5479 = vmatpush1.msra.mxu0 0.0
        %5480 = vmatprep.subr.mxu0 0.0
        %5481 = vmatpush1.msra.mxu0 0.0
        %5482 = vmatprep.subr.mxu0 0.0
        %5483 = vmatpush1.msra.mxu0 0.0
        %5484 = vmatprep.subr.mxu0 0.0
        %5485 = vmatpush1.msra.mxu0 0.0
        %5486 = vmatprep.subr.mxu0 0.0
        %5487 = vmatpush1.msra.mxu0 0.0
        %5488 = vmatprep.subr.mxu0 0.0
        %5489 = vmatpush1.msra.mxu0 0.0
        %5490 = vmatprep.subr.mxu0 0.0
        %5491 = vmatpush1.msra.mxu0 0.0
        %5492 = vmatprep.subr.mxu0 0.0
        %5493 = vmatpush1.msra.mxu0 0.0
        %5494 = vmatprep.subr.mxu0 0.0
        %5495 = vmatpush1.msra.mxu0 0.0
        %5496 = vmatprep.subr.mxu0 0.0
        %5497 = vmatpush1.msra.mxu0 0.0
        %5498 = vmatprep.subr.mxu0 0.0
        %5499 = vmatpush1.msra.mxu0 0.0
        %5500 = vmatprep.subr.mxu0 0.0
        %5501 = vmatpush1.msra.mxu0 0.0
        %5502 = vmatprep.subr.mxu0 0.0
        %5503 = vmatpush1.msra.mxu0 0.0
        %5504 = vmatprep.subr.mxu0 0.0
        %5505 = vmatpush1.msra.mxu0 0.0
        %5506 = vmatprep.subr.mxu0 0.0
        %5507 = vmatpush1.msra.mxu0 0.0
        %5508 = vmatprep.subr.mxu0 0.0
        %5509 = vmatpush1.msra.mxu0 0.0
        %5510 = vmatprep.subr.mxu0 0.0
        %5511 = vmatpush1.msra.mxu0 0.0
        %5512 = vmatprep.subr.mxu0 0.0
        %5513 = vmatpush1.msra.mxu0 0.0
        %5514 = vmatprep.subr.mxu0 0.0
        %5515 = vmatpush1.msra.mxu0 0.0
        %5516 = vmatprep.subr.mxu0 0.0
        %5517 = vmatpush1.msra.mxu0 0.0
        %5518 = vmatprep.subr.mxu0 0.0
        %5519 = vmatpush1.msra.mxu0 0.0
        %5520 = vmatprep.subr.mxu0 0.0
        %5521 = vmatpush1.msra.mxu0 0.0
        %5522 = vmatprep.subr.mxu0 0.0
        %5523 = vmatpush1.msra.mxu0 0.0
        %5524 = vmatprep.subr.mxu0 0.0
        %5525 = vmatpush1.msra.mxu0 0.0
        %5526 = vmatprep.subr.mxu0 0.0
        %5527 = vmatpush1.msra.mxu0 0.0
        %5528 = vmatprep.subr.mxu0 0.0
        %5529 = vmatpush1.msra.mxu0 0.0
        %5530 = vmatprep.mubr.f32.mxu0 0.0
        %5531 = vmatmul.mubr.f32.gmra.mrb[0].mxu0 %v5180
        %v5532 = vpop.f32.mrb[0].mxu0
        %v5533 = vadd.f32 %v5178, %v5532
        %v5534 = vpop.f32.mrb[0].mxu0
        %v5535 = vadd.f32 %v5178, %v5534
        %5536 = vdwg.mxu0
        %5537 = vmatprep.subr.mxu0 %v5155
        %5538 = vmatpush1.msra.mxu0 %v5154
        %5539 = vmatprep.subr.mxu0 %v5167
        %5540 = vmatpush1.msra.mxu0 %v5166
        %5541 = vmatprep.subr.mxu0 0.0
        %5542 = vmatpush1.msra.mxu0 0.0
        %5543 = vmatprep.subr.mxu0 0.0
        %5544 = vmatpush1.msra.mxu0 0.0
        %5545 = vmatprep.subr.mxu0 0.0
        %5546 = vmatpush1.msra.mxu0 0.0
        %5547 = vmatprep.subr.mxu0 0.0
        %5548 = vmatpush1.msra.mxu0 0.0
        %5549 = vmatprep.subr.mxu0 0.0
        %5550 = vmatpush1.msra.mxu0 0.0
        %5551 = vmatprep.subr.mxu0 0.0
        %5552 = vmatpush1.msra.mxu0 0.0
        %5553 = vmatprep.subr.mxu0 0.0
        %5554 = vmatpush1.msra.mxu0 0.0
        %5555 = vmatprep.subr.mxu0 0.0
        %5556 = vmatpush1.msra.mxu0 0.0
        %5557 = vmatprep.subr.mxu0 0.0
        %5558 = vmatpush1.msra.mxu0 0.0
        %5559 = vmatprep.subr.mxu0 0.0
        %5560 = vmatpush1.msra.mxu0 0.0
        %5561 = vmatprep.subr.mxu0 0.0
        %5562 = vmatpush1.msra.mxu0 0.0
        %5563 = vmatprep.subr.mxu0 0.0
        %5564 = vmatpush1.msra.mxu0 0.0
        %5565 = vmatprep.subr.mxu0 0.0
        %5566 = vmatpush1.msra.mxu0 0.0
        %5567 = vmatprep.subr.mxu0 0.0
        %5568 = vmatpush1.msra.mxu0 0.0
        %5569 = vmatprep.subr.mxu0 0.0
        %5570 = vmatpush1.msra.mxu0 0.0
        %5571 = vmatprep.subr.mxu0 0.0
        %5572 = vmatpush1.msra.mxu0 0.0
        %5573 = vmatprep.subr.mxu0 0.0
        %5574 = vmatpush1.msra.mxu0 0.0
        %5575 = vmatprep.subr.mxu0 0.0
        %5576 = vmatpush1.msra.mxu0 0.0
        %5577 = vmatprep.subr.mxu0 0.0
        %5578 = vmatpush1.msra.mxu0 0.0
        %5579 = vmatprep.subr.mxu0 0.0
        %5580 = vmatpush1.msra.mxu0 0.0
        %5581 = vmatprep.subr.mxu0 0.0
        %5582 = vmatpush1.msra.mxu0 0.0
        %5583 = vmatprep.subr.mxu0 0.0
        %5584 = vmatpush1.msra.mxu0 0.0
        %5585 = vmatprep.subr.mxu0 0.0
        %5586 = vmatpush1.msra.mxu0 0.0
        %5587 = vmatprep.subr.mxu0 0.0
        %5588 = vmatpush1.msra.mxu0 0.0
        %5589 = vmatprep.subr.mxu0 0.0
        %5590 = vmatpush1.msra.mxu0 0.0
        %5591 = vmatprep.subr.mxu0 0.0
        %5592 = vmatpush1.msra.mxu0 0.0
        %5593 = vmatprep.subr.mxu0 0.0
        %5594 = vmatpush1.msra.mxu0 0.0
        %5595 = vmatprep.subr.mxu0 0.0
        %5596 = vmatpush1.msra.mxu0 0.0
        %5597 = vmatprep.subr.mxu0 0.0
        %5598 = vmatpush1.msra.mxu0 0.0
        %5599 = vmatprep.subr.mxu0 0.0
        %5600 = vmatpush1.msra.mxu0 0.0
        %5601 = vmatprep.mubr.f32.mxu0 0.0
        %5602 = vmatmul.mubr.f32.gmra.mrb[0].mxu0 %v5180
        %v5603 = vpop.f32.mrb[0].mxu0
        %v5604 = vadd.f32 %v5178, %v5603
        %v5605 = vpop.f32.mrb[0].mxu0
        %v5606 = vadd.f32 %v5178, %v5605
        %5607 = vdwg.mxu0
        %v5620 = vcombine.low %v5249, %v5251
        %v5621 = vcombine.low %v5320, %v5322
        %v5622 = vcombine.low %v5391, %v5393
        %v5623 = vcombine.low %v5462, %v5464
        %v5625 = vunpack.c.l.s4 1966171168
        %v5626 = vunpack.c.0.s8 %v5625
        %v5627 = vlaneseq
        %v5628 = vshrl.u32 %v5627, 7
        %v5629 = vsub.s32 %v5626, %v5628
        %v5630 = vrot.slane %v5620, %v5629
        %v5632 = vunpack.c.l.s4 1966171168
        %v5633 = vunpack.c.0.s8 %v5632
        %v5634 = vlaneseq
        %v5635 = vshrl.u32 %v5634, 7
        %v5636 = vsub.s32 %v5633, %v5635
        %v5637 = vrot.slane %v5621, %v5636
        %v5639 = vunpack.c.l.s4 1966171168
        %v5640 = vunpack.c.0.s8 %v5639
        %v5641 = vlaneseq
        %v5642 = vshrl.u32 %v5641, 7
        %v5643 = vsub.s32 %v5640, %v5642
        %v5644 = vrot.slane %v5622, %v5643
        %v5646 = vunpack.c.l.s4 1966171168
        %v5647 = vunpack.c.0.s8 %v5646
        %v5648 = vlaneseq
        %v5649 = vshrl.u32 %v5648, 7
        %v5650 = vsub.s32 %v5647, %v5649
        %v5651 = vrot.slane %v5623, %v5650
        %v5652 = vcombine.low %v5630, %v5637
        %v5653 = vcombine.low %v5644, %v5651
        %v5655 = vunpack.c.l.s4 1966171168
        %v5656 = vunpack.c.0.s8 %v5655
        %v5657 = vlaneseq
        %v5658 = vshrl.u32 %v5657, 7
        %v5659 = vsub.s32 %v5656, %v5658
        %v5660 = vrot.slane %v5652, %v5659
        %v5662 = vunpack.c.l.s4 1966171168
        %v5663 = vunpack.c.0.s8 %v5662
        %v5664 = vlaneseq
        %v5665 = vshrl.u32 %v5664, 7
        %v5666 = vsub.s32 %v5663, %v5665
        %v5667 = vrot.slane %v5653, %v5666
        %v5668 = vcombine.low %v5660, %v5667
        %v5669 = vcombine.low %v5533, %v5535
        %v5670 = vcombine.low %v5604, %v5606
        %v5672 = vunpack.c.l.s4 1966171168
        %v5673 = vunpack.c.0.s8 %v5672
        %v5674 = vlaneseq
        %v5675 = vshrl.u32 %v5674, 7
        %v5676 = vsub.s32 %v5673, %v5675
        %v5677 = vrot.slane %v5669, %v5676
        %v5679 = vunpack.c.l.s4 1966171168
        %v5680 = vunpack.c.0.s8 %v5679
        %v5681 = vlaneseq
        %v5682 = vshrl.u32 %v5681, 7
        %v5683 = vsub.s32 %v5680, %v5682
        %v5684 = vrot.slane %v5670, %v5683
        %v5685 = vcombine.low %v5677, %v5684
        %v5687 = vunpack.c.l.s4 1966171168
        %v5688 = vunpack.c.0.s8 %v5687
        %v5689 = vlaneseq
        %v5690 = vshrl.u32 %v5689, 7
        %v5691 = vsub.s32 %v5688, %v5690
        %v5692 = vrot.slane %v5685, %v5691
        %5695 = vst [vmem:[%s372] sm:$0xff] %v5668
        %v5696 = vlaneseq
        %vm5697 = vcmp.ge.s32.totalorder %v5696, 0
        %vm5698 = vcmp.lt.s32.totalorder %v5696, 512
        %vm5699 = vmand %vm5697, %vm5698
        %5700 = vst.msk [vmem:[%s372 + $0x8] sm:$0xf] %vm5699, %v5692
        %s5701 = smul.u32 12, %s21
        %p5702 = scmp.lt.s32.totalorder %s5701, 23
        %s5703 = scalar_select %p5702, %s5701, 23
        %s5704 = scalar_lea.vmem %s8, %s5703
        // Predicated region
        $region76: #{custom_2d_conv_matching.1} parent=70 // pred_check
          %p5705 = pneg %p212
        $region77: #{custom_2d_conv_matching.1} parent=70 // pred_check_branch
          %5707 = sbr.rel (%p5705) target = $region79
        $region78: #{custom_2d_conv_matching.1} parent=70 // pred_region
          %s5708 = smul.u32 12, %s21
        $region79: #{custom_2d_conv_matching.1} parent=70 // pred_fallthru
          _
      $region71: #{custom_2d_conv_matching.1} parent=5 // pred_fallthru
        _
      %p5709 = scmp.le.s32.totalorder 2, %s16
      // Predicated region
      $region80: #{custom_2d_conv_matching.1} parent=5 // pred_check
        %p5710 = pneg %p5709
      $region81: #{custom_2d_conv_matching.1} parent=5 // pred_check_branch
        %5712 = sbr.rel (%p5710) target = $region83
      $region82: #{custom_2d_conv_matching.1} parent=5 // pred_region
        %s5713 = ssub.s32 %s16, 2
        // Predicated region
        $region84: #{custom_2d_conv_matching.1} parent=82 // pred_check
          %p5714 = pneg %p218
        $region85: #{custom_2d_conv_matching.1} parent=82 // pred_check_branch
          %5716 = sbr.rel (%p5714) target = $region87
        $region86: #{custom_2d_conv_matching.1} parent=82 // pred_region
          %s5717 = smul.u32 12, %s22
          %p5718 = scmp.lt.s32.totalorder %s5717, 23
          %s5719 = scalar_select %p5718, %s5717, 23
          %s5720 = scalar_lea.vmem %s8, %s5719
        $region87: #{custom_2d_conv_matching.1} parent=82 // pred_fallthru
          _
      $region83: #{custom_2d_conv_matching.1} parent=5 // pred_fallthru
        _
    $region6: #{custom_2d_conv_matching.1} parent=1 // loop_footer
      %s20 = sadd.s32 1, %s16
    $region7: #{custom_2d_conv_matching.1} parent=1 // loop_footer_branch
      %15 = sbr.rel target = $region3
    $region8: #{custom_2d_conv_matching.1} parent=1 // loop_exit
      _

</llo_original>
